<compile_context>
chip_gen: v7x
topology: tpu7x:2x2x1
jax: 0.10.0
libtpu: 0.0.40
codegen_flags: <defaults>
</compile_context>

<pallas_src>
import functools

import jax
import jax.numpy as jnp
from jax.experimental import pallas as pl
from jax.experimental.pallas import tpu as pltpu


def _round_up(x, m):
    return (x + m - 1) // m * m


# ----------------------------------------------------------------------------
# Pallas kernels
# ----------------------------------------------------------------------------
def _fused_matmul_kernel(act, x_ref, w_ref, b_ref, o_ref, acc_ref):
    """Tiled GEMM: acc += x @ w (bf16 in, f32 acc); epilogue adds bias + act.

    BatchNorm scale is pre-folded into the weight columns in the wrapper, so
    the epilogue is only a bias add + activation (keeps VALU pressure low).
    """
    @pl.when(pl.program_id(2) == 0)
    def _():
        acc_ref[...] = jnp.zeros_like(acc_ref)

    acc_ref[...] += jnp.dot(x_ref[...], w_ref[...],
                            preferred_element_type=jnp.float32)

    @pl.when(pl.program_id(2) == pl.num_programs(2) - 1)
    def _():
        y = acc_ref[...] + b_ref[...]          # f32 epilogue (v5e-safe)
        if act == "relu":
            y = jnp.maximum(y, 0.0)
        elif act == "hardswish":
            y = y * jnp.clip(y + 3.0, 0.0, 6.0) * (1.0 / 6.0)
        elif act == "sigmoid":
            y = jax.nn.sigmoid(y)
        o_ref[...] = y.astype(o_ref.dtype)


def fused_matmul(x, w, bias, act="none"):
    """act((x @ w) + bias) with M/N/K tiling, lane-padded N, bf16 MXU inputs."""
    M, K = x.shape
    K2, N = w.shape
    assert K == K2

    # Lane-dense output: pad N to a multiple of 128.
    Npad = _round_up(N, 128)
    tn = 256 if Npad % 256 == 0 else 128
    # Reduction axis: multiples of 128 (256/512 when possible for the MXU).
    Kpad = _round_up(K, 128)
    if Kpad % 512 == 0:
        tk = 512
    elif Kpad % 256 == 0:
        tk = 256
    else:
        tk = 128
    tm = min(256, _round_up(M, 8))
    Mpad = _round_up(M, tm)

    x = x.astype(jnp.bfloat16)
    w = w.astype(jnp.bfloat16)
    bias = bias.astype(jnp.float32).reshape(1, N)
    if (Mpad, Kpad) != (M, K):
        x = jnp.pad(x, ((0, Mpad - M), (0, Kpad - K)))
    if (Kpad, Npad) != (K, N):
        w = jnp.pad(w, ((0, Kpad - K), (0, Npad - N)))
    if Npad != N:
        bias = jnp.pad(bias, ((0, 0), (0, Npad - N)))

    grid = (Mpad // tm, Npad // tn, Kpad // tk)
    out = pl.pallas_call(
        functools.partial(_fused_matmul_kernel, act),
        out_shape=jax.ShapeDtypeStruct((Mpad, Npad), jnp.float32),
        grid=grid,
        in_specs=[
            pl.BlockSpec((tm, tk), lambda i, j, k: (i, k)),
            pl.BlockSpec((tk, tn), lambda i, j, k: (k, j)),
            pl.BlockSpec((1, tn), lambda i, j, k: (0, j)),
        ],
        out_specs=pl.BlockSpec((tm, tn), lambda i, j, k: (i, j)),
        scratch_shapes=[pltpu.VMEM((tm, tn), jnp.float32)],
        compiler_params=pltpu.CompilerParams(
            dimension_semantics=("parallel", "parallel", "arbitrary"),
            vmem_limit_bytes=64 * 1024 * 1024,
        ),
    )(x, w, bias)
    if (Mpad, Npad) != (M, N):
        out = out[:M, :N]
    return out


def _scale_apply_kernel(x_ref, a_ref, o_ref):
    o_ref[...] = x_ref[...] * a_ref[...]


def scale_apply(x, att):
    """x: (M, C) f32, att: (M, 1) -> x * att, tiled over rows."""
    M, C = x.shape
    tm = min(512, _round_up(M, 8))
    Mpad = _round_up(M, tm)
    if Mpad != M:
        x = jnp.pad(x, ((0, Mpad - M), (0, 0)))
        att = jnp.pad(att, ((0, Mpad - M), (0, 0)))
    out = pl.pallas_call(
        _scale_apply_kernel,
        out_shape=jax.ShapeDtypeStruct((Mpad, C), jnp.float32),
        grid=(Mpad // tm,),
        in_specs=[
            pl.BlockSpec((tm, C), lambda i: (i, 0)),
            pl.BlockSpec((tm, 1), lambda i: (i, 0)),
        ],
        out_specs=pl.BlockSpec((tm, C), lambda i: (i, 0)),
        compiler_params=pltpu.CompilerParams(
            dimension_semantics=("parallel",)),
    )(x.astype(jnp.float32), att.astype(jnp.float32))
    return out[:M]


# ----------------------------------------------------------------------------
# JAX glue: im2col, pixel shuffle, deformable sampling
# ----------------------------------------------------------------------------
def im2col(x, kh, kw, stride, pad):
    """x: (N, H, W, C) -> cols (N, Ho, Wo, kh*kw*C), column order (ki, kj, c)."""
    # TODO(synk): im2col is still materialized in HBM; a windowed-BlockSpec
    # conv kernel would remove this intermediate.
    N, H, W, C = x.shape
    xp = jnp.pad(x, ((0, 0), (pad, pad), (pad, pad), (0, 0)))
    Ho = (H + 2 * pad - kh) // stride + 1
    Wo = (W + 2 * pad - kw) // stride + 1
    patches = []
    for i in range(kh):
        for j in range(kw):
            patches.append(
                jax.lax.slice(
                    xp,
                    (0, i, j, 0),
                    (N, i + (Ho - 1) * stride + 1, j + (Wo - 1) * stride + 1, C),
                    (1, stride, stride, 1),
                )
            )
    cols = jnp.stack(patches, axis=3)  # (N, Ho, Wo, kh*kw, C)
    return cols.reshape(N, Ho, Wo, kh * kw * C), Ho, Wo


def pixel_shuffle(x, r):
    """NHWC PixelShuffle matching torch.nn.PixelShuffle on NCHW."""
    N, H, W, C = x.shape
    Co = C // (r * r)
    x = x.reshape(N, H, W, Co, r, r)
    x = jnp.transpose(x, (0, 1, 4, 2, 5, 3))
    return x.reshape(N, H * r, W * r, Co)


def conv_bn_act(x, w, conv_bias, bn, act, stride, pad):
    """Conv2d (+ folded BatchNorm) (+ activation) via the Pallas GEMM kernel."""
    Cout, Cin, kh, kw = w.shape
    N = x.shape[0]
    cols, Ho, Wo = im2col(x.astype(jnp.bfloat16), kh, kw, stride, pad)
    xm = cols.reshape(N * Ho * Wo, kh * kw * Cin)
    wm = jnp.transpose(w, (2, 3, 1, 0)).reshape(kh * kw * Cin, Cout)
    if bn is not None:
        gamma, beta, mean, var = bn
        scale = gamma / jnp.sqrt(var + 1e-5)
        shift = beta - mean * scale
    else:
        scale = jnp.ones((Cout,), jnp.float32)
        shift = jnp.zeros((Cout,), jnp.float32)
    bias = shift if conv_bias is None else conv_bias * scale + shift
    wm = wm.astype(jnp.float32) * scale[None, :]   # fold BN scale into weights
    y = fused_matmul(xm, wm, bias.reshape(1, Cout), act)
    return y.reshape(N, Ho, Wo, Cout)


def deform_sample(x, off, mask, pad=1):
    """Modulated deformable bilinear sampling.

    x:    (N, H, W, C)
    off:  (N, H, W, G, K, 2)   last dim = (dy, dx)
    mask: (N, H, W, G, K)
    returns (N, H, W, G, K, Cg)
    """
    # TODO(synk): the 4-corner gather is plain JAX (XLA gather); a Pallas
    # scalar-prefetch gather kernel would avoid the HBM intermediates.
    N, H, W, C = x.shape
    G, K = off.shape[3], off.shape[4]
    Cg = C // G
    kw = int(round(K ** 0.5))
    kidx = jnp.arange(K)
    ki = (kidx // kw).astype(jnp.float32)
    kj = (kidx % kw).astype(jnp.float32)
    hs = jnp.arange(H, dtype=jnp.float32)
    ws = jnp.arange(W, dtype=jnp.float32)
    base_y = hs[:, None] - pad + ki[None, :]  # (H, K)
    base_x = ws[:, None] - pad + kj[None, :]  # (W, K)
    sy = base_y[None, :, None, None, :] + off[..., 0]  # (N,H,W,G,K)
    sx = base_x[None, None, :, None, :] + off[..., 1]

    y0 = jnp.floor(sy)
    x0 = jnp.floor(sx)
    y1 = y0 + 1.0
    x1 = x0 + 1.0
    wy1 = sy - y0
    wy0 = 1.0 - wy1
    wx1 = sx - x0
    wx0 = 1.0 - wx1

    flat = x.reshape(N, H * W, G, Cg)

    def gather_corner(yi, xi):
        valid = ((yi >= 0) & (yi < H) & (xi >= 0) & (xi < W)).astype(jnp.float32)
        yc = jnp.clip(yi, 0, H - 1).astype(jnp.int32)
        xc = jnp.clip(xi, 0, W - 1).astype(jnp.int32)
        idx = yc * W + xc  # (N,H,W,G,K)

        def one(f_g, idx_g):  # f_g: (H*W, Cg), idx_g: (H, W, K)
            return f_g[idx_g]  # (H, W, K, Cg)

        # outer vmap over N (axis 0 of both); inner vmap over groups G
        # (axis 1 of flat-without-N, axis 2 of idx-without-N).
        g = jax.vmap(
            jax.vmap(one, in_axes=(1, 2), out_axes=2), in_axes=(0, 0)
        )(flat, idx)  # (N, H, W, G, K, Cg)
        return g * valid[..., None]

    v00 = gather_corner(y0, x0)
    v01 = gather_corner(y0, x1)
    v10 = gather_corner(y1, x0)
    v11 = gather_corner(y1, x1)
    val = (
        v00 * (wy0 * wx0)[..., None]
        + v01 * (wy0 * wx1)[..., None]
        + v10 * (wy1 * wx0)[..., None]
        + v11 * (wy1 * wx1)[..., None]
    )
    return val * mask[..., None]


def dcn_relu(feat, offset_feat, om_w, om_b, w, b, groups=8):
    """relu( modulated_deform_conv(feat, offsets/mask from offset_feat) )."""
    N, H, W, C = feat.shape
    G, K = groups, 9
    om = conv_bn_act(offset_feat, om_w, om_b, None, "none", 1, 1)  # (N,H,W,3*G*K)
    o1 = om[..., : G * K]
    o2 = om[..., G * K : 2 * G * K]
    m = jax.nn.sigmoid(om[..., 2 * G * K :])
    off = jnp.stack(
        [o1.reshape(N, H, W, G, K), o2.reshape(N, H, W, G, K)], axis=-1
    )
    mask = m.reshape(N, H, W, G, K)
    samp = deform_sample(feat, off, mask, pad=1)  # (N,H,W,G,K,Cg)
    # column order (cin, k) to match weight reshape below
    cols = jnp.transpose(samp, (0, 1, 2, 3, 5, 4)).reshape(N * H * W, C * K)
    wm = jnp.transpose(w.reshape(C, C, K), (1, 2, 0)).reshape(C * K, C)
    y = fused_matmul(cols, wm, b.reshape(1, C), "relu")
    return y.reshape(N, H, W, C)


def spatial_attention(x, w):
    """SpatialAttention(k=3) followed by elementwise multiply with x.

    The mean/max reduce and the tiny 2->1 3x3 attention conv stay in JAX (they
    touch only a 2-channel map); the full-tensor x * att scale runs in a tiled
    Pallas kernel.
    """
    N, H, W, C = x.shape
    avg = jnp.mean(x, axis=-1, keepdims=True)
    mx = jnp.max(x, axis=-1, keepdims=True)
    two = jnp.concatenate([avg, mx], axis=-1)          # (N,H,W,2)
    cols, _, _ = im2col(two, 3, 3, 1, 1)               # (N,H,W,18)
    wm = jnp.transpose(w, (2, 3, 1, 0)).reshape(18, 1)
    att = jax.nn.sigmoid(cols @ wm)                    # (N,H,W,1)
    flat = x.reshape(N * H * W, C)
    out = scale_apply(flat, att.reshape(N * H * W, 1))
    return out.reshape(N, H, W, C)


# ----------------------------------------------------------------------------
# Parameters & model forward
# ----------------------------------------------------------------------------
def init_params(key, dim):
    keys = iter(jax.random.split(key, 128))

    def nrm(shape, s=0.1):
        return (jax.random.normal(next(keys), shape) * s).astype(jnp.float32)

    def bn(c):
        gamma = 1.0 + nrm((c,), 0.05)
        beta = nrm((c,), 0.05)
        mean = nrm((c,), 0.05)
        var = jnp.ones((c,), jnp.float32)
        return (gamma, beta, mean, var)

    p = {}
    chs = [3, dim // 8, dim // 4, dim // 2, dim]
    for i in range(4):
        p[f"cnn{i+1}_w"] = nrm((chs[i + 1], chs[i], 3, 3))
        p[f"cnn{i+1}_b"] = nrm((chs[i + 1],), 0.05)
        p[f"cnn{i+1}_bn"] = bn(chs[i + 1])
    for name, nf in [("align_2", dim // 4), ("align_3", dim // 2), ("align_4", dim)]:
        p[f"{name}_off_w"] = nrm((nf, 2 * nf, 1, 1))
        p[f"{name}_off_bn"] = bn(nf)
        p[f"{name}_om_w"] = nrm((8 * 3 * 9, nf, 3, 3), 0.05)
        p[f"{name}_om_b"] = nrm((8 * 3 * 9,), 0.02)
        p[f"{name}_dcn_w"] = nrm((nf, nf, 3, 3))
        p[f"{name}_dcn_b"] = nrm((nf,), 0.05)
    for name in ["sa_2", "sa_3", "sa_4"]:
        p[f"{name}_w"] = nrm((1, 2, 3, 3))
    p["cls_w"] = nrm((8, 7 * dim // 32, 3, 3))
    p["cls_b"] = nrm((8,), 0.05)
    p["cls_bn"] = bn(8)
    return p


def model_forward(params, t1_img, t2_img):
    # layout: inputs NCHW (PyTorch convention) -> NHWC internally -> NCHW out
    t1 = jnp.transpose(t1_img, (0, 2, 3, 1)).astype(jnp.float32)
    t2 = jnp.transpose(t2_img, (0, 2, 3, 1)).astype(jnp.float32)

    def cnn_forward(x):
        feas = []
        for i in range(4):
            x = conv_bn_act(
                x,
                params[f"cnn{i+1}_w"],
                params[f"cnn{i+1}_b"],
                params[f"cnn{i+1}_bn"],
                "hardswish",
                stride=2,
                pad=1,
            )
            feas.append(x)
        return feas

    t1f = cnn_forward(t1)
    t2f = cnn_forward(t2)

    def margin_max(f1, f2, name):
        cat = jnp.concatenate([f1, f2], axis=-1)
        offset = conv_bn_act(
            cat,
            params[f"{name}_off_w"],
            None,
            params[f"{name}_off_bn"],
            "none",
            stride=1,
            pad=0,
        )
        fea_align = dcn_relu(
            f2,
            offset,
            params[f"{name}_om_w"],
            params[f"{name}_om_b"],
            params[f"{name}_dcn_w"],
            params[f"{name}_dcn_b"],
            groups=8,
        )
        return jnp.concatenate([f1, fea_align], axis=-1)

    fea4 = margin_max(t1f[3], t2f[3], "align_4")
    fea4 = spatial_attention(fea4, params["sa_4_w"])
    fea4 = pixel_shuffle(fea4, 2)

    fea3 = margin_max(t1f[2], t2f[2], "align_3")
    fea3 = spatial_attention(fea3, params["sa_3_w"])
    fea3 = jnp.concatenate([fea3, fea4], axis=-1)
    fea3 = pixel_shuffle(fea3, 2)

    fea2 = margin_max(t1f[1], t2f[1], "align_2")
    fea2 = spatial_attention(fea2, params["sa_2_w"])
    fea = jnp.concatenate([fea2, fea3], axis=-1)

    # classifier: PixelShuffle(2) -> Conv3x3 -> BN -> ReLU -> PixelShuffle(2)
    x = pixel_shuffle(fea, 2)
    x = conv_bn_act(
        x, params["cls_w"], params["cls_b"], params["cls_bn"], "relu", stride=1, pad=1
    )
    x = pixel_shuffle(x, 2)
    return jnp.transpose(x, (0, 3, 1, 2))  # back to NCHW


if __name__ == "__main__":
    dim = 32  # small but structurally consistent (192 in the original)
    key = jax.random.PRNGKey(0)
    pkey, k1, k2 = jax.random.split(key, 3)
    params = init_params(pkey, dim)

    t1 = jax.random.normal(k1, (2, 3, 32, 32), dtype=jnp.float32)
    t2 = jax.random.normal(k2, (2, 3, 32, 32), dtype=jnp.float32)

    fwd = jax.jit(model_forward)
    out = fwd(params, t1, t2)
    jax.block_until_ready(out)

    assert out.shape == (2, 2, 32, 32), out.shape
    assert jnp.all(jnp.isfinite(out))
    print("KERNEL_OK")
</pallas_src>

<mosaic_0001>
module attributes {stable_mosaic.version = 11 : i64} {
  func.func @_fused_matmul_kernel(%arg0: i32, %arg1: i32, %arg2: i32, %arg3: memref<256x128xbf16, #tpu.memory_space<vmem>>, %arg4: memref<128x128xbf16, #tpu.memory_space<vmem>>, %arg5: memref<1x128xf32, #tpu.memory_space<vmem>>, %arg6: memref<256x128xf32, #tpu.memory_space<vmem>>, %arg7: memref<256x128xf32, #tpu.memory_space<vmem>>) attributes {dimension_semantics = [#tpu.dimension_semantics<parallel>, #tpu.dimension_semantics<parallel>, #tpu.dimension_semantics<arbitrary>], iteration_bounds = array<i64: 2, 1, 1>, scalar_prefetch = 0 : i64, scratch_operands = 1 : i64, tpu.core_type = #tpu.core_type<tc>, window_params = [{transform_indices = @transform_0, window_bounds = array<i64: 256, 128>}, {transform_indices = @transform_1, window_bounds = array<i64: 128, 128>}, {transform_indices = @transform_2, window_bounds = array<i64: 1, 128>}, {transform_indices = @transform_3, window_bounds = array<i64: 256, 128>}]} {
    %c0_i32 = arith.constant 0 : i32
    %0 = arith.cmpi eq, %arg2, %c0_i32 : i32
    %1 = arith.extui %0 : i1 to i32
    %c0_i32_0 = arith.constant 0 : i32
    %2 = arith.cmpi ne, %1, %c0_i32_0 : i32
    scf.if %2 {
      %cst_10 = arith.constant 0.000000e+00 : f32
      %12 = vector.broadcast %cst_10 : f32 to vector<256x128xf32>
      %c0_11 = arith.constant 0 : index
      %c0_12 = arith.constant 0 : index
      %13 = vector.load %arg7[%c0_11, %c0_12] : memref<256x128xf32, #tpu.memory_space<vmem>>, vector<256x128xf32>
      tpu.vector_store %arg7[%c0_11, %c0_12], %12 {strides = array<i32>} : memref<256x128xf32, #tpu.memory_space<vmem>>, vector<256x128xf32>,
    } else {
    }
    %c0 = arith.constant 0 : index
    %c0_1 = arith.constant 0 : index
    %3 = vector.load %arg7[%c0, %c0_1] : memref<256x128xf32, #tpu.memory_space<vmem>>, vector<256x128xf32>
    %c0_2 = arith.constant 0 : index
    %c0_3 = arith.constant 0 : index
    %4 = vector.load %arg3[%c0_2, %c0_3] : memref<256x128xbf16, #tpu.memory_space<vmem>>, vector<256x128xbf16>
    %c0_4 = arith.constant 0 : index
    %c0_5 = arith.constant 0 : index
    %5 = vector.load %arg4[%c0_4, %c0_5] : memref<128x128xbf16, #tpu.memory_space<vmem>>, vector<128x128xbf16>
    %cst = arith.constant dense<0.000000e+00> : vector<256x128xf32>
    %6 = tpu.matmul %4, %5, %cst {dimension_numbers = #tpu.dot_dimension_numbers<[1], [0], [0], [1], [0, 0, 1, 1], [], []>} : vector<256x128xbf16>, vector<128x128xbf16>, vector<256x128xf32> -> vector<256x128xf32>
    %7 = arith.addf %3, %6 : vector<256x128xf32>
    %c0_6 = arith.constant 0 : index
    %c0_7 = arith.constant 0 : index
    %8 = vector.load %arg7[%c0_6, %c0_7] : memref<256x128xf32, #tpu.memory_space<vmem>>, vector<256x128xf32>
    tpu.vector_store %arg7[%c0_6, %c0_7], %7 {strides = array<i32>} : memref<256x128xf32, #tpu.memory_space<vmem>>, vector<256x128xf32>,
    %c0_i32_8 = arith.constant 0 : i32
    %9 = arith.cmpi eq, %arg2, %c0_i32_8 : i32
    %10 = arith.extui %9 : i1 to i32
    %c0_i32_9 = arith.constant 0 : i32
    %11 = arith.cmpi ne, %10, %c0_i32_9 : i32
    scf.if %11 {
      %c0_10 = arith.constant 0 : index
      %c0_11 = arith.constant 0 : index
      %12 = vector.load %arg7[%c0_10, %c0_11] : memref<256x128xf32, #tpu.memory_space<vmem>>, vector<256x128xf32>
      %c0_12 = arith.constant 0 : index
      %c0_13 = arith.constant 0 : index
      %13 = vector.load %arg5[%c0_12, %c0_13] : memref<1x128xf32, #tpu.memory_space<vmem>>, vector<1x128xf32>
      %14 = vector.broadcast %13 : vector<1x128xf32> to vector<256x128xf32>
      %15 = arith.addf %12, %14 : vector<256x128xf32>
      %cst_14 = arith.constant 3.000000e+00 : f32
      %16 = vector.broadcast %cst_14 : f32 to vector<256x128xf32>
      %17 = arith.addf %15, %16 : vector<256x128xf32>
      %cst_15 = arith.constant 0.000000e+00 : f32
      %cst_16 = arith.constant 6.000000e+00 : f32
      %18 = vector.broadcast %cst_15 : f32 to vector<256x128xf32>
      %19 = arith.maximumf %18, %17 : vector<256x128xf32>
      %20 = vector.broadcast %cst_16 : f32 to vector<256x128xf32>
      %21 = arith.minimumf %20, %19 : vector<256x128xf32>
      %22 = arith.mulf %15, %21 : vector<256x128xf32>
      %cst_17 = arith.constant 0.166666672 : f32
      %23 = vector.broadcast %cst_17 : f32 to vector<256x128xf32>
      %24 = arith.mulf %22, %23 : vector<256x128xf32>
      %c0_18 = arith.constant 0 : index
      %c0_19 = arith.constant 0 : index
      %25 = vector.load %arg6[%c0_18, %c0_19] : memref<256x128xf32, #tpu.memory_space<vmem>>, vector<256x128xf32>
      tpu.vector_store %arg6[%c0_18, %c0_19], %24 {strides = array<i32>} : memref<256x128xf32, #tpu.memory_space<vmem>>, vector<256x128xf32>,
    } else {
    }
    return
  }
  func.func @transform_0(%arg0: i32, %arg1: i32, %arg2: i32) -> (i32, i32) {
    %c0_i32 = arith.constant 0 : i32
    return %arg0, %arg2 : i32, i32
  }
  func.func @transform_1(%arg0: i32, %arg1: i32, %arg2: i32) -> (i32, i32) {
    %c0_i32 = arith.constant 0 : i32
    return %arg2, %arg1 : i32, i32
  }
  func.func @transform_2(%arg0: i32, %arg1: i32, %arg2: i32) -> (i32, i32) {
    %c0_i32 = arith.constant 0 : i32
    %c0_i32_0 = arith.constant 0 : i32
    return %c0_i32, %arg1 : i32, i32
  }
  func.func @transform_3(%arg0: i32, %arg1: i32, %arg2: i32) -> (i32, i32) {
    %c0_i32 = arith.constant 0 : i32
    return %arg0, %arg1 : i32, i32
  }
}

module attributes {stable_mosaic.version = 11 : i64} {
  func.func @_fused_matmul_kernel(%arg0: i32, %arg1: i32, %arg2: i32, %arg3: memref<128x128xbf16, #tpu.memory_space<vmem>>, %arg4: memref<128x128xbf16, #tpu.memory_space<vmem>>, %arg5: memref<1x128xf32, #tpu.memory_space<vmem>>, %arg6: memref<128x128xf32, #tpu.memory_space<vmem>>, %arg7: memref<128x128xf32, #tpu.memory_space<vmem>>) attributes {dimension_semantics = [#tpu.dimension_semantics<parallel>, #tpu.dimension_semantics<parallel>, #tpu.dimension_semantics<arbitrary>], iteration_bounds = array<i64: 1, 1, 1>, scalar_prefetch = 0 : i64, scratch_operands = 1 : i64, tpu.core_type = #tpu.core_type<tc>, window_params = [{transform_indices = @transform_0, window_bounds = array<i64: 128, 128>}, {transform_indices = @transform_1, window_bounds = array<i64: 128, 128>}, {transform_indices = @transform_2, window_bounds = array<i64: 1, 128>}, {transform_indices = @transform_3, window_bounds = array<i64: 128, 128>}]} {
    %c0_i32 = arith.constant 0 : i32
    %0 = arith.cmpi eq, %arg2, %c0_i32 : i32
    %1 = arith.extui %0 : i1 to i32
    %c0_i32_0 = arith.constant 0 : i32
    %2 = arith.cmpi ne, %1, %c0_i32_0 : i32
    scf.if %2 {
      %cst_10 = arith.constant 0.000000e+00 : f32
      %12 = vector.broadcast %cst_10 : f32 to vector<128x128xf32>
      %c0_11 = arith.constant 0 : index
      %c0_12 = arith.constant 0 : index
      %13 = vector.load %arg7[%c0_11, %c0_12] : memref<128x128xf32, #tpu.memory_space<vmem>>, vector<128x128xf32>
      tpu.vector_store %arg7[%c0_11, %c0_12], %12 {strides = array<i32>} : memref<128x128xf32, #tpu.memory_space<vmem>>, vector<128x128xf32>,
    } else {
    }
    %c0 = arith.constant 0 : index
    %c0_1 = arith.constant 0 : index
    %3 = vector.load %arg7[%c0, %c0_1] : memref<128x128xf32, #tpu.memory_space<vmem>>, vector<128x128xf32>
    %c0_2 = arith.constant 0 : index
    %c0_3 = arith.constant 0 : index
    %4 = vector.load %arg3[%c0_2, %c0_3] : memref<128x128xbf16, #tpu.memory_space<vmem>>, vector<128x128xbf16>
    %c0_4 = arith.constant 0 : index
    %c0_5 = arith.constant 0 : index
    %5 = vector.load %arg4[%c0_4, %c0_5] : memref<128x128xbf16, #tpu.memory_space<vmem>>, vector<128x128xbf16>
    %cst = arith.constant dense<0.000000e+00> : vector<128x128xf32>
    %6 = tpu.matmul %4, %5, %cst {dimension_numbers = #tpu.dot_dimension_numbers<[1], [0], [0], [1], [0, 0, 1, 1], [], []>} : vector<128x128xbf16>, vector<128x128xbf16>, vector<128x128xf32> -> vector<128x128xf32>
    %7 = arith.addf %3, %6 : vector<128x128xf32>
    %c0_6 = arith.constant 0 : index
    %c0_7 = arith.constant 0 : index
    %8 = vector.load %arg7[%c0_6, %c0_7] : memref<128x128xf32, #tpu.memory_space<vmem>>, vector<128x128xf32>
    tpu.vector_store %arg7[%c0_6, %c0_7], %7 {strides = array<i32>} : memref<128x128xf32, #tpu.memory_space<vmem>>, vector<128x128xf32>,
    %c0_i32_8 = arith.constant 0 : i32
    %9 = arith.cmpi eq, %arg2, %c0_i32_8 : i32
    %10 = arith.extui %9 : i1 to i32
    %c0_i32_9 = arith.constant 0 : i32
    %11 = arith.cmpi ne, %10, %c0_i32_9 : i32
    scf.if %11 {
      %c0_10 = arith.constant 0 : index
      %c0_11 = arith.constant 0 : index
      %12 = vector.load %arg7[%c0_10, %c0_11] : memref<128x128xf32, #tpu.memory_space<vmem>>, vector<128x128xf32>
      %c0_12 = arith.constant 0 : index
      %c0_13 = arith.constant 0 : index
      %13 = vector.load %arg5[%c0_12, %c0_13] : memref<1x128xf32, #tpu.memory_space<vmem>>, vector<1x128xf32>
      %14 = vector.broadcast %13 : vector<1x128xf32> to vector<128x128xf32>
      %15 = arith.addf %12, %14 : vector<128x128xf32>
      %cst_14 = arith.constant 3.000000e+00 : f32
      %16 = vector.broadcast %cst_14 : f32 to vector<128x128xf32>
      %17 = arith.addf %15, %16 : vector<128x128xf32>
      %cst_15 = arith.constant 0.000000e+00 : f32
      %cst_16 = arith.constant 6.000000e+00 : f32
      %18 = vector.broadcast %cst_15 : f32 to vector<128x128xf32>
      %19 = arith.maximumf %18, %17 : vector<128x128xf32>
      %20 = vector.broadcast %cst_16 : f32 to vector<128x128xf32>
      %21 = arith.minimumf %20, %19 : vector<128x128xf32>
      %22 = arith.mulf %15, %21 : vector<128x128xf32>
      %cst_17 = arith.constant 0.166666672 : f32
      %23 = vector.broadcast %cst_17 : f32 to vector<128x128xf32>
      %24 = arith.mulf %22, %23 : vector<128x128xf32>
      %c0_18 = arith.constant 0 : index
      %c0_19 = arith.constant 0 : index
      %25 = vector.load %arg6[%c0_18, %c0_19] : memref<128x128xf32, #tpu.memory_space<vmem>>, vector<128x128xf32>
      tpu.vector_store %arg6[%c0_18, %c0_19], %24 {strides = array<i32>} : memref<128x128xf32, #tpu.memory_space<vmem>>, vector<128x128xf32>,
    } else {
    }
    return
  }
  func.func @transform_0(%arg0: i32, %arg1: i32, %arg2: i32) -> (i32, i32) {
    %c0_i32 = arith.constant 0 : i32
    return %arg0, %arg2 : i32, i32
  }
  func.func @transform_1(%arg0: i32, %arg1: i32, %arg2: i32) -> (i32, i32) {
    %c0_i32 = arith.constant 0 : i32
    return %arg2, %arg1 : i32, i32
  }
  func.func @transform_2(%arg0: i32, %arg1: i32, %arg2: i32) -> (i32, i32) {
    %c0_i32 = arith.constant 0 : i32
    %c0_i32_0 = arith.constant 0 : i32
    return %c0_i32, %arg1 : i32, i32
  }
  func.func @transform_3(%arg0: i32, %arg1: i32, %arg2: i32) -> (i32, i32) {
    %c0_i32 = arith.constant 0 : i32
    return %arg0, %arg1 : i32, i32
  }
}

module attributes {stable_mosaic.version = 11 : i64} {
  func.func @_fused_matmul_kernel(%arg0: i32, %arg1: i32, %arg2: i32, %arg3: memref<32x128xbf16, #tpu.memory_space<vmem>>, %arg4: memref<128x128xbf16, #tpu.memory_space<vmem>>, %arg5: memref<1x128xf32, #tpu.memory_space<vmem>>, %arg6: memref<32x128xf32, #tpu.memory_space<vmem>>, %arg7: memref<32x128xf32, #tpu.memory_space<vmem>>) attributes {dimension_semantics = [#tpu.dimension_semantics<parallel>, #tpu.dimension_semantics<parallel>, #tpu.dimension_semantics<arbitrary>], iteration_bounds = array<i64: 1, 1, 1>, scalar_prefetch = 0 : i64, scratch_operands = 1 : i64, tpu.core_type = #tpu.core_type<tc>, window_params = [{transform_indices = @transform_0, window_bounds = array<i64: 32, 128>}, {transform_indices = @transform_1, window_bounds = array<i64: 128, 128>}, {transform_indices = @transform_2, window_bounds = array<i64: 1, 128>}, {transform_indices = @transform_3, window_bounds = array<i64: 32, 128>}]} {
    %c0_i32 = arith.constant 0 : i32
    %0 = arith.cmpi eq, %arg2, %c0_i32 : i32
    %1 = arith.extui %0 : i1 to i32
    %c0_i32_0 = arith.constant 0 : i32
    %2 = arith.cmpi ne, %1, %c0_i32_0 : i32
    scf.if %2 {
      %cst_10 = arith.constant 0.000000e+00 : f32
      %12 = vector.broadcast %cst_10 : f32 to vector<32x128xf32>
      %c0_11 = arith.constant 0 : index
      %c0_12 = arith.constant 0 : index
      %13 = vector.load %arg7[%c0_11, %c0_12] : memref<32x128xf32, #tpu.memory_space<vmem>>, vector<32x128xf32>
      tpu.vector_store %arg7[%c0_11, %c0_12], %12 {strides = array<i32>} : memref<32x128xf32, #tpu.memory_space<vmem>>, vector<32x128xf32>,
    } else {
    }
    %c0 = arith.constant 0 : index
    %c0_1 = arith.constant 0 : index
    %3 = vector.load %arg7[%c0, %c0_1] : memref<32x128xf32, #tpu.memory_space<vmem>>, vector<32x128xf32>
    %c0_2 = arith.constant 0 : index
    %c0_3 = arith.constant 0 : index
    %4 = vector.load %arg3[%c0_2, %c0_3] : memref<32x128xbf16, #tpu.memory_space<vmem>>, vector<32x128xbf16>
    %c0_4 = arith.constant 0 : index
    %c0_5 = arith.constant 0 : index
    %5 = vector.load %arg4[%c0_4, %c0_5] : memref<128x128xbf16, #tpu.memory_space<vmem>>, vector<128x128xbf16>
    %cst = arith.constant dense<0.000000e+00> : vector<32x128xf32>
    %6 = tpu.matmul %4, %5, %cst {dimension_numbers = #tpu.dot_dimension_numbers<[1], [0], [0], [1], [0, 0, 1, 1], [], []>} : vector<32x128xbf16>, vector<128x128xbf16>, vector<32x128xf32> -> vector<32x128xf32>
    %7 = arith.addf %3, %6 : vector<32x128xf32>
    %c0_6 = arith.constant 0 : index
    %c0_7 = arith.constant 0 : index
    %8 = vector.load %arg7[%c0_6, %c0_7] : memref<32x128xf32, #tpu.memory_space<vmem>>, vector<32x128xf32>
    tpu.vector_store %arg7[%c0_6, %c0_7], %7 {strides = array<i32>} : memref<32x128xf32, #tpu.memory_space<vmem>>, vector<32x128xf32>,
    %c0_i32_8 = arith.constant 0 : i32
    %9 = arith.cmpi eq, %arg2, %c0_i32_8 : i32
    %10 = arith.extui %9 : i1 to i32
    %c0_i32_9 = arith.constant 0 : i32
    %11 = arith.cmpi ne, %10, %c0_i32_9 : i32
    scf.if %11 {
      %c0_10 = arith.constant 0 : index
      %c0_11 = arith.constant 0 : index
      %12 = vector.load %arg7[%c0_10, %c0_11] : memref<32x128xf32, #tpu.memory_space<vmem>>, vector<32x128xf32>
      %c0_12 = arith.constant 0 : index
      %c0_13 = arith.constant 0 : index
      %13 = vector.load %arg5[%c0_12, %c0_13] : memref<1x128xf32, #tpu.memory_space<vmem>>, vector<1x128xf32>
      %14 = vector.broadcast %13 : vector<1x128xf32> to vector<32x128xf32>
      %15 = arith.addf %12, %14 : vector<32x128xf32>
      %cst_14 = arith.constant 3.000000e+00 : f32
      %16 = vector.broadcast %cst_14 : f32 to vector<32x128xf32>
      %17 = arith.addf %15, %16 : vector<32x128xf32>
      %cst_15 = arith.constant 0.000000e+00 : f32
      %cst_16 = arith.constant 6.000000e+00 : f32
      %18 = vector.broadcast %cst_15 : f32 to vector<32x128xf32>
      %19 = arith.maximumf %18, %17 : vector<32x128xf32>
      %20 = vector.broadcast %cst_16 : f32 to vector<32x128xf32>
      %21 = arith.minimumf %20, %19 : vector<32x128xf32>
      %22 = arith.mulf %15, %21 : vector<32x128xf32>
      %cst_17 = arith.constant 0.166666672 : f32
      %23 = vector.broadcast %cst_17 : f32 to vector<32x128xf32>
      %24 = arith.mulf %22, %23 : vector<32x128xf32>
      %c0_18 = arith.constant 0 : index
      %c0_19 = arith.constant 0 : index
      %25 = vector.load %arg6[%c0_18, %c0_19] : memref<32x128xf32, #tpu.memory_space<vmem>>, vector<32x128xf32>
      tpu.vector_store %arg6[%c0_18, %c0_19], %24 {strides = array<i32>} : memref<32x128xf32, #tpu.memory_space<vmem>>, vector<32x128xf32>,
    } else {
    }
    return
  }
  func.func @transform_0(%arg0: i32, %arg1: i32, %arg2: i32) -> (i32, i32) {
    %c0_i32 = arith.constant 0 : i32
    return %arg0, %arg2 : i32, i32
  }
  func.func @transform_1(%arg0: i32, %arg1: i32, %arg2: i32) -> (i32, i32) {
    %c0_i32 = arith.constant 0 : i32
    return %arg2, %arg1 : i32, i32
  }
  func.func @transform_2(%arg0: i32, %arg1: i32, %arg2: i32) -> (i32, i32) {
    %c0_i32 = arith.constant 0 : i32
    %c0_i32_0 = arith.constant 0 : i32
    return %c0_i32, %arg1 : i32, i32
  }
  func.func @transform_3(%arg0: i32, %arg1: i32, %arg2: i32) -> (i32, i32) {
    %c0_i32 = arith.constant 0 : i32
    return %arg0, %arg1 : i32, i32
  }
}

module attributes {stable_mosaic.version = 11 : i64} {
  func.func @_fused_matmul_kernel(%arg0: i32, %arg1: i32, %arg2: i32, %arg3: memref<8x256xbf16, #tpu.memory_space<vmem>>, %arg4: memref<256x128xbf16, #tpu.memory_space<vmem>>, %arg5: memref<1x128xf32, #tpu.memory_space<vmem>>, %arg6: memref<8x128xf32, #tpu.memory_space<vmem>>, %arg7: memref<8x128xf32, #tpu.memory_space<vmem>>) attributes {dimension_semantics = [#tpu.dimension_semantics<parallel>, #tpu.dimension_semantics<parallel>, #tpu.dimension_semantics<arbitrary>], iteration_bounds = array<i64: 1, 1, 1>, scalar_prefetch = 0 : i64, scratch_operands = 1 : i64, tpu.core_type = #tpu.core_type<tc>, window_params = [{transform_indices = @transform_0, window_bounds = array<i64: 8, 256>}, {transform_indices = @transform_1, window_bounds = array<i64: 256, 128>}, {transform_indices = @transform_2, window_bounds = array<i64: 1, 128>}, {transform_indices = @transform_3, window_bounds = array<i64: 8, 128>}]} {
    %c0_i32 = arith.constant 0 : i32
    %0 = arith.cmpi eq, %arg2, %c0_i32 : i32
    %1 = arith.extui %0 : i1 to i32
    %c0_i32_0 = arith.constant 0 : i32
    %2 = arith.cmpi ne, %1, %c0_i32_0 : i32
    scf.if %2 {
      %cst_10 = arith.constant 0.000000e+00 : f32
      %12 = vector.broadcast %cst_10 : f32 to vector<8x128xf32>
      %c0_11 = arith.constant 0 : index
      %c0_12 = arith.constant 0 : index
      %13 = vector.load %arg7[%c0_11, %c0_12] : memref<8x128xf32, #tpu.memory_space<vmem>>, vector<8x128xf32>
      tpu.vector_store %arg7[%c0_11, %c0_12], %12 {strides = array<i32>} : memref<8x128xf32, #tpu.memory_space<vmem>>, vector<8x128xf32>,
    } else {
    }
    %c0 = arith.constant 0 : index
    %c0_1 = arith.constant 0 : index
    %3 = vector.load %arg7[%c0, %c0_1] : memref<8x128xf32, #tpu.memory_space<vmem>>, vector<8x128xf32>
    %c0_2 = arith.constant 0 : index
    %c0_3 = arith.constant 0 : index
    %4 = vector.load %arg3[%c0_2, %c0_3] : memref<8x256xbf16, #tpu.memory_space<vmem>>, vector<8x256xbf16>
    %c0_4 = arith.constant 0 : index
    %c0_5 = arith.constant 0 : index
    %5 = vector.load %arg4[%c0_4, %c0_5] : memref<256x128xbf16, #tpu.memory_space<vmem>>, vector<256x128xbf16>
    %cst = arith.constant dense<0.000000e+00> : vector<8x128xf32>
    %6 = tpu.matmul %4, %5, %cst {dimension_numbers = #tpu.dot_dimension_numbers<[1], [0], [0], [1], [0, 0, 1, 1], [], []>} : vector<8x256xbf16>, vector<256x128xbf16>, vector<8x128xf32> -> vector<8x128xf32>
    %7 = arith.addf %3, %6 : vector<8x128xf32>
    %c0_6 = arith.constant 0 : index
    %c0_7 = arith.constant 0 : index
    %8 = vector.load %arg7[%c0_6, %c0_7] : memref<8x128xf32, #tpu.memory_space<vmem>>, vector<8x128xf32>
    tpu.vector_store %arg7[%c0_6, %c0_7], %7 {strides = array<i32>} : memref<8x128xf32, #tpu.memory_space<vmem>>, vector<8x128xf32>,
    %c0_i32_8 = arith.constant 0 : i32
    %9 = arith.cmpi eq, %arg2, %c0_i32_8 : i32
    %10 = arith.extui %9 : i1 to i32
    %c0_i32_9 = arith.constant 0 : i32
    %11 = arith.cmpi ne, %10, %c0_i32_9 : i32
    scf.if %11 {
      %c0_10 = arith.constant 0 : index
      %c0_11 = arith.constant 0 : index
      %12 = vector.load %arg7[%c0_10, %c0_11] : memref<8x128xf32, #tpu.memory_space<vmem>>, vector<8x128xf32>
      %c0_12 = arith.constant 0 : index
      %c0_13 = arith.constant 0 : index
      %13 = vector.load %arg5[%c0_12, %c0_13] : memref<1x128xf32, #tpu.memory_space<vmem>>, vector<1x128xf32>
      %14 = vector.broadcast %13 : vector<1x128xf32> to vector<8x128xf32>
      %15 = arith.addf %12, %14 : vector<8x128xf32>
      %cst_14 = arith.constant 3.000000e+00 : f32
      %16 = vector.broadcast %cst_14 : f32 to vector<8x128xf32>
      %17 = arith.addf %15, %16 : vector<8x128xf32>
      %cst_15 = arith.constant 0.000000e+00 : f32
      %cst_16 = arith.constant 6.000000e+00 : f32
      %18 = vector.broadcast %cst_15 : f32 to vector<8x128xf32>
      %19 = arith.maximumf %18, %17 : vector<8x128xf32>
      %20 = vector.broadcast %cst_16 : f32 to vector<8x128xf32>
      %21 = arith.minimumf %20, %19 : vector<8x128xf32>
      %22 = arith.mulf %15, %21 : vector<8x128xf32>
      %cst_17 = arith.constant 0.166666672 : f32
      %23 = vector.broadcast %cst_17 : f32 to vector<8x128xf32>
      %24 = arith.mulf %22, %23 : vector<8x128xf32>
      %c0_18 = arith.constant 0 : index
      %c0_19 = arith.constant 0 : index
      %25 = vector.load %arg6[%c0_18, %c0_19] : memref<8x128xf32, #tpu.memory_space<vmem>>, vector<8x128xf32>
      tpu.vector_store %arg6[%c0_18, %c0_19], %24 {strides = array<i32>} : memref<8x128xf32, #tpu.memory_space<vmem>>, vector<8x128xf32>,
    } else {
    }
    return
  }
  func.func @transform_0(%arg0: i32, %arg1: i32, %arg2: i32) -> (i32, i32) {
    %c0_i32 = arith.constant 0 : i32
    return %arg0, %arg2 : i32, i32
  }
  func.func @transform_1(%arg0: i32, %arg1: i32, %arg2: i32) -> (i32, i32) {
    %c0_i32 = arith.constant 0 : i32
    return %arg2, %arg1 : i32, i32
  }
  func.func @transform_2(%arg0: i32, %arg1: i32, %arg2: i32) -> (i32, i32) {
    %c0_i32 = arith.constant 0 : i32
    %c0_i32_0 = arith.constant 0 : i32
    return %c0_i32, %arg1 : i32, i32
  }
  func.func @transform_3(%arg0: i32, %arg1: i32, %arg2: i32) -> (i32, i32) {
    %c0_i32 = arith.constant 0 : i32
    return %arg0, %arg1 : i32, i32
  }
}

module attributes {stable_mosaic.version = 11 : i64} {
  func.func @_fused_matmul_kernel(%arg0: i32, %arg1: i32, %arg2: i32, %arg3: memref<8x128xbf16, #tpu.memory_space<vmem>>, %arg4: memref<128x128xbf16, #tpu.memory_space<vmem>>, %arg5: memref<1x128xf32, #tpu.memory_space<vmem>>, %arg6: memref<8x128xf32, #tpu.memory_space<vmem>>, %arg7: memref<8x128xf32, #tpu.memory_space<vmem>>) attributes {dimension_semantics = [#tpu.dimension_semantics<parallel>, #tpu.dimension_semantics<parallel>, #tpu.dimension_semantics<arbitrary>], iteration_bounds = array<i64: 1, 1, 1>, scalar_prefetch = 0 : i64, scratch_operands = 1 : i64, tpu.core_type = #tpu.core_type<tc>, window_params = [{transform_indices = @transform_0, window_bounds = array<i64: 8, 128>}, {transform_indices = @transform_1, window_bounds = array<i64: 128, 128>}, {transform_indices = @transform_2, window_bounds = array<i64: 1, 128>}, {transform_indices = @transform_3, window_bounds = array<i64: 8, 128>}]} {
    %c0_i32 = arith.constant 0 : i32
    %0 = arith.cmpi eq, %arg2, %c0_i32 : i32
    %1 = arith.extui %0 : i1 to i32
    %c0_i32_0 = arith.constant 0 : i32
    %2 = arith.cmpi ne, %1, %c0_i32_0 : i32
    scf.if %2 {
      %cst_10 = arith.constant 0.000000e+00 : f32
      %12 = vector.broadcast %cst_10 : f32 to vector<8x128xf32>
      %c0_11 = arith.constant 0 : index
      %c0_12 = arith.constant 0 : index
      %13 = vector.load %arg7[%c0_11, %c0_12] : memref<8x128xf32, #tpu.memory_space<vmem>>, vector<8x128xf32>
      tpu.vector_store %arg7[%c0_11, %c0_12], %12 {strides = array<i32>} : memref<8x128xf32, #tpu.memory_space<vmem>>, vector<8x128xf32>,
    } else {
    }
    %c0 = arith.constant 0 : index
    %c0_1 = arith.constant 0 : index
    %3 = vector.load %arg7[%c0, %c0_1] : memref<8x128xf32, #tpu.memory_space<vmem>>, vector<8x128xf32>
    %c0_2 = arith.constant 0 : index
    %c0_3 = arith.constant 0 : index
    %4 = vector.load %arg3[%c0_2, %c0_3] : memref<8x128xbf16, #tpu.memory_space<vmem>>, vector<8x128xbf16>
    %c0_4 = arith.constant 0 : index
    %c0_5 = arith.constant 0 : index
    %5 = vector.load %arg4[%c0_4, %c0_5] : memref<128x128xbf16, #tpu.memory_space<vmem>>, vector<128x128xbf16>
    %cst = arith.constant dense<0.000000e+00> : vector<8x128xf32>
    %6 = tpu.matmul %4, %5, %cst {dimension_numbers = #tpu.dot_dimension_numbers<[1], [0], [0], [1], [0, 0, 1, 1], [], []>} : vector<8x128xbf16>, vector<128x128xbf16>, vector<8x128xf32> -> vector<8x128xf32>
    %7 = arith.addf %3, %6 : vector<8x128xf32>
    %c0_6 = arith.constant 0 : index
    %c0_7 = arith.constant 0 : index
    %8 = vector.load %arg7[%c0_6, %c0_7] : memref<8x128xf32, #tpu.memory_space<vmem>>, vector<8x128xf32>
    tpu.vector_store %arg7[%c0_6, %c0_7], %7 {strides = array<i32>} : memref<8x128xf32, #tpu.memory_space<vmem>>, vector<8x128xf32>,
    %c0_i32_8 = arith.constant 0 : i32
    %9 = arith.cmpi eq, %arg2, %c0_i32_8 : i32
    %10 = arith.extui %9 : i1 to i32
    %c0_i32_9 = arith.constant 0 : i32
    %11 = arith.cmpi ne, %10, %c0_i32_9 : i32
    scf.if %11 {
      %c0_10 = arith.constant 0 : index
      %c0_11 = arith.constant 0 : index
      %12 = vector.load %arg7[%c0_10, %c0_11] : memref<8x128xf32, #tpu.memory_space<vmem>>, vector<8x128xf32>
      %c0_12 = arith.constant 0 : index
      %c0_13 = arith.constant 0 : index
      %13 = vector.load %arg5[%c0_12, %c0_13] : memref<1x128xf32, #tpu.memory_space<vmem>>, vector<1x128xf32>
      %14 = vector.broadcast %13 : vector<1x128xf32> to vector<8x128xf32>
      %15 = arith.addf %12, %14 : vector<8x128xf32>
      %c0_14 = arith.constant 0 : index
      %c0_15 = arith.constant 0 : index
      %16 = vector.load %arg6[%c0_14, %c0_15] : memref<8x128xf32, #tpu.memory_space<vmem>>, vector<8x128xf32>
      tpu.vector_store %arg6[%c0_14, %c0_15], %15 {strides = array<i32>} : memref<8x128xf32, #tpu.memory_space<vmem>>, vector<8x128xf32>,
    } else {
    }
    return
  }
  func.func @transform_0(%arg0: i32, %arg1: i32, %arg2: i32) -> (i32, i32) {
    %c0_i32 = arith.constant 0 : i32
    return %arg0, %arg2 : i32, i32
  }
  func.func @transform_1(%arg0: i32, %arg1: i32, %arg2: i32) -> (i32, i32) {
    %c0_i32 = arith.constant 0 : i32
    return %arg2, %arg1 : i32, i32
  }
  func.func @transform_2(%arg0: i32, %arg1: i32, %arg2: i32) -> (i32, i32) {
    %c0_i32 = arith.constant 0 : i32
    %c0_i32_0 = arith.constant 0 : i32
    return %c0_i32, %arg1 : i32, i32
  }
  func.func @transform_3(%arg0: i32, %arg1: i32, %arg2: i32) -> (i32, i32) {
    %c0_i32 = arith.constant 0 : i32
    return %arg0, %arg1 : i32, i32
  }
}

module attributes {stable_mosaic.version = 11 : i64} {
  func.func @_fused_matmul_kernel(%arg0: i32, %arg1: i32, %arg2: i32, %arg3: memref<8x128xbf16, #tpu.memory_space<vmem>>, %arg4: memref<128x256xbf16, #tpu.memory_space<vmem>>, %arg5: memref<1x256xf32, #tpu.memory_space<vmem>>, %arg6: memref<8x256xf32, #tpu.memory_space<vmem>>, %arg7: memref<8x256xf32, #tpu.memory_space<vmem>>) attributes {dimension_semantics = [#tpu.dimension_semantics<parallel>, #tpu.dimension_semantics<parallel>, #tpu.dimension_semantics<arbitrary>], iteration_bounds = array<i64: 1, 1, 3>, scalar_prefetch = 0 : i64, scratch_operands = 1 : i64, tpu.core_type = #tpu.core_type<tc>, window_params = [{transform_indices = @transform_0, window_bounds = array<i64: 8, 128>}, {transform_indices = @transform_1, window_bounds = array<i64: 128, 256>}, {transform_indices = @transform_2, window_bounds = array<i64: 1, 256>}, {transform_indices = @transform_3, window_bounds = array<i64: 8, 256>}]} {
    %c0_i32 = arith.constant 0 : i32
    %0 = arith.cmpi eq, %arg2, %c0_i32 : i32
    %1 = arith.extui %0 : i1 to i32
    %c0_i32_0 = arith.constant 0 : i32
    %2 = arith.cmpi ne, %1, %c0_i32_0 : i32
    scf.if %2 {
      %cst_9 = arith.constant 0.000000e+00 : f32
      %12 = vector.broadcast %cst_9 : f32 to vector<8x256xf32>
      %c0_10 = arith.constant 0 : index
      %c0_11 = arith.constant 0 : index
      %13 = vector.load %arg7[%c0_10, %c0_11] : memref<8x256xf32, #tpu.memory_space<vmem>>, vector<8x256xf32>
      tpu.vector_store %arg7[%c0_10, %c0_11], %12 {strides = array<i32>} : memref<8x256xf32, #tpu.memory_space<vmem>>, vector<8x256xf32>,
    } else {
    }
    %c0 = arith.constant 0 : index
    %c0_1 = arith.constant 0 : index
    %3 = vector.load %arg7[%c0, %c0_1] : memref<8x256xf32, #tpu.memory_space<vmem>>, vector<8x256xf32>
    %c0_2 = arith.constant 0 : index
    %c0_3 = arith.constant 0 : index
    %4 = vector.load %arg3[%c0_2, %c0_3] : memref<8x128xbf16, #tpu.memory_space<vmem>>, vector<8x128xbf16>
    %c0_4 = arith.constant 0 : index
    %c0_5 = arith.constant 0 : index
    %5 = vector.load %arg4[%c0_4, %c0_5] : memref<128x256xbf16, #tpu.memory_space<vmem>>, vector<128x256xbf16>
    %cst = arith.constant dense<0.000000e+00> : vector<8x256xf32>
    %6 = tpu.matmul %4, %5, %cst {dimension_numbers = #tpu.dot_dimension_numbers<[1], [0], [0], [1], [0, 0, 1, 1], [], []>} : vector<8x128xbf16>, vector<128x256xbf16>, vector<8x256xf32> -> vector<8x256xf32>
    %7 = arith.addf %3, %6 : vector<8x256xf32>
    %c0_6 = arith.constant 0 : index
    %c0_7 = arith.constant 0 : index
    %8 = vector.load %arg7[%c0_6, %c0_7] : memref<8x256xf32, #tpu.memory_space<vmem>>, vector<8x256xf32>
    tpu.vector_store %arg7[%c0_6, %c0_7], %7 {strides = array<i32>} : memref<8x256xf32, #tpu.memory_space<vmem>>, vector<8x256xf32>,
    %c2_i32 = arith.constant 2 : i32
    %9 = arith.cmpi eq, %arg2, %c2_i32 : i32
    %10 = arith.extui %9 : i1 to i32
    %c0_i32_8 = arith.constant 0 : i32
    %11 = arith.cmpi ne, %10, %c0_i32_8 : i32
    scf.if %11 {
      %c0_9 = arith.constant 0 : index
      %c0_10 = arith.constant 0 : index
      %12 = vector.load %arg7[%c0_9, %c0_10] : memref<8x256xf32, #tpu.memory_space<vmem>>, vector<8x256xf32>
      %c0_11 = arith.constant 0 : index
      %c0_12 = arith.constant 0 : index
      %13 = vector.load %arg5[%c0_11, %c0_12] : memref<1x256xf32, #tpu.memory_space<vmem>>, vector<1x256xf32>
      %14 = vector.broadcast %13 : vector<1x256xf32> to vector<8x256xf32>
      %15 = arith.addf %12, %14 : vector<8x256xf32>
      %c0_13 = arith.constant 0 : index
      %c0_14 = arith.constant 0 : index
      %16 = vector.load %arg6[%c0_13, %c0_14] : memref<8x256xf32, #tpu.memory_space<vmem>>, vector<8x256xf32>
      tpu.vector_store %arg6[%c0_13, %c0_14], %15 {strides = array<i32>} : memref<8x256xf32, #tpu.memory_space<vmem>>, vector<8x256xf32>,
    } else {
    }
    return
  }
  func.func @transform_0(%arg0: i32, %arg1: i32, %arg2: i32) -> (i32, i32) {
    %c0_i32 = arith.constant 0 : i32
    return %arg0, %arg2 : i32, i32
  }
  func.func @transform_1(%arg0: i32, %arg1: i32, %arg2: i32) -> (i32, i32) {
    %c0_i32 = arith.constant 0 : i32
    return %arg2, %arg1 : i32, i32
  }
  func.func @transform_2(%arg0: i32, %arg1: i32, %arg2: i32) -> (i32, i32) {
    %c0_i32 = arith.constant 0 : i32
    %c0_i32_0 = arith.constant 0 : i32
    return %c0_i32, %arg1 : i32, i32
  }
  func.func @transform_3(%arg0: i32, %arg1: i32, %arg2: i32) -> (i32, i32) {
    %c0_i32 = arith.constant 0 : i32
    return %arg0, %arg1 : i32, i32
  }
}

module attributes {stable_mosaic.version = 11 : i64} {
  func.func @_fused_matmul_kernel(%arg0: i32, %arg1: i32, %arg2: i32, %arg3: memref<8x128xbf16, #tpu.memory_space<vmem>>, %arg4: memref<128x128xbf16, #tpu.memory_space<vmem>>, %arg5: memref<1x128xf32, #tpu.memory_space<vmem>>, %arg6: memref<8x128xf32, #tpu.memory_space<vmem>>, %arg7: memref<8x128xf32, #tpu.memory_space<vmem>>) attributes {dimension_semantics = [#tpu.dimension_semantics<parallel>, #tpu.dimension_semantics<parallel>, #tpu.dimension_semantics<arbitrary>], iteration_bounds = array<i64: 1, 1, 3>, scalar_prefetch = 0 : i64, scratch_operands = 1 : i64, tpu.core_type = #tpu.core_type<tc>, window_params = [{transform_indices = @transform_0, window_bounds = array<i64: 8, 128>}, {transform_indices = @transform_1, window_bounds = array<i64: 128, 128>}, {transform_indices = @transform_2, window_bounds = array<i64: 1, 128>}, {transform_indices = @transform_3, window_bounds = array<i64: 8, 128>}]} {
    %c0_i32 = arith.constant 0 : i32
    %0 = arith.cmpi eq, %arg2, %c0_i32 : i32
    %1 = arith.extui %0 : i1 to i32
    %c0_i32_0 = arith.constant 0 : i32
    %2 = arith.cmpi ne, %1, %c0_i32_0 : i32
    scf.if %2 {
      %cst_9 = arith.constant 0.000000e+00 : f32
      %12 = vector.broadcast %cst_9 : f32 to vector<8x128xf32>
      %c0_10 = arith.constant 0 : index
      %c0_11 = arith.constant 0 : index
      %13 = vector.load %arg7[%c0_10, %c0_11] : memref<8x128xf32, #tpu.memory_space<vmem>>, vector<8x128xf32>
      tpu.vector_store %arg7[%c0_10, %c0_11], %12 {strides = array<i32>} : memref<8x128xf32, #tpu.memory_space<vmem>>, vector<8x128xf32>,
    } else {
    }
    %c0 = arith.constant 0 : index
    %c0_1 = arith.constant 0 : index
    %3 = vector.load %arg7[%c0, %c0_1] : memref<8x128xf32, #tpu.memory_space<vmem>>, vector<8x128xf32>
    %c0_2 = arith.constant 0 : index
    %c0_3 = arith.constant 0 : index
    %4 = vector.load %arg3[%c0_2, %c0_3] : memref<8x128xbf16, #tpu.memory_space<vmem>>, vector<8x128xbf16>
    %c0_4 = arith.constant 0 : index
    %c0_5 = arith.constant 0 : index
    %5 = vector.load %arg4[%c0_4, %c0_5] : memref<128x128xbf16, #tpu.memory_space<vmem>>, vector<128x128xbf16>
    %cst = arith.constant dense<0.000000e+00> : vector<8x128xf32>
    %6 = tpu.matmul %4, %5, %cst {dimension_numbers = #tpu.dot_dimension_numbers<[1], [0], [0], [1], [0, 0, 1, 1], [], []>} : vector<8x128xbf16>, vector<128x128xbf16>, vector<8x128xf32> -> vector<8x128xf32>
    %7 = arith.addf %3, %6 : vector<8x128xf32>
    %c0_6 = arith.constant 0 : index
    %c0_7 = arith.constant 0 : index
    %8 = vector.load %arg7[%c0_6, %c0_7] : memref<8x128xf32, #tpu.memory_space<vmem>>, vector<8x128xf32>
    tpu.vector_store %arg7[%c0_6, %c0_7], %7 {strides = array<i32>} : memref<8x128xf32, #tpu.memory_space<vmem>>, vector<8x128xf32>,
    %c2_i32 = arith.constant 2 : i32
    %9 = arith.cmpi eq, %arg2, %c2_i32 : i32
    %10 = arith.extui %9 : i1 to i32
    %c0_i32_8 = arith.constant 0 : i32
    %11 = arith.cmpi ne, %10, %c0_i32_8 : i32
    scf.if %11 {
      %c0_9 = arith.constant 0 : index
      %c0_10 = arith.constant 0 : index
      %12 = vector.load %arg7[%c0_9, %c0_10] : memref<8x128xf32, #tpu.memory_space<vmem>>, vector<8x128xf32>
      %c0_11 = arith.constant 0 : index
      %c0_12 = arith.constant 0 : index
      %13 = vector.load %arg5[%c0_11, %c0_12] : memref<1x128xf32, #tpu.memory_space<vmem>>, vector<1x128xf32>
      %14 = vector.broadcast %13 : vector<1x128xf32> to vector<8x128xf32>
      %15 = arith.addf %12, %14 : vector<8x128xf32>
      %cst_13 = arith.constant 0.000000e+00 : f32
      %16 = vector.broadcast %cst_13 : f32 to vector<8x128xf32>
      %17 = arith.maximumf %15, %16 : vector<8x128xf32>
      %c0_14 = arith.constant 0 : index
      %c0_15 = arith.constant 0 : index
      %18 = vector.load %arg6[%c0_14, %c0_15] : memref<8x128xf32, #tpu.memory_space<vmem>>, vector<8x128xf32>
      tpu.vector_store %arg6[%c0_14, %c0_15], %17 {strides = array<i32>} : memref<8x128xf32, #tpu.memory_space<vmem>>, vector<8x128xf32>,
    } else {
    }
    return
  }
  func.func @transform_0(%arg0: i32, %arg1: i32, %arg2: i32) -> (i32, i32) {
    %c0_i32 = arith.constant 0 : i32
    return %arg0, %arg2 : i32, i32
  }
  func.func @transform_1(%arg0: i32, %arg1: i32, %arg2: i32) -> (i32, i32) {
    %c0_i32 = arith.constant 0 : i32
    return %arg2, %arg1 : i32, i32
  }
  func.func @transform_2(%arg0: i32, %arg1: i32, %arg2: i32) -> (i32, i32) {
    %c0_i32 = arith.constant 0 : i32
    %c0_i32_0 = arith.constant 0 : i32
    return %c0_i32, %arg1 : i32, i32
  }
  func.func @transform_3(%arg0: i32, %arg1: i32, %arg2: i32) -> (i32, i32) {
    %c0_i32 = arith.constant 0 : i32
    return %arg0, %arg1 : i32, i32
  }
}

module attributes {stable_mosaic.version = 11 : i64} {
  func.func @_scale_apply_kernel(%arg0: i32, %arg1: memref<8x64xf32, #tpu.memory_space<vmem>>, %arg2: memref<8x1xf32, #tpu.memory_space<vmem>>, %arg3: memref<8x64xf32, #tpu.memory_space<vmem>>) attributes {dimension_semantics = [#tpu.dimension_semantics<parallel>], iteration_bounds = array<i64: 1>, scalar_prefetch = 0 : i64, scratch_operands = 0 : i64, tpu.core_type = #tpu.core_type<tc>, window_params = [{transform_indices = @transform_0, window_bounds = array<i64: 8, 64>}, {transform_indices = @transform_1, window_bounds = array<i64: 8, 1>}, {transform_indices = @transform_2, window_bounds = array<i64: 8, 64>}]} {
    %c0 = arith.constant 0 : index
    %c0_0 = arith.constant 0 : index
    %0 = vector.load %arg1[%c0, %c0_0] : memref<8x64xf32, #tpu.memory_space<vmem>>, vector<8x64xf32>
    %c0_1 = arith.constant 0 : index
    %c0_2 = arith.constant 0 : index
    %1 = vector.load %arg2[%c0_1, %c0_2] : memref<8x1xf32, #tpu.memory_space<vmem>>, vector<8x1xf32>
    %2 = vector.broadcast %1 : vector<8x1xf32> to vector<8x64xf32>
    %3 = arith.mulf %0, %2 : vector<8x64xf32>
    %c0_3 = arith.constant 0 : index
    %c0_4 = arith.constant 0 : index
    %4 = vector.load %arg3[%c0_3, %c0_4] : memref<8x64xf32, #tpu.memory_space<vmem>>, vector<8x64xf32>
    tpu.vector_store %arg3[%c0_3, %c0_4], %3 {strides = array<i32>} : memref<8x64xf32, #tpu.memory_space<vmem>>, vector<8x64xf32>,
    return
  }
  func.func @transform_0(%arg0: i32) -> (i32, i32) {
    %c0_i32 = arith.constant 0 : i32
    %c0_i32_0 = arith.constant 0 : i32
    return %arg0, %c0_i32 : i32, i32
  }
  func.func @transform_1(%arg0: i32) -> (i32, i32) {
    %c0_i32 = arith.constant 0 : i32
    %c0_i32_0 = arith.constant 0 : i32
    return %arg0, %c0_i32 : i32, i32
  }
  func.func @transform_2(%arg0: i32) -> (i32, i32) {
    %c0_i32 = arith.constant 0 : i32
    %c0_i32_0 = arith.constant 0 : i32
    return %arg0, %c0_i32 : i32, i32
  }
}

module attributes {stable_mosaic.version = 11 : i64} {
  func.func @_fused_matmul_kernel(%arg0: i32, %arg1: i32, %arg2: i32, %arg3: memref<32x128xbf16, #tpu.memory_space<vmem>>, %arg4: memref<128x128xbf16, #tpu.memory_space<vmem>>, %arg5: memref<1x128xf32, #tpu.memory_space<vmem>>, %arg6: memref<32x128xf32, #tpu.memory_space<vmem>>, %arg7: memref<32x128xf32, #tpu.memory_space<vmem>>) attributes {dimension_semantics = [#tpu.dimension_semantics<parallel>, #tpu.dimension_semantics<parallel>, #tpu.dimension_semantics<arbitrary>], iteration_bounds = array<i64: 1, 1, 1>, scalar_prefetch = 0 : i64, scratch_operands = 1 : i64, tpu.core_type = #tpu.core_type<tc>, window_params = [{transform_indices = @transform_0, window_bounds = array<i64: 32, 128>}, {transform_indices = @transform_1, window_bounds = array<i64: 128, 128>}, {transform_indices = @transform_2, window_bounds = array<i64: 1, 128>}, {transform_indices = @transform_3, window_bounds = array<i64: 32, 128>}]} {
    %c0_i32 = arith.constant 0 : i32
    %0 = arith.cmpi eq, %arg2, %c0_i32 : i32
    %1 = arith.extui %0 : i1 to i32
    %c0_i32_0 = arith.constant 0 : i32
    %2 = arith.cmpi ne, %1, %c0_i32_0 : i32
    scf.if %2 {
      %cst_10 = arith.constant 0.000000e+00 : f32
      %12 = vector.broadcast %cst_10 : f32 to vector<32x128xf32>
      %c0_11 = arith.constant 0 : index
      %c0_12 = arith.constant 0 : index
      %13 = vector.load %arg7[%c0_11, %c0_12] : memref<32x128xf32, #tpu.memory_space<vmem>>, vector<32x128xf32>
      tpu.vector_store %arg7[%c0_11, %c0_12], %12 {strides = array<i32>} : memref<32x128xf32, #tpu.memory_space<vmem>>, vector<32x128xf32>,
    } else {
    }
    %c0 = arith.constant 0 : index
    %c0_1 = arith.constant 0 : index
    %3 = vector.load %arg7[%c0, %c0_1] : memref<32x128xf32, #tpu.memory_space<vmem>>, vector<32x128xf32>
    %c0_2 = arith.constant 0 : index
    %c0_3 = arith.constant 0 : index
    %4 = vector.load %arg3[%c0_2, %c0_3] : memref<32x128xbf16, #tpu.memory_space<vmem>>, vector<32x128xbf16>
    %c0_4 = arith.constant 0 : index
    %c0_5 = arith.constant 0 : index
    %5 = vector.load %arg4[%c0_4, %c0_5] : memref<128x128xbf16, #tpu.memory_space<vmem>>, vector<128x128xbf16>
    %cst = arith.constant dense<0.000000e+00> : vector<32x128xf32>
    %6 = tpu.matmul %4, %5, %cst {dimension_numbers = #tpu.dot_dimension_numbers<[1], [0], [0], [1], [0, 0, 1, 1], [], []>} : vector<32x128xbf16>, vector<128x128xbf16>, vector<32x128xf32> -> vector<32x128xf32>
    %7 = arith.addf %3, %6 : vector<32x128xf32>
    %c0_6 = arith.constant 0 : index
    %c0_7 = arith.constant 0 : index
    %8 = vector.load %arg7[%c0_6, %c0_7] : memref<32x128xf32, #tpu.memory_space<vmem>>, vector<32x128xf32>
    tpu.vector_store %arg7[%c0_6, %c0_7], %7 {strides = array<i32>} : memref<32x128xf32, #tpu.memory_space<vmem>>, vector<32x128xf32>,
    %c0_i32_8 = arith.constant 0 : i32
    %9 = arith.cmpi eq, %arg2, %c0_i32_8 : i32
    %10 = arith.extui %9 : i1 to i32
    %c0_i32_9 = arith.constant 0 : i32
    %11 = arith.cmpi ne, %10, %c0_i32_9 : i32
    scf.if %11 {
      %c0_10 = arith.constant 0 : index
      %c0_11 = arith.constant 0 : index
      %12 = vector.load %arg7[%c0_10, %c0_11] : memref<32x128xf32, #tpu.memory_space<vmem>>, vector<32x128xf32>
      %c0_12 = arith.constant 0 : index
      %c0_13 = arith.constant 0 : index
      %13 = vector.load %arg5[%c0_12, %c0_13] : memref<1x128xf32, #tpu.memory_space<vmem>>, vector<1x128xf32>
      %14 = vector.broadcast %13 : vector<1x128xf32> to vector<32x128xf32>
      %15 = arith.addf %12, %14 : vector<32x128xf32>
      %c0_14 = arith.constant 0 : index
      %c0_15 = arith.constant 0 : index
      %16 = vector.load %arg6[%c0_14, %c0_15] : memref<32x128xf32, #tpu.memory_space<vmem>>, vector<32x128xf32>
      tpu.vector_store %arg6[%c0_14, %c0_15], %15 {strides = array<i32>} : memref<32x128xf32, #tpu.memory_space<vmem>>, vector<32x128xf32>,
    } else {
    }
    return
  }
  func.func @transform_0(%arg0: i32, %arg1: i32, %arg2: i32) -> (i32, i32) {
    %c0_i32 = arith.constant 0 : i32
    return %arg0, %arg2 : i32, i32
  }
  func.func @transform_1(%arg0: i32, %arg1: i32, %arg2: i32) -> (i32, i32) {
    %c0_i32 = arith.constant 0 : i32
    return %arg2, %arg1 : i32, i32
  }
  func.func @transform_2(%arg0: i32, %arg1: i32, %arg2: i32) -> (i32, i32) {
    %c0_i32 = arith.constant 0 : i32
    %c0_i32_0 = arith.constant 0 : i32
    return %c0_i32, %arg1 : i32, i32
  }
  func.func @transform_3(%arg0: i32, %arg1: i32, %arg2: i32) -> (i32, i32) {
    %c0_i32 = arith.constant 0 : i32
    return %arg0, %arg1 : i32, i32
  }
}

module attributes {stable_mosaic.version = 11 : i64} {
  func.func @_fused_matmul_kernel(%arg0: i32, %arg1: i32, %arg2: i32, %arg3: memref<32x256xbf16, #tpu.memory_space<vmem>>, %arg4: memref<256x256xbf16, #tpu.memory_space<vmem>>, %arg5: memref<1x256xf32, #tpu.memory_space<vmem>>, %arg6: memref<32x256xf32, #tpu.memory_space<vmem>>, %arg7: memref<32x256xf32, #tpu.memory_space<vmem>>) attributes {dimension_semantics = [#tpu.dimension_semantics<parallel>, #tpu.dimension_semantics<parallel>, #tpu.dimension_semantics<arbitrary>], iteration_bounds = array<i64: 1, 1, 1>, scalar_prefetch = 0 : i64, scratch_operands = 1 : i64, tpu.core_type = #tpu.core_type<tc>, window_params = [{transform_indices = @transform_0, window_bounds = array<i64: 32, 256>}, {transform_indices = @transform_1, window_bounds = array<i64: 256, 256>}, {transform_indices = @transform_2, window_bounds = array<i64: 1, 256>}, {transform_indices = @transform_3, window_bounds = array<i64: 32, 256>}]} {
    %c0_i32 = arith.constant 0 : i32
    %0 = arith.cmpi eq, %arg2, %c0_i32 : i32
    %1 = arith.extui %0 : i1 to i32
    %c0_i32_0 = arith.constant 0 : i32
    %2 = arith.cmpi ne, %1, %c0_i32_0 : i32
    scf.if %2 {
      %cst_10 = arith.constant 0.000000e+00 : f32
      %12 = vector.broadcast %cst_10 : f32 to vector<32x256xf32>
      %c0_11 = arith.constant 0 : index
      %c0_12 = arith.constant 0 : index
      %13 = vector.load %arg7[%c0_11, %c0_12] : memref<32x256xf32, #tpu.memory_space<vmem>>, vector<32x256xf32>
      tpu.vector_store %arg7[%c0_11, %c0_12], %12 {strides = array<i32>} : memref<32x256xf32, #tpu.memory_space<vmem>>, vector<32x256xf32>,
    } else {
    }
    %c0 = arith.constant 0 : index
    %c0_1 = arith.constant 0 : index
    %3 = vector.load %arg7[%c0, %c0_1] : memref<32x256xf32, #tpu.memory_space<vmem>>, vector<32x256xf32>
    %c0_2 = arith.constant 0 : index
    %c0_3 = arith.constant 0 : index
    %4 = vector.load %arg3[%c0_2, %c0_3] : memref<32x256xbf16, #tpu.memory_space<vmem>>, vector<32x256xbf16>
    %c0_4 = arith.constant 0 : index
    %c0_5 = arith.constant 0 : index
    %5 = vector.load %arg4[%c0_4, %c0_5] : memref<256x256xbf16, #tpu.memory_space<vmem>>, vector<256x256xbf16>
    %cst = arith.constant dense<0.000000e+00> : vector<32x256xf32>
    %6 = tpu.matmul %4, %5, %cst {dimension_numbers = #tpu.dot_dimension_numbers<[1], [0], [0], [1], [0, 0, 1, 1], [], []>} : vector<32x256xbf16>, vector<256x256xbf16>, vector<32x256xf32> -> vector<32x256xf32>
    %7 = arith.addf %3, %6 : vector<32x256xf32>
    %c0_6 = arith.constant 0 : index
    %c0_7 = arith.constant 0 : index
    %8 = vector.load %arg7[%c0_6, %c0_7] : memref<32x256xf32, #tpu.memory_space<vmem>>, vector<32x256xf32>
    tpu.vector_store %arg7[%c0_6, %c0_7], %7 {strides = array<i32>} : memref<32x256xf32, #tpu.memory_space<vmem>>, vector<32x256xf32>,
    %c0_i32_8 = arith.constant 0 : i32
    %9 = arith.cmpi eq, %arg2, %c0_i32_8 : i32
    %10 = arith.extui %9 : i1 to i32
    %c0_i32_9 = arith.constant 0 : i32
    %11 = arith.cmpi ne, %10, %c0_i32_9 : i32
    scf.if %11 {
      %c0_10 = arith.constant 0 : index
      %c0_11 = arith.constant 0 : index
      %12 = vector.load %arg7[%c0_10, %c0_11] : memref<32x256xf32, #tpu.memory_space<vmem>>, vector<32x256xf32>
      %c0_12 = arith.constant 0 : index
      %c0_13 = arith.constant 0 : index
      %13 = vector.load %arg5[%c0_12, %c0_13] : memref<1x256xf32, #tpu.memory_space<vmem>>, vector<1x256xf32>
      %14 = vector.broadcast %13 : vector<1x256xf32> to vector<32x256xf32>
      %15 = arith.addf %12, %14 : vector<32x256xf32>
      %c0_14 = arith.constant 0 : index
      %c0_15 = arith.constant 0 : index
      %16 = vector.load %arg6[%c0_14, %c0_15] : memref<32x256xf32, #tpu.memory_space<vmem>>, vector<32x256xf32>
      tpu.vector_store %arg6[%c0_14, %c0_15], %15 {strides = array<i32>} : memref<32x256xf32, #tpu.memory_space<vmem>>, vector<32x256xf32>,
    } else {
    }
    return
  }
  func.func @transform_0(%arg0: i32, %arg1: i32, %arg2: i32) -> (i32, i32) {
    %c0_i32 = arith.constant 0 : i32
    return %arg0, %arg2 : i32, i32
  }
  func.func @transform_1(%arg0: i32, %arg1: i32, %arg2: i32) -> (i32, i32) {
    %c0_i32 = arith.constant 0 : i32
    return %arg2, %arg1 : i32, i32
  }
  func.func @transform_2(%arg0: i32, %arg1: i32, %arg2: i32) -> (i32, i32) {
    %c0_i32 = arith.constant 0 : i32
    %c0_i32_0 = arith.constant 0 : i32
    return %c0_i32, %arg1 : i32, i32
  }
  func.func @transform_3(%arg0: i32, %arg1: i32, %arg2: i32) -> (i32, i32) {
    %c0_i32 = arith.constant 0 : i32
    return %arg0, %arg1 : i32, i32
  }
}

module attributes {stable_mosaic.version = 11 : i64} {
  func.func @_fused_matmul_kernel(%arg0: i32, %arg1: i32, %arg2: i32, %arg3: memref<32x256xbf16, #tpu.memory_space<vmem>>, %arg4: memref<256x128xbf16, #tpu.memory_space<vmem>>, %arg5: memref<1x128xf32, #tpu.memory_space<vmem>>, %arg6: memref<32x128xf32, #tpu.memory_space<vmem>>, %arg7: memref<32x128xf32, #tpu.memory_space<vmem>>) attributes {dimension_semantics = [#tpu.dimension_semantics<parallel>, #tpu.dimension_semantics<parallel>, #tpu.dimension_semantics<arbitrary>], iteration_bounds = array<i64: 1, 1, 1>, scalar_prefetch = 0 : i64, scratch_operands = 1 : i64, tpu.core_type = #tpu.core_type<tc>, window_params = [{transform_indices = @transform_0, window_bounds = array<i64: 32, 256>}, {transform_indices = @transform_1, window_bounds = array<i64: 256, 128>}, {transform_indices = @transform_2, window_bounds = array<i64: 1, 128>}, {transform_indices = @transform_3, window_bounds = array<i64: 32, 128>}]} {
    %c0_i32 = arith.constant 0 : i32
    %0 = arith.cmpi eq, %arg2, %c0_i32 : i32
    %1 = arith.extui %0 : i1 to i32
    %c0_i32_0 = arith.constant 0 : i32
    %2 = arith.cmpi ne, %1, %c0_i32_0 : i32
    scf.if %2 {
      %cst_10 = arith.constant 0.000000e+00 : f32
      %12 = vector.broadcast %cst_10 : f32 to vector<32x128xf32>
      %c0_11 = arith.constant 0 : index
      %c0_12 = arith.constant 0 : index
      %13 = vector.load %arg7[%c0_11, %c0_12] : memref<32x128xf32, #tpu.memory_space<vmem>>, vector<32x128xf32>
      tpu.vector_store %arg7[%c0_11, %c0_12], %12 {strides = array<i32>} : memref<32x128xf32, #tpu.memory_space<vmem>>, vector<32x128xf32>,
    } else {
    }
    %c0 = arith.constant 0 : index
    %c0_1 = arith.constant 0 : index
    %3 = vector.load %arg7[%c0, %c0_1] : memref<32x128xf32, #tpu.memory_space<vmem>>, vector<32x128xf32>
    %c0_2 = arith.constant 0 : index
    %c0_3 = arith.constant 0 : index
    %4 = vector.load %arg3[%c0_2, %c0_3] : memref<32x256xbf16, #tpu.memory_space<vmem>>, vector<32x256xbf16>
    %c0_4 = arith.constant 0 : index
    %c0_5 = arith.constant 0 : index
    %5 = vector.load %arg4[%c0_4, %c0_5] : memref<256x128xbf16, #tpu.memory_space<vmem>>, vector<256x128xbf16>
    %cst = arith.constant dense<0.000000e+00> : vector<32x128xf32>
    %6 = tpu.matmul %4, %5, %cst {dimension_numbers = #tpu.dot_dimension_numbers<[1], [0], [0], [1], [0, 0, 1, 1], [], []>} : vector<32x256xbf16>, vector<256x128xbf16>, vector<32x128xf32> -> vector<32x128xf32>
    %7 = arith.addf %3, %6 : vector<32x128xf32>
    %c0_6 = arith.constant 0 : index
    %c0_7 = arith.constant 0 : index
    %8 = vector.load %arg7[%c0_6, %c0_7] : memref<32x128xf32, #tpu.memory_space<vmem>>, vector<32x128xf32>
    tpu.vector_store %arg7[%c0_6, %c0_7], %7 {strides = array<i32>} : memref<32x128xf32, #tpu.memory_space<vmem>>, vector<32x128xf32>,
    %c0_i32_8 = arith.constant 0 : i32
    %9 = arith.cmpi eq, %arg2, %c0_i32_8 : i32
    %10 = arith.extui %9 : i1 to i32
    %c0_i32_9 = arith.constant 0 : i32
    %11 = arith.cmpi ne, %10, %c0_i32_9 : i32
    scf.if %11 {
      %c0_10 = arith.constant 0 : index
      %c0_11 = arith.constant 0 : index
      %12 = vector.load %arg7[%c0_10, %c0_11] : memref<32x128xf32, #tpu.memory_space<vmem>>, vector<32x128xf32>
      %c0_12 = arith.constant 0 : index
      %c0_13 = arith.constant 0 : index
      %13 = vector.load %arg5[%c0_12, %c0_13] : memref<1x128xf32, #tpu.memory_space<vmem>>, vector<1x128xf32>
      %14 = vector.broadcast %13 : vector<1x128xf32> to vector<32x128xf32>
      %15 = arith.addf %12, %14 : vector<32x128xf32>
      %cst_14 = arith.constant 0.000000e+00 : f32
      %16 = vector.broadcast %cst_14 : f32 to vector<32x128xf32>
      %17 = arith.maximumf %15, %16 : vector<32x128xf32>
      %c0_15 = arith.constant 0 : index
      %c0_16 = arith.constant 0 : index
      %18 = vector.load %arg6[%c0_15, %c0_16] : memref<32x128xf32, #tpu.memory_space<vmem>>, vector<32x128xf32>
      tpu.vector_store %arg6[%c0_15, %c0_16], %17 {strides = array<i32>} : memref<32x128xf32, #tpu.memory_space<vmem>>, vector<32x128xf32>,
    } else {
    }
    return
  }
  func.func @transform_0(%arg0: i32, %arg1: i32, %arg2: i32) -> (i32, i32) {
    %c0_i32 = arith.constant 0 : i32
    return %arg0, %arg2 : i32, i32
  }
  func.func @transform_1(%arg0: i32, %arg1: i32, %arg2: i32) -> (i32, i32) {
    %c0_i32 = arith.constant 0 : i32
    return %arg2, %arg1 : i32, i32
  }
  func.func @transform_2(%arg0: i32, %arg1: i32, %arg2: i32) -> (i32, i32) {
    %c0_i32 = arith.constant 0 : i32
    %c0_i32_0 = arith.constant 0 : i32
    return %c0_i32, %arg1 : i32, i32
  }
  func.func @transform_3(%arg0: i32, %arg1: i32, %arg2: i32) -> (i32, i32) {
    %c0_i32 = arith.constant 0 : i32
    return %arg0, %arg1 : i32, i32
  }
}

module attributes {stable_mosaic.version = 11 : i64} {
  func.func @_scale_apply_kernel(%arg0: i32, %arg1: memref<32x32xf32, #tpu.memory_space<vmem>>, %arg2: memref<32x1xf32, #tpu.memory_space<vmem>>, %arg3: memref<32x32xf32, #tpu.memory_space<vmem>>) attributes {dimension_semantics = [#tpu.dimension_semantics<parallel>], iteration_bounds = array<i64: 1>, scalar_prefetch = 0 : i64, scratch_operands = 0 : i64, tpu.core_type = #tpu.core_type<tc>, window_params = [{transform_indices = @transform_0, window_bounds = array<i64: 32, 32>}, {transform_indices = @transform_1, window_bounds = array<i64: 32, 1>}, {transform_indices = @transform_2, window_bounds = array<i64: 32, 32>}]} {
    %c0 = arith.constant 0 : index
    %c0_0 = arith.constant 0 : index
    %0 = vector.load %arg1[%c0, %c0_0] : memref<32x32xf32, #tpu.memory_space<vmem>>, vector<32x32xf32>
    %c0_1 = arith.constant 0 : index
    %c0_2 = arith.constant 0 : index
    %1 = vector.load %arg2[%c0_1, %c0_2] : memref<32x1xf32, #tpu.memory_space<vmem>>, vector<32x1xf32>
    %2 = vector.broadcast %1 : vector<32x1xf32> to vector<32x32xf32>
    %3 = arith.mulf %0, %2 : vector<32x32xf32>
    %c0_3 = arith.constant 0 : index
    %c0_4 = arith.constant 0 : index
    %4 = vector.load %arg3[%c0_3, %c0_4] : memref<32x32xf32, #tpu.memory_space<vmem>>, vector<32x32xf32>
    tpu.vector_store %arg3[%c0_3, %c0_4], %3 {strides = array<i32>} : memref<32x32xf32, #tpu.memory_space<vmem>>, vector<32x32xf32>,
    return
  }
  func.func @transform_0(%arg0: i32) -> (i32, i32) {
    %c0_i32 = arith.constant 0 : i32
    %c0_i32_0 = arith.constant 0 : i32
    return %arg0, %c0_i32 : i32, i32
  }
  func.func @transform_1(%arg0: i32) -> (i32, i32) {
    %c0_i32 = arith.constant 0 : i32
    %c0_i32_0 = arith.constant 0 : i32
    return %arg0, %c0_i32 : i32, i32
  }
  func.func @transform_2(%arg0: i32) -> (i32, i32) {
    %c0_i32 = arith.constant 0 : i32
    %c0_i32_0 = arith.constant 0 : i32
    return %arg0, %c0_i32 : i32, i32
  }
}

module attributes {stable_mosaic.version = 11 : i64} {
  func.func @_fused_matmul_kernel(%arg0: i32, %arg1: i32, %arg2: i32, %arg3: memref<128x128xbf16, #tpu.memory_space<vmem>>, %arg4: memref<128x128xbf16, #tpu.memory_space<vmem>>, %arg5: memref<1x128xf32, #tpu.memory_space<vmem>>, %arg6: memref<128x128xf32, #tpu.memory_space<vmem>>, %arg7: memref<128x128xf32, #tpu.memory_space<vmem>>) attributes {dimension_semantics = [#tpu.dimension_semantics<parallel>, #tpu.dimension_semantics<parallel>, #tpu.dimension_semantics<arbitrary>], iteration_bounds = array<i64: 1, 1, 1>, scalar_prefetch = 0 : i64, scratch_operands = 1 : i64, tpu.core_type = #tpu.core_type<tc>, window_params = [{transform_indices = @transform_0, window_bounds = array<i64: 128, 128>}, {transform_indices = @transform_1, window_bounds = array<i64: 128, 128>}, {transform_indices = @transform_2, window_bounds = array<i64: 1, 128>}, {transform_indices = @transform_3, window_bounds = array<i64: 128, 128>}]} {
    %c0_i32 = arith.constant 0 : i32
    %0 = arith.cmpi eq, %arg2, %c0_i32 : i32
    %1 = arith.extui %0 : i1 to i32
    %c0_i32_0 = arith.constant 0 : i32
    %2 = arith.cmpi ne, %1, %c0_i32_0 : i32
    scf.if %2 {
      %cst_10 = arith.constant 0.000000e+00 : f32
      %12 = vector.broadcast %cst_10 : f32 to vector<128x128xf32>
      %c0_11 = arith.constant 0 : index
      %c0_12 = arith.constant 0 : index
      %13 = vector.load %arg7[%c0_11, %c0_12] : memref<128x128xf32, #tpu.memory_space<vmem>>, vector<128x128xf32>
      tpu.vector_store %arg7[%c0_11, %c0_12], %12 {strides = array<i32>} : memref<128x128xf32, #tpu.memory_space<vmem>>, vector<128x128xf32>,
    } else {
    }
    %c0 = arith.constant 0 : index
    %c0_1 = arith.constant 0 : index
    %3 = vector.load %arg7[%c0, %c0_1] : memref<128x128xf32, #tpu.memory_space<vmem>>, vector<128x128xf32>
    %c0_2 = arith.constant 0 : index
    %c0_3 = arith.constant 0 : index
    %4 = vector.load %arg3[%c0_2, %c0_3] : memref<128x128xbf16, #tpu.memory_space<vmem>>, vector<128x128xbf16>
    %c0_4 = arith.constant 0 : index
    %c0_5 = arith.constant 0 : index
    %5 = vector.load %arg4[%c0_4, %c0_5] : memref<128x128xbf16, #tpu.memory_space<vmem>>, vector<128x128xbf16>
    %cst = arith.constant dense<0.000000e+00> : vector<128x128xf32>
    %6 = tpu.matmul %4, %5, %cst {dimension_numbers = #tpu.dot_dimension_numbers<[1], [0], [0], [1], [0, 0, 1, 1], [], []>} : vector<128x128xbf16>, vector<128x128xbf16>, vector<128x128xf32> -> vector<128x128xf32>
    %7 = arith.addf %3, %6 : vector<128x128xf32>
    %c0_6 = arith.constant 0 : index
    %c0_7 = arith.constant 0 : index
    %8 = vector.load %arg7[%c0_6, %c0_7] : memref<128x128xf32, #tpu.memory_space<vmem>>, vector<128x128xf32>
    tpu.vector_store %arg7[%c0_6, %c0_7], %7 {strides = array<i32>} : memref<128x128xf32, #tpu.memory_space<vmem>>, vector<128x128xf32>,
    %c0_i32_8 = arith.constant 0 : i32
    %9 = arith.cmpi eq, %arg2, %c0_i32_8 : i32
    %10 = arith.extui %9 : i1 to i32
    %c0_i32_9 = arith.constant 0 : i32
    %11 = arith.cmpi ne, %10, %c0_i32_9 : i32
    scf.if %11 {
      %c0_10 = arith.constant 0 : index
      %c0_11 = arith.constant 0 : index
      %12 = vector.load %arg7[%c0_10, %c0_11] : memref<128x128xf32, #tpu.memory_space<vmem>>, vector<128x128xf32>
      %c0_12 = arith.constant 0 : index
      %c0_13 = arith.constant 0 : index
      %13 = vector.load %arg5[%c0_12, %c0_13] : memref<1x128xf32, #tpu.memory_space<vmem>>, vector<1x128xf32>
      %14 = vector.broadcast %13 : vector<1x128xf32> to vector<128x128xf32>
      %15 = arith.addf %12, %14 : vector<128x128xf32>
      %c0_14 = arith.constant 0 : index
      %c0_15 = arith.constant 0 : index
      %16 = vector.load %arg6[%c0_14, %c0_15] : memref<128x128xf32, #tpu.memory_space<vmem>>, vector<128x128xf32>
      tpu.vector_store %arg6[%c0_14, %c0_15], %15 {strides = array<i32>} : memref<128x128xf32, #tpu.memory_space<vmem>>, vector<128x128xf32>,
    } else {
    }
    return
  }
  func.func @transform_0(%arg0: i32, %arg1: i32, %arg2: i32) -> (i32, i32) {
    %c0_i32 = arith.constant 0 : i32
    return %arg0, %arg2 : i32, i32
  }
  func.func @transform_1(%arg0: i32, %arg1: i32, %arg2: i32) -> (i32, i32) {
    %c0_i32 = arith.constant 0 : i32
    return %arg2, %arg1 : i32, i32
  }
  func.func @transform_2(%arg0: i32, %arg1: i32, %arg2: i32) -> (i32, i32) {
    %c0_i32 = arith.constant 0 : i32
    %c0_i32_0 = arith.constant 0 : i32
    return %c0_i32, %arg1 : i32, i32
  }
  func.func @transform_3(%arg0: i32, %arg1: i32, %arg2: i32) -> (i32, i32) {
    %c0_i32 = arith.constant 0 : i32
    return %arg0, %arg1 : i32, i32
  }
}

module attributes {stable_mosaic.version = 11 : i64} {
  func.func @_fused_matmul_kernel(%arg0: i32, %arg1: i32, %arg2: i32, %arg3: memref<128x128xbf16, #tpu.memory_space<vmem>>, %arg4: memref<128x256xbf16, #tpu.memory_space<vmem>>, %arg5: memref<1x256xf32, #tpu.memory_space<vmem>>, %arg6: memref<128x256xf32, #tpu.memory_space<vmem>>, %arg7: memref<128x256xf32, #tpu.memory_space<vmem>>) attributes {dimension_semantics = [#tpu.dimension_semantics<parallel>, #tpu.dimension_semantics<parallel>, #tpu.dimension_semantics<arbitrary>], iteration_bounds = array<i64: 1, 1, 1>, scalar_prefetch = 0 : i64, scratch_operands = 1 : i64, tpu.core_type = #tpu.core_type<tc>, window_params = [{transform_indices = @transform_0, window_bounds = array<i64: 128, 128>}, {transform_indices = @transform_1, window_bounds = array<i64: 128, 256>}, {transform_indices = @transform_2, window_bounds = array<i64: 1, 256>}, {transform_indices = @transform_3, window_bounds = array<i64: 128, 256>}]} {
    %c0_i32 = arith.constant 0 : i32
    %0 = arith.cmpi eq, %arg2, %c0_i32 : i32
    %1 = arith.extui %0 : i1 to i32
    %c0_i32_0 = arith.constant 0 : i32
    %2 = arith.cmpi ne, %1, %c0_i32_0 : i32
    scf.if %2 {
      %cst_10 = arith.constant 0.000000e+00 : f32
      %12 = vector.broadcast %cst_10 : f32 to vector<128x256xf32>
      %c0_11 = arith.constant 0 : index
      %c0_12 = arith.constant 0 : index
      %13 = vector.load %arg7[%c0_11, %c0_12] : memref<128x256xf32, #tpu.memory_space<vmem>>, vector<128x256xf32>
      tpu.vector_store %arg7[%c0_11, %c0_12], %12 {strides = array<i32>} : memref<128x256xf32, #tpu.memory_space<vmem>>, vector<128x256xf32>,
    } else {
    }
    %c0 = arith.constant 0 : index
    %c0_1 = arith.constant 0 : index
    %3 = vector.load %arg7[%c0, %c0_1] : memref<128x256xf32, #tpu.memory_space<vmem>>, vector<128x256xf32>
    %c0_2 = arith.constant 0 : index
    %c0_3 = arith.constant 0 : index
    %4 = vector.load %arg3[%c0_2, %c0_3] : memref<128x128xbf16, #tpu.memory_space<vmem>>, vector<128x128xbf16>
    %c0_4 = arith.constant 0 : index
    %c0_5 = arith.constant 0 : index
    %5 = vector.load %arg4[%c0_4, %c0_5] : memref<128x256xbf16, #tpu.memory_space<vmem>>, vector<128x256xbf16>
    %cst = arith.constant dense<0.000000e+00> : vector<128x256xf32>
    %6 = tpu.matmul %4, %5, %cst {dimension_numbers = #tpu.dot_dimension_numbers<[1], [0], [0], [1], [0, 0, 1, 1], [], []>} : vector<128x128xbf16>, vector<128x256xbf16>, vector<128x256xf32> -> vector<128x256xf32>
    %7 = arith.addf %3, %6 : vector<128x256xf32>
    %c0_6 = arith.constant 0 : index
    %c0_7 = arith.constant 0 : index
    %8 = vector.load %arg7[%c0_6, %c0_7] : memref<128x256xf32, #tpu.memory_space<vmem>>, vector<128x256xf32>
    tpu.vector_store %arg7[%c0_6, %c0_7], %7 {strides = array<i32>} : memref<128x256xf32, #tpu.memory_space<vmem>>, vector<128x256xf32>,
    %c0_i32_8 = arith.constant 0 : i32
    %9 = arith.cmpi eq, %arg2, %c0_i32_8 : i32
    %10 = arith.extui %9 : i1 to i32
    %c0_i32_9 = arith.constant 0 : i32
    %11 = arith.cmpi ne, %10, %c0_i32_9 : i32
    scf.if %11 {
      %c0_10 = arith.constant 0 : index
      %c0_11 = arith.constant 0 : index
      %12 = vector.load %arg7[%c0_10, %c0_11] : memref<128x256xf32, #tpu.memory_space<vmem>>, vector<128x256xf32>
      %c0_12 = arith.constant 0 : index
      %c0_13 = arith.constant 0 : index
      %13 = vector.load %arg5[%c0_12, %c0_13] : memref<1x256xf32, #tpu.memory_space<vmem>>, vector<1x256xf32>
      %14 = vector.broadcast %13 : vector<1x256xf32> to vector<128x256xf32>
      %15 = arith.addf %12, %14 : vector<128x256xf32>
      %c0_14 = arith.constant 0 : index
      %c0_15 = arith.constant 0 : index
      %16 = vector.load %arg6[%c0_14, %c0_15] : memref<128x256xf32, #tpu.memory_space<vmem>>, vector<128x256xf32>
      tpu.vector_store %arg6[%c0_14, %c0_15], %15 {strides = array<i32>} : memref<128x256xf32, #tpu.memory_space<vmem>>, vector<128x256xf32>,
    } else {
    }
    return
  }
  func.func @transform_0(%arg0: i32, %arg1: i32, %arg2: i32) -> (i32, i32) {
    %c0_i32 = arith.constant 0 : i32
    return %arg0, %arg2 : i32, i32
  }
  func.func @transform_1(%arg0: i32, %arg1: i32, %arg2: i32) -> (i32, i32) {
    %c0_i32 = arith.constant 0 : i32
    return %arg2, %arg1 : i32, i32
  }
  func.func @transform_2(%arg0: i32, %arg1: i32, %arg2: i32) -> (i32, i32) {
    %c0_i32 = arith.constant 0 : i32
    %c0_i32_0 = arith.constant 0 : i32
    return %c0_i32, %arg1 : i32, i32
  }
  func.func @transform_3(%arg0: i32, %arg1: i32, %arg2: i32) -> (i32, i32) {
    %c0_i32 = arith.constant 0 : i32
    return %arg0, %arg1 : i32, i32
  }
}

module attributes {stable_mosaic.version = 11 : i64} {
  func.func @_fused_matmul_kernel(%arg0: i32, %arg1: i32, %arg2: i32, %arg3: memref<128x128xbf16, #tpu.memory_space<vmem>>, %arg4: memref<128x128xbf16, #tpu.memory_space<vmem>>, %arg5: memref<1x128xf32, #tpu.memory_space<vmem>>, %arg6: memref<128x128xf32, #tpu.memory_space<vmem>>, %arg7: memref<128x128xf32, #tpu.memory_space<vmem>>) attributes {dimension_semantics = [#tpu.dimension_semantics<parallel>, #tpu.dimension_semantics<parallel>, #tpu.dimension_semantics<arbitrary>], iteration_bounds = array<i64: 1, 1, 1>, scalar_prefetch = 0 : i64, scratch_operands = 1 : i64, tpu.core_type = #tpu.core_type<tc>, window_params = [{transform_indices = @transform_0, window_bounds = array<i64: 128, 128>}, {transform_indices = @transform_1, window_bounds = array<i64: 128, 128>}, {transform_indices = @transform_2, window_bounds = array<i64: 1, 128>}, {transform_indices = @transform_3, window_bounds = array<i64: 128, 128>}]} {
    %c0_i32 = arith.constant 0 : i32
    %0 = arith.cmpi eq, %arg2, %c0_i32 : i32
    %1 = arith.extui %0 : i1 to i32
    %c0_i32_0 = arith.constant 0 : i32
    %2 = arith.cmpi ne, %1, %c0_i32_0 : i32
    scf.if %2 {
      %cst_10 = arith.constant 0.000000e+00 : f32
      %12 = vector.broadcast %cst_10 : f32 to vector<128x128xf32>
      %c0_11 = arith.constant 0 : index
      %c0_12 = arith.constant 0 : index
      %13 = vector.load %arg7[%c0_11, %c0_12] : memref<128x128xf32, #tpu.memory_space<vmem>>, vector<128x128xf32>
      tpu.vector_store %arg7[%c0_11, %c0_12], %12 {strides = array<i32>} : memref<128x128xf32, #tpu.memory_space<vmem>>, vector<128x128xf32>,
    } else {
    }
    %c0 = arith.constant 0 : index
    %c0_1 = arith.constant 0 : index
    %3 = vector.load %arg7[%c0, %c0_1] : memref<128x128xf32, #tpu.memory_space<vmem>>, vector<128x128xf32>
    %c0_2 = arith.constant 0 : index
    %c0_3 = arith.constant 0 : index
    %4 = vector.load %arg3[%c0_2, %c0_3] : memref<128x128xbf16, #tpu.memory_space<vmem>>, vector<128x128xbf16>
    %c0_4 = arith.constant 0 : index
    %c0_5 = arith.constant 0 : index
    %5 = vector.load %arg4[%c0_4, %c0_5] : memref<128x128xbf16, #tpu.memory_space<vmem>>, vector<128x128xbf16>
    %cst = arith.constant dense<0.000000e+00> : vector<128x128xf32>
    %6 = tpu.matmul %4, %5, %cst {dimension_numbers = #tpu.dot_dimension_numbers<[1], [0], [0], [1], [0, 0, 1, 1], [], []>} : vector<128x128xbf16>, vector<128x128xbf16>, vector<128x128xf32> -> vector<128x128xf32>
    %7 = arith.addf %3, %6 : vector<128x128xf32>
    %c0_6 = arith.constant 0 : index
    %c0_7 = arith.constant 0 : index
    %8 = vector.load %arg7[%c0_6, %c0_7] : memref<128x128xf32, #tpu.memory_space<vmem>>, vector<128x128xf32>
    tpu.vector_store %arg7[%c0_6, %c0_7], %7 {strides = array<i32>} : memref<128x128xf32, #tpu.memory_space<vmem>>, vector<128x128xf32>,
    %c0_i32_8 = arith.constant 0 : i32
    %9 = arith.cmpi eq, %arg2, %c0_i32_8 : i32
    %10 = arith.extui %9 : i1 to i32
    %c0_i32_9 = arith.constant 0 : i32
    %11 = arith.cmpi ne, %10, %c0_i32_9 : i32
    scf.if %11 {
      %c0_10 = arith.constant 0 : index
      %c0_11 = arith.constant 0 : index
      %12 = vector.load %arg7[%c0_10, %c0_11] : memref<128x128xf32, #tpu.memory_space<vmem>>, vector<128x128xf32>
      %c0_12 = arith.constant 0 : index
      %c0_13 = arith.constant 0 : index
      %13 = vector.load %arg5[%c0_12, %c0_13] : memref<1x128xf32, #tpu.memory_space<vmem>>, vector<1x128xf32>
      %14 = vector.broadcast %13 : vector<1x128xf32> to vector<128x128xf32>
      %15 = arith.addf %12, %14 : vector<128x128xf32>
      %cst_14 = arith.constant 0.000000e+00 : f32
      %16 = vector.broadcast %cst_14 : f32 to vector<128x128xf32>
      %17 = arith.maximumf %15, %16 : vector<128x128xf32>
      %c0_15 = arith.constant 0 : index
      %c0_16 = arith.constant 0 : index
      %18 = vector.load %arg6[%c0_15, %c0_16] : memref<128x128xf32, #tpu.memory_space<vmem>>, vector<128x128xf32>
      tpu.vector_store %arg6[%c0_15, %c0_16], %17 {strides = array<i32>} : memref<128x128xf32, #tpu.memory_space<vmem>>, vector<128x128xf32>,
    } else {
    }
    return
  }
  func.func @transform_0(%arg0: i32, %arg1: i32, %arg2: i32) -> (i32, i32) {
    %c0_i32 = arith.constant 0 : i32
    return %arg0, %arg2 : i32, i32
  }
  func.func @transform_1(%arg0: i32, %arg1: i32, %arg2: i32) -> (i32, i32) {
    %c0_i32 = arith.constant 0 : i32
    return %arg2, %arg1 : i32, i32
  }
  func.func @transform_2(%arg0: i32, %arg1: i32, %arg2: i32) -> (i32, i32) {
    %c0_i32 = arith.constant 0 : i32
    %c0_i32_0 = arith.constant 0 : i32
    return %c0_i32, %arg1 : i32, i32
  }
  func.func @transform_3(%arg0: i32, %arg1: i32, %arg2: i32) -> (i32, i32) {
    %c0_i32 = arith.constant 0 : i32
    return %arg0, %arg1 : i32, i32
  }
}

module attributes {stable_mosaic.version = 11 : i64} {
  func.func @_scale_apply_kernel(%arg0: i32, %arg1: memref<128x16xf32, #tpu.memory_space<vmem>>, %arg2: memref<128x1xf32, #tpu.memory_space<vmem>>, %arg3: memref<128x16xf32, #tpu.memory_space<vmem>>) attributes {dimension_semantics = [#tpu.dimension_semantics<parallel>], iteration_bounds = array<i64: 1>, scalar_prefetch = 0 : i64, scratch_operands = 0 : i64, tpu.core_type = #tpu.core_type<tc>, window_params = [{transform_indices = @transform_0, window_bounds = array<i64: 128, 16>}, {transform_indices = @transform_1, window_bounds = array<i64: 128, 1>}, {transform_indices = @transform_2, window_bounds = array<i64: 128, 16>}]} {
    %c0 = arith.constant 0 : index
    %c0_0 = arith.constant 0 : index
    %0 = vector.load %arg1[%c0, %c0_0] : memref<128x16xf32, #tpu.memory_space<vmem>>, vector<128x16xf32>
    %c0_1 = arith.constant 0 : index
    %c0_2 = arith.constant 0 : index
    %1 = vector.load %arg2[%c0_1, %c0_2] : memref<128x1xf32, #tpu.memory_space<vmem>>, vector<128x1xf32>
    %2 = vector.broadcast %1 : vector<128x1xf32> to vector<128x16xf32>
    %3 = arith.mulf %0, %2 : vector<128x16xf32>
    %c0_3 = arith.constant 0 : index
    %c0_4 = arith.constant 0 : index
    %4 = vector.load %arg3[%c0_3, %c0_4] : memref<128x16xf32, #tpu.memory_space<vmem>>, vector<128x16xf32>
    tpu.vector_store %arg3[%c0_3, %c0_4], %3 {strides = array<i32>} : memref<128x16xf32, #tpu.memory_space<vmem>>, vector<128x16xf32>,
    return
  }
  func.func @transform_0(%arg0: i32) -> (i32, i32) {
    %c0_i32 = arith.constant 0 : i32
    %c0_i32_0 = arith.constant 0 : i32
    return %arg0, %c0_i32 : i32, i32
  }
  func.func @transform_1(%arg0: i32) -> (i32, i32) {
    %c0_i32 = arith.constant 0 : i32
    %c0_i32_0 = arith.constant 0 : i32
    return %arg0, %c0_i32 : i32, i32
  }
  func.func @transform_2(%arg0: i32) -> (i32, i32) {
    %c0_i32 = arith.constant 0 : i32
    %c0_i32_0 = arith.constant 0 : i32
    return %arg0, %c0_i32 : i32, i32
  }
}

module attributes {stable_mosaic.version = 11 : i64} {
  func.func @_fused_matmul_kernel(%arg0: i32, %arg1: i32, %arg2: i32, %arg3: memref<256x128xbf16, #tpu.memory_space<vmem>>, %arg4: memref<128x128xbf16, #tpu.memory_space<vmem>>, %arg5: memref<1x128xf32, #tpu.memory_space<vmem>>, %arg6: memref<256x128xf32, #tpu.memory_space<vmem>>, %arg7: memref<256x128xf32, #tpu.memory_space<vmem>>) attributes {dimension_semantics = [#tpu.dimension_semantics<parallel>, #tpu.dimension_semantics<parallel>, #tpu.dimension_semantics<arbitrary>], iteration_bounds = array<i64: 2, 1, 1>, scalar_prefetch = 0 : i64, scratch_operands = 1 : i64, tpu.core_type = #tpu.core_type<tc>, window_params = [{transform_indices = @transform_0, window_bounds = array<i64: 256, 128>}, {transform_indices = @transform_1, window_bounds = array<i64: 128, 128>}, {transform_indices = @transform_2, window_bounds = array<i64: 1, 128>}, {transform_indices = @transform_3, window_bounds = array<i64: 256, 128>}]} {
    %c0_i32 = arith.constant 0 : i32
    %0 = arith.cmpi eq, %arg2, %c0_i32 : i32
    %1 = arith.extui %0 : i1 to i32
    %c0_i32_0 = arith.constant 0 : i32
    %2 = arith.cmpi ne, %1, %c0_i32_0 : i32
    scf.if %2 {
      %cst_10 = arith.constant 0.000000e+00 : f32
      %12 = vector.broadcast %cst_10 : f32 to vector<256x128xf32>
      %c0_11 = arith.constant 0 : index
      %c0_12 = arith.constant 0 : index
      %13 = vector.load %arg7[%c0_11, %c0_12] : memref<256x128xf32, #tpu.memory_space<vmem>>, vector<256x128xf32>
      tpu.vector_store %arg7[%c0_11, %c0_12], %12 {strides = array<i32>} : memref<256x128xf32, #tpu.memory_space<vmem>>, vector<256x128xf32>,
    } else {
    }
    %c0 = arith.constant 0 : index
    %c0_1 = arith.constant 0 : index
    %3 = vector.load %arg7[%c0, %c0_1] : memref<256x128xf32, #tpu.memory_space<vmem>>, vector<256x128xf32>
    %c0_2 = arith.constant 0 : index
    %c0_3 = arith.constant 0 : index
    %4 = vector.load %arg3[%c0_2, %c0_3] : memref<256x128xbf16, #tpu.memory_space<vmem>>, vector<256x128xbf16>
    %c0_4 = arith.constant 0 : index
    %c0_5 = arith.constant 0 : index
    %5 = vector.load %arg4[%c0_4, %c0_5] : memref<128x128xbf16, #tpu.memory_space<vmem>>, vector<128x128xbf16>
    %cst = arith.constant dense<0.000000e+00> : vector<256x128xf32>
    %6 = tpu.matmul %4, %5, %cst {dimension_numbers = #tpu.dot_dimension_numbers<[1], [0], [0], [1], [0, 0, 1, 1], [], []>} : vector<256x128xbf16>, vector<128x128xbf16>, vector<256x128xf32> -> vector<256x128xf32>
    %7 = arith.addf %3, %6 : vector<256x128xf32>
    %c0_6 = arith.constant 0 : index
    %c0_7 = arith.constant 0 : index
    %8 = vector.load %arg7[%c0_6, %c0_7] : memref<256x128xf32, #tpu.memory_space<vmem>>, vector<256x128xf32>
    tpu.vector_store %arg7[%c0_6, %c0_7], %7 {strides = array<i32>} : memref<256x128xf32, #tpu.memory_space<vmem>>, vector<256x128xf32>,
    %c0_i32_8 = arith.constant 0 : i32
    %9 = arith.cmpi eq, %arg2, %c0_i32_8 : i32
    %10 = arith.extui %9 : i1 to i32
    %c0_i32_9 = arith.constant 0 : i32
    %11 = arith.cmpi ne, %10, %c0_i32_9 : i32
    scf.if %11 {
      %c0_10 = arith.constant 0 : index
      %c0_11 = arith.constant 0 : index
      %12 = vector.load %arg7[%c0_10, %c0_11] : memref<256x128xf32, #tpu.memory_space<vmem>>, vector<256x128xf32>
      %c0_12 = arith.constant 0 : index
      %c0_13 = arith.constant 0 : index
      %13 = vector.load %arg5[%c0_12, %c0_13] : memref<1x128xf32, #tpu.memory_space<vmem>>, vector<1x128xf32>
      %14 = vector.broadcast %13 : vector<1x128xf32> to vector<256x128xf32>
      %15 = arith.addf %12, %14 : vector<256x128xf32>
      %cst_14 = arith.constant 0.000000e+00 : f32
      %16 = vector.broadcast %cst_14 : f32 to vector<256x128xf32>
      %17 = arith.maximumf %15, %16 : vector<256x128xf32>
      %c0_15 = arith.constant 0 : index
      %c0_16 = arith.constant 0 : index
      %18 = vector.load %arg6[%c0_15, %c0_16] : memref<256x128xf32, #tpu.memory_space<vmem>>, vector<256x128xf32>
      tpu.vector_store %arg6[%c0_15, %c0_16], %17 {strides = array<i32>} : memref<256x128xf32, #tpu.memory_space<vmem>>, vector<256x128xf32>,
    } else {
    }
    return
  }
  func.func @transform_0(%arg0: i32, %arg1: i32, %arg2: i32) -> (i32, i32) {
    %c0_i32 = arith.constant 0 : i32
    return %arg0, %arg2 : i32, i32
  }
  func.func @transform_1(%arg0: i32, %arg1: i32, %arg2: i32) -> (i32, i32) {
    %c0_i32 = arith.constant 0 : i32
    return %arg2, %arg1 : i32, i32
  }
  func.func @transform_2(%arg0: i32, %arg1: i32, %arg2: i32) -> (i32, i32) {
    %c0_i32 = arith.constant 0 : i32
    %c0_i32_0 = arith.constant 0 : i32
    return %c0_i32, %arg1 : i32, i32
  }
  func.func @transform_3(%arg0: i32, %arg1: i32, %arg2: i32) -> (i32, i32) {
    %c0_i32 = arith.constant 0 : i32
    return %arg0, %arg1 : i32, i32
  }
}

</mosaic_0001>

<llo_original>
// kernel: model_forward.25
$region0: #{model_forward.25}
  #allocation0 [shape = 'u32[]', space=smem, size = 0x4, offset = 0x4, fixed_abs, tag = 'smem constant byte address 0x4 - core index']
  #allocation1 [shape = 'u32[144,128]{1,0:T(1,128)}', space=vmem, size = 0x12000, scoped, tag = 'internal scratch']
  #allocation2 [shape = 'f32[256,128]{1,0:T(8,128)}', space=vmem, size = 0x20000, scoped, tag = 'scratch operand']
  %s0 = inlined_call_operand.hbm [shape: bf16[512,128], index: 0, kind: input, shape index: {}]
  %s1 = inlined_call_operand.hbm [shape: bf16[128,128], index: 1, kind: input, shape index: {}]
  %s2 = inlined_call_operand.hbm [shape: f32[1,128], index: 2, kind: input, shape index: {}]
  %s3 = inlined_call_operand.hbm [shape: f32[512,128], index: 3, kind: output, shape index: {}]
  %s4 = sld [smem:[#allocation0]]
  $region65: #{model_forward.25} parent=0
    _
  %s6 = ssub.s32 1, %s4
  %s7 = scalar_select 0, %s6, %s4
  $region1: #{model_forward.25} parent=0
    #allocation3 [shape = 'u8[131072]{0}', space=vmem, size = 0x20000, scoped, tag = 'input window, operand 0']
    #allocation4 [shape = 's32[2]{0}', space=sflag, size = 0x8, scoped, tag = 'scoped memory for model_forward.25']
    #allocation5 [shape = 's32[2]{0}', space=sflag, size = 0x8, scoped, tag = 'scoped memory for model_forward.25']
    #allocation6 [shape = 'u8[32768]{0}', space=vmem, size = 0x8000, scoped, tag = 'input window, operand 1, single buffered']
    #allocation7 [shape = 's32[1]{0}', space=sflag, size = 0x4, scoped, tag = 'scoped memory for model_forward.25']
    #allocation8 [shape = 'u8[512]{0}', space=vmem, size = 0x400, scoped, tag = 'input window, operand 2, single buffered']
    #allocation9 [shape = 'u8[262144]{0}', space=vmem, size = 0x40000, scoped, tag = 'output window, operand 0']
    %8 = vsyncpa [#allocation4], 0
    %s9 = scalar_lea.sflag [#allocation4], 1
    %10 = vsyncpa %s9, 0
    %11 = vsyncpa [#allocation7], 0
    %12 = vsyncpa [#allocation5], 0
    %s13 = scalar_lea.sflag [#allocation5], 1
    %14 = vsyncpa %s13, 0
    loop: start=0, step=1, limit=4
    $region2: #{model_forward.25} parent=1 // loop_pre_header
      _
    $region3: #{model_forward.25} parent=1 // loop_header
      %s16 = sphi 0, %s20
      %p17 = scmp.ge.s32.totalorder %s16, 4
      %s23 = sphi 0, %s42
      %s24 = sphi 0, %s38
      %s25 = sphi 0, %s34
      %s26 = sphi 0, %s23
      %s27 = sphi 0, %s24
      %s28 = sphi 0, %s25
      %s29 = sphi 0, %s26
      %s30 = sphi 0, %s27
      %s31 = sphi 0, %s28
      %s47 = sphi 0, %s49
      %s50 = sphi 0, %s47
      %s51 = sphi 0, %s50
      %s67 = sphi 0, %s51
      %s75 = sphi 0, %s77
      %s78 = sphi 0, %s75
      %s79 = sphi 0, %s78
      %s95 = sphi 0, %s79
      %s101 = sphi 0, %s103
      %s104 = sphi 0, %s101
      %s105 = sphi 0, %s104
      %s121 = sphi 0, %s105
      %s129 = sphi 0, %s131
      %s132 = sphi 0, %s129
      %s133 = sphi 0, %s132
      %s149 = sphi 0, %s133
    $region4: #{model_forward.25} parent=1 // loop_header_branch
      %19 = sbr.rel (%p17) target = $region8
    $region5: #{model_forward.25} parent=1 // loop_body
      %s21 = ssub.s32 %s16, 1
      %s22 = ssub.s32 %s16, 2
      %s32 = sadd.s32 1, %s25
      %p33 = scmp.ge.s32.totalorder %s32, 1
      %s34 = scalar_select %p33, 0, %s32
      %s35 = sadd.s32 1, %s24
      %s36 = scalar_select %p33, %s35, %s24
      %p37 = scmp.ge.s32.totalorder %s36, 1
      %s38 = scalar_select %p37, 0, %s36
      %s39 = sadd.s32 1, %s23
      %s40 = scalar_select %p37, %s39, %s23
      %p41 = scmp.ge.s32.totalorder %s40, 2
      %s42 = scalar_select %p41, 0, %s40
      %s43 = ssub.s32 %s23, %s42
      %s44 = ssub.s32 %s25, %s34
      %s45 = sor.u32 %s43, %s44
      %p46 = scmp.eq.s32.totalorder %s45, 0
      %s48 = sadd.s32 %s47, 1
      %s49 = scalar_select %p46, %s47, %s48
      %p52 = pneg %p46
      %p53 = scmp.eq.s32.totalorder %s16, 1
      %p54 = por %p52, %p53
      %p55 = scmp.ne.s32.totalorder %s47, %s50
      %p56 = scmp.eq.s32.totalorder %s16, 0
      %p57 = por %p55, %p56
      %p58 = scmp.ne.s32.totalorder %s47, %s50
      %p59 = scmp.eq.s32.totalorder %s21, 1
      %p60 = por %p58, %p59
      %p61 = scmp.ne.s32.totalorder %s50, %s51
      %p62 = scmp.eq.s32.totalorder %s21, 0
      %p63 = por %p61, %p62
      %p64 = scmp.ne.s32.totalorder %s50, %s51
      %p65 = scmp.eq.s32.totalorder %s22, 1
      %p66 = por %p64, %p65
      %p68 = scmp.ne.s32.totalorder %s51, %s67
      %p69 = scmp.eq.s32.totalorder %s22, 0
      %p70 = por %p68, %p69
      %s71 = ssub.s32 %s25, %s34
      %s72 = ssub.s32 %s24, %s38
      %s73 = sor.u32 %s71, %s72
      %p74 = scmp.eq.s32.totalorder %s73, 0
      %s76 = sadd.s32 %s75, 1
      %s77 = scalar_select %p74, %s75, %s76
      %p80 = pneg %p74
      %p81 = scmp.eq.s32.totalorder %s16, 1
      %p82 = por %p80, %p81
      %p83 = scmp.ne.s32.totalorder %s75, %s78
      %p84 = scmp.eq.s32.totalorder %s16, 0
      %p85 = por %p83, %p84
      %p86 = scmp.ne.s32.totalorder %s75, %s78
      %p87 = scmp.eq.s32.totalorder %s21, 1
      %p88 = por %p86, %p87
      %p89 = scmp.ne.s32.totalorder %s78, %s79
      %p90 = scmp.eq.s32.totalorder %s21, 0
      %p91 = por %p89, %p90
      %p92 = scmp.ne.s32.totalorder %s78, %s79
      %p93 = scmp.eq.s32.totalorder %s22, 1
      %p94 = por %p92, %p93
      %p96 = scmp.ne.s32.totalorder %s79, %s95
      %p97 = scmp.eq.s32.totalorder %s22, 0
      %p98 = por %p96, %p97
      %s99 = ssub.s32 %s24, %s38
      %p100 = scmp.eq.s32.totalorder %s99, 0
      %s102 = sadd.s32 %s101, 1
      %s103 = scalar_select %p100, %s101, %s102
      %p106 = pneg %p100
      %p107 = scmp.eq.s32.totalorder %s16, 1
      %p108 = por %p106, %p107
      %p109 = scmp.ne.s32.totalorder %s101, %s104
      %p110 = scmp.eq.s32.totalorder %s16, 0
      %p111 = por %p109, %p110
      %p112 = scmp.ne.s32.totalorder %s101, %s104
      %p113 = scmp.eq.s32.totalorder %s21, 1
      %p114 = por %p112, %p113
      %p115 = scmp.ne.s32.totalorder %s104, %s105
      %p116 = scmp.eq.s32.totalorder %s21, 0
      %p117 = por %p115, %p116
      %p118 = scmp.ne.s32.totalorder %s104, %s105
      %p119 = scmp.eq.s32.totalorder %s22, 1
      %p120 = por %p118, %p119
      %p122 = scmp.ne.s32.totalorder %s105, %s121
      %p123 = scmp.eq.s32.totalorder %s22, 0
      %p124 = por %p122, %p123
      %s125 = ssub.s32 %s23, %s42
      %s126 = ssub.s32 %s24, %s38
      %s127 = sor.u32 %s125, %s126
      %p128 = scmp.eq.s32.totalorder %s127, 0
      %s130 = sadd.s32 %s129, 1
      %s131 = scalar_select %p128, %s129, %s130
      %p134 = pneg %p128
      %p135 = scmp.eq.s32.totalorder %s16, 1
      %p136 = por %p134, %p135
      %p137 = scmp.ne.s32.totalorder %s129, %s132
      %p138 = scmp.eq.s32.totalorder %s16, 0
      %p139 = por %p137, %p138
      %p140 = scmp.ne.s32.totalorder %s129, %s132
      %p141 = scmp.eq.s32.totalorder %s21, 1
      %p142 = por %p140, %p141
      %p143 = scmp.ne.s32.totalorder %s132, %s133
      %p144 = scmp.eq.s32.totalorder %s21, 0
      %p145 = por %p143, %p144
      %p146 = scmp.ne.s32.totalorder %s132, %s133
      %p147 = scmp.eq.s32.totalorder %s22, 1
      %p148 = por %p146, %p147
      %p150 = scmp.ne.s32.totalorder %s133, %s149
      %p151 = scmp.eq.s32.totalorder %s22, 0
      %p152 = por %p150, %p151
      %p153 = scmp.le.s32.totalorder 1, %s16
      %p154 = scmp.lt.s32.totalorder %s16, 3
      %p155 = pnand %p153, %p154
      %p156 = pneg %p155
      // Predicated region
      $region9: #{model_forward.25} parent=5 // pred_check
        _
      $region10: #{model_forward.25} parent=5 // pred_check_branch
        %158 = sbr.rel (%p155) target = $region12
      $region11: #{model_forward.25} parent=5 // pred_region
        %s159 = ssub.s32 %s16, 1
        // Predicated region
        $region13: #{model_forward.25} parent=11 // pred_check
          %p160 = pneg %p91
        $region14: #{model_forward.25} parent=11 // pred_check_branch
          %162 = sbr.rel (%p160) target = $region16
        $region15: #{model_forward.25} parent=11 // pred_region
          %s163 = smul.u32 16, %s28
          %s165 = ssub.s32 1024, 1024
          %166 = vsyncadd [#allocation7], %s165
          %s167 = sadd.s32 %s27, %s163
          %s168 = smul.addr %s167, 64
          %s169 = scalar_lea.hbm %s1, %s168
          %s170 = sshll.u32 [#allocation6], 4
          %s171 = int_to_ptr.vmem [resolvable:$true] %s170
          %176 = dma.hbm_to_vmem [thread:$0]  %s169, 1024, %s171, [#allocation7], 64, 64, 4
        $region16: #{model_forward.25} parent=11 // pred_fallthru
          _
        // Predicated region
        $region17: #{model_forward.25} parent=11 // pred_check
          %p177 = pneg %p117
        $region18: #{model_forward.25} parent=11 // pred_check_branch
          %179 = sbr.rel (%p177) target = $region20
        $region19: #{model_forward.25} parent=11 // pred_region
          %s181 = ssub.s32 16, 16
          %182 = vsyncadd [#allocation7], %s181
          %s183 = smul.addr %s27, 16
          %s184 = scalar_lea.hbm %s2, %s183
          %s186 = sshll.u32 [#allocation8], 4
          %s187 = int_to_ptr.vmem [resolvable:$true] %s186
          %189 = dma.hbm_to_vmem [thread:$0]  %s184, 16, %s187, [#allocation7]
        $region20: #{model_forward.25} parent=11 // pred_fallthru
          _
      $region12: #{model_forward.25} parent=5 // pred_fallthru
        _
      %p190 = scmp.lt.s32.totalorder %s16, 2
      // Predicated region
      $region21: #{model_forward.25} parent=5 // pred_check
        %p191 = pneg %p190
      $region22: #{model_forward.25} parent=5 // pred_check_branch
        %193 = sbr.rel (%p191) target = $region24
      $region23: #{model_forward.25} parent=5 // pred_region
        // Predicated region
        $region25: #{model_forward.25} parent=23 // pred_check
          %p194 = pneg %p57
        $region26: #{model_forward.25} parent=23 // pred_check_branch
          %196 = sbr.rel (%p194) target = $region28
        $region27: #{model_forward.25} parent=23 // pred_region
          %s197 = sand.u32 %s47, 1
          %s198 = scalar_lea.sflag [#allocation4], %s197
          %s199 = sand.u32 %s47, 1
          %s200 = smul.addr %s199, 128
          %s201 = scalar_lea.vmem [#allocation3], %s200
          %s202 = smul.u32 32, %s23
          %s204 = ssub.s32 2048, 2048
          %205 = vsyncadd %s198, %s204
          %s206 = sadd.s32 %s25, %s202
          %s207 = smul.addr %s206, 64
          %s208 = scalar_lea.hbm %s0, %s207
          %s209 = sshll.u32 %s201, 4
          %s210 = int_to_ptr.vmem [resolvable:$true] %s209
          %215 = dma.hbm_to_vmem [thread:$0]  %s208, 2048, %s210, %s198, 64, 64, 4
        $region28: #{model_forward.25} parent=23 // pred_fallthru
          _
      $region24: #{model_forward.25} parent=5 // pred_fallthru
        _
      %p216 = scmp.le.s32.totalorder 1, %s16
      %p217 = scmp.lt.s32.totalorder %s16, 3
      %p218 = pnand %p216, %p217
      %p219 = pneg %p218
      // Predicated region
      $region29: #{model_forward.25} parent=5 // pred_check
        _
      $region30: #{model_forward.25} parent=5 // pred_check_branch
        %221 = sbr.rel (%p218) target = $region32
      $region31: #{model_forward.25} parent=5 // pred_region
        %s222 = ssub.s32 %s16, 1
        %s223 = sand.u32 %s50, 1
        %s224 = scalar_lea.sflag [#allocation4], %s223
        %s225 = sand.u32 %s50, 1
        %s226 = smul.addr %s225, 128
        %s227 = scalar_lea.vmem [#allocation3], %s226
        // Predicated region
        $region33: #{model_forward.25} parent=31 // pred_check
          %p228 = pneg %p63
        $region34: #{model_forward.25} parent=31 // pred_check_branch
          %230 = sbr.rel (%p228) target = $region36
        $region35: #{model_forward.25} parent=31 // pred_region
          %231 = dma.done %s224, 2048
        $region36: #{model_forward.25} parent=31 // pred_fallthru
          _
        // Predicated region
        $region37: #{model_forward.25} parent=31 // pred_check
          %p232 = pneg %p91
        $region38: #{model_forward.25} parent=31 // pred_check_branch
          %234 = sbr.rel (%p232) target = $region40
        $region39: #{model_forward.25} parent=31 // pred_region
          %235 = dma.done [#allocation7], 1024
        $region40: #{model_forward.25} parent=31 // pred_fallthru
          _
        // Predicated region
        $region41: #{model_forward.25} parent=31 // pred_check
          %p236 = pneg %p117
        $region42: #{model_forward.25} parent=31 // pred_check_branch
          %238 = sbr.rel (%p236) target = $region44
        $region43: #{model_forward.25} parent=31 // pred_region
          %239 = dma.done [#allocation7], 16
        $region44: #{model_forward.25} parent=31 // pred_fallthru
          _
        %s240 = sand.u32 %s50, 1
        %s241 = scalar_lea.sflag [#allocation4], %s240
        %s242 = sand.u32 %s50, 1
        %s243 = smul.addr %s242, 128
        %s244 = scalar_lea.vmem [#allocation3], %s243
        %p245 = pneg %p63
        %p246 = pneg %p60
        %p247 = pneg %p91
        %p248 = pneg %p88
        %p249 = pneg %p117
        %p250 = pneg %p114
        %p251 = pneg %p145
        %p252 = pneg %p142
        %s253 = sand.u32 %s132, 1
        %s254 = scalar_lea.sflag [#allocation5], %s253
        %s255 = sand.u32 %s132, 1
        %s256 = smul.addr %s255, 256
        %s257 = scalar_lea.vmem [#allocation9], %s256
        %s258 = smul.u32 32, %s26
        %s259 = smul.u32 16, %s28
        %s260 = smul.u32 32, %s26
        %p262 = scmp.eq.s32.totalorder %s28, 0
        // Predicated region
        $region45: #{model_forward.25} parent=31 // pred_check
          %p263 = pneg %p262
        $region46: #{model_forward.25} parent=31 // pred_check_branch
          %265 = sbr.rel (%p263) target = $region48
        $region47: #{model_forward.25} parent=31 // pred_region
          %266 = vst [vmem:[#allocation2] sm:$0xff] 0.0
          %267 = vst [vmem:[#allocation2 + $0x8] sm:$0xff] 0.0
          %268 = vst [vmem:[#allocation2 + $0x10] sm:$0xff] 0.0
          %269 = vst [vmem:[#allocation2 + $0x18] sm:$0xff] 0.0
          %270 = vst [vmem:[#allocation2 + $0x20] sm:$0xff] 0.0
          %271 = vst [vmem:[#allocation2 + $0x28] sm:$0xff] 0.0
          %272 = vst [vmem:[#allocation2 + $0x30] sm:$0xff] 0.0
          %273 = vst [vmem:[#allocation2 + $0x38] sm:$0xff] 0.0
          %274 = vst [vmem:[#allocation2 + $0x40] sm:$0xff] 0.0
          %275 = vst [vmem:[#allocation2 + $0x48] sm:$0xff] 0.0
          %276 = vst [vmem:[#allocation2 + $0x50] sm:$0xff] 0.0
          %277 = vst [vmem:[#allocation2 + $0x58] sm:$0xff] 0.0
          %278 = vst [vmem:[#allocation2 + $0x60] sm:$0xff] 0.0
          %279 = vst [vmem:[#allocation2 + $0x68] sm:$0xff] 0.0
          %280 = vst [vmem:[#allocation2 + $0x70] sm:$0xff] 0.0
          %281 = vst [vmem:[#allocation2 + $0x78] sm:$0xff] 0.0
          %282 = vst [vmem:[#allocation2 + $0x80] sm:$0xff] 0.0
          %283 = vst [vmem:[#allocation2 + $0x88] sm:$0xff] 0.0
          %284 = vst [vmem:[#allocation2 + $0x90] sm:$0xff] 0.0
          %285 = vst [vmem:[#allocation2 + $0x98] sm:$0xff] 0.0
          %286 = vst [vmem:[#allocation2 + $0xa0] sm:$0xff] 0.0
          %287 = vst [vmem:[#allocation2 + $0xa8] sm:$0xff] 0.0
          %288 = vst [vmem:[#allocation2 + $0xb0] sm:$0xff] 0.0
          %289 = vst [vmem:[#allocation2 + $0xb8] sm:$0xff] 0.0
          %290 = vst [vmem:[#allocation2 + $0xc0] sm:$0xff] 0.0
          %291 = vst [vmem:[#allocation2 + $0xc8] sm:$0xff] 0.0
          %292 = vst [vmem:[#allocation2 + $0xd0] sm:$0xff] 0.0
          %293 = vst [vmem:[#allocation2 + $0xd8] sm:$0xff] 0.0
          %294 = vst [vmem:[#allocation2 + $0xe0] sm:$0xff] 0.0
          %295 = vst [vmem:[#allocation2 + $0xe8] sm:$0xff] 0.0
          %296 = vst [vmem:[#allocation2 + $0xf0] sm:$0xff] 0.0
          %297 = vst [vmem:[#allocation2 + $0xf8] sm:$0xff] 0.0
        $region48: #{model_forward.25} parent=31 // pred_fallthru
          _
        %v298 = vld [vmem:[#allocation2] sm:$0xff]
        %v299 = vld [vmem:[#allocation2 + $0x8] sm:$0xff]
        %v300 = vld [vmem:[#allocation2 + $0x10] sm:$0xff]
        %v301 = vld [vmem:[#allocation2 + $0x18] sm:$0xff]
        %v302 = vld [vmem:[#allocation2 + $0x20] sm:$0xff]
        %v303 = vld [vmem:[#allocation2 + $0x28] sm:$0xff]
        %v304 = vld [vmem:[#allocation2 + $0x30] sm:$0xff]
        %v305 = vld [vmem:[#allocation2 + $0x38] sm:$0xff]
        %v306 = vld [vmem:[#allocation2 + $0x40] sm:$0xff]
        %v307 = vld [vmem:[#allocation2 + $0x48] sm:$0xff]
        %v308 = vld [vmem:[#allocation2 + $0x50] sm:$0xff]
        %v309 = vld [vmem:[#allocation2 + $0x58] sm:$0xff]
        %v310 = vld [vmem:[#allocation2 + $0x60] sm:$0xff]
        %v311 = vld [vmem:[#allocation2 + $0x68] sm:$0xff]
        %v312 = vld [vmem:[#allocation2 + $0x70] sm:$0xff]
        %v313 = vld [vmem:[#allocation2 + $0x78] sm:$0xff]
        %v314 = vld [vmem:[#allocation2 + $0x80] sm:$0xff]
        %v315 = vld [vmem:[#allocation2 + $0x88] sm:$0xff]
        %v316 = vld [vmem:[#allocation2 + $0x90] sm:$0xff]
        %v317 = vld [vmem:[#allocation2 + $0x98] sm:$0xff]
        %v318 = vld [vmem:[#allocation2 + $0xa0] sm:$0xff]
        %v319 = vld [vmem:[#allocation2 + $0xa8] sm:$0xff]
        %v320 = vld [vmem:[#allocation2 + $0xb0] sm:$0xff]
        %v321 = vld [vmem:[#allocation2 + $0xb8] sm:$0xff]
        %v322 = vld [vmem:[#allocation2 + $0xc0] sm:$0xff]
        %v323 = vld [vmem:[#allocation2 + $0xc8] sm:$0xff]
        %v324 = vld [vmem:[#allocation2 + $0xd0] sm:$0xff]
        %v325 = vld [vmem:[#allocation2 + $0xd8] sm:$0xff]
        %v326 = vld [vmem:[#allocation2 + $0xe0] sm:$0xff]
        %v327 = vld [vmem:[#allocation2 + $0xe8] sm:$0xff]
        %v328 = vld [vmem:[#allocation2 + $0xf0] sm:$0xff]
        %v329 = vld [vmem:[#allocation2 + $0xf8] sm:$0xff]
        %v330 = vld [vmem:[%s227] sm:$0xf]
        %v331 = vld [vmem:[%s227 + $0x4] sm:$0xf]
        %v332 = vld [vmem:[%s227 + $0x8] sm:$0xf]
        %v333 = vld [vmem:[%s227 + $0xc] sm:$0xf]
        %v334 = vld [vmem:[%s227 + $0x10] sm:$0xf]
        %v335 = vld [vmem:[%s227 + $0x14] sm:$0xf]
        %v336 = vld [vmem:[%s227 + $0x18] sm:$0xf]
        %v337 = vld [vmem:[%s227 + $0x1c] sm:$0xf]
        %v338 = vld [vmem:[%s227 + $0x20] sm:$0xf]
        %v339 = vld [vmem:[%s227 + $0x24] sm:$0xf]
        %v340 = vld [vmem:[%s227 + $0x28] sm:$0xf]
        %v341 = vld [vmem:[%s227 + $0x2c] sm:$0xf]
        %v342 = vld [vmem:[%s227 + $0x30] sm:$0xf]
        %v343 = vld [vmem:[%s227 + $0x34] sm:$0xf]
        %v344 = vld [vmem:[%s227 + $0x38] sm:$0xf]
        %v345 = vld [vmem:[%s227 + $0x3c] sm:$0xf]
        %v346 = vld [vmem:[%s227 + $0x40] sm:$0xf]
        %v347 = vld [vmem:[%s227 + $0x44] sm:$0xf]
        %v348 = vld [vmem:[%s227 + $0x48] sm:$0xf]
        %v349 = vld [vmem:[%s227 + $0x4c] sm:$0xf]
        %v350 = vld [vmem:[%s227 + $0x50] sm:$0xf]
        %v351 = vld [vmem:[%s227 + $0x54] sm:$0xf]
        %v352 = vld [vmem:[%s227 + $0x58] sm:$0xf]
        %v353 = vld [vmem:[%s227 + $0x5c] sm:$0xf]
        %v354 = vld [vmem:[%s227 + $0x60] sm:$0xf]
        %v355 = vld [vmem:[%s227 + $0x64] sm:$0xf]
        %v356 = vld [vmem:[%s227 + $0x68] sm:$0xf]
        %v357 = vld [vmem:[%s227 + $0x6c] sm:$0xf]
        %v358 = vld [vmem:[%s227 + $0x70] sm:$0xf]
        %v359 = vld [vmem:[%s227 + $0x74] sm:$0xf]
        %v360 = vld [vmem:[%s227 + $0x78] sm:$0xf]
        %v361 = vld [vmem:[%s227 + $0x7c] sm:$0xf]
        %v362 = vld [vmem:[#allocation6] sm:$0xf]
        %v363 = vld [vmem:[#allocation6 + $0x4] sm:$0xf]
        %v364 = vld [vmem:[#allocation6 + $0x8] sm:$0xf]
        %v365 = vld [vmem:[#allocation6 + $0xc] sm:$0xf]
        %v366 = vld [vmem:[#allocation6 + $0x10] sm:$0xf]
        %v367 = vld [vmem:[#allocation6 + $0x14] sm:$0xf]
        %v368 = vld [vmem:[#allocation6 + $0x18] sm:$0xf]
        %v369 = vld [vmem:[#allocation6 + $0x1c] sm:$0xf]
        %v370 = vld [vmem:[#allocation6 + $0x20] sm:$0xf]
        %v371 = vld [vmem:[#allocation6 + $0x24] sm:$0xf]
        %v372 = vld [vmem:[#allocation6 + $0x28] sm:$0xf]
        %v373 = vld [vmem:[#allocation6 + $0x2c] sm:$0xf]
        %v374 = vld [vmem:[#allocation6 + $0x30] sm:$0xf]
        %v375 = vld [vmem:[#allocation6 + $0x34] sm:$0xf]
        %v376 = vld [vmem:[#allocation6 + $0x38] sm:$0xf]
        %v377 = vld [vmem:[#allocation6 + $0x3c] sm:$0xf]
        %v410 = vunpack.c.l.b16 %v330
        %v411 = vunpack.c.l.b16 %v331
        %v412 = vunpack.c.l.b16 %v332
        %v413 = vunpack.c.l.b16 %v333
        %v414 = vunpack.c.l.b16 %v334
        %v415 = vunpack.c.l.b16 %v335
        %v416 = vunpack.c.l.b16 %v336
        %v417 = vunpack.c.l.b16 %v337
        %v418 = vunpack.c.l.b16 %v338
        %v419 = vunpack.c.l.b16 %v339
        %v420 = vunpack.c.l.b16 %v340
        %v421 = vunpack.c.l.b16 %v341
        %v422 = vunpack.c.l.b16 %v342
        %v423 = vunpack.c.l.b16 %v343
        %v424 = vunpack.c.l.b16 %v344
        %v425 = vunpack.c.l.b16 %v345
        %v426 = vunpack.c.l.b16 %v346
        %v427 = vunpack.c.l.b16 %v347
        %v428 = vunpack.c.l.b16 %v348
        %v429 = vunpack.c.l.b16 %v349
        %v430 = vunpack.c.l.b16 %v350
        %v431 = vunpack.c.l.b16 %v351
        %v432 = vunpack.c.l.b16 %v352
        %v433 = vunpack.c.l.b16 %v353
        %v434 = vunpack.c.l.b16 %v354
        %v435 = vunpack.c.l.b16 %v355
        %v436 = vunpack.c.l.b16 %v356
        %v437 = vunpack.c.l.b16 %v357
        %v438 = vunpack.c.l.b16 %v358
        %v439 = vunpack.c.l.b16 %v359
        %v440 = vunpack.c.l.b16 %v360
        %v441 = vunpack.c.l.b16 %v361
        %v442 = vpack.c.b16 %v411, %v410
        %v443 = vpack.c.b16 %v413, %v412
        %v444 = vpack.c.b16 %v415, %v414
        %v445 = vpack.c.b16 %v417, %v416
        %v446 = vpack.c.b16 %v419, %v418
        %v447 = vpack.c.b16 %v421, %v420
        %v448 = vpack.c.b16 %v423, %v422
        %v449 = vpack.c.b16 %v425, %v424
        %v450 = vpack.c.b16 %v427, %v426
        %v451 = vpack.c.b16 %v429, %v428
        %v452 = vpack.c.b16 %v431, %v430
        %v453 = vpack.c.b16 %v433, %v432
        %v454 = vpack.c.b16 %v435, %v434
        %v455 = vpack.c.b16 %v437, %v436
        %v456 = vpack.c.b16 %v439, %v438
        %v457 = vpack.c.b16 %v441, %v440
        %v490 = vunpack.c.l.b16 %v362
        %v491 = vunpack.c.l.b16 %v363
        %v492 = vunpack.c.l.b16 %v364
        %v493 = vunpack.c.l.b16 %v365
        %v494 = vunpack.c.l.b16 %v366
        %v495 = vunpack.c.l.b16 %v367
        %v496 = vunpack.c.l.b16 %v368
        %v497 = vunpack.c.l.b16 %v369
        %v498 = vunpack.c.l.b16 %v370
        %v499 = vunpack.c.l.b16 %v371
        %v500 = vunpack.c.l.b16 %v372
        %v501 = vunpack.c.l.b16 %v373
        %v502 = vunpack.c.l.b16 %v374
        %v503 = vunpack.c.l.b16 %v375
        %v504 = vunpack.c.l.b16 %v376
        %v505 = vunpack.c.l.b16 %v377
        %v506 = vpack.c.b16 %v491, %v490
        %v507 = vpack.c.b16 %v493, %v492
        %v508 = vpack.c.b16 %v495, %v494
        %v509 = vpack.c.b16 %v497, %v496
        %v510 = vpack.c.b16 %v499, %v498
        %v511 = vpack.c.b16 %v501, %v500
        %v512 = vpack.c.b16 %v503, %v502
        %v513 = vpack.c.b16 %v505, %v504
        %522 = vmatprep.subr.bf16.mxu0 0
        %523 = vmatpush1.bf16.msra.mxu0 %v506
        %524 = vmatprep.subr.bf16.mxu0 0
        %525 = vmatpush1.bf16.msra.mxu0 %v507
        %526 = vmatprep.subr.bf16.mxu0 0
        %527 = vmatpush1.bf16.msra.mxu0 %v508
        %528 = vmatprep.subr.bf16.mxu0 0
        %529 = vmatpush1.bf16.msra.mxu0 %v509
        %530 = vmatprep.subr.bf16.mxu0 0
        %531 = vmatpush1.bf16.msra.mxu0 %v510
        %532 = vmatprep.subr.bf16.mxu0 0
        %533 = vmatpush1.bf16.msra.mxu0 %v511
        %534 = vmatprep.subr.bf16.mxu0 0
        %535 = vmatpush1.bf16.msra.mxu0 %v512
        %536 = vmatprep.subr.bf16.mxu0 0
        %537 = vmatpush1.bf16.msra.mxu0 %v513
        %538 = vmatprep.subr.bf16.mxu0 0
        %539 = vmatpush1.bf16.msra.mxu0 0
        %540 = vmatprep.subr.bf16.mxu0 0
        %541 = vmatpush1.bf16.msra.mxu0 0
        %542 = vmatprep.subr.bf16.mxu0 0
        %543 = vmatpush1.bf16.msra.mxu0 0
        %544 = vmatprep.subr.bf16.mxu0 0
        %545 = vmatpush1.bf16.msra.mxu0 0
        %546 = vmatprep.subr.bf16.mxu0 0
        %547 = vmatpush1.bf16.msra.mxu0 0
        %548 = vmatprep.subr.bf16.mxu0 0
        %549 = vmatpush1.bf16.msra.mxu0 0
        %550 = vmatprep.subr.bf16.mxu0 0
        %551 = vmatpush1.bf16.msra.mxu0 0
        %552 = vmatprep.subr.bf16.mxu0 0
        %553 = vmatpush1.bf16.msra.mxu0 0
        %554 = vmatprep.mubr.bf16.mxu0 0
        %555 = vmatmul.mubr.bf16.gmra.mrb[0].mxu0 %v442
        %v556 = vpop.f32.mrb[0].mxu0
        %v557 = vadd.f32 0.0, %v556
        %v558 = vpop.f32.mrb[0].mxu0
        %v559 = vpop.f32.mrb[0].mxu0
        %v560 = vadd.f32 0.0, %v559
        %v561 = vpop.f32.mrb[0].mxu0
        %562 = vmatprep.mubr.bf16.mxu0 0
        %563 = vmatmul.mubr.bf16.gmra.mrb[0].mxu0 %v443
        %v564 = vpop.f32.mrb[0].mxu0
        %v565 = vadd.f32 0.0, %v564
        %v566 = vpop.f32.mrb[0].mxu0
        %v567 = vpop.f32.mrb[0].mxu0
        %v568 = vadd.f32 0.0, %v567
        %v569 = vpop.f32.mrb[0].mxu0
        %570 = vmatprep.mubr.bf16.mxu0 0
        %571 = vmatmul.mubr.bf16.gmra.mrb[0].mxu0 %v444
        %v572 = vpop.f32.mrb[0].mxu0
        %v573 = vadd.f32 0.0, %v572
        %v574 = vpop.f32.mrb[0].mxu0
        %v575 = vpop.f32.mrb[0].mxu0
        %v576 = vadd.f32 0.0, %v575
        %v577 = vpop.f32.mrb[0].mxu0
        %578 = vmatprep.mubr.bf16.mxu0 0
        %579 = vmatmul.mubr.bf16.gmra.mrb[0].mxu0 %v445
        %v580 = vpop.f32.mrb[0].mxu0
        %v581 = vadd.f32 0.0, %v580
        %v582 = vpop.f32.mrb[0].mxu0
        %v583 = vpop.f32.mrb[0].mxu0
        %v584 = vadd.f32 0.0, %v583
        %v585 = vpop.f32.mrb[0].mxu0
        %586 = vmatprep.mubr.bf16.mxu0 0
        %587 = vmatmul.mubr.bf16.gmra.mrb[0].mxu0 %v446
        %v588 = vpop.f32.mrb[0].mxu0
        %v589 = vadd.f32 0.0, %v588
        %v590 = vpop.f32.mrb[0].mxu0
        %v591 = vpop.f32.mrb[0].mxu0
        %v592 = vadd.f32 0.0, %v591
        %v593 = vpop.f32.mrb[0].mxu0
        %594 = vmatprep.mubr.bf16.mxu0 0
        %595 = vmatmul.mubr.bf16.gmra.mrb[0].mxu0 %v447
        %v596 = vpop.f32.mrb[0].mxu0
        %v597 = vadd.f32 0.0, %v596
        %v598 = vpop.f32.mrb[0].mxu0
        %v599 = vpop.f32.mrb[0].mxu0
        %v600 = vadd.f32 0.0, %v599
        %v601 = vpop.f32.mrb[0].mxu0
        %602 = vmatprep.mubr.bf16.mxu0 0
        %603 = vmatmul.mubr.bf16.gmra.mrb[0].mxu0 %v448
        %v604 = vpop.f32.mrb[0].mxu0
        %v605 = vadd.f32 0.0, %v604
        %v606 = vpop.f32.mrb[0].mxu0
        %v607 = vpop.f32.mrb[0].mxu0
        %v608 = vadd.f32 0.0, %v607
        %v609 = vpop.f32.mrb[0].mxu0
        %610 = vmatprep.mubr.bf16.mxu0 0
        %611 = vmatmul.mubr.bf16.gmra.mrb[0].mxu0 %v449
        %v612 = vpop.f32.mrb[0].mxu0
        %v613 = vadd.f32 0.0, %v612
        %v614 = vpop.f32.mrb[0].mxu0
        %v615 = vpop.f32.mrb[0].mxu0
        %v616 = vadd.f32 0.0, %v615
        %v617 = vpop.f32.mrb[0].mxu0
        %618 = vmatprep.mubr.bf16.mxu0 0
        %619 = vmatmul.mubr.bf16.gmra.mrb[0].mxu0 %v450
        %v620 = vpop.f32.mrb[0].mxu0
        %v621 = vadd.f32 0.0, %v620
        %v622 = vpop.f32.mrb[0].mxu0
        %v623 = vpop.f32.mrb[0].mxu0
        %v624 = vadd.f32 0.0, %v623
        %v625 = vpop.f32.mrb[0].mxu0
        %626 = vmatprep.mubr.bf16.mxu0 0
        %627 = vmatmul.mubr.bf16.gmra.mrb[0].mxu0 %v451
        %v628 = vpop.f32.mrb[0].mxu0
        %v629 = vadd.f32 0.0, %v628
        %v630 = vpop.f32.mrb[0].mxu0
        %v631 = vpop.f32.mrb[0].mxu0
        %v632 = vadd.f32 0.0, %v631
        %v633 = vpop.f32.mrb[0].mxu0
        %634 = vmatprep.mubr.bf16.mxu0 0
        %635 = vmatmul.mubr.bf16.gmra.mrb[0].mxu0 %v452
        %v636 = vpop.f32.mrb[0].mxu0
        %v637 = vadd.f32 0.0, %v636
        %v638 = vpop.f32.mrb[0].mxu0
        %v639 = vpop.f32.mrb[0].mxu0
        %v640 = vadd.f32 0.0, %v639
        %v641 = vpop.f32.mrb[0].mxu0
        %642 = vmatprep.mubr.bf16.mxu0 0
        %643 = vmatmul.mubr.bf16.gmra.mrb[0].mxu0 %v453
        %v644 = vpop.f32.mrb[0].mxu0
        %v645 = vadd.f32 0.0, %v644
        %v646 = vpop.f32.mrb[0].mxu0
        %v647 = vpop.f32.mrb[0].mxu0
        %v648 = vadd.f32 0.0, %v647
        %v649 = vpop.f32.mrb[0].mxu0
        %650 = vmatprep.mubr.bf16.mxu0 0
        %651 = vmatmul.mubr.bf16.gmra.mrb[0].mxu0 %v454
        %v652 = vpop.f32.mrb[0].mxu0
        %v653 = vadd.f32 0.0, %v652
        %v654 = vpop.f32.mrb[0].mxu0
        %v655 = vpop.f32.mrb[0].mxu0
        %v656 = vadd.f32 0.0, %v655
        %v657 = vpop.f32.mrb[0].mxu0
        %658 = vmatprep.mubr.bf16.mxu0 0
        %659 = vmatmul.mubr.bf16.gmra.mrb[0].mxu0 %v455
        %v660 = vpop.f32.mrb[0].mxu0
        %v661 = vadd.f32 0.0, %v660
        %v662 = vpop.f32.mrb[0].mxu0
        %v663 = vpop.f32.mrb[0].mxu0
        %v664 = vadd.f32 0.0, %v663
        %v665 = vpop.f32.mrb[0].mxu0
        %666 = vmatprep.mubr.bf16.mxu0 0
        %667 = vmatmul.mubr.bf16.gmra.mrb[0].mxu0 %v456
        %v668 = vpop.f32.mrb[0].mxu0
        %v669 = vadd.f32 0.0, %v668
        %v670 = vpop.f32.mrb[0].mxu0
        %v671 = vpop.f32.mrb[0].mxu0
        %v672 = vadd.f32 0.0, %v671
        %v673 = vpop.f32.mrb[0].mxu0
        %674 = vmatprep.mubr.bf16.mxu0 0
        %675 = vmatmul.mubr.bf16.gmra.mrb[0].mxu0 %v457
        %v676 = vpop.f32.mrb[0].mxu0
        %v677 = vadd.f32 0.0, %v676
        %v678 = vpop.f32.mrb[0].mxu0
        %v679 = vpop.f32.mrb[0].mxu0
        %v680 = vadd.f32 0.0, %v679
        %v681 = vpop.f32.mrb[0].mxu0
        %682 = vdwg.mxu0
        %v683 = vadd.f32 %v298, %v557
        %v684 = vadd.f32 %v299, %v560
        %v685 = vadd.f32 %v300, %v565
        %v686 = vadd.f32 %v301, %v568
        %v687 = vadd.f32 %v302, %v573
        %v688 = vadd.f32 %v303, %v576
        %v689 = vadd.f32 %v304, %v581
        %v690 = vadd.f32 %v305, %v584
        %v691 = vadd.f32 %v306, %v589
        %v692 = vadd.f32 %v307, %v592
        %v693 = vadd.f32 %v308, %v597
        %v694 = vadd.f32 %v309, %v600
        %v695 = vadd.f32 %v310, %v605
        %v696 = vadd.f32 %v311, %v608
        %v697 = vadd.f32 %v312, %v613
        %v698 = vadd.f32 %v313, %v616
        %v699 = vadd.f32 %v314, %v621
        %v700 = vadd.f32 %v315, %v624
        %v701 = vadd.f32 %v316, %v629
        %v702 = vadd.f32 %v317, %v632
        %v703 = vadd.f32 %v318, %v637
        %v704 = vadd.f32 %v319, %v640
        %v705 = vadd.f32 %v320, %v645
        %v706 = vadd.f32 %v321, %v648
        %v707 = vadd.f32 %v322, %v653
        %v708 = vadd.f32 %v323, %v656
        %v709 = vadd.f32 %v324, %v661
        %v710 = vadd.f32 %v325, %v664
        %v711 = vadd.f32 %v326, %v669
        %v712 = vadd.f32 %v327, %v672
        %v713 = vadd.f32 %v328, %v677
        %v714 = vadd.f32 %v329, %v680
        %715 = vst [vmem:[#allocation2] sm:$0xff] %v683
        %716 = vst [vmem:[#allocation2 + $0x8] sm:$0xff] %v684
        %717 = vst [vmem:[#allocation2 + $0x10] sm:$0xff] %v685
        %718 = vst [vmem:[#allocation2 + $0x18] sm:$0xff] %v686
        %719 = vst [vmem:[#allocation2 + $0x20] sm:$0xff] %v687
        %720 = vst [vmem:[#allocation2 + $0x28] sm:$0xff] %v688
        %721 = vst [vmem:[#allocation2 + $0x30] sm:$0xff] %v689
        %722 = vst [vmem:[#allocation2 + $0x38] sm:$0xff] %v690
        %723 = vst [vmem:[#allocation2 + $0x40] sm:$0xff] %v691
        %724 = vst [vmem:[#allocation2 + $0x48] sm:$0xff] %v692
        %725 = vst [vmem:[#allocation2 + $0x50] sm:$0xff] %v693
        %726 = vst [vmem:[#allocation2 + $0x58] sm:$0xff] %v694
        %727 = vst [vmem:[#allocation2 + $0x60] sm:$0xff] %v695
        %728 = vst [vmem:[#allocation2 + $0x68] sm:$0xff] %v696
        %729 = vst [vmem:[#allocation2 + $0x70] sm:$0xff] %v697
        %730 = vst [vmem:[#allocation2 + $0x78] sm:$0xff] %v698
        %731 = vst [vmem:[#allocation2 + $0x80] sm:$0xff] %v699
        %732 = vst [vmem:[#allocation2 + $0x88] sm:$0xff] %v700
        %733 = vst [vmem:[#allocation2 + $0x90] sm:$0xff] %v701
        %734 = vst [vmem:[#allocation2 + $0x98] sm:$0xff] %v702
        %735 = vst [vmem:[#allocation2 + $0xa0] sm:$0xff] %v703
        %736 = vst [vmem:[#allocation2 + $0xa8] sm:$0xff] %v704
        %737 = vst [vmem:[#allocation2 + $0xb0] sm:$0xff] %v705
        %738 = vst [vmem:[#allocation2 + $0xb8] sm:$0xff] %v706
        %739 = vst [vmem:[#allocation2 + $0xc0] sm:$0xff] %v707
        %740 = vst [vmem:[#allocation2 + $0xc8] sm:$0xff] %v708
        %741 = vst [vmem:[#allocation2 + $0xd0] sm:$0xff] %v709
        %742 = vst [vmem:[#allocation2 + $0xd8] sm:$0xff] %v710
        %743 = vst [vmem:[#allocation2 + $0xe0] sm:$0xff] %v711
        %744 = vst [vmem:[#allocation2 + $0xe8] sm:$0xff] %v712
        %745 = vst [vmem:[#allocation2 + $0xf0] sm:$0xff] %v713
        %746 = vst [vmem:[#allocation2 + $0xf8] sm:$0xff] %v714
        // Predicated region
        $region49: #{model_forward.25} parent=31 // pred_check
          %p747 = pneg %p262
        $region50: #{model_forward.25} parent=31 // pred_check_branch
          %749 = sbr.rel (%p747) target = $region52
        $region51: #{model_forward.25} parent=31 // pred_region
          %v750 = vld [vmem:[#allocation2] sm:$0xff]
          %v751 = vld [vmem:[#allocation2 + $0x8] sm:$0xff]
          %v752 = vld [vmem:[#allocation2 + $0x10] sm:$0xff]
          %v753 = vld [vmem:[#allocation2 + $0x18] sm:$0xff]
          %v754 = vld [vmem:[#allocation2 + $0x20] sm:$0xff]
          %v755 = vld [vmem:[#allocation2 + $0x28] sm:$0xff]
          %v756 = vld [vmem:[#allocation2 + $0x30] sm:$0xff]
          %v757 = vld [vmem:[#allocation2 + $0x38] sm:$0xff]
          %v758 = vld [vmem:[#allocation2 + $0x40] sm:$0xff]
          %v759 = vld [vmem:[#allocation2 + $0x48] sm:$0xff]
          %v760 = vld [vmem:[#allocation2 + $0x50] sm:$0xff]
          %v761 = vld [vmem:[#allocation2 + $0x58] sm:$0xff]
          %v762 = vld [vmem:[#allocation2 + $0x60] sm:$0xff]
          %v763 = vld [vmem:[#allocation2 + $0x68] sm:$0xff]
          %v764 = vld [vmem:[#allocation2 + $0x70] sm:$0xff]
          %v765 = vld [vmem:[#allocation2 + $0x78] sm:$0xff]
          %v766 = vld [vmem:[#allocation2 + $0x80] sm:$0xff]
          %v767 = vld [vmem:[#allocation2 + $0x88] sm:$0xff]
          %v768 = vld [vmem:[#allocation2 + $0x90] sm:$0xff]
          %v769 = vld [vmem:[#allocation2 + $0x98] sm:$0xff]
          %v770 = vld [vmem:[#allocation2 + $0xa0] sm:$0xff]
          %v771 = vld [vmem:[#allocation2 + $0xa8] sm:$0xff]
          %v772 = vld [vmem:[#allocation2 + $0xb0] sm:$0xff]
          %v773 = vld [vmem:[#allocation2 + $0xb8] sm:$0xff]
          %v774 = vld [vmem:[#allocation2 + $0xc0] sm:$0xff]
          %v775 = vld [vmem:[#allocation2 + $0xc8] sm:$0xff]
          %v776 = vld [vmem:[#allocation2 + $0xd0] sm:$0xff]
          %v777 = vld [vmem:[#allocation2 + $0xd8] sm:$0xff]
          %v778 = vld [vmem:[#allocation2 + $0xe0] sm:$0xff]
          %v779 = vld [vmem:[#allocation2 + $0xe8] sm:$0xff]
          %v780 = vld [vmem:[#allocation2 + $0xf0] sm:$0xff]
          %v781 = vld [vmem:[#allocation2 + $0xf8] sm:$0xff]
          %v782 = vld [vmem:[#allocation8] sm:$0x1]
          %v784 = vlaneseq
          %v785 = vshrl.u32 %v784, 7
          %v786 = vsub.s32 0, %v785
          %v787 = vrot.slane %v782, %v786
          %v789 = vadd.f32 %v750, %v787
          %v790 = vadd.f32 %v751, %v787
          %v791 = vadd.f32 %v752, %v787
          %v792 = vadd.f32 %v753, %v787
          %v793 = vadd.f32 %v754, %v787
          %v794 = vadd.f32 %v755, %v787
          %v795 = vadd.f32 %v756, %v787
          %v796 = vadd.f32 %v757, %v787
          %v797 = vadd.f32 %v758, %v787
          %v798 = vadd.f32 %v759, %v787
          %v799 = vadd.f32 %v760, %v787
          %v800 = vadd.f32 %v761, %v787
          %v801 = vadd.f32 %v762, %v787
          %v802 = vadd.f32 %v763, %v787
          %v803 = vadd.f32 %v764, %v787
          %v804 = vadd.f32 %v765, %v787
          %v805 = vadd.f32 %v766, %v787
          %v806 = vadd.f32 %v767, %v787
          %v807 = vadd.f32 %v768, %v787
          %v808 = vadd.f32 %v769, %v787
          %v809 = vadd.f32 %v770, %v787
          %v810 = vadd.f32 %v771, %v787
          %v811 = vadd.f32 %v772, %v787
          %v812 = vadd.f32 %v773, %v787
          %v813 = vadd.f32 %v774, %v787
          %v814 = vadd.f32 %v775, %v787
          %v815 = vadd.f32 %v776, %v787
          %v816 = vadd.f32 %v777, %v787
          %v817 = vadd.f32 %v778, %v787
          %v818 = vadd.f32 %v779, %v787
          %v819 = vadd.f32 %v780, %v787
          %v820 = vadd.f32 %v781, %v787
          %v821 = vadd.f32 %v789, 3.0
          %v822 = vadd.f32 %v790, 3.0
          %v823 = vadd.f32 %v791, 3.0
          %v824 = vadd.f32 %v792, 3.0
          %v825 = vadd.f32 %v793, 3.0
          %v826 = vadd.f32 %v794, 3.0
          %v827 = vadd.f32 %v795, 3.0
          %v828 = vadd.f32 %v796, 3.0
          %v829 = vadd.f32 %v797, 3.0
          %v830 = vadd.f32 %v798, 3.0
          %v831 = vadd.f32 %v799, 3.0
          %v832 = vadd.f32 %v800, 3.0
          %v833 = vadd.f32 %v801, 3.0
          %v834 = vadd.f32 %v802, 3.0
          %v835 = vadd.f32 %v803, 3.0
          %v836 = vadd.f32 %v804, 3.0
          %v837 = vadd.f32 %v805, 3.0
          %v838 = vadd.f32 %v806, 3.0
          %v839 = vadd.f32 %v807, 3.0
          %v840 = vadd.f32 %v808, 3.0
          %v841 = vadd.f32 %v809, 3.0
          %v842 = vadd.f32 %v810, 3.0
          %v843 = vadd.f32 %v811, 3.0
          %v844 = vadd.f32 %v812, 3.0
          %v845 = vadd.f32 %v813, 3.0
          %v846 = vadd.f32 %v814, 3.0
          %v847 = vadd.f32 %v815, 3.0
          %v848 = vadd.f32 %v816, 3.0
          %v849 = vadd.f32 %v817, 3.0
          %v850 = vadd.f32 %v818, 3.0
          %v851 = vadd.f32 %v819, 3.0
          %v852 = vadd.f32 %v820, 3.0
          %v853 = vmax.f32 %v821, 0.0
          %v854 = vmax.f32 %v822, 0.0
          %v855 = vmax.f32 %v823, 0.0
          %v856 = vmax.f32 %v824, 0.0
          %v857 = vmax.f32 %v825, 0.0
          %v858 = vmax.f32 %v826, 0.0
          %v859 = vmax.f32 %v827, 0.0
          %v860 = vmax.f32 %v828, 0.0
          %v861 = vmax.f32 %v829, 0.0
          %v862 = vmax.f32 %v830, 0.0
          %v863 = vmax.f32 %v831, 0.0
          %v864 = vmax.f32 %v832, 0.0
          %v865 = vmax.f32 %v833, 0.0
          %v866 = vmax.f32 %v834, 0.0
          %v867 = vmax.f32 %v835, 0.0
          %v868 = vmax.f32 %v836, 0.0
          %v869 = vmax.f32 %v837, 0.0
          %v870 = vmax.f32 %v838, 0.0
          %v871 = vmax.f32 %v839, 0.0
          %v872 = vmax.f32 %v840, 0.0
          %v873 = vmax.f32 %v841, 0.0
          %v874 = vmax.f32 %v842, 0.0
          %v875 = vmax.f32 %v843, 0.0
          %v876 = vmax.f32 %v844, 0.0
          %v877 = vmax.f32 %v845, 0.0
          %v878 = vmax.f32 %v846, 0.0
          %v879 = vmax.f32 %v847, 0.0
          %v880 = vmax.f32 %v848, 0.0
          %v881 = vmax.f32 %v849, 0.0
          %v882 = vmax.f32 %v850, 0.0
          %v883 = vmax.f32 %v851, 0.0
          %v884 = vmax.f32 %v852, 0.0
          %v885 = vmin.f32 %v853, 6.0
          %v886 = vmin.f32 %v854, 6.0
          %v887 = vmin.f32 %v855, 6.0
          %v888 = vmin.f32 %v856, 6.0
          %v889 = vmin.f32 %v857, 6.0
          %v890 = vmin.f32 %v858, 6.0
          %v891 = vmin.f32 %v859, 6.0
          %v892 = vmin.f32 %v860, 6.0
          %v893 = vmin.f32 %v861, 6.0
          %v894 = vmin.f32 %v862, 6.0
          %v895 = vmin.f32 %v863, 6.0
          %v896 = vmin.f32 %v864, 6.0
          %v897 = vmin.f32 %v865, 6.0
          %v898 = vmin.f32 %v866, 6.0
          %v899 = vmin.f32 %v867, 6.0
          %v900 = vmin.f32 %v868, 6.0
          %v901 = vmin.f32 %v869, 6.0
          %v902 = vmin.f32 %v870, 6.0
          %v903 = vmin.f32 %v871, 6.0
          %v904 = vmin.f32 %v872, 6.0
          %v905 = vmin.f32 %v873, 6.0
          %v906 = vmin.f32 %v874, 6.0
          %v907 = vmin.f32 %v875, 6.0
          %v908 = vmin.f32 %v876, 6.0
          %v909 = vmin.f32 %v877, 6.0
          %v910 = vmin.f32 %v878, 6.0
          %v911 = vmin.f32 %v879, 6.0
          %v912 = vmin.f32 %v880, 6.0
          %v913 = vmin.f32 %v881, 6.0
          %v914 = vmin.f32 %v882, 6.0
          %v915 = vmin.f32 %v883, 6.0
          %v916 = vmin.f32 %v884, 6.0
          %v917 = vmul.f32 %v789, %v885
          %v918 = vmul.f32 %v790, %v886
          %v919 = vmul.f32 %v791, %v887
          %v920 = vmul.f32 %v792, %v888
          %v921 = vmul.f32 %v793, %v889
          %v922 = vmul.f32 %v794, %v890
          %v923 = vmul.f32 %v795, %v891
          %v924 = vmul.f32 %v796, %v892
          %v925 = vmul.f32 %v797, %v893
          %v926 = vmul.f32 %v798, %v894
          %v927 = vmul.f32 %v799, %v895
          %v928 = vmul.f32 %v800, %v896
          %v929 = vmul.f32 %v801, %v897
          %v930 = vmul.f32 %v802, %v898
          %v931 = vmul.f32 %v803, %v899
          %v932 = vmul.f32 %v804, %v900
          %v933 = vmul.f32 %v805, %v901
          %v934 = vmul.f32 %v806, %v902
          %v935 = vmul.f32 %v807, %v903
          %v936 = vmul.f32 %v808, %v904
          %v937 = vmul.f32 %v809, %v905
          %v938 = vmul.f32 %v810, %v906
          %v939 = vmul.f32 %v811, %v907
          %v940 = vmul.f32 %v812, %v908
          %v941 = vmul.f32 %v813, %v909
          %v942 = vmul.f32 %v814, %v910
          %v943 = vmul.f32 %v815, %v911
          %v944 = vmul.f32 %v816, %v912
          %v945 = vmul.f32 %v817, %v913
          %v946 = vmul.f32 %v818, %v914
          %v947 = vmul.f32 %v819, %v915
          %v948 = vmul.f32 %v820, %v916
          %v949 = vmul.f32 %v917, 0.16666667
          %v950 = vmul.f32 %v918, 0.16666667
          %v951 = vmul.f32 %v919, 0.16666667
          %v952 = vmul.f32 %v920, 0.16666667
          %v953 = vmul.f32 %v921, 0.16666667
          %v954 = vmul.f32 %v922, 0.16666667
          %v955 = vmul.f32 %v923, 0.16666667
          %v956 = vmul.f32 %v924, 0.16666667
          %v957 = vmul.f32 %v925, 0.16666667
          %v958 = vmul.f32 %v926, 0.16666667
          %v959 = vmul.f32 %v927, 0.16666667
          %v960 = vmul.f32 %v928, 0.16666667
          %v961 = vmul.f32 %v929, 0.16666667
          %v962 = vmul.f32 %v930, 0.16666667
          %v963 = vmul.f32 %v931, 0.16666667
          %v964 = vmul.f32 %v932, 0.16666667
          %v965 = vmul.f32 %v933, 0.16666667
          %v966 = vmul.f32 %v934, 0.16666667
          %v967 = vmul.f32 %v935, 0.16666667
          %v968 = vmul.f32 %v936, 0.16666667
          %v969 = vmul.f32 %v937, 0.16666667
          %v970 = vmul.f32 %v938, 0.16666667
          %v971 = vmul.f32 %v939, 0.16666667
          %v972 = vmul.f32 %v940, 0.16666667
          %v973 = vmul.f32 %v941, 0.16666667
          %v974 = vmul.f32 %v942, 0.16666667
          %v975 = vmul.f32 %v943, 0.16666667
          %v976 = vmul.f32 %v944, 0.16666667
          %v977 = vmul.f32 %v945, 0.16666667
          %v978 = vmul.f32 %v946, 0.16666667
          %v979 = vmul.f32 %v947, 0.16666667
          %v980 = vmul.f32 %v948, 0.16666667
          %981 = vst [vmem:[%s257] sm:$0xff] %v949
          %982 = vst [vmem:[%s257 + $0x8] sm:$0xff] %v950
          %983 = vst [vmem:[%s257 + $0x10] sm:$0xff] %v951
          %984 = vst [vmem:[%s257 + $0x18] sm:$0xff] %v952
          %985 = vst [vmem:[%s257 + $0x20] sm:$0xff] %v953
          %986 = vst [vmem:[%s257 + $0x28] sm:$0xff] %v954
          %987 = vst [vmem:[%s257 + $0x30] sm:$0xff] %v955
          %988 = vst [vmem:[%s257 + $0x38] sm:$0xff] %v956
          %989 = vst [vmem:[%s257 + $0x40] sm:$0xff] %v957
          %990 = vst [vmem:[%s257 + $0x48] sm:$0xff] %v958
          %991 = vst [vmem:[%s257 + $0x50] sm:$0xff] %v959
          %992 = vst [vmem:[%s257 + $0x58] sm:$0xff] %v960
          %993 = vst [vmem:[%s257 + $0x60] sm:$0xff] %v961
          %994 = vst [vmem:[%s257 + $0x68] sm:$0xff] %v962
          %995 = vst [vmem:[%s257 + $0x70] sm:$0xff] %v963
          %996 = vst [vmem:[%s257 + $0x78] sm:$0xff] %v964
          %997 = vst [vmem:[%s257 + $0x80] sm:$0xff] %v965
          %998 = vst [vmem:[%s257 + $0x88] sm:$0xff] %v966
          %999 = vst [vmem:[%s257 + $0x90] sm:$0xff] %v967
          %1000 = vst [vmem:[%s257 + $0x98] sm:$0xff] %v968
          %1001 = vst [vmem:[%s257 + $0xa0] sm:$0xff] %v969
          %1002 = vst [vmem:[%s257 + $0xa8] sm:$0xff] %v970
          %1003 = vst [vmem:[%s257 + $0xb0] sm:$0xff] %v971
          %1004 = vst [vmem:[%s257 + $0xb8] sm:$0xff] %v972
          %1005 = vst [vmem:[%s257 + $0xc0] sm:$0xff] %v973
          %1006 = vst [vmem:[%s257 + $0xc8] sm:$0xff] %v974
          %1007 = vst [vmem:[%s257 + $0xd0] sm:$0xff] %v975
          %1008 = vst [vmem:[%s257 + $0xd8] sm:$0xff] %v976
          %1009 = vst [vmem:[%s257 + $0xe0] sm:$0xff] %v977
          %1010 = vst [vmem:[%s257 + $0xe8] sm:$0xff] %v978
          %1011 = vst [vmem:[%s257 + $0xf0] sm:$0xff] %v979
          %1012 = vst [vmem:[%s257 + $0xf8] sm:$0xff] %v980
        $region52: #{model_forward.25} parent=31 // pred_fallthru
          _
        %s1013 = sand.u32 %s132, 1
        %s1014 = scalar_lea.sflag [#allocation5], %s1013
        %s1015 = sand.u32 %s132, 1
        %s1016 = smul.addr %s1015, 256
        %s1017 = scalar_lea.vmem [#allocation9], %s1016
        // Predicated region
        $region53: #{model_forward.25} parent=31 // pred_check
          %p1018 = pneg %p142
        $region54: #{model_forward.25} parent=31 // pred_check_branch
          %1020 = sbr.rel (%p1018) target = $region56
        $region55: #{model_forward.25} parent=31 // pred_region
          %s1021 = smul.u32 32, %s26
          %s1023 = ssub.s32 4096, 4096
          %1024 = vsyncadd %s1014, %s1023
          %s1025 = sadd.s32 %s27, %s1021
          %s1026 = smul.addr %s1025, 128
          %s1027 = scalar_lea.hbm %s3, %s1026
          %s1028 = sshll.u32 %s1017, 4
          %s1029 = int_to_ptr.vmem [resolvable:$true] %s1028
          %1034 = dma.vmem_to_hbm [thread:$0]  %s1029, 4096, %s1027, %s1014, 128, 128, 8
        $region56: #{model_forward.25} parent=31 // pred_fallthru
          _
      $region32: #{model_forward.25} parent=5 // pred_fallthru
        _
      %p1035 = scmp.le.s32.totalorder 2, %s16
      // Predicated region
      $region57: #{model_forward.25} parent=5 // pred_check
        %p1036 = pneg %p1035
      $region58: #{model_forward.25} parent=5 // pred_check_branch
        %1038 = sbr.rel (%p1036) target = $region60
      $region59: #{model_forward.25} parent=5 // pred_region
        %s1039 = ssub.s32 %s16, 2
        // Predicated region
        $region61: #{model_forward.25} parent=59 // pred_check
          %p1040 = pneg %p148
        $region62: #{model_forward.25} parent=59 // pred_check_branch
          %1042 = sbr.rel (%p1040) target = $region64
        $region63: #{model_forward.25} parent=59 // pred_region
          %s1043 = sand.u32 %s133, 1
          %s1044 = scalar_lea.sflag [#allocation5], %s1043
          %s1045 = sand.u32 %s133, 1
          %s1046 = smul.addr %s1045, 256
          %s1047 = scalar_lea.vmem [#allocation9], %s1046
          %1048 = dma.done %s1044, 4096
        $region64: #{model_forward.25} parent=59 // pred_fallthru
          _
      $region60: #{model_forward.25} parent=5 // pred_fallthru
        _
    $region6: #{model_forward.25} parent=1 // loop_footer
      %s20 = sadd.s32 1, %s16
    $region7: #{model_forward.25} parent=1 // loop_footer_branch
      %15 = sbr.rel target = $region3
    $region8: #{model_forward.25} parent=1 // loop_exit
      _
    %1049 = vsyncpa [#allocation4], 1
    %s1050 = scalar_lea.sflag [#allocation4], 1
    %1051 = vsyncpa %s1050, 1
    %1052 = vsyncpa [#allocation7], 1
    %1053 = vsyncpa [#allocation5], 1
    %s1054 = scalar_lea.sflag [#allocation5], 1
    %1055 = vsyncpa %s1054, 1

// kernel: model_forward.26
$region0: #{model_forward.26}
  #allocation0 [shape = 'u32[]', space=smem, size = 0x4, offset = 0x4, fixed_abs, tag = 'smem constant byte address 0x4 - core index']
  #allocation1 [shape = 'u32[144,128]{1,0:T(1,128)}', space=vmem, size = 0x12000, scoped, tag = 'internal scratch']
  #allocation2 [shape = 'f32[128,128]{1,0:T(8,128)}', space=vmem, size = 0x10000, scoped, tag = 'scratch operand']
  %s0 = inlined_call_operand.hbm [shape: bf16[128,128], index: 0, kind: input, shape index: {}]
  %s1 = inlined_call_operand.hbm [shape: bf16[128,128], index: 1, kind: input, shape index: {}]
  %s2 = inlined_call_operand.hbm [shape: f32[1,128], index: 2, kind: input, shape index: {}]
  %s3 = inlined_call_operand.hbm [shape: f32[128,128], index: 3, kind: output, shape index: {}]
  %s4 = sld [smem:[#allocation0]]
  $region42: #{model_forward.26} parent=0
    _
  %s6 = ssub.s32 1, %s4
  %s7 = scalar_select 0, %s6, %s4
  $region1: #{model_forward.26} parent=0
    #allocation3 [shape = 'u8[32768]{0}', space=vmem, size = 0x8000, scoped, tag = 'input window, operand 0, single buffered']
    #allocation4 [shape = 's32[1]{0}', space=sflag, size = 0x4, scoped, tag = 'scoped memory for model_forward.26']
    #allocation5 [shape = 's32[1]{0}', space=sflag, size = 0x4, scoped, tag = 'scoped memory for model_forward.26']
    #allocation6 [shape = 'u8[32768]{0}', space=vmem, size = 0x8000, scoped, tag = 'input window, operand 1, single buffered']
    #allocation7 [shape = 's32[1]{0}', space=sflag, size = 0x4, scoped, tag = 'scoped memory for model_forward.26']
    #allocation8 [shape = 'u8[512]{0}', space=vmem, size = 0x400, scoped, tag = 'input window, operand 2, single buffered']
    #allocation9 [shape = 'u8[65536]{0}', space=vmem, size = 0x10000, scoped, tag = 'output window, operand 0, single buffered']
    %8 = vsyncpa [#allocation4], 0
    %9 = vsyncpa [#allocation7], 0
    %10 = vsyncpa [#allocation5], 0
    // Predicated region
    $region2: #{model_forward.26} parent=1 // pred_check
      _
    $region3: #{model_forward.26} parent=1 // pred_check_branch
      %12 = sbr.rel (0) target = $region5
    $region4: #{model_forward.26} parent=1 // pred_region
      %s14 = ssub.s32 1024, 1024
      %15 = vsyncadd [#allocation4], %s14
      %s16 = sshll.u32 [#allocation3], 4
      %s17 = int_to_ptr.vmem [resolvable:$true] %s16
      %22 = dma.hbm_to_vmem [thread:$0]  %s0, 1024, %s17, [#allocation4], 64, 64, 4
    $region5: #{model_forward.26} parent=1 // pred_fallthru
      _
    // Predicated region
    $region6: #{model_forward.26} parent=1 // pred_check
      _
    $region7: #{model_forward.26} parent=1 // pred_check_branch
      %24 = sbr.rel (0) target = $region9
    $region8: #{model_forward.26} parent=1 // pred_region
      %s26 = ssub.s32 1024, 1024
      %27 = vsyncadd [#allocation7], %s26
      %s28 = sshll.u32 [#allocation6], 4
      %s29 = int_to_ptr.vmem [resolvable:$true] %s28
      %34 = dma.hbm_to_vmem [thread:$0]  %s1, 1024, %s29, [#allocation7], 64, 64, 4
    $region9: #{model_forward.26} parent=1 // pred_fallthru
      _
    // Predicated region
    $region10: #{model_forward.26} parent=1 // pred_check
      _
    $region11: #{model_forward.26} parent=1 // pred_check_branch
      %36 = sbr.rel (0) target = $region13
    $region12: #{model_forward.26} parent=1 // pred_region
      %s38 = ssub.s32 16, 16
      %39 = vsyncadd [#allocation7], %s38
      %s41 = sshll.u32 [#allocation8], 4
      %s42 = int_to_ptr.vmem [resolvable:$true] %s41
      %44 = dma.hbm_to_vmem [thread:$0]  %s2, 16, %s42, [#allocation7]
    $region13: #{model_forward.26} parent=1 // pred_fallthru
      _
    // Predicated region
    $region14: #{model_forward.26} parent=1 // pred_check
      _
    $region15: #{model_forward.26} parent=1 // pred_check_branch
      %46 = sbr.rel (0) target = $region17
    $region16: #{model_forward.26} parent=1 // pred_region
      %47 = dma.done [#allocation4], 1024
    $region17: #{model_forward.26} parent=1 // pred_fallthru
      _
    // Predicated region
    $region18: #{model_forward.26} parent=1 // pred_check
      _
    $region19: #{model_forward.26} parent=1 // pred_check_branch
      %49 = sbr.rel (0) target = $region21
    $region20: #{model_forward.26} parent=1 // pred_region
      %50 = dma.done [#allocation7], 1024
    $region21: #{model_forward.26} parent=1 // pred_fallthru
      _
    // Predicated region
    $region22: #{model_forward.26} parent=1 // pred_check
      _
    $region23: #{model_forward.26} parent=1 // pred_check_branch
      %52 = sbr.rel (0) target = $region25
    $region24: #{model_forward.26} parent=1 // pred_region
      %53 = dma.done [#allocation7], 16
    $region25: #{model_forward.26} parent=1 // pred_fallthru
      _
    %p55 = scmp.eq.s32.totalorder 0, 0
    // Predicated region
    $region26: #{model_forward.26} parent=1 // pred_check
      %p56 = pneg %p55
    $region27: #{model_forward.26} parent=1 // pred_check_branch
      %58 = sbr.rel (%p56) target = $region29
    $region28: #{model_forward.26} parent=1 // pred_region
      %59 = vst [vmem:[#allocation2] sm:$0xff] 0.0
      %60 = vst [vmem:[#allocation2 + $0x8] sm:$0xff] 0.0
      %61 = vst [vmem:[#allocation2 + $0x10] sm:$0xff] 0.0
      %62 = vst [vmem:[#allocation2 + $0x18] sm:$0xff] 0.0
      %63 = vst [vmem:[#allocation2 + $0x20] sm:$0xff] 0.0
      %64 = vst [vmem:[#allocation2 + $0x28] sm:$0xff] 0.0
      %65 = vst [vmem:[#allocation2 + $0x30] sm:$0xff] 0.0
      %66 = vst [vmem:[#allocation2 + $0x38] sm:$0xff] 0.0
      %67 = vst [vmem:[#allocation2 + $0x40] sm:$0xff] 0.0
      %68 = vst [vmem:[#allocation2 + $0x48] sm:$0xff] 0.0
      %69 = vst [vmem:[#allocation2 + $0x50] sm:$0xff] 0.0
      %70 = vst [vmem:[#allocation2 + $0x58] sm:$0xff] 0.0
      %71 = vst [vmem:[#allocation2 + $0x60] sm:$0xff] 0.0
      %72 = vst [vmem:[#allocation2 + $0x68] sm:$0xff] 0.0
      %73 = vst [vmem:[#allocation2 + $0x70] sm:$0xff] 0.0
      %74 = vst [vmem:[#allocation2 + $0x78] sm:$0xff] 0.0
    $region29: #{model_forward.26} parent=1 // pred_fallthru
      _
    %v75 = vld [vmem:[#allocation2] sm:$0xff]
    %v76 = vld [vmem:[#allocation2 + $0x8] sm:$0xff]
    %v77 = vld [vmem:[#allocation2 + $0x10] sm:$0xff]
    %v78 = vld [vmem:[#allocation2 + $0x18] sm:$0xff]
    %v79 = vld [vmem:[#allocation2 + $0x20] sm:$0xff]
    %v80 = vld [vmem:[#allocation2 + $0x28] sm:$0xff]
    %v81 = vld [vmem:[#allocation2 + $0x30] sm:$0xff]
    %v82 = vld [vmem:[#allocation2 + $0x38] sm:$0xff]
    %v83 = vld [vmem:[#allocation2 + $0x40] sm:$0xff]
    %v84 = vld [vmem:[#allocation2 + $0x48] sm:$0xff]
    %v85 = vld [vmem:[#allocation2 + $0x50] sm:$0xff]
    %v86 = vld [vmem:[#allocation2 + $0x58] sm:$0xff]
    %v87 = vld [vmem:[#allocation2 + $0x60] sm:$0xff]
    %v88 = vld [vmem:[#allocation2 + $0x68] sm:$0xff]
    %v89 = vld [vmem:[#allocation2 + $0x70] sm:$0xff]
    %v90 = vld [vmem:[#allocation2 + $0x78] sm:$0xff]
    %v91 = vld [vmem:[#allocation3] sm:$0xf]
    %v92 = vld [vmem:[#allocation3 + $0x4] sm:$0xf]
    %v93 = vld [vmem:[#allocation3 + $0x8] sm:$0xf]
    %v94 = vld [vmem:[#allocation3 + $0xc] sm:$0xf]
    %v95 = vld [vmem:[#allocation3 + $0x10] sm:$0xf]
    %v96 = vld [vmem:[#allocation3 + $0x14] sm:$0xf]
    %v97 = vld [vmem:[#allocation3 + $0x18] sm:$0xf]
    %v98 = vld [vmem:[#allocation3 + $0x1c] sm:$0xf]
    %v99 = vld [vmem:[#allocation3 + $0x20] sm:$0xf]
    %v100 = vld [vmem:[#allocation3 + $0x24] sm:$0xf]
    %v101 = vld [vmem:[#allocation3 + $0x28] sm:$0xf]
    %v102 = vld [vmem:[#allocation3 + $0x2c] sm:$0xf]
    %v103 = vld [vmem:[#allocation3 + $0x30] sm:$0xf]
    %v104 = vld [vmem:[#allocation3 + $0x34] sm:$0xf]
    %v105 = vld [vmem:[#allocation3 + $0x38] sm:$0xf]
    %v106 = vld [vmem:[#allocation3 + $0x3c] sm:$0xf]
    %v107 = vld [vmem:[#allocation6] sm:$0xf]
    %v108 = vld [vmem:[#allocation6 + $0x4] sm:$0xf]
    %v109 = vld [vmem:[#allocation6 + $0x8] sm:$0xf]
    %v110 = vld [vmem:[#allocation6 + $0xc] sm:$0xf]
    %v111 = vld [vmem:[#allocation6 + $0x10] sm:$0xf]
    %v112 = vld [vmem:[#allocation6 + $0x14] sm:$0xf]
    %v113 = vld [vmem:[#allocation6 + $0x18] sm:$0xf]
    %v114 = vld [vmem:[#allocation6 + $0x1c] sm:$0xf]
    %v115 = vld [vmem:[#allocation6 + $0x20] sm:$0xf]
    %v116 = vld [vmem:[#allocation6 + $0x24] sm:$0xf]
    %v117 = vld [vmem:[#allocation6 + $0x28] sm:$0xf]
    %v118 = vld [vmem:[#allocation6 + $0x2c] sm:$0xf]
    %v119 = vld [vmem:[#allocation6 + $0x30] sm:$0xf]
    %v120 = vld [vmem:[#allocation6 + $0x34] sm:$0xf]
    %v121 = vld [vmem:[#allocation6 + $0x38] sm:$0xf]
    %v122 = vld [vmem:[#allocation6 + $0x3c] sm:$0xf]
    %v139 = vunpack.c.l.b16 %v91
    %v140 = vunpack.c.l.b16 %v92
    %v141 = vunpack.c.l.b16 %v93
    %v142 = vunpack.c.l.b16 %v94
    %v143 = vunpack.c.l.b16 %v95
    %v144 = vunpack.c.l.b16 %v96
    %v145 = vunpack.c.l.b16 %v97
    %v146 = vunpack.c.l.b16 %v98
    %v147 = vunpack.c.l.b16 %v99
    %v148 = vunpack.c.l.b16 %v100
    %v149 = vunpack.c.l.b16 %v101
    %v150 = vunpack.c.l.b16 %v102
    %v151 = vunpack.c.l.b16 %v103
    %v152 = vunpack.c.l.b16 %v104
    %v153 = vunpack.c.l.b16 %v105
    %v154 = vunpack.c.l.b16 %v106
    %v155 = vpack.c.b16 %v140, %v139
    %v156 = vpack.c.b16 %v142, %v141
    %v157 = vpack.c.b16 %v144, %v143
    %v158 = vpack.c.b16 %v146, %v145
    %v159 = vpack.c.b16 %v148, %v147
    %v160 = vpack.c.b16 %v150, %v149
    %v161 = vpack.c.b16 %v152, %v151
    %v162 = vpack.c.b16 %v154, %v153
    %v187 = vunpack.c.l.b16 %v107
    %v188 = vunpack.c.l.b16 %v108
    %v189 = vunpack.c.l.b16 %v109
    %v190 = vunpack.c.l.b16 %v110
    %v191 = vunpack.c.l.b16 %v111
    %v192 = vunpack.c.l.b16 %v112
    %v193 = vunpack.c.l.b16 %v113
    %v194 = vunpack.c.l.b16 %v114
    %v195 = vunpack.c.l.b16 %v115
    %v196 = vunpack.c.l.b16 %v116
    %v197 = vunpack.c.l.b16 %v117
    %v198 = vunpack.c.l.b16 %v118
    %v199 = vunpack.c.l.b16 %v119
    %v200 = vunpack.c.l.b16 %v120
    %v201 = vunpack.c.l.b16 %v121
    %v202 = vunpack.c.l.b16 %v122
    %v203 = vpack.c.b16 %v188, %v187
    %v204 = vpack.c.b16 %v190, %v189
    %v205 = vpack.c.b16 %v192, %v191
    %v206 = vpack.c.b16 %v194, %v193
    %v207 = vpack.c.b16 %v196, %v195
    %v208 = vpack.c.b16 %v198, %v197
    %v209 = vpack.c.b16 %v200, %v199
    %v210 = vpack.c.b16 %v202, %v201
    %219 = vmatprep.subr.bf16.mxu0 0
    %220 = vmatpush1.bf16.msra.mxu0 %v203
    %221 = vmatprep.subr.bf16.mxu0 0
    %222 = vmatpush1.bf16.msra.mxu0 %v204
    %223 = vmatprep.subr.bf16.mxu0 0
    %224 = vmatpush1.bf16.msra.mxu0 %v205
    %225 = vmatprep.subr.bf16.mxu0 0
    %226 = vmatpush1.bf16.msra.mxu0 %v206
    %227 = vmatprep.subr.bf16.mxu0 0
    %228 = vmatpush1.bf16.msra.mxu0 %v207
    %229 = vmatprep.subr.bf16.mxu0 0
    %230 = vmatpush1.bf16.msra.mxu0 %v208
    %231 = vmatprep.subr.bf16.mxu0 0
    %232 = vmatpush1.bf16.msra.mxu0 %v209
    %233 = vmatprep.subr.bf16.mxu0 0
    %234 = vmatpush1.bf16.msra.mxu0 %v210
    %235 = vmatprep.subr.bf16.mxu0 0
    %236 = vmatpush1.bf16.msra.mxu0 0
    %237 = vmatprep.subr.bf16.mxu0 0
    %238 = vmatpush1.bf16.msra.mxu0 0
    %239 = vmatprep.subr.bf16.mxu0 0
    %240 = vmatpush1.bf16.msra.mxu0 0
    %241 = vmatprep.subr.bf16.mxu0 0
    %242 = vmatpush1.bf16.msra.mxu0 0
    %243 = vmatprep.subr.bf16.mxu0 0
    %244 = vmatpush1.bf16.msra.mxu0 0
    %245 = vmatprep.subr.bf16.mxu0 0
    %246 = vmatpush1.bf16.msra.mxu0 0
    %247 = vmatprep.subr.bf16.mxu0 0
    %248 = vmatpush1.bf16.msra.mxu0 0
    %249 = vmatprep.subr.bf16.mxu0 0
    %250 = vmatpush1.bf16.msra.mxu0 0
    %251 = vmatprep.mubr.bf16.mxu0 0
    %252 = vmatmul.mubr.bf16.gmra.mrb[0].mxu0 %v155
    %v253 = vpop.f32.mrb[0].mxu0
    %v254 = vadd.f32 0.0, %v253
    %v255 = vpop.f32.mrb[0].mxu0
    %v256 = vpop.f32.mrb[0].mxu0
    %v257 = vadd.f32 0.0, %v256
    %v258 = vpop.f32.mrb[0].mxu0
    %259 = vmatprep.mubr.bf16.mxu0 0
    %260 = vmatmul.mubr.bf16.gmra.mrb[0].mxu0 %v156
    %v261 = vpop.f32.mrb[0].mxu0
    %v262 = vadd.f32 0.0, %v261
    %v263 = vpop.f32.mrb[0].mxu0
    %v264 = vpop.f32.mrb[0].mxu0
    %v265 = vadd.f32 0.0, %v264
    %v266 = vpop.f32.mrb[0].mxu0
    %267 = vmatprep.mubr.bf16.mxu0 0
    %268 = vmatmul.mubr.bf16.gmra.mrb[0].mxu0 %v157
    %v269 = vpop.f32.mrb[0].mxu0
    %v270 = vadd.f32 0.0, %v269
    %v271 = vpop.f32.mrb[0].mxu0
    %v272 = vpop.f32.mrb[0].mxu0
    %v273 = vadd.f32 0.0, %v272
    %v274 = vpop.f32.mrb[0].mxu0
    %275 = vmatprep.mubr.bf16.mxu0 0
    %276 = vmatmul.mubr.bf16.gmra.mrb[0].mxu0 %v158
    %v277 = vpop.f32.mrb[0].mxu0
    %v278 = vadd.f32 0.0, %v277
    %v279 = vpop.f32.mrb[0].mxu0
    %v280 = vpop.f32.mrb[0].mxu0
    %v281 = vadd.f32 0.0, %v280
    %v282 = vpop.f32.mrb[0].mxu0
    %283 = vmatprep.mubr.bf16.mxu0 0
    %284 = vmatmul.mubr.bf16.gmra.mrb[0].mxu0 %v159
    %v285 = vpop.f32.mrb[0].mxu0
    %v286 = vadd.f32 0.0, %v285
    %v287 = vpop.f32.mrb[0].mxu0
    %v288 = vpop.f32.mrb[0].mxu0
    %v289 = vadd.f32 0.0, %v288
    %v290 = vpop.f32.mrb[0].mxu0
    %291 = vmatprep.mubr.bf16.mxu0 0
    %292 = vmatmul.mubr.bf16.gmra.mrb[0].mxu0 %v160
    %v293 = vpop.f32.mrb[0].mxu0
    %v294 = vadd.f32 0.0, %v293
    %v295 = vpop.f32.mrb[0].mxu0
    %v296 = vpop.f32.mrb[0].mxu0
    %v297 = vadd.f32 0.0, %v296
    %v298 = vpop.f32.mrb[0].mxu0
    %299 = vmatprep.mubr.bf16.mxu0 0
    %300 = vmatmul.mubr.bf16.gmra.mrb[0].mxu0 %v161
    %v301 = vpop.f32.mrb[0].mxu0
    %v302 = vadd.f32 0.0, %v301
    %v303 = vpop.f32.mrb[0].mxu0
    %v304 = vpop.f32.mrb[0].mxu0
    %v305 = vadd.f32 0.0, %v304
    %v306 = vpop.f32.mrb[0].mxu0
    %307 = vmatprep.mubr.bf16.mxu0 0
    %308 = vmatmul.mubr.bf16.gmra.mrb[0].mxu0 %v162
    %v309 = vpop.f32.mrb[0].mxu0
    %v310 = vadd.f32 0.0, %v309
    %v311 = vpop.f32.mrb[0].mxu0
    %v312 = vpop.f32.mrb[0].mxu0
    %v313 = vadd.f32 0.0, %v312
    %v314 = vpop.f32.mrb[0].mxu0
    %315 = vdwg.mxu0
    %v316 = vadd.f32 %v75, %v254
    %v317 = vadd.f32 %v76, %v257
    %v318 = vadd.f32 %v77, %v262
    %v319 = vadd.f32 %v78, %v265
    %v320 = vadd.f32 %v79, %v270
    %v321 = vadd.f32 %v80, %v273
    %v322 = vadd.f32 %v81, %v278
    %v323 = vadd.f32 %v82, %v281
    %v324 = vadd.f32 %v83, %v286
    %v325 = vadd.f32 %v84, %v289
    %v326 = vadd.f32 %v85, %v294
    %v327 = vadd.f32 %v86, %v297
    %v328 = vadd.f32 %v87, %v302
    %v329 = vadd.f32 %v88, %v305
    %v330 = vadd.f32 %v89, %v310
    %v331 = vadd.f32 %v90, %v313
    %332 = vst [vmem:[#allocation2] sm:$0xff] %v316
    %333 = vst [vmem:[#allocation2 + $0x8] sm:$0xff] %v317
    %334 = vst [vmem:[#allocation2 + $0x10] sm:$0xff] %v318
    %335 = vst [vmem:[#allocation2 + $0x18] sm:$0xff] %v319
    %336 = vst [vmem:[#allocation2 + $0x20] sm:$0xff] %v320
    %337 = vst [vmem:[#allocation2 + $0x28] sm:$0xff] %v321
    %338 = vst [vmem:[#allocation2 + $0x30] sm:$0xff] %v322
    %339 = vst [vmem:[#allocation2 + $0x38] sm:$0xff] %v323
    %340 = vst [vmem:[#allocation2 + $0x40] sm:$0xff] %v324
    %341 = vst [vmem:[#allocation2 + $0x48] sm:$0xff] %v325
    %342 = vst [vmem:[#allocation2 + $0x50] sm:$0xff] %v326
    %343 = vst [vmem:[#allocation2 + $0x58] sm:$0xff] %v327
    %344 = vst [vmem:[#allocation2 + $0x60] sm:$0xff] %v328
    %345 = vst [vmem:[#allocation2 + $0x68] sm:$0xff] %v329
    %346 = vst [vmem:[#allocation2 + $0x70] sm:$0xff] %v330
    %347 = vst [vmem:[#allocation2 + $0x78] sm:$0xff] %v331
    // Predicated region
    $region30: #{model_forward.26} parent=1 // pred_check
      %p348 = pneg %p55
    $region31: #{model_forward.26} parent=1 // pred_check_branch
      %350 = sbr.rel (%p348) target = $region33
    $region32: #{model_forward.26} parent=1 // pred_region
      %v351 = vld [vmem:[#allocation2] sm:$0xff]
      %v352 = vld [vmem:[#allocation2 + $0x8] sm:$0xff]
      %v353 = vld [vmem:[#allocation2 + $0x10] sm:$0xff]
      %v354 = vld [vmem:[#allocation2 + $0x18] sm:$0xff]
      %v355 = vld [vmem:[#allocation2 + $0x20] sm:$0xff]
      %v356 = vld [vmem:[#allocation2 + $0x28] sm:$0xff]
      %v357 = vld [vmem:[#allocation2 + $0x30] sm:$0xff]
      %v358 = vld [vmem:[#allocation2 + $0x38] sm:$0xff]
      %v359 = vld [vmem:[#allocation2 + $0x40] sm:$0xff]
      %v360 = vld [vmem:[#allocation2 + $0x48] sm:$0xff]
      %v361 = vld [vmem:[#allocation2 + $0x50] sm:$0xff]
      %v362 = vld [vmem:[#allocation2 + $0x58] sm:$0xff]
      %v363 = vld [vmem:[#allocation2 + $0x60] sm:$0xff]
      %v364 = vld [vmem:[#allocation2 + $0x68] sm:$0xff]
      %v365 = vld [vmem:[#allocation2 + $0x70] sm:$0xff]
      %v366 = vld [vmem:[#allocation2 + $0x78] sm:$0xff]
      %v367 = vld [vmem:[#allocation8] sm:$0x1]
      %v369 = vlaneseq
      %v370 = vshrl.u32 %v369, 7
      %v371 = vsub.s32 0, %v370
      %v372 = vrot.slane %v367, %v371
      %v374 = vadd.f32 %v351, %v372
      %v375 = vadd.f32 %v352, %v372
      %v376 = vadd.f32 %v353, %v372
      %v377 = vadd.f32 %v354, %v372
      %v378 = vadd.f32 %v355, %v372
      %v379 = vadd.f32 %v356, %v372
      %v380 = vadd.f32 %v357, %v372
      %v381 = vadd.f32 %v358, %v372
      %v382 = vadd.f32 %v359, %v372
      %v383 = vadd.f32 %v360, %v372
      %v384 = vadd.f32 %v361, %v372
      %v385 = vadd.f32 %v362, %v372
      %v386 = vadd.f32 %v363, %v372
      %v387 = vadd.f32 %v364, %v372
      %v388 = vadd.f32 %v365, %v372
      %v389 = vadd.f32 %v366, %v372
      %v390 = vadd.f32 %v374, 3.0
      %v391 = vadd.f32 %v375, 3.0
      %v392 = vadd.f32 %v376, 3.0
      %v393 = vadd.f32 %v377, 3.0
      %v394 = vadd.f32 %v378, 3.0
      %v395 = vadd.f32 %v379, 3.0
      %v396 = vadd.f32 %v380, 3.0
      %v397 = vadd.f32 %v381, 3.0
      %v398 = vadd.f32 %v382, 3.0
      %v399 = vadd.f32 %v383, 3.0
      %v400 = vadd.f32 %v384, 3.0
      %v401 = vadd.f32 %v385, 3.0
      %v402 = vadd.f32 %v386, 3.0
      %v403 = vadd.f32 %v387, 3.0
      %v404 = vadd.f32 %v388, 3.0
      %v405 = vadd.f32 %v389, 3.0
      %v406 = vmax.f32 %v390, 0.0
      %v407 = vmax.f32 %v391, 0.0
      %v408 = vmax.f32 %v392, 0.0
      %v409 = vmax.f32 %v393, 0.0
      %v410 = vmax.f32 %v394, 0.0
      %v411 = vmax.f32 %v395, 0.0
      %v412 = vmax.f32 %v396, 0.0
      %v413 = vmax.f32 %v397, 0.0
      %v414 = vmax.f32 %v398, 0.0
      %v415 = vmax.f32 %v399, 0.0
      %v416 = vmax.f32 %v400, 0.0
      %v417 = vmax.f32 %v401, 0.0
      %v418 = vmax.f32 %v402, 0.0
      %v419 = vmax.f32 %v403, 0.0
      %v420 = vmax.f32 %v404, 0.0
      %v421 = vmax.f32 %v405, 0.0
      %v422 = vmin.f32 %v406, 6.0
      %v423 = vmin.f32 %v407, 6.0
      %v424 = vmin.f32 %v408, 6.0
      %v425 = vmin.f32 %v409, 6.0
      %v426 = vmin.f32 %v410, 6.0
      %v427 = vmin.f32 %v411, 6.0
      %v428 = vmin.f32 %v412, 6.0
      %v429 = vmin.f32 %v413, 6.0
      %v430 = vmin.f32 %v414, 6.0
      %v431 = vmin.f32 %v415, 6.0
      %v432 = vmin.f32 %v416, 6.0
      %v433 = vmin.f32 %v417, 6.0
      %v434 = vmin.f32 %v418, 6.0
      %v435 = vmin.f32 %v419, 6.0
      %v436 = vmin.f32 %v420, 6.0
      %v437 = vmin.f32 %v421, 6.0
      %v438 = vmul.f32 %v374, %v422
      %v439 = vmul.f32 %v375, %v423
      %v440 = vmul.f32 %v376, %v424
      %v441 = vmul.f32 %v377, %v425
      %v442 = vmul.f32 %v378, %v426
      %v443 = vmul.f32 %v379, %v427
      %v444 = vmul.f32 %v380, %v428
      %v445 = vmul.f32 %v381, %v429
      %v446 = vmul.f32 %v382, %v430
      %v447 = vmul.f32 %v383, %v431
      %v448 = vmul.f32 %v384, %v432
      %v449 = vmul.f32 %v385, %v433
      %v450 = vmul.f32 %v386, %v434
      %v451 = vmul.f32 %v387, %v435
      %v452 = vmul.f32 %v388, %v436
      %v453 = vmul.f32 %v389, %v437
      %v454 = vmul.f32 %v438, 0.16666667
      %v455 = vmul.f32 %v439, 0.16666667
      %v456 = vmul.f32 %v440, 0.16666667
      %v457 = vmul.f32 %v441, 0.16666667
      %v458 = vmul.f32 %v442, 0.16666667
      %v459 = vmul.f32 %v443, 0.16666667
      %v460 = vmul.f32 %v444, 0.16666667
      %v461 = vmul.f32 %v445, 0.16666667
      %v462 = vmul.f32 %v446, 0.16666667
      %v463 = vmul.f32 %v447, 0.16666667
      %v464 = vmul.f32 %v448, 0.16666667
      %v465 = vmul.f32 %v449, 0.16666667
      %v466 = vmul.f32 %v450, 0.16666667
      %v467 = vmul.f32 %v451, 0.16666667
      %v468 = vmul.f32 %v452, 0.16666667
      %v469 = vmul.f32 %v453, 0.16666667
      %470 = vst [vmem:[#allocation9] sm:$0xff] %v454
      %471 = vst [vmem:[#allocation9 + $0x8] sm:$0xff] %v455
      %472 = vst [vmem:[#allocation9 + $0x10] sm:$0xff] %v456
      %473 = vst [vmem:[#allocation9 + $0x18] sm:$0xff] %v457
      %474 = vst [vmem:[#allocation9 + $0x20] sm:$0xff] %v458
      %475 = vst [vmem:[#allocation9 + $0x28] sm:$0xff] %v459
      %476 = vst [vmem:[#allocation9 + $0x30] sm:$0xff] %v460
      %477 = vst [vmem:[#allocation9 + $0x38] sm:$0xff] %v461
      %478 = vst [vmem:[#allocation9 + $0x40] sm:$0xff] %v462
      %479 = vst [vmem:[#allocation9 + $0x48] sm:$0xff] %v463
      %480 = vst [vmem:[#allocation9 + $0x50] sm:$0xff] %v464
      %481 = vst [vmem:[#allocation9 + $0x58] sm:$0xff] %v465
      %482 = vst [vmem:[#allocation9 + $0x60] sm:$0xff] %v466
      %483 = vst [vmem:[#allocation9 + $0x68] sm:$0xff] %v467
      %484 = vst [vmem:[#allocation9 + $0x70] sm:$0xff] %v468
      %485 = vst [vmem:[#allocation9 + $0x78] sm:$0xff] %v469
    $region33: #{model_forward.26} parent=1 // pred_fallthru
      _
    // Predicated region
    $region34: #{model_forward.26} parent=1 // pred_check
      _
    $region35: #{model_forward.26} parent=1 // pred_check_branch
      %487 = sbr.rel (0) target = $region37
    $region36: #{model_forward.26} parent=1 // pred_region
      %s489 = ssub.s32 2048, 2048
      %490 = vsyncadd [#allocation5], %s489
      %s491 = sshll.u32 [#allocation9], 4
      %s492 = int_to_ptr.vmem [resolvable:$true] %s491
      %497 = dma.vmem_to_hbm [thread:$0]  %s492, 2048, %s3, [#allocation5], 128, 128, 8
    $region37: #{model_forward.26} parent=1 // pred_fallthru
      _
    // Predicated region
    $region38: #{model_forward.26} parent=1 // pred_check
      _
    $region39: #{model_forward.26} parent=1 // pred_check_branch
      %499 = sbr.rel (0) target = $region41
    $region40: #{model_forward.26} parent=1 // pred_region
      %500 = dma.done [#allocation5], 2048
    $region41: #{model_forward.26} parent=1 // pred_fallthru
      _
    %501 = vsyncpa [#allocation4], 1
    %502 = vsyncpa [#allocation7], 1
    %503 = vsyncpa [#allocation5], 1

// kernel: model_forward.27
$region0: #{model_forward.27}
  #allocation0 [shape = 'u32[]', space=smem, size = 0x4, offset = 0x4, fixed_abs, tag = 'smem constant byte address 0x4 - core index']
  #allocation1 [shape = 'u32[144,128]{1,0:T(1,128)}', space=vmem, size = 0x12000, scoped, tag = 'internal scratch']
  #allocation2 [shape = 'f32[32,128]{1,0:T(8,128)}', space=vmem, size = 0x4000, scoped, tag = 'scratch operand']
  %s0 = inlined_call_operand.hbm [shape: bf16[32,128], index: 0, kind: input, shape index: {}]
  %s1 = inlined_call_operand.hbm [shape: bf16[128,128], index: 1, kind: input, shape index: {}]
  %s2 = inlined_call_operand.hbm [shape: f32[1,128], index: 2, kind: input, shape index: {}]
  %s3 = inlined_call_operand.hbm [shape: f32[32,128], index: 3, kind: output, shape index: {}]
  %s4 = sld [smem:[#allocation0]]
  $region42: #{model_forward.27} parent=0
    _
  %s6 = ssub.s32 1, %s4
  %s7 = scalar_select 0, %s6, %s4
  $region1: #{model_forward.27} parent=0
    #allocation3 [shape = 'u8[8192]{0}', space=vmem, size = 0x2000, scoped, tag = 'input window, operand 0, single buffered']
    #allocation4 [shape = 's32[1]{0}', space=sflag, size = 0x4, scoped, tag = 'scoped memory for model_forward.27']
    #allocation5 [shape = 's32[1]{0}', space=sflag, size = 0x4, scoped, tag = 'scoped memory for model_forward.27']
    #allocation6 [shape = 'u8[32768]{0}', space=vmem, size = 0x8000, scoped, tag = 'input window, operand 1, single buffered']
    #allocation7 [shape = 's32[1]{0}', space=sflag, size = 0x4, scoped, tag = 'scoped memory for model_forward.27']
    #allocation8 [shape = 'u8[512]{0}', space=vmem, size = 0x400, scoped, tag = 'input window, operand 2, single buffered']
    #allocation9 [shape = 'u8[16384]{0}', space=vmem, size = 0x4000, scoped, tag = 'output window, operand 0, single buffered']
    %8 = vsyncpa [#allocation4], 0
    %9 = vsyncpa [#allocation7], 0
    %10 = vsyncpa [#allocation5], 0
    // Predicated region
    $region2: #{model_forward.27} parent=1 // pred_check
      _
    $region3: #{model_forward.27} parent=1 // pred_check_branch
      %12 = sbr.rel (0) target = $region5
    $region4: #{model_forward.27} parent=1 // pred_region
      %s14 = ssub.s32 256, 256
      %15 = vsyncadd [#allocation4], %s14
      %s16 = sshll.u32 [#allocation3], 4
      %s17 = int_to_ptr.vmem [resolvable:$true] %s16
      %22 = dma.hbm_to_vmem [thread:$0]  %s0, 256, %s17, [#allocation4], 64, 64, 4
    $region5: #{model_forward.27} parent=1 // pred_fallthru
      _
    // Predicated region
    $region6: #{model_forward.27} parent=1 // pred_check
      _
    $region7: #{model_forward.27} parent=1 // pred_check_branch
      %24 = sbr.rel (0) target = $region9
    $region8: #{model_forward.27} parent=1 // pred_region
      %s26 = ssub.s32 1024, 1024
      %27 = vsyncadd [#allocation7], %s26
      %s28 = sshll.u32 [#allocation6], 4
      %s29 = int_to_ptr.vmem [resolvable:$true] %s28
      %34 = dma.hbm_to_vmem [thread:$0]  %s1, 1024, %s29, [#allocation7], 64, 64, 4
    $region9: #{model_forward.27} parent=1 // pred_fallthru
      _
    // Predicated region
    $region10: #{model_forward.27} parent=1 // pred_check
      _
    $region11: #{model_forward.27} parent=1 // pred_check_branch
      %36 = sbr.rel (0) target = $region13
    $region12: #{model_forward.27} parent=1 // pred_region
      %s38 = ssub.s32 16, 16
      %39 = vsyncadd [#allocation7], %s38
      %s41 = sshll.u32 [#allocation8], 4
      %s42 = int_to_ptr.vmem [resolvable:$true] %s41
      %44 = dma.hbm_to_vmem [thread:$0]  %s2, 16, %s42, [#allocation7]
    $region13: #{model_forward.27} parent=1 // pred_fallthru
      _
    // Predicated region
    $region14: #{model_forward.27} parent=1 // pred_check
      _
    $region15: #{model_forward.27} parent=1 // pred_check_branch
      %46 = sbr.rel (0) target = $region17
    $region16: #{model_forward.27} parent=1 // pred_region
      %47 = dma.done [#allocation4], 256
    $region17: #{model_forward.27} parent=1 // pred_fallthru
      _
    // Predicated region
    $region18: #{model_forward.27} parent=1 // pred_check
      _
    $region19: #{model_forward.27} parent=1 // pred_check_branch
      %49 = sbr.rel (0) target = $region21
    $region20: #{model_forward.27} parent=1 // pred_region
      %50 = dma.done [#allocation7], 1024
    $region21: #{model_forward.27} parent=1 // pred_fallthru
      _
    // Predicated region
    $region22: #{model_forward.27} parent=1 // pred_check
      _
    $region23: #{model_forward.27} parent=1 // pred_check_branch
      %52 = sbr.rel (0) target = $region25
    $region24: #{model_forward.27} parent=1 // pred_region
      %53 = dma.done [#allocation7], 16
    $region25: #{model_forward.27} parent=1 // pred_fallthru
      _
    %p55 = scmp.eq.s32.totalorder 0, 0
    // Predicated region
    $region26: #{model_forward.27} parent=1 // pred_check
      %p56 = pneg %p55
    $region27: #{model_forward.27} parent=1 // pred_check_branch
      %58 = sbr.rel (%p56) target = $region29
    $region28: #{model_forward.27} parent=1 // pred_region
      %59 = vst [vmem:[#allocation2] sm:$0xff] 0.0
      %60 = vst [vmem:[#allocation2 + $0x8] sm:$0xff] 0.0
      %61 = vst [vmem:[#allocation2 + $0x10] sm:$0xff] 0.0
      %62 = vst [vmem:[#allocation2 + $0x18] sm:$0xff] 0.0
    $region29: #{model_forward.27} parent=1 // pred_fallthru
      _
    %v63 = vld [vmem:[#allocation2] sm:$0xff]
    %v64 = vld [vmem:[#allocation2 + $0x8] sm:$0xff]
    %v65 = vld [vmem:[#allocation2 + $0x10] sm:$0xff]
    %v66 = vld [vmem:[#allocation2 + $0x18] sm:$0xff]
    %v67 = vld [vmem:[#allocation3] sm:$0xf]
    %v68 = vld [vmem:[#allocation3 + $0x4] sm:$0xf]
    %v69 = vld [vmem:[#allocation3 + $0x8] sm:$0xf]
    %v70 = vld [vmem:[#allocation3 + $0xc] sm:$0xf]
    %v71 = vld [vmem:[#allocation6] sm:$0xf]
    %v72 = vld [vmem:[#allocation6 + $0x4] sm:$0xf]
    %v73 = vld [vmem:[#allocation6 + $0x8] sm:$0xf]
    %v74 = vld [vmem:[#allocation6 + $0xc] sm:$0xf]
    %v75 = vld [vmem:[#allocation6 + $0x10] sm:$0xf]
    %v76 = vld [vmem:[#allocation6 + $0x14] sm:$0xf]
    %v77 = vld [vmem:[#allocation6 + $0x18] sm:$0xf]
    %v78 = vld [vmem:[#allocation6 + $0x1c] sm:$0xf]
    %v79 = vld [vmem:[#allocation6 + $0x20] sm:$0xf]
    %v80 = vld [vmem:[#allocation6 + $0x24] sm:$0xf]
    %v81 = vld [vmem:[#allocation6 + $0x28] sm:$0xf]
    %v82 = vld [vmem:[#allocation6 + $0x2c] sm:$0xf]
    %v83 = vld [vmem:[#allocation6 + $0x30] sm:$0xf]
    %v84 = vld [vmem:[#allocation6 + $0x34] sm:$0xf]
    %v85 = vld [vmem:[#allocation6 + $0x38] sm:$0xf]
    %v86 = vld [vmem:[#allocation6 + $0x3c] sm:$0xf]
    %v91 = vunpack.c.l.b16 %v67
    %v92 = vunpack.c.l.b16 %v68
    %v93 = vunpack.c.l.b16 %v69
    %v94 = vunpack.c.l.b16 %v70
    %v95 = vpack.c.b16 %v92, %v91
    %v96 = vpack.c.b16 %v94, %v93
    %v115 = vunpack.c.l.b16 %v71
    %v116 = vunpack.c.l.b16 %v72
    %v117 = vunpack.c.l.b16 %v73
    %v118 = vunpack.c.l.b16 %v74
    %v119 = vunpack.c.l.b16 %v75
    %v120 = vunpack.c.l.b16 %v76
    %v121 = vunpack.c.l.b16 %v77
    %v122 = vunpack.c.l.b16 %v78
    %v123 = vunpack.c.l.b16 %v79
    %v124 = vunpack.c.l.b16 %v80
    %v125 = vunpack.c.l.b16 %v81
    %v126 = vunpack.c.l.b16 %v82
    %v127 = vunpack.c.l.b16 %v83
    %v128 = vunpack.c.l.b16 %v84
    %v129 = vunpack.c.l.b16 %v85
    %v130 = vunpack.c.l.b16 %v86
    %v131 = vpack.c.b16 %v116, %v115
    %v132 = vpack.c.b16 %v118, %v117
    %v133 = vpack.c.b16 %v120, %v119
    %v134 = vpack.c.b16 %v122, %v121
    %v135 = vpack.c.b16 %v124, %v123
    %v136 = vpack.c.b16 %v126, %v125
    %v137 = vpack.c.b16 %v128, %v127
    %v138 = vpack.c.b16 %v130, %v129
    %147 = vmatprep.subr.bf16.mxu0 0
    %148 = vmatpush1.bf16.msra.mxu0 %v131
    %149 = vmatprep.subr.bf16.mxu0 0
    %150 = vmatpush1.bf16.msra.mxu0 %v132
    %151 = vmatprep.subr.bf16.mxu0 0
    %152 = vmatpush1.bf16.msra.mxu0 %v133
    %153 = vmatprep.subr.bf16.mxu0 0
    %154 = vmatpush1.bf16.msra.mxu0 %v134
    %155 = vmatprep.subr.bf16.mxu0 0
    %156 = vmatpush1.bf16.msra.mxu0 %v135
    %157 = vmatprep.subr.bf16.mxu0 0
    %158 = vmatpush1.bf16.msra.mxu0 %v136
    %159 = vmatprep.subr.bf16.mxu0 0
    %160 = vmatpush1.bf16.msra.mxu0 %v137
    %161 = vmatprep.subr.bf16.mxu0 0
    %162 = vmatpush1.bf16.msra.mxu0 %v138
    %163 = vmatprep.subr.bf16.mxu0 0
    %164 = vmatpush1.bf16.msra.mxu0 0
    %165 = vmatprep.subr.bf16.mxu0 0
    %166 = vmatpush1.bf16.msra.mxu0 0
    %167 = vmatprep.subr.bf16.mxu0 0
    %168 = vmatpush1.bf16.msra.mxu0 0
    %169 = vmatprep.subr.bf16.mxu0 0
    %170 = vmatpush1.bf16.msra.mxu0 0
    %171 = vmatprep.subr.bf16.mxu0 0
    %172 = vmatpush1.bf16.msra.mxu0 0
    %173 = vmatprep.subr.bf16.mxu0 0
    %174 = vmatpush1.bf16.msra.mxu0 0
    %175 = vmatprep.subr.bf16.mxu0 0
    %176 = vmatpush1.bf16.msra.mxu0 0
    %177 = vmatprep.subr.bf16.mxu0 0
    %178 = vmatpush1.bf16.msra.mxu0 0
    %179 = vmatprep.mubr.bf16.mxu0 0
    %180 = vmatmul.mubr.bf16.gmra.mrb[0].mxu0 %v95
    %v181 = vpop.f32.mrb[0].mxu0
    %v182 = vadd.f32 0.0, %v181
    %v183 = vpop.f32.mrb[0].mxu0
    %v184 = vpop.f32.mrb[0].mxu0
    %v185 = vadd.f32 0.0, %v184
    %v186 = vpop.f32.mrb[0].mxu0
    %187 = vmatprep.mubr.bf16.mxu0 0
    %188 = vmatmul.mubr.bf16.gmra.mrb[0].mxu0 %v96
    %v189 = vpop.f32.mrb[0].mxu0
    %v190 = vadd.f32 0.0, %v189
    %v191 = vpop.f32.mrb[0].mxu0
    %v192 = vpop.f32.mrb[0].mxu0
    %v193 = vadd.f32 0.0, %v192
    %v194 = vpop.f32.mrb[0].mxu0
    %195 = vdwg.mxu0
    %v196 = vadd.f32 %v63, %v182
    %v197 = vadd.f32 %v64, %v185
    %v198 = vadd.f32 %v65, %v190
    %v199 = vadd.f32 %v66, %v193
    %200 = vst [vmem:[#allocation2] sm:$0xff] %v196
    %201 = vst [vmem:[#allocation2 + $0x8] sm:$0xff] %v197
    %202 = vst [vmem:[#allocation2 + $0x10] sm:$0xff] %v198
    %203 = vst [vmem:[#allocation2 + $0x18] sm:$0xff] %v199
    // Predicated region
    $region30: #{model_forward.27} parent=1 // pred_check
      %p204 = pneg %p55
    $region31: #{model_forward.27} parent=1 // pred_check_branch
      %206 = sbr.rel (%p204) target = $region33
    $region32: #{model_forward.27} parent=1 // pred_region
      %v207 = vld [vmem:[#allocation2] sm:$0xff]
      %v208 = vld [vmem:[#allocation2 + $0x8] sm:$0xff]
      %v209 = vld [vmem:[#allocation2 + $0x10] sm:$0xff]
      %v210 = vld [vmem:[#allocation2 + $0x18] sm:$0xff]
      %v211 = vld [vmem:[#allocation8] sm:$0x1]
      %v213 = vlaneseq
      %v214 = vshrl.u32 %v213, 7
      %v215 = vsub.s32 0, %v214
      %v216 = vrot.slane %v211, %v215
      %v218 = vadd.f32 %v207, %v216
      %v219 = vadd.f32 %v208, %v216
      %v220 = vadd.f32 %v209, %v216
      %v221 = vadd.f32 %v210, %v216
      %v222 = vadd.f32 %v218, 3.0
      %v223 = vadd.f32 %v219, 3.0
      %v224 = vadd.f32 %v220, 3.0
      %v225 = vadd.f32 %v221, 3.0
      %v226 = vmax.f32 %v222, 0.0
      %v227 = vmax.f32 %v223, 0.0
      %v228 = vmax.f32 %v224, 0.0
      %v229 = vmax.f32 %v225, 0.0
      %v230 = vmin.f32 %v226, 6.0
      %v231 = vmin.f32 %v227, 6.0
      %v232 = vmin.f32 %v228, 6.0
      %v233 = vmin.f32 %v229, 6.0
      %v234 = vmul.f32 %v218, %v230
      %v235 = vmul.f32 %v219, %v231
      %v236 = vmul.f32 %v220, %v232
      %v237 = vmul.f32 %v221, %v233
      %v238 = vmul.f32 %v234, 0.16666667
      %v239 = vmul.f32 %v235, 0.16666667
      %v240 = vmul.f32 %v236, 0.16666667
      %v241 = vmul.f32 %v237, 0.16666667
      %242 = vst [vmem:[#allocation9] sm:$0xff] %v238
      %243 = vst [vmem:[#allocation9 + $0x8] sm:$0xff] %v239
      %244 = vst [vmem:[#allocation9 + $0x10] sm:$0xff] %v240
      %245 = vst [vmem:[#allocation9 + $0x18] sm:$0xff] %v241
    $region33: #{model_forward.27} parent=1 // pred_fallthru
      _
    // Predicated region
    $region34: #{model_forward.27} parent=1 // pred_check
      _
    $region35: #{model_forward.27} parent=1 // pred_check_branch
      %247 = sbr.rel (0) target = $region37
    $region36: #{model_forward.27} parent=1 // pred_region
      %s249 = ssub.s32 512, 512
      %250 = vsyncadd [#allocation5], %s249
      %s251 = sshll.u32 [#allocation9], 4
      %s252 = int_to_ptr.vmem [resolvable:$true] %s251
      %257 = dma.vmem_to_hbm [thread:$0]  %s252, 512, %s3, [#allocation5], 128, 128, 8
    $region37: #{model_forward.27} parent=1 // pred_fallthru
      _
    // Predicated region
    $region38: #{model_forward.27} parent=1 // pred_check
      _
    $region39: #{model_forward.27} parent=1 // pred_check_branch
      %259 = sbr.rel (0) target = $region41
    $region40: #{model_forward.27} parent=1 // pred_region
      %260 = dma.done [#allocation5], 512
    $region41: #{model_forward.27} parent=1 // pred_fallthru
      _
    %261 = vsyncpa [#allocation4], 1
    %262 = vsyncpa [#allocation7], 1
    %263 = vsyncpa [#allocation5], 1

// kernel: model_forward.28
$region0: #{model_forward.28}
  #allocation0 [shape = 'u32[]', space=smem, size = 0x4, offset = 0x4, fixed_abs, tag = 'smem constant byte address 0x4 - core index']
  #allocation1 [shape = 'u32[144,128]{1,0:T(1,128)}', space=vmem, size = 0x12000, scoped, tag = 'internal scratch']
  #allocation2 [shape = 'f32[8,128]{1,0:T(8,128)}', space=vmem, size = 0x1000, scoped, tag = 'scratch operand']
  %s0 = inlined_call_operand.hbm [shape: bf16[8,256], index: 0, kind: input, shape index: {}]
  %s1 = inlined_call_operand.hbm [shape: bf16[256,128], index: 1, kind: input, shape index: {}]
  %s2 = inlined_call_operand.hbm [shape: f32[1,128], index: 2, kind: input, shape index: {}]
  %s3 = inlined_call_operand.hbm [shape: f32[8,128], index: 3, kind: output, shape index: {}]
  %s4 = sld [smem:[#allocation0]]
  $region42: #{model_forward.28} parent=0
    _
  %s6 = ssub.s32 1, %s4
  %s7 = scalar_select 0, %s6, %s4
  $region1: #{model_forward.28} parent=0
    #allocation3 [shape = 'u8[4096]{0}', space=vmem, size = 0x1000, scoped, tag = 'input window, operand 0, single buffered']
    #allocation4 [shape = 's32[1]{0}', space=sflag, size = 0x4, scoped, tag = 'scoped memory for model_forward.28']
    #allocation5 [shape = 's32[1]{0}', space=sflag, size = 0x4, scoped, tag = 'scoped memory for model_forward.28']
    #allocation6 [shape = 'u8[65536]{0}', space=vmem, size = 0x10000, scoped, tag = 'input window, operand 1, single buffered']
    #allocation7 [shape = 's32[1]{0}', space=sflag, size = 0x4, scoped, tag = 'scoped memory for model_forward.28']
    #allocation8 [shape = 'u8[512]{0}', space=vmem, size = 0x400, scoped, tag = 'input window, operand 2, single buffered']
    #allocation9 [shape = 'u8[4096]{0}', space=vmem, size = 0x1000, scoped, tag = 'output window, operand 0, single buffered']
    %8 = vsyncpa [#allocation4], 0
    %9 = vsyncpa [#allocation7], 0
    %10 = vsyncpa [#allocation5], 0
    // Predicated region
    $region2: #{model_forward.28} parent=1 // pred_check
      _
    $region3: #{model_forward.28} parent=1 // pred_check_branch
      %12 = sbr.rel (0) target = $region5
    $region4: #{model_forward.28} parent=1 // pred_region
      %s14 = ssub.s32 128, 128
      %15 = vsyncadd [#allocation4], %s14
      %s17 = sshll.u32 [#allocation3], 4
      %s18 = int_to_ptr.vmem [resolvable:$true] %s17
      %20 = dma.hbm_to_vmem [thread:$0]  %s0, 128, %s18, [#allocation4]
    $region5: #{model_forward.28} parent=1 // pred_fallthru
      _
    // Predicated region
    $region6: #{model_forward.28} parent=1 // pred_check
      _
    $region7: #{model_forward.28} parent=1 // pred_check_branch
      %22 = sbr.rel (0) target = $region9
    $region8: #{model_forward.28} parent=1 // pred_region
      %s24 = ssub.s32 2048, 2048
      %25 = vsyncadd [#allocation7], %s24
      %s26 = sshll.u32 [#allocation6], 4
      %s27 = int_to_ptr.vmem [resolvable:$true] %s26
      %32 = dma.hbm_to_vmem [thread:$0]  %s1, 2048, %s27, [#allocation7], 64, 64, 4
    $region9: #{model_forward.28} parent=1 // pred_fallthru
      _
    // Predicated region
    $region10: #{model_forward.28} parent=1 // pred_check
      _
    $region11: #{model_forward.28} parent=1 // pred_check_branch
      %34 = sbr.rel (0) target = $region13
    $region12: #{model_forward.28} parent=1 // pred_region
      %s36 = ssub.s32 16, 16
      %37 = vsyncadd [#allocation7], %s36
      %s39 = sshll.u32 [#allocation8], 4
      %s40 = int_to_ptr.vmem [resolvable:$true] %s39
      %42 = dma.hbm_to_vmem [thread:$0]  %s2, 16, %s40, [#allocation7]
    $region13: #{model_forward.28} parent=1 // pred_fallthru
      _
    // Predicated region
    $region14: #{model_forward.28} parent=1 // pred_check
      _
    $region15: #{model_forward.28} parent=1 // pred_check_branch
      %44 = sbr.rel (0) target = $region17
    $region16: #{model_forward.28} parent=1 // pred_region
      %45 = dma.done [#allocation4], 128
    $region17: #{model_forward.28} parent=1 // pred_fallthru
      _
    // Predicated region
    $region18: #{model_forward.28} parent=1 // pred_check
      _
    $region19: #{model_forward.28} parent=1 // pred_check_branch
      %47 = sbr.rel (0) target = $region21
    $region20: #{model_forward.28} parent=1 // pred_region
      %48 = dma.done [#allocation7], 2048
    $region21: #{model_forward.28} parent=1 // pred_fallthru
      _
    // Predicated region
    $region22: #{model_forward.28} parent=1 // pred_check
      _
    $region23: #{model_forward.28} parent=1 // pred_check_branch
      %50 = sbr.rel (0) target = $region25
    $region24: #{model_forward.28} parent=1 // pred_region
      %51 = dma.done [#allocation7], 16
    $region25: #{model_forward.28} parent=1 // pred_fallthru
      _
    %p53 = scmp.eq.s32.totalorder 0, 0
    // Predicated region
    $region26: #{model_forward.28} parent=1 // pred_check
      %p54 = pneg %p53
    $region27: #{model_forward.28} parent=1 // pred_check_branch
      %56 = sbr.rel (%p54) target = $region29
    $region28: #{model_forward.28} parent=1 // pred_region
      %57 = vst [vmem:[#allocation2] sm:$0xff] 0.0
    $region29: #{model_forward.28} parent=1 // pred_fallthru
      _
    %v58 = vld [vmem:[#allocation2] sm:$0xff]
    %v59 = vld [vmem:[#allocation3] sm:$0xff]
    %v60 = vld [vmem:[#allocation6] sm:$0xf]
    %v61 = vld [vmem:[#allocation6 + $0x4] sm:$0xf]
    %v62 = vld [vmem:[#allocation6 + $0x8] sm:$0xf]
    %v63 = vld [vmem:[#allocation6 + $0xc] sm:$0xf]
    %v64 = vld [vmem:[#allocation6 + $0x10] sm:$0xf]
    %v65 = vld [vmem:[#allocation6 + $0x14] sm:$0xf]
    %v66 = vld [vmem:[#allocation6 + $0x18] sm:$0xf]
    %v67 = vld [vmem:[#allocation6 + $0x1c] sm:$0xf]
    %v68 = vld [vmem:[#allocation6 + $0x20] sm:$0xf]
    %v69 = vld [vmem:[#allocation6 + $0x24] sm:$0xf]
    %v70 = vld [vmem:[#allocation6 + $0x28] sm:$0xf]
    %v71 = vld [vmem:[#allocation6 + $0x2c] sm:$0xf]
    %v72 = vld [vmem:[#allocation6 + $0x30] sm:$0xf]
    %v73 = vld [vmem:[#allocation6 + $0x34] sm:$0xf]
    %v74 = vld [vmem:[#allocation6 + $0x38] sm:$0xf]
    %v75 = vld [vmem:[#allocation6 + $0x3c] sm:$0xf]
    %v76 = vld [vmem:[#allocation6 + $0x40] sm:$0xf]
    %v77 = vld [vmem:[#allocation6 + $0x44] sm:$0xf]
    %v78 = vld [vmem:[#allocation6 + $0x48] sm:$0xf]
    %v79 = vld [vmem:[#allocation6 + $0x4c] sm:$0xf]
    %v80 = vld [vmem:[#allocation6 + $0x50] sm:$0xf]
    %v81 = vld [vmem:[#allocation6 + $0x54] sm:$0xf]
    %v82 = vld [vmem:[#allocation6 + $0x58] sm:$0xf]
    %v83 = vld [vmem:[#allocation6 + $0x5c] sm:$0xf]
    %v84 = vld [vmem:[#allocation6 + $0x60] sm:$0xf]
    %v85 = vld [vmem:[#allocation6 + $0x64] sm:$0xf]
    %v86 = vld [vmem:[#allocation6 + $0x68] sm:$0xf]
    %v87 = vld [vmem:[#allocation6 + $0x6c] sm:$0xf]
    %v88 = vld [vmem:[#allocation6 + $0x70] sm:$0xf]
    %v89 = vld [vmem:[#allocation6 + $0x74] sm:$0xf]
    %v90 = vld [vmem:[#allocation6 + $0x78] sm:$0xf]
    %v91 = vld [vmem:[#allocation6 + $0x7c] sm:$0xf]
    %v93 = vunpack.c.l.b16 %v59
    %v94 = vunpack.c.h.b16 %v59
    %v95 = vpack.c.b16 %v93, %v93
    %v96 = vpack.c.b16 %v94, %v94
    %v131 = vunpack.c.l.b16 %v60
    %v132 = vunpack.c.l.b16 %v61
    %v133 = vunpack.c.l.b16 %v62
    %v134 = vunpack.c.l.b16 %v63
    %v135 = vunpack.c.l.b16 %v64
    %v136 = vunpack.c.l.b16 %v65
    %v137 = vunpack.c.l.b16 %v66
    %v138 = vunpack.c.l.b16 %v67
    %v139 = vunpack.c.l.b16 %v68
    %v140 = vunpack.c.l.b16 %v69
    %v141 = vunpack.c.l.b16 %v70
    %v142 = vunpack.c.l.b16 %v71
    %v143 = vunpack.c.l.b16 %v72
    %v144 = vunpack.c.l.b16 %v73
    %v145 = vunpack.c.l.b16 %v74
    %v146 = vunpack.c.l.b16 %v75
    %v147 = vunpack.c.l.b16 %v76
    %v148 = vunpack.c.l.b16 %v77
    %v149 = vunpack.c.l.b16 %v78
    %v150 = vunpack.c.l.b16 %v79
    %v151 = vunpack.c.l.b16 %v80
    %v152 = vunpack.c.l.b16 %v81
    %v153 = vunpack.c.l.b16 %v82
    %v154 = vunpack.c.l.b16 %v83
    %v155 = vunpack.c.l.b16 %v84
    %v156 = vunpack.c.l.b16 %v85
    %v157 = vunpack.c.l.b16 %v86
    %v158 = vunpack.c.l.b16 %v87
    %v159 = vunpack.c.l.b16 %v88
    %v160 = vunpack.c.l.b16 %v89
    %v161 = vunpack.c.l.b16 %v90
    %v162 = vunpack.c.l.b16 %v91
    %v163 = vpack.c.b16 %v132, %v131
    %v164 = vpack.c.b16 %v134, %v133
    %v165 = vpack.c.b16 %v136, %v135
    %v166 = vpack.c.b16 %v138, %v137
    %v167 = vpack.c.b16 %v140, %v139
    %v168 = vpack.c.b16 %v142, %v141
    %v169 = vpack.c.b16 %v144, %v143
    %v170 = vpack.c.b16 %v146, %v145
    %v171 = vpack.c.b16 %v148, %v147
    %v172 = vpack.c.b16 %v150, %v149
    %v173 = vpack.c.b16 %v152, %v151
    %v174 = vpack.c.b16 %v154, %v153
    %v175 = vpack.c.b16 %v156, %v155
    %v176 = vpack.c.b16 %v158, %v157
    %v177 = vpack.c.b16 %v160, %v159
    %v178 = vpack.c.b16 %v162, %v161
    %195 = vmatprep.subr.bf16.mxu0 0
    %196 = vmatpush1.bf16.msra.mxu0 %v163
    %197 = vmatprep.subr.bf16.mxu0 0
    %198 = vmatpush1.bf16.msra.mxu0 %v164
    %199 = vmatprep.subr.bf16.mxu0 0
    %200 = vmatpush1.bf16.msra.mxu0 %v165
    %201 = vmatprep.subr.bf16.mxu0 0
    %202 = vmatpush1.bf16.msra.mxu0 %v166
    %203 = vmatprep.subr.bf16.mxu0 0
    %204 = vmatpush1.bf16.msra.mxu0 %v167
    %205 = vmatprep.subr.bf16.mxu0 0
    %206 = vmatpush1.bf16.msra.mxu0 %v168
    %207 = vmatprep.subr.bf16.mxu0 0
    %208 = vmatpush1.bf16.msra.mxu0 %v169
    %209 = vmatprep.subr.bf16.mxu0 0
    %210 = vmatpush1.bf16.msra.mxu0 %v170
    %211 = vmatprep.subr.bf16.mxu0 0
    %212 = vmatpush1.bf16.msra.mxu0 %v171
    %213 = vmatprep.subr.bf16.mxu0 0
    %214 = vmatpush1.bf16.msra.mxu0 %v172
    %215 = vmatprep.subr.bf16.mxu0 0
    %216 = vmatpush1.bf16.msra.mxu0 %v173
    %217 = vmatprep.subr.bf16.mxu0 0
    %218 = vmatpush1.bf16.msra.mxu0 %v174
    %219 = vmatprep.subr.bf16.mxu0 0
    %220 = vmatpush1.bf16.msra.mxu0 %v175
    %221 = vmatprep.subr.bf16.mxu0 0
    %222 = vmatpush1.bf16.msra.mxu0 %v176
    %223 = vmatprep.subr.bf16.mxu0 0
    %224 = vmatpush1.bf16.msra.mxu0 %v177
    %225 = vmatprep.subr.bf16.mxu0 0
    %226 = vmatpush1.bf16.msra.mxu0 %v178
    %227 = vmatprep.mubr.bf16.mxu0 %v96
    %228 = vmatmul.mubr.bf16.gmra.mrb[0].mxu0 %v95
    %v229 = vpop.f32.mrb[0].mxu0
    %v230 = vadd.f32 0.0, %v229
    %v231 = vpop.f32.mrb[0].mxu0
    %v232 = vpop.f32.mrb[0].mxu0
    %v233 = vpop.f32.mrb[0].mxu0
    %234 = vdwg.mxu0
    %v235 = vadd.f32 %v58, %v230
    %236 = vst [vmem:[#allocation2] sm:$0xff] %v235
    // Predicated region
    $region30: #{model_forward.28} parent=1 // pred_check
      %p237 = pneg %p53
    $region31: #{model_forward.28} parent=1 // pred_check_branch
      %239 = sbr.rel (%p237) target = $region33
    $region32: #{model_forward.28} parent=1 // pred_region
      %v240 = vld [vmem:[#allocation2] sm:$0xff]
      %v241 = vld [vmem:[#allocation8] sm:$0x1]
      %v243 = vlaneseq
      %v244 = vshrl.u32 %v243, 7
      %v245 = vsub.s32 0, %v244
      %v246 = vrot.slane %v241, %v245
      %v248 = vadd.f32 %v240, %v246
      %v249 = vadd.f32 %v248, 3.0
      %v250 = vmax.f32 %v249, 0.0
      %v251 = vmin.f32 %v250, 6.0
      %v252 = vmul.f32 %v248, %v251
      %v253 = vmul.f32 %v252, 0.16666667
      %254 = vst [vmem:[#allocation9] sm:$0xff] %v253
    $region33: #{model_forward.28} parent=1 // pred_fallthru
      _
    // Predicated region
    $region34: #{model_forward.28} parent=1 // pred_check
      _
    $region35: #{model_forward.28} parent=1 // pred_check_branch
      %256 = sbr.rel (0) target = $region37
    $region36: #{model_forward.28} parent=1 // pred_region
      %s258 = ssub.s32 128, 128
      %259 = vsyncadd [#allocation5], %s258
      %s261 = sshll.u32 [#allocation9], 4
      %s262 = int_to_ptr.vmem [resolvable:$true] %s261
      %264 = dma.vmem_to_hbm [thread:$0]  %s262, 128, %s3, [#allocation5]
    $region37: #{model_forward.28} parent=1 // pred_fallthru
      _
    // Predicated region
    $region38: #{model_forward.28} parent=1 // pred_check
      _
    $region39: #{model_forward.28} parent=1 // pred_check_branch
      %266 = sbr.rel (0) target = $region41
    $region40: #{model_forward.28} parent=1 // pred_region
      %267 = dma.done [#allocation5], 128
    $region41: #{model_forward.28} parent=1 // pred_fallthru
      _
    %268 = vsyncpa [#allocation4], 1
    %269 = vsyncpa [#allocation7], 1
    %270 = vsyncpa [#allocation5], 1

// kernel: model_forward.29
$region0: #{model_forward.29}
  #allocation0 [shape = 'u32[]', space=smem, size = 0x4, offset = 0x4, fixed_abs, tag = 'smem constant byte address 0x4 - core index']
  #allocation1 [shape = 'u32[144,128]{1,0:T(1,128)}', space=vmem, size = 0x12000, scoped, tag = 'internal scratch']
  #allocation2 [shape = 'f32[8,128]{1,0:T(8,128)}', space=vmem, size = 0x1000, scoped, tag = 'scratch operand']
  %s0 = inlined_call_operand.hbm [shape: bf16[8,128], index: 0, kind: input, shape index: {}]
  %s1 = inlined_call_operand.hbm [shape: bf16[128,128], index: 1, kind: input, shape index: {}]
  %s2 = inlined_call_operand.hbm [shape: f32[1,128], index: 2, kind: input, shape index: {}]
  %s3 = inlined_call_operand.hbm [shape: f32[8,128], index: 3, kind: output, shape index: {}]
  %s4 = sld [smem:[#allocation0]]
  $region42: #{model_forward.29} parent=0
    _
  %s6 = ssub.s32 1, %s4
  %s7 = scalar_select 0, %s6, %s4
  $region1: #{model_forward.29} parent=0
    #allocation3 [shape = 'u8[2048]{0}', space=vmem, size = 0x800, scoped, tag = 'input window, operand 0, single buffered']
    #allocation4 [shape = 's32[1]{0}', space=sflag, size = 0x4, scoped, tag = 'scoped memory for model_forward.29']
    #allocation5 [shape = 's32[1]{0}', space=sflag, size = 0x4, scoped, tag = 'scoped memory for model_forward.29']
    #allocation6 [shape = 'u8[32768]{0}', space=vmem, size = 0x8000, scoped, tag = 'input window, operand 1, single buffered']
    #allocation7 [shape = 's32[1]{0}', space=sflag, size = 0x4, scoped, tag = 'scoped memory for model_forward.29']
    #allocation8 [shape = 'u8[512]{0}', space=vmem, size = 0x400, scoped, tag = 'input window, operand 2, single buffered']
    #allocation9 [shape = 'u8[4096]{0}', space=vmem, size = 0x1000, scoped, tag = 'output window, operand 0, single buffered']
    %8 = vsyncpa [#allocation4], 0
    %9 = vsyncpa [#allocation7], 0
    %10 = vsyncpa [#allocation5], 0
    // Predicated region
    $region2: #{model_forward.29} parent=1 // pred_check
      _
    $region3: #{model_forward.29} parent=1 // pred_check_branch
      %12 = sbr.rel (0) target = $region5
    $region4: #{model_forward.29} parent=1 // pred_region
      %s14 = ssub.s32 64, 64
      %15 = vsyncadd [#allocation4], %s14
      %s17 = sshll.u32 [#allocation3], 4
      %s18 = int_to_ptr.vmem [resolvable:$true] %s17
      %20 = dma.hbm_to_vmem [thread:$0]  %s0, 64, %s18, [#allocation4]
    $region5: #{model_forward.29} parent=1 // pred_fallthru
      _
    // Predicated region
    $region6: #{model_forward.29} parent=1 // pred_check
      _
    $region7: #{model_forward.29} parent=1 // pred_check_branch
      %22 = sbr.rel (0) target = $region9
    $region8: #{model_forward.29} parent=1 // pred_region
      %s24 = ssub.s32 1024, 1024
      %25 = vsyncadd [#allocation7], %s24
      %s26 = sshll.u32 [#allocation6], 4
      %s27 = int_to_ptr.vmem [resolvable:$true] %s26
      %32 = dma.hbm_to_vmem [thread:$0]  %s1, 1024, %s27, [#allocation7], 64, 64, 4
    $region9: #{model_forward.29} parent=1 // pred_fallthru
      _
    // Predicated region
    $region10: #{model_forward.29} parent=1 // pred_check
      _
    $region11: #{model_forward.29} parent=1 // pred_check_branch
      %34 = sbr.rel (0) target = $region13
    $region12: #{model_forward.29} parent=1 // pred_region
      %s36 = ssub.s32 16, 16
      %37 = vsyncadd [#allocation7], %s36
      %s39 = sshll.u32 [#allocation8], 4
      %s40 = int_to_ptr.vmem [resolvable:$true] %s39
      %42 = dma.hbm_to_vmem [thread:$0]  %s2, 16, %s40, [#allocation7]
    $region13: #{model_forward.29} parent=1 // pred_fallthru
      _
    // Predicated region
    $region14: #{model_forward.29} parent=1 // pred_check
      _
    $region15: #{model_forward.29} parent=1 // pred_check_branch
      %44 = sbr.rel (0) target = $region17
    $region16: #{model_forward.29} parent=1 // pred_region
      %45 = dma.done [#allocation4], 64
    $region17: #{model_forward.29} parent=1 // pred_fallthru
      _
    // Predicated region
    $region18: #{model_forward.29} parent=1 // pred_check
      _
    $region19: #{model_forward.29} parent=1 // pred_check_branch
      %47 = sbr.rel (0) target = $region21
    $region20: #{model_forward.29} parent=1 // pred_region
      %48 = dma.done [#allocation7], 1024
    $region21: #{model_forward.29} parent=1 // pred_fallthru
      _
    // Predicated region
    $region22: #{model_forward.29} parent=1 // pred_check
      _
    $region23: #{model_forward.29} parent=1 // pred_check_branch
      %50 = sbr.rel (0) target = $region25
    $region24: #{model_forward.29} parent=1 // pred_region
      %51 = dma.done [#allocation7], 16
    $region25: #{model_forward.29} parent=1 // pred_fallthru
      _
    %p53 = scmp.eq.s32.totalorder 0, 0
    // Predicated region
    $region26: #{model_forward.29} parent=1 // pred_check
      %p54 = pneg %p53
    $region27: #{model_forward.29} parent=1 // pred_check_branch
      %56 = sbr.rel (%p54) target = $region29
    $region28: #{model_forward.29} parent=1 // pred_region
      %57 = vst [vmem:[#allocation2] sm:$0xff] 0.0
    $region29: #{model_forward.29} parent=1 // pred_fallthru
      _
    %v58 = vld [vmem:[#allocation2] sm:$0xff]
    %v59 = vld [vmem:[#allocation3] sm:$0xf]
    %v60 = vld [vmem:[#allocation6] sm:$0xf]
    %v61 = vld [vmem:[#allocation6 + $0x4] sm:$0xf]
    %v62 = vld [vmem:[#allocation6 + $0x8] sm:$0xf]
    %v63 = vld [vmem:[#allocation6 + $0xc] sm:$0xf]
    %v64 = vld [vmem:[#allocation6 + $0x10] sm:$0xf]
    %v65 = vld [vmem:[#allocation6 + $0x14] sm:$0xf]
    %v66 = vld [vmem:[#allocation6 + $0x18] sm:$0xf]
    %v67 = vld [vmem:[#allocation6 + $0x1c] sm:$0xf]
    %v68 = vld [vmem:[#allocation6 + $0x20] sm:$0xf]
    %v69 = vld [vmem:[#allocation6 + $0x24] sm:$0xf]
    %v70 = vld [vmem:[#allocation6 + $0x28] sm:$0xf]
    %v71 = vld [vmem:[#allocation6 + $0x2c] sm:$0xf]
    %v72 = vld [vmem:[#allocation6 + $0x30] sm:$0xf]
    %v73 = vld [vmem:[#allocation6 + $0x34] sm:$0xf]
    %v74 = vld [vmem:[#allocation6 + $0x38] sm:$0xf]
    %v75 = vld [vmem:[#allocation6 + $0x3c] sm:$0xf]
    %v92 = vunpack.c.l.b16 %v60
    %v93 = vunpack.c.l.b16 %v61
    %v94 = vunpack.c.l.b16 %v62
    %v95 = vunpack.c.l.b16 %v63
    %v96 = vunpack.c.l.b16 %v64
    %v97 = vunpack.c.l.b16 %v65
    %v98 = vunpack.c.l.b16 %v66
    %v99 = vunpack.c.l.b16 %v67
    %v100 = vunpack.c.l.b16 %v68
    %v101 = vunpack.c.l.b16 %v69
    %v102 = vunpack.c.l.b16 %v70
    %v103 = vunpack.c.l.b16 %v71
    %v104 = vunpack.c.l.b16 %v72
    %v105 = vunpack.c.l.b16 %v73
    %v106 = vunpack.c.l.b16 %v74
    %v107 = vunpack.c.l.b16 %v75
    %v108 = vpack.c.b16 %v93, %v92
    %v109 = vpack.c.b16 %v95, %v94
    %v110 = vpack.c.b16 %v97, %v96
    %v111 = vpack.c.b16 %v99, %v98
    %v112 = vpack.c.b16 %v101, %v100
    %v113 = vpack.c.b16 %v103, %v102
    %v114 = vpack.c.b16 %v105, %v104
    %v115 = vpack.c.b16 %v107, %v106
    %124 = vmatprep.subr.bf16.mxu0 0
    %125 = vmatpush1.bf16.msra.mxu0 %v108
    %126 = vmatprep.subr.bf16.mxu0 0
    %127 = vmatpush1.bf16.msra.mxu0 %v109
    %128 = vmatprep.subr.bf16.mxu0 0
    %129 = vmatpush1.bf16.msra.mxu0 %v110
    %130 = vmatprep.subr.bf16.mxu0 0
    %131 = vmatpush1.bf16.msra.mxu0 %v111
    %132 = vmatprep.subr.bf16.mxu0 0
    %133 = vmatpush1.bf16.msra.mxu0 %v112
    %134 = vmatprep.subr.bf16.mxu0 0
    %135 = vmatpush1.bf16.msra.mxu0 %v113
    %136 = vmatprep.subr.bf16.mxu0 0
    %137 = vmatpush1.bf16.msra.mxu0 %v114
    %138 = vmatprep.subr.bf16.mxu0 0
    %139 = vmatpush1.bf16.msra.mxu0 %v115
    %140 = vmatprep.subr.bf16.mxu0 0
    %141 = vmatpush1.bf16.msra.mxu0 0
    %142 = vmatprep.subr.bf16.mxu0 0
    %143 = vmatpush1.bf16.msra.mxu0 0
    %144 = vmatprep.subr.bf16.mxu0 0
    %145 = vmatpush1.bf16.msra.mxu0 0
    %146 = vmatprep.subr.bf16.mxu0 0
    %147 = vmatpush1.bf16.msra.mxu0 0
    %148 = vmatprep.subr.bf16.mxu0 0
    %149 = vmatpush1.bf16.msra.mxu0 0
    %150 = vmatprep.subr.bf16.mxu0 0
    %151 = vmatpush1.bf16.msra.mxu0 0
    %152 = vmatprep.subr.bf16.mxu0 0
    %153 = vmatpush1.bf16.msra.mxu0 0
    %154 = vmatprep.subr.bf16.mxu0 0
    %155 = vmatpush1.bf16.msra.mxu0 0
    %156 = vmatprep.mubr.bf16.mxu0 0
    %157 = vmatmul.mubr.bf16.gmra.mrb[0].mxu0 %v59
    %v158 = vpop.f32.mrb[0].mxu0
    %v159 = vadd.f32 0.0, %v158
    %v160 = vpop.f32.mrb[0].mxu0
    %v161 = vpop.f32.mrb[0].mxu0
    %v162 = vpop.f32.mrb[0].mxu0
    %163 = vdwg.mxu0
    %v164 = vadd.f32 %v58, %v159
    %165 = vst [vmem:[#allocation2] sm:$0xff] %v164
    // Predicated region
    $region30: #{model_forward.29} parent=1 // pred_check
      %p166 = pneg %p53
    $region31: #{model_forward.29} parent=1 // pred_check_branch
      %168 = sbr.rel (%p166) target = $region33
    $region32: #{model_forward.29} parent=1 // pred_region
      %v169 = vld [vmem:[#allocation2] sm:$0xff]
      %v170 = vld [vmem:[#allocation8] sm:$0x1]
      %v172 = vlaneseq
      %v173 = vshrl.u32 %v172, 7
      %v174 = vsub.s32 0, %v173
      %v175 = vrot.slane %v170, %v174
      %v177 = vadd.f32 %v169, %v175
      %178 = vst [vmem:[#allocation9] sm:$0xff] %v177
    $region33: #{model_forward.29} parent=1 // pred_fallthru
      _
    // Predicated region
    $region34: #{model_forward.29} parent=1 // pred_check
      _
    $region35: #{model_forward.29} parent=1 // pred_check_branch
      %180 = sbr.rel (0) target = $region37
    $region36: #{model_forward.29} parent=1 // pred_region
      %s182 = ssub.s32 128, 128
      %183 = vsyncadd [#allocation5], %s182
      %s185 = sshll.u32 [#allocation9], 4
      %s186 = int_to_ptr.vmem [resolvable:$true] %s185
      %188 = dma.vmem_to_hbm [thread:$0]  %s186, 128, %s3, [#allocation5]
    $region37: #{model_forward.29} parent=1 // pred_fallthru
      _
    // Predicated region
    $region38: #{model_forward.29} parent=1 // pred_check
      _
    $region39: #{model_forward.29} parent=1 // pred_check_branch
      %190 = sbr.rel (0) target = $region41
    $region40: #{model_forward.29} parent=1 // pred_region
      %191 = dma.done [#allocation5], 128
    $region41: #{model_forward.29} parent=1 // pred_fallthru
      _
    %192 = vsyncpa [#allocation4], 1
    %193 = vsyncpa [#allocation7], 1
    %194 = vsyncpa [#allocation5], 1

// kernel: model_forward.30
$region0: #{model_forward.30}
  #allocation0 [shape = 'u32[]', space=smem, size = 0x4, offset = 0x4, fixed_abs, tag = 'smem constant byte address 0x4 - core index']
  #allocation1 [shape = 'u32[144,128]{1,0:T(1,128)}', space=vmem, size = 0x12000, scoped, tag = 'internal scratch']
  #allocation2 [shape = 'f32[8,256]{1,0:T(8,128)}', space=vmem, size = 0x2000, scoped, tag = 'scratch operand']
  %s0 = inlined_call_operand.hbm [shape: bf16[8,384], index: 0, kind: input, shape index: {}]
  %s1 = inlined_call_operand.hbm [shape: bf16[384,256], index: 1, kind: input, shape index: {}]
  %s2 = inlined_call_operand.hbm [shape: f32[1,256], index: 2, kind: input, shape index: {}]
  %s3 = inlined_call_operand.hbm [shape: f32[8,256], index: 3, kind: output, shape index: {}]
  %s4 = sld [smem:[#allocation0]]
  $region65: #{model_forward.30} parent=0
    _
  %s6 = ssub.s32 1, %s4
  %s7 = scalar_select 0, %s6, %s4
  $region1: #{model_forward.30} parent=0
    #allocation3 [shape = 'u8[4096]{0}', space=vmem, size = 0x1000, scoped, tag = 'input window, operand 0']
    #allocation4 [shape = 's32[2]{0}', space=sflag, size = 0x8, scoped, tag = 'scoped memory for model_forward.30']
    #allocation5 [shape = 's32[2]{0}', space=sflag, size = 0x8, scoped, tag = 'scoped memory for model_forward.30']
    #allocation6 [shape = 'u8[131072]{0}', space=vmem, size = 0x20000, scoped, tag = 'input window, operand 1']
    #allocation7 [shape = 's32[2]{0}', space=sflag, size = 0x8, scoped, tag = 'scoped memory for model_forward.30']
    #allocation8 [shape = 'u8[1024]{0}', space=vmem, size = 0x400, scoped, tag = 'input window, operand 2, single buffered']
    #allocation9 [shape = 'u8[8192]{0}', space=vmem, size = 0x2000, scoped, tag = 'output window, operand 0, single buffered']
    %8 = vsyncpa [#allocation4], 0
    %s9 = scalar_lea.sflag [#allocation4], 1
    %10 = vsyncpa %s9, 0
    %11 = vsyncpa [#allocation7], 0
    %s12 = scalar_lea.sflag [#allocation7], 1
    %13 = vsyncpa %s12, 0
    %14 = vsyncpa [#allocation5], 0
    loop: start=0, step=1, limit=5
    $region2: #{model_forward.30} parent=1 // loop_pre_header
      _
    $region3: #{model_forward.30} parent=1 // loop_header
      %s16 = sphi 0, %s20
      %p17 = scmp.ge.s32.totalorder %s16, 5
      %s23 = sphi 0, %s42
      %s24 = sphi 0, %s38
      %s25 = sphi 0, %s34
      %s26 = sphi 0, %s23
      %s27 = sphi 0, %s24
      %s28 = sphi 0, %s25
      %s29 = sphi 0, %s26
      %s30 = sphi 0, %s27
      %s31 = sphi 0, %s28
      %s47 = sphi 0, %s49
      %s50 = sphi 0, %s47
      %s51 = sphi 0, %s50
      %s67 = sphi 0, %s51
      %s75 = sphi 0, %s77
      %s78 = sphi 0, %s75
      %s79 = sphi 0, %s78
      %s95 = sphi 0, %s79
      %s101 = sphi 0, %s103
      %s104 = sphi 0, %s101
      %s105 = sphi 0, %s104
      %s121 = sphi 0, %s105
      %s129 = sphi 0, %s131
      %s132 = sphi 0, %s129
      %s133 = sphi 0, %s132
      %s149 = sphi 0, %s133
    $region4: #{model_forward.30} parent=1 // loop_header_branch
      %19 = sbr.rel (%p17) target = $region8
    $region5: #{model_forward.30} parent=1 // loop_body
      %s21 = ssub.s32 %s16, 1
      %s22 = ssub.s32 %s16, 2
      %s32 = sadd.s32 1, %s25
      %p33 = scmp.ge.s32.totalorder %s32, 3
      %s34 = scalar_select %p33, 0, %s32
      %s35 = sadd.s32 1, %s24
      %s36 = scalar_select %p33, %s35, %s24
      %p37 = scmp.ge.s32.totalorder %s36, 1
      %s38 = scalar_select %p37, 0, %s36
      %s39 = sadd.s32 1, %s23
      %s40 = scalar_select %p37, %s39, %s23
      %p41 = scmp.ge.s32.totalorder %s40, 1
      %s42 = scalar_select %p41, 0, %s40
      %s43 = ssub.s32 %s23, %s42
      %s44 = ssub.s32 %s25, %s34
      %s45 = sor.u32 %s43, %s44
      %p46 = scmp.eq.s32.totalorder %s45, 0
      %s48 = sadd.s32 %s47, 1
      %s49 = scalar_select %p46, %s47, %s48
      %p52 = pneg %p46
      %p53 = scmp.eq.s32.totalorder %s16, 2
      %p54 = por %p52, %p53
      %p55 = scmp.ne.s32.totalorder %s47, %s50
      %p56 = scmp.eq.s32.totalorder %s16, 0
      %p57 = por %p55, %p56
      %p58 = scmp.ne.s32.totalorder %s47, %s50
      %p59 = scmp.eq.s32.totalorder %s21, 2
      %p60 = por %p58, %p59
      %p61 = scmp.ne.s32.totalorder %s50, %s51
      %p62 = scmp.eq.s32.totalorder %s21, 0
      %p63 = por %p61, %p62
      %p64 = scmp.ne.s32.totalorder %s50, %s51
      %p65 = scmp.eq.s32.totalorder %s22, 2
      %p66 = por %p64, %p65
      %p68 = scmp.ne.s32.totalorder %s51, %s67
      %p69 = scmp.eq.s32.totalorder %s22, 0
      %p70 = por %p68, %p69
      %s71 = ssub.s32 %s25, %s34
      %s72 = ssub.s32 %s24, %s38
      %s73 = sor.u32 %s71, %s72
      %p74 = scmp.eq.s32.totalorder %s73, 0
      %s76 = sadd.s32 %s75, 1
      %s77 = scalar_select %p74, %s75, %s76
      %p80 = pneg %p74
      %p81 = scmp.eq.s32.totalorder %s16, 2
      %p82 = por %p80, %p81
      %p83 = scmp.ne.s32.totalorder %s75, %s78
      %p84 = scmp.eq.s32.totalorder %s16, 0
      %p85 = por %p83, %p84
      %p86 = scmp.ne.s32.totalorder %s75, %s78
      %p87 = scmp.eq.s32.totalorder %s21, 2
      %p88 = por %p86, %p87
      %p89 = scmp.ne.s32.totalorder %s78, %s79
      %p90 = scmp.eq.s32.totalorder %s21, 0
      %p91 = por %p89, %p90
      %p92 = scmp.ne.s32.totalorder %s78, %s79
      %p93 = scmp.eq.s32.totalorder %s22, 2
      %p94 = por %p92, %p93
      %p96 = scmp.ne.s32.totalorder %s79, %s95
      %p97 = scmp.eq.s32.totalorder %s22, 0
      %p98 = por %p96, %p97
      %s99 = ssub.s32 %s24, %s38
      %p100 = scmp.eq.s32.totalorder %s99, 0
      %s102 = sadd.s32 %s101, 1
      %s103 = scalar_select %p100, %s101, %s102
      %p106 = pneg %p100
      %p107 = scmp.eq.s32.totalorder %s16, 2
      %p108 = por %p106, %p107
      %p109 = scmp.ne.s32.totalorder %s101, %s104
      %p110 = scmp.eq.s32.totalorder %s16, 0
      %p111 = por %p109, %p110
      %p112 = scmp.ne.s32.totalorder %s101, %s104
      %p113 = scmp.eq.s32.totalorder %s21, 2
      %p114 = por %p112, %p113
      %p115 = scmp.ne.s32.totalorder %s104, %s105
      %p116 = scmp.eq.s32.totalorder %s21, 0
      %p117 = por %p115, %p116
      %p118 = scmp.ne.s32.totalorder %s104, %s105
      %p119 = scmp.eq.s32.totalorder %s22, 2
      %p120 = por %p118, %p119
      %p122 = scmp.ne.s32.totalorder %s105, %s121
      %p123 = scmp.eq.s32.totalorder %s22, 0
      %p124 = por %p122, %p123
      %s125 = ssub.s32 %s23, %s42
      %s126 = ssub.s32 %s24, %s38
      %s127 = sor.u32 %s125, %s126
      %p128 = scmp.eq.s32.totalorder %s127, 0
      %s130 = sadd.s32 %s129, 1
      %s131 = scalar_select %p128, %s129, %s130
      %p134 = pneg %p128
      %p135 = scmp.eq.s32.totalorder %s16, 2
      %p136 = por %p134, %p135
      %p137 = scmp.ne.s32.totalorder %s129, %s132
      %p138 = scmp.eq.s32.totalorder %s16, 0
      %p139 = por %p137, %p138
      %p140 = scmp.ne.s32.totalorder %s129, %s132
      %p141 = scmp.eq.s32.totalorder %s21, 2
      %p142 = por %p140, %p141
      %p143 = scmp.ne.s32.totalorder %s132, %s133
      %p144 = scmp.eq.s32.totalorder %s21, 0
      %p145 = por %p143, %p144
      %p146 = scmp.ne.s32.totalorder %s132, %s133
      %p147 = scmp.eq.s32.totalorder %s22, 2
      %p148 = por %p146, %p147
      %p150 = scmp.ne.s32.totalorder %s133, %s149
      %p151 = scmp.eq.s32.totalorder %s22, 0
      %p152 = por %p150, %p151
      %p153 = scmp.le.s32.totalorder 1, %s16
      %p154 = scmp.lt.s32.totalorder %s16, 4
      %p155 = pnand %p153, %p154
      %p156 = pneg %p155
      // Predicated region
      $region9: #{model_forward.30} parent=5 // pred_check
        _
      $region10: #{model_forward.30} parent=5 // pred_check_branch
        %158 = sbr.rel (%p155) target = $region12
      $region11: #{model_forward.30} parent=5 // pred_region
        %s159 = ssub.s32 %s16, 1
        // Predicated region
        $region13: #{model_forward.30} parent=11 // pred_check
          %p160 = pneg %p117
        $region14: #{model_forward.30} parent=11 // pred_check_branch
          %162 = sbr.rel (%p160) target = $region16
        $region15: #{model_forward.30} parent=11 // pred_region
          %s163 = smul.u32 2, %s27
          %s165 = ssub.s32 32, 32
          %166 = vsyncadd [#allocation7], %s165
          %s167 = smul.addr %s163, 16
          %s168 = scalar_lea.hbm %s2, %s167
          %s170 = sshll.u32 [#allocation8], 4
          %s171 = int_to_ptr.vmem [resolvable:$true] %s170
          %173 = dma.hbm_to_vmem [thread:$0]  %s168, 32, %s171, [#allocation7]
        $region16: #{model_forward.30} parent=11 // pred_fallthru
          _
      $region12: #{model_forward.30} parent=5 // pred_fallthru
        _
      %p174 = scmp.lt.s32.totalorder %s16, 3
      // Predicated region
      $region17: #{model_forward.30} parent=5 // pred_check
        %p175 = pneg %p174
      $region18: #{model_forward.30} parent=5 // pred_check_branch
        %177 = sbr.rel (%p175) target = $region20
      $region19: #{model_forward.30} parent=5 // pred_region
        // Predicated region
        $region21: #{model_forward.30} parent=19 // pred_check
          %p178 = pneg %p57
        $region22: #{model_forward.30} parent=19 // pred_check_branch
          %180 = sbr.rel (%p178) target = $region24
        $region23: #{model_forward.30} parent=19 // pred_region
          %s181 = sand.u32 %s47, 1
          %s182 = scalar_lea.sflag [#allocation4], %s181
          %s183 = sand.u32 %s47, 1
          %s184 = smul.addr %s183, 4
          %s185 = scalar_lea.vmem [#allocation3], %s184
          %s187 = ssub.s32 64, 64
          %188 = vsyncadd %s182, %s187
          %s189 = smul.addr %s23, 3
          %s190 = sadd.s32 %s25, %s189
          %s191 = smul.addr %s190, 64
          %s192 = scalar_lea.hbm %s0, %s191
          %s194 = sshll.u32 %s185, 4
          %s195 = int_to_ptr.vmem [resolvable:$true] %s194
          %197 = dma.hbm_to_vmem [thread:$0]  %s192, 64, %s195, %s182
        $region24: #{model_forward.30} parent=19 // pred_fallthru
          _
        // Predicated region
        $region25: #{model_forward.30} parent=19 // pred_check
          %p198 = pneg %p85
        $region26: #{model_forward.30} parent=19 // pred_check_branch
          %200 = sbr.rel (%p198) target = $region28
        $region27: #{model_forward.30} parent=19 // pred_region
          %s201 = sand.u32 %s16, 1
          %s202 = scalar_lea.sflag [#allocation7], %s201
          %s203 = sand.u32 %s75, 1
          %s204 = smul.addr %s203, 128
          %s205 = scalar_lea.vmem [#allocation6], %s204
          %s206 = smul.u32 16, %s25
          %s207 = smul.u32 2, %s24
          %s209 = ssub.s32 2048, 2048
          %210 = vsyncadd %s202, %s209
          %s211 = smul.addr %s206, 2
          %s212 = sadd.s32 %s207, %s211
          %s213 = smul.addr %s212, 64
          %s214 = scalar_lea.hbm %s1, %s213
          %s215 = sshll.u32 %s205, 4
          %s216 = int_to_ptr.vmem [resolvable:$true] %s215
          %221 = dma.hbm_to_vmem [thread:$0]  %s214, 2048, %s216, %s202, 128, 128, 8
        $region28: #{model_forward.30} parent=19 // pred_fallthru
          _
      $region20: #{model_forward.30} parent=5 // pred_fallthru
        _
      %p222 = scmp.le.s32.totalorder 1, %s16
      %p223 = scmp.lt.s32.totalorder %s16, 4
      %p224 = pnand %p222, %p223
      %p225 = pneg %p224
      // Predicated region
      $region29: #{model_forward.30} parent=5 // pred_check
        _
      $region30: #{model_forward.30} parent=5 // pred_check_branch
        %227 = sbr.rel (%p224) target = $region32
      $region31: #{model_forward.30} parent=5 // pred_region
        %s228 = ssub.s32 %s16, 1
        %s229 = sand.u32 %s50, 1
        %s230 = scalar_lea.sflag [#allocation4], %s229
        %s231 = sand.u32 %s50, 1
        %s232 = smul.addr %s231, 4
        %s233 = scalar_lea.vmem [#allocation3], %s232
        // Predicated region
        $region33: #{model_forward.30} parent=31 // pred_check
          %p234 = pneg %p63
        $region34: #{model_forward.30} parent=31 // pred_check_branch
          %236 = sbr.rel (%p234) target = $region36
        $region35: #{model_forward.30} parent=31 // pred_region
          %237 = dma.done %s230, 64
        $region36: #{model_forward.30} parent=31 // pred_fallthru
          _
        %s238 = sand.u32 %s21, 1
        %s239 = scalar_lea.sflag [#allocation7], %s238
        %s240 = sand.u32 %s78, 1
        %s241 = smul.addr %s240, 128
        %s242 = scalar_lea.vmem [#allocation6], %s241
        // Predicated region
        $region37: #{model_forward.30} parent=31 // pred_check
          %p243 = pneg %p91
        $region38: #{model_forward.30} parent=31 // pred_check_branch
          %245 = sbr.rel (%p243) target = $region40
        $region39: #{model_forward.30} parent=31 // pred_region
          %246 = dma.done %s239, 2048
        $region40: #{model_forward.30} parent=31 // pred_fallthru
          _
        // Predicated region
        $region41: #{model_forward.30} parent=31 // pred_check
          %p247 = pneg %p117
        $region42: #{model_forward.30} parent=31 // pred_check_branch
          %249 = sbr.rel (%p247) target = $region44
        $region43: #{model_forward.30} parent=31 // pred_region
          %250 = dma.done [#allocation7], 32
        $region44: #{model_forward.30} parent=31 // pred_fallthru
          _
        %s251 = sand.u32 %s50, 1
        %s252 = scalar_lea.sflag [#allocation4], %s251
        %s253 = sand.u32 %s50, 1
        %s254 = smul.addr %s253, 4
        %s255 = scalar_lea.vmem [#allocation3], %s254
        %p256 = pneg %p63
        %p257 = pneg %p60
        %s258 = sand.u32 %s21, 1
        %s259 = scalar_lea.sflag [#allocation7], %s258
        %s260 = sand.u32 %s78, 1
        %s261 = smul.addr %s260, 128
        %s262 = scalar_lea.vmem [#allocation6], %s261
        %p263 = pneg %p91
        %p264 = pneg %p88
        %p265 = pneg %p117
        %p266 = pneg %p114
        %p267 = pneg %p145
        %p268 = pneg %p142
        %s269 = smul.u32 16, %s28
        %s270 = smul.u32 2, %s27
        %s271 = smul.u32 2, %s27
        %s272 = smul.u32 2, %s27
        %p274 = scmp.eq.s32.totalorder %s28, 0
        // Predicated region
        $region45: #{model_forward.30} parent=31 // pred_check
          %p275 = pneg %p274
        $region46: #{model_forward.30} parent=31 // pred_check_branch
          %277 = sbr.rel (%p275) target = $region48
        $region47: #{model_forward.30} parent=31 // pred_region
          %278 = vst [vmem:[#allocation2] sm:$0xff] 0.0
          %279 = vst [vmem:[#allocation2 + $0x8] sm:$0xff] 0.0
        $region48: #{model_forward.30} parent=31 // pred_fallthru
          _
        %v280 = vld [vmem:[#allocation2] sm:$0xff]
        %v281 = vld [vmem:[#allocation2 + $0x8] sm:$0xff]
        %v282 = vld [vmem:[%s233] sm:$0xf]
        %v283 = vld [vmem:[%s242] sm:$0xff]
        %v284 = vld [vmem:[%s242 + $0x8] sm:$0xff]
        %v285 = vld [vmem:[%s242 + $0x10] sm:$0xff]
        %v286 = vld [vmem:[%s242 + $0x18] sm:$0xff]
        %v287 = vld [vmem:[%s242 + $0x20] sm:$0xff]
        %v288 = vld [vmem:[%s242 + $0x28] sm:$0xff]
        %v289 = vld [vmem:[%s242 + $0x30] sm:$0xff]
        %v290 = vld [vmem:[%s242 + $0x38] sm:$0xff]
        %v291 = vld [vmem:[%s242 + $0x40] sm:$0xff]
        %v292 = vld [vmem:[%s242 + $0x48] sm:$0xff]
        %v293 = vld [vmem:[%s242 + $0x50] sm:$0xff]
        %v294 = vld [vmem:[%s242 + $0x58] sm:$0xff]
        %v295 = vld [vmem:[%s242 + $0x60] sm:$0xff]
        %v296 = vld [vmem:[%s242 + $0x68] sm:$0xff]
        %v297 = vld [vmem:[%s242 + $0x70] sm:$0xff]
        %v298 = vld [vmem:[%s242 + $0x78] sm:$0xff]
        %v315 = vunpack.c.l.b16 %v283
        %v316 = vunpack.c.h.b16 %v283
        %v317 = vunpack.c.l.b16 %v284
        %v318 = vunpack.c.h.b16 %v284
        %v319 = vunpack.c.l.b16 %v285
        %v320 = vunpack.c.h.b16 %v285
        %v321 = vunpack.c.l.b16 %v286
        %v322 = vunpack.c.h.b16 %v286
        %v323 = vunpack.c.l.b16 %v287
        %v324 = vunpack.c.h.b16 %v287
        %v325 = vunpack.c.l.b16 %v288
        %v326 = vunpack.c.h.b16 %v288
        %v327 = vunpack.c.l.b16 %v289
        %v328 = vunpack.c.h.b16 %v289
        %v329 = vunpack.c.l.b16 %v290
        %v330 = vunpack.c.h.b16 %v290
        %v331 = vunpack.c.l.b16 %v291
        %v332 = vunpack.c.h.b16 %v291
        %v333 = vunpack.c.l.b16 %v292
        %v334 = vunpack.c.h.b16 %v292
        %v335 = vunpack.c.l.b16 %v293
        %v336 = vunpack.c.h.b16 %v293
        %v337 = vunpack.c.l.b16 %v294
        %v338 = vunpack.c.h.b16 %v294
        %v339 = vunpack.c.l.b16 %v295
        %v340 = vunpack.c.h.b16 %v295
        %v341 = vunpack.c.l.b16 %v296
        %v342 = vunpack.c.h.b16 %v296
        %v343 = vunpack.c.l.b16 %v297
        %v344 = vunpack.c.h.b16 %v297
        %v345 = vunpack.c.l.b16 %v298
        %v346 = vunpack.c.h.b16 %v298
        %v347 = vpack.c.b16 %v317, %v315
        %v348 = vpack.c.b16 %v318, %v316
        %v349 = vpack.c.b16 %v321, %v319
        %v350 = vpack.c.b16 %v322, %v320
        %v351 = vpack.c.b16 %v325, %v323
        %v352 = vpack.c.b16 %v326, %v324
        %v353 = vpack.c.b16 %v329, %v327
        %v354 = vpack.c.b16 %v330, %v328
        %v355 = vpack.c.b16 %v333, %v331
        %v356 = vpack.c.b16 %v334, %v332
        %v357 = vpack.c.b16 %v337, %v335
        %v358 = vpack.c.b16 %v338, %v336
        %v359 = vpack.c.b16 %v341, %v339
        %v360 = vpack.c.b16 %v342, %v340
        %v361 = vpack.c.b16 %v345, %v343
        %v362 = vpack.c.b16 %v346, %v344
        %379 = vmatprep.subr.bf16.mxu0 %v348
        %380 = vmatpush1.bf16.msra.mxu0 %v347
        %381 = vmatprep.subr.bf16.mxu0 %v350
        %382 = vmatpush1.bf16.msra.mxu0 %v349
        %383 = vmatprep.subr.bf16.mxu0 %v352
        %384 = vmatpush1.bf16.msra.mxu0 %v351
        %385 = vmatprep.subr.bf16.mxu0 %v354
        %386 = vmatpush1.bf16.msra.mxu0 %v353
        %387 = vmatprep.subr.bf16.mxu0 %v356
        %388 = vmatpush1.bf16.msra.mxu0 %v355
        %389 = vmatprep.subr.bf16.mxu0 %v358
        %390 = vmatpush1.bf16.msra.mxu0 %v357
        %391 = vmatprep.subr.bf16.mxu0 %v360
        %392 = vmatpush1.bf16.msra.mxu0 %v359
        %393 = vmatprep.subr.bf16.mxu0 %v362
        %394 = vmatpush1.bf16.msra.mxu0 %v361
        %395 = vmatprep.subr.bf16.mxu0 0
        %396 = vmatpush1.bf16.msra.mxu0 0
        %397 = vmatprep.subr.bf16.mxu0 0
        %398 = vmatpush1.bf16.msra.mxu0 0
        %399 = vmatprep.subr.bf16.mxu0 0
        %400 = vmatpush1.bf16.msra.mxu0 0
        %401 = vmatprep.subr.bf16.mxu0 0
        %402 = vmatpush1.bf16.msra.mxu0 0
        %403 = vmatprep.subr.bf16.mxu0 0
        %404 = vmatpush1.bf16.msra.mxu0 0
        %405 = vmatprep.subr.bf16.mxu0 0
        %406 = vmatpush1.bf16.msra.mxu0 0
        %407 = vmatprep.subr.bf16.mxu0 0
        %408 = vmatpush1.bf16.msra.mxu0 0
        %409 = vmatprep.subr.bf16.mxu0 0
        %410 = vmatpush1.bf16.msra.mxu0 0
        %411 = vmatprep.mubr.bf16.mxu0 0
        %412 = vmatmul.mubr.bf16.gmra.mrb[0].mxu0 %v282
        %v413 = vpop.f32.mrb[0].mxu0
        %v414 = vadd.f32 0.0, %v413
        %v415 = vpop.f32.mrb[0].mxu0
        %v416 = vadd.f32 0.0, %v415
        %v417 = vpop.f32.mrb[0].mxu0
        %v418 = vpop.f32.mrb[0].mxu0
        %419 = vdwg.mxu0
        %v420 = vadd.f32 %v280, %v414
        %v421 = vadd.f32 %v281, %v416
        %422 = vst [vmem:[#allocation2] sm:$0xff] %v420
        %423 = vst [vmem:[#allocation2 + $0x8] sm:$0xff] %v421
        %p424 = scmp.eq.s32.totalorder %s28, 2
        // Predicated region
        $region49: #{model_forward.30} parent=31 // pred_check
          %p425 = pneg %p424
        $region50: #{model_forward.30} parent=31 // pred_check_branch
          %427 = sbr.rel (%p425) target = $region52
        $region51: #{model_forward.30} parent=31 // pred_region
          %v428 = vld [vmem:[#allocation2] sm:$0xff]
          %v429 = vld [vmem:[#allocation2 + $0x8] sm:$0xff]
          %v430 = vld [vmem:[#allocation8] sm:$0x3]
          %v432 = vlaneseq
          %v433 = vshrl.u32 %v432, 7
          %v434 = vsub.s32 0, %v433
          %v435 = vrot.slane %v430, %v434
          %v436 = vlaneseq
          %v437 = vshrl.u32 %v436, 7
          %v438 = vsub.s32 1, %v437
          %v439 = vrot.slane %v430, %v438
          %v442 = vadd.f32 %v428, %v435
          %v443 = vadd.f32 %v429, %v439
          %444 = vst [vmem:[#allocation9] sm:$0xff] %v442
          %445 = vst [vmem:[#allocation9 + $0x8] sm:$0xff] %v443
        $region52: #{model_forward.30} parent=31 // pred_fallthru
          _
        // Predicated region
        $region53: #{model_forward.30} parent=31 // pred_check
          %p446 = pneg %p142
        $region54: #{model_forward.30} parent=31 // pred_check_branch
          %448 = sbr.rel (%p446) target = $region56
        $region55: #{model_forward.30} parent=31 // pred_region
          %s449 = smul.u32 2, %s27
          %s451 = ssub.s32 256, 256
          %452 = vsyncadd [#allocation5], %s451
          %s453 = smul.addr %s26, 2
          %s454 = sadd.s32 %s449, %s453
          %s455 = smul.addr %s454, 128
          %s456 = scalar_lea.hbm %s3, %s455
          %s458 = sshll.u32 [#allocation9], 4
          %s459 = int_to_ptr.vmem [resolvable:$true] %s458
          %461 = dma.vmem_to_hbm [thread:$0]  %s459, 256, %s456, [#allocation5]
        $region56: #{model_forward.30} parent=31 // pred_fallthru
          _
        // Predicated region
        $region57: #{model_forward.30} parent=31 // pred_check
          %p462 = pneg %p142
        $region58: #{model_forward.30} parent=31 // pred_check_branch
          %464 = sbr.rel (%p462) target = $region60
        $region59: #{model_forward.30} parent=31 // pred_region
          %465 = dma.done [#allocation5], 256
        $region60: #{model_forward.30} parent=31 // pred_fallthru
          _
      $region32: #{model_forward.30} parent=5 // pred_fallthru
        _
      %p466 = scmp.le.s32.totalorder 2, %s16
      // Predicated region
      $region61: #{model_forward.30} parent=5 // pred_check
        %p467 = pneg %p466
      $region62: #{model_forward.30} parent=5 // pred_check_branch
        %469 = sbr.rel (%p467) target = $region64
      $region63: #{model_forward.30} parent=5 // pred_region
        %s470 = ssub.s32 %s16, 2
      $region64: #{model_forward.30} parent=5 // pred_fallthru
        _
    $region6: #{model_forward.30} parent=1 // loop_footer
      %s20 = sadd.s32 1, %s16
    $region7: #{model_forward.30} parent=1 // loop_footer_branch
      %15 = sbr.rel target = $region3
    $region8: #{model_forward.30} parent=1 // loop_exit
      _
    %471 = vsyncpa [#allocation4], 1
    %s472 = scalar_lea.sflag [#allocation4], 1
    %473 = vsyncpa %s472, 1
    %474 = vsyncpa [#allocation7], 1
    %s475 = scalar_lea.sflag [#allocation7], 1
    %476 = vsyncpa %s475, 1
    %477 = vsyncpa [#allocation5], 1
    %s478 = scalar_lea.sflag [#allocation5], 1
    %479 = vsyncpa %s478, 1

// kernel: model_forward.31
$region0: #{model_forward.31}
  #allocation0 [shape = 'u32[]', space=smem, size = 0x4, offset = 0x4, fixed_abs, tag = 'smem constant byte address 0x4 - core index']
  #allocation1 [shape = 'u32[144,128]{1,0:T(1,128)}', space=vmem, size = 0x12000, scoped, tag = 'internal scratch']
  #allocation2 [shape = 'f32[8,128]{1,0:T(8,128)}', space=vmem, size = 0x1000, scoped, tag = 'scratch operand']
  %s0 = inlined_call_operand.hbm [shape: bf16[8,384], index: 0, kind: input, shape index: {}]
  %s1 = inlined_call_operand.hbm [shape: bf16[384,128], index: 1, kind: input, shape index: {}]
  %s2 = inlined_call_operand.hbm [shape: f32[1,128], index: 2, kind: input, shape index: {}]
  %s3 = inlined_call_operand.hbm [shape: f32[8,128], index: 3, kind: output, shape index: {}]
  %s4 = sld [smem:[#allocation0]]
  $region65: #{model_forward.31} parent=0
    _
  %s6 = ssub.s32 1, %s4
  %s7 = scalar_select 0, %s6, %s4
  $region1: #{model_forward.31} parent=0
    #allocation3 [shape = 'u8[4096]{0}', space=vmem, size = 0x1000, scoped, tag = 'input window, operand 0']
    #allocation4 [shape = 's32[2]{0}', space=sflag, size = 0x8, scoped, tag = 'scoped memory for model_forward.31']
    #allocation5 [shape = 's32[2]{0}', space=sflag, size = 0x8, scoped, tag = 'scoped memory for model_forward.31']
    #allocation6 [shape = 'u8[65536]{0}', space=vmem, size = 0x10000, scoped, tag = 'input window, operand 1']
    #allocation7 [shape = 's32[2]{0}', space=sflag, size = 0x8, scoped, tag = 'scoped memory for model_forward.31']
    #allocation8 [shape = 'u8[512]{0}', space=vmem, size = 0x400, scoped, tag = 'input window, operand 2, single buffered']
    #allocation9 [shape = 'u8[4096]{0}', space=vmem, size = 0x1000, scoped, tag = 'output window, operand 0, single buffered']
    %8 = vsyncpa [#allocation4], 0
    %s9 = scalar_lea.sflag [#allocation4], 1
    %10 = vsyncpa %s9, 0
    %11 = vsyncpa [#allocation7], 0
    %s12 = scalar_lea.sflag [#allocation7], 1
    %13 = vsyncpa %s12, 0
    %14 = vsyncpa [#allocation5], 0
    loop: start=0, step=1, limit=5
    $region2: #{model_forward.31} parent=1 // loop_pre_header
      _
    $region3: #{model_forward.31} parent=1 // loop_header
      %s16 = sphi 0, %s20
      %p17 = scmp.ge.s32.totalorder %s16, 5
      %s23 = sphi 0, %s42
      %s24 = sphi 0, %s38
      %s25 = sphi 0, %s34
      %s26 = sphi 0, %s23
      %s27 = sphi 0, %s24
      %s28 = sphi 0, %s25
      %s29 = sphi 0, %s26
      %s30 = sphi 0, %s27
      %s31 = sphi 0, %s28
      %s47 = sphi 0, %s49
      %s50 = sphi 0, %s47
      %s51 = sphi 0, %s50
      %s67 = sphi 0, %s51
      %s75 = sphi 0, %s77
      %s78 = sphi 0, %s75
      %s79 = sphi 0, %s78
      %s95 = sphi 0, %s79
      %s101 = sphi 0, %s103
      %s104 = sphi 0, %s101
      %s105 = sphi 0, %s104
      %s121 = sphi 0, %s105
      %s129 = sphi 0, %s131
      %s132 = sphi 0, %s129
      %s133 = sphi 0, %s132
      %s149 = sphi 0, %s133
    $region4: #{model_forward.31} parent=1 // loop_header_branch
      %19 = sbr.rel (%p17) target = $region8
    $region5: #{model_forward.31} parent=1 // loop_body
      %s21 = ssub.s32 %s16, 1
      %s22 = ssub.s32 %s16, 2
      %s32 = sadd.s32 1, %s25
      %p33 = scmp.ge.s32.totalorder %s32, 3
      %s34 = scalar_select %p33, 0, %s32
      %s35 = sadd.s32 1, %s24
      %s36 = scalar_select %p33, %s35, %s24
      %p37 = scmp.ge.s32.totalorder %s36, 1
      %s38 = scalar_select %p37, 0, %s36
      %s39 = sadd.s32 1, %s23
      %s40 = scalar_select %p37, %s39, %s23
      %p41 = scmp.ge.s32.totalorder %s40, 1
      %s42 = scalar_select %p41, 0, %s40
      %s43 = ssub.s32 %s23, %s42
      %s44 = ssub.s32 %s25, %s34
      %s45 = sor.u32 %s43, %s44
      %p46 = scmp.eq.s32.totalorder %s45, 0
      %s48 = sadd.s32 %s47, 1
      %s49 = scalar_select %p46, %s47, %s48
      %p52 = pneg %p46
      %p53 = scmp.eq.s32.totalorder %s16, 2
      %p54 = por %p52, %p53
      %p55 = scmp.ne.s32.totalorder %s47, %s50
      %p56 = scmp.eq.s32.totalorder %s16, 0
      %p57 = por %p55, %p56
      %p58 = scmp.ne.s32.totalorder %s47, %s50
      %p59 = scmp.eq.s32.totalorder %s21, 2
      %p60 = por %p58, %p59
      %p61 = scmp.ne.s32.totalorder %s50, %s51
      %p62 = scmp.eq.s32.totalorder %s21, 0
      %p63 = por %p61, %p62
      %p64 = scmp.ne.s32.totalorder %s50, %s51
      %p65 = scmp.eq.s32.totalorder %s22, 2
      %p66 = por %p64, %p65
      %p68 = scmp.ne.s32.totalorder %s51, %s67
      %p69 = scmp.eq.s32.totalorder %s22, 0
      %p70 = por %p68, %p69
      %s71 = ssub.s32 %s25, %s34
      %s72 = ssub.s32 %s24, %s38
      %s73 = sor.u32 %s71, %s72
      %p74 = scmp.eq.s32.totalorder %s73, 0
      %s76 = sadd.s32 %s75, 1
      %s77 = scalar_select %p74, %s75, %s76
      %p80 = pneg %p74
      %p81 = scmp.eq.s32.totalorder %s16, 2
      %p82 = por %p80, %p81
      %p83 = scmp.ne.s32.totalorder %s75, %s78
      %p84 = scmp.eq.s32.totalorder %s16, 0
      %p85 = por %p83, %p84
      %p86 = scmp.ne.s32.totalorder %s75, %s78
      %p87 = scmp.eq.s32.totalorder %s21, 2
      %p88 = por %p86, %p87
      %p89 = scmp.ne.s32.totalorder %s78, %s79
      %p90 = scmp.eq.s32.totalorder %s21, 0
      %p91 = por %p89, %p90
      %p92 = scmp.ne.s32.totalorder %s78, %s79
      %p93 = scmp.eq.s32.totalorder %s22, 2
      %p94 = por %p92, %p93
      %p96 = scmp.ne.s32.totalorder %s79, %s95
      %p97 = scmp.eq.s32.totalorder %s22, 0
      %p98 = por %p96, %p97
      %s99 = ssub.s32 %s24, %s38
      %p100 = scmp.eq.s32.totalorder %s99, 0
      %s102 = sadd.s32 %s101, 1
      %s103 = scalar_select %p100, %s101, %s102
      %p106 = pneg %p100
      %p107 = scmp.eq.s32.totalorder %s16, 2
      %p108 = por %p106, %p107
      %p109 = scmp.ne.s32.totalorder %s101, %s104
      %p110 = scmp.eq.s32.totalorder %s16, 0
      %p111 = por %p109, %p110
      %p112 = scmp.ne.s32.totalorder %s101, %s104
      %p113 = scmp.eq.s32.totalorder %s21, 2
      %p114 = por %p112, %p113
      %p115 = scmp.ne.s32.totalorder %s104, %s105
      %p116 = scmp.eq.s32.totalorder %s21, 0
      %p117 = por %p115, %p116
      %p118 = scmp.ne.s32.totalorder %s104, %s105
      %p119 = scmp.eq.s32.totalorder %s22, 2
      %p120 = por %p118, %p119
      %p122 = scmp.ne.s32.totalorder %s105, %s121
      %p123 = scmp.eq.s32.totalorder %s22, 0
      %p124 = por %p122, %p123
      %s125 = ssub.s32 %s23, %s42
      %s126 = ssub.s32 %s24, %s38
      %s127 = sor.u32 %s125, %s126
      %p128 = scmp.eq.s32.totalorder %s127, 0
      %s130 = sadd.s32 %s129, 1
      %s131 = scalar_select %p128, %s129, %s130
      %p134 = pneg %p128
      %p135 = scmp.eq.s32.totalorder %s16, 2
      %p136 = por %p134, %p135
      %p137 = scmp.ne.s32.totalorder %s129, %s132
      %p138 = scmp.eq.s32.totalorder %s16, 0
      %p139 = por %p137, %p138
      %p140 = scmp.ne.s32.totalorder %s129, %s132
      %p141 = scmp.eq.s32.totalorder %s21, 2
      %p142 = por %p140, %p141
      %p143 = scmp.ne.s32.totalorder %s132, %s133
      %p144 = scmp.eq.s32.totalorder %s21, 0
      %p145 = por %p143, %p144
      %p146 = scmp.ne.s32.totalorder %s132, %s133
      %p147 = scmp.eq.s32.totalorder %s22, 2
      %p148 = por %p146, %p147
      %p150 = scmp.ne.s32.totalorder %s133, %s149
      %p151 = scmp.eq.s32.totalorder %s22, 0
      %p152 = por %p150, %p151
      %p153 = scmp.le.s32.totalorder 1, %s16
      %p154 = scmp.lt.s32.totalorder %s16, 4
      %p155 = pnand %p153, %p154
      %p156 = pneg %p155
      // Predicated region
      $region9: #{model_forward.31} parent=5 // pred_check
        _
      $region10: #{model_forward.31} parent=5 // pred_check_branch
        %158 = sbr.rel (%p155) target = $region12
      $region11: #{model_forward.31} parent=5 // pred_region
        %s159 = ssub.s32 %s16, 1
        // Predicated region
        $region13: #{model_forward.31} parent=11 // pred_check
          %p160 = pneg %p117
        $region14: #{model_forward.31} parent=11 // pred_check_branch
          %162 = sbr.rel (%p160) target = $region16
        $region15: #{model_forward.31} parent=11 // pred_region
          %s164 = ssub.s32 16, 16
          %165 = vsyncadd [#allocation7], %s164
          %s166 = smul.addr %s27, 16
          %s167 = scalar_lea.hbm %s2, %s166
          %s169 = sshll.u32 [#allocation8], 4
          %s170 = int_to_ptr.vmem [resolvable:$true] %s169
          %172 = dma.hbm_to_vmem [thread:$0]  %s167, 16, %s170, [#allocation7]
        $region16: #{model_forward.31} parent=11 // pred_fallthru
          _
      $region12: #{model_forward.31} parent=5 // pred_fallthru
        _
      %p173 = scmp.lt.s32.totalorder %s16, 3
      // Predicated region
      $region17: #{model_forward.31} parent=5 // pred_check
        %p174 = pneg %p173
      $region18: #{model_forward.31} parent=5 // pred_check_branch
        %176 = sbr.rel (%p174) target = $region20
      $region19: #{model_forward.31} parent=5 // pred_region
        // Predicated region
        $region21: #{model_forward.31} parent=19 // pred_check
          %p177 = pneg %p57
        $region22: #{model_forward.31} parent=19 // pred_check_branch
          %179 = sbr.rel (%p177) target = $region24
        $region23: #{model_forward.31} parent=19 // pred_region
          %s180 = sand.u32 %s47, 1
          %s181 = scalar_lea.sflag [#allocation4], %s180
          %s182 = sand.u32 %s47, 1
          %s183 = smul.addr %s182, 4
          %s184 = scalar_lea.vmem [#allocation3], %s183
          %s186 = ssub.s32 64, 64
          %187 = vsyncadd %s181, %s186
          %s188 = smul.addr %s23, 3
          %s189 = sadd.s32 %s25, %s188
          %s190 = smul.addr %s189, 64
          %s191 = scalar_lea.hbm %s0, %s190
          %s193 = sshll.u32 %s184, 4
          %s194 = int_to_ptr.vmem [resolvable:$true] %s193
          %196 = dma.hbm_to_vmem [thread:$0]  %s191, 64, %s194, %s181
        $region24: #{model_forward.31} parent=19 // pred_fallthru
          _
        // Predicated region
        $region25: #{model_forward.31} parent=19 // pred_check
          %p197 = pneg %p85
        $region26: #{model_forward.31} parent=19 // pred_check_branch
          %199 = sbr.rel (%p197) target = $region28
        $region27: #{model_forward.31} parent=19 // pred_region
          %s200 = sand.u32 %s16, 1
          %s201 = scalar_lea.sflag [#allocation7], %s200
          %s202 = sand.u32 %s75, 1
          %s203 = smul.addr %s202, 64
          %s204 = scalar_lea.vmem [#allocation6], %s203
          %s205 = smul.u32 16, %s25
          %s207 = ssub.s32 1024, 1024
          %208 = vsyncadd %s201, %s207
          %s209 = sadd.s32 %s24, %s205
          %s210 = smul.addr %s209, 64
          %s211 = scalar_lea.hbm %s1, %s210
          %s212 = sshll.u32 %s204, 4
          %s213 = int_to_ptr.vmem [resolvable:$true] %s212
          %218 = dma.hbm_to_vmem [thread:$0]  %s211, 1024, %s213, %s201, 64, 64, 4
        $region28: #{model_forward.31} parent=19 // pred_fallthru
          _
      $region20: #{model_forward.31} parent=5 // pred_fallthru
        _
      %p219 = scmp.le.s32.totalorder 1, %s16
      %p220 = scmp.lt.s32.totalorder %s16, 4
      %p221 = pnand %p219, %p220
      %p222 = pneg %p221
      // Predicated region
      $region29: #{model_forward.31} parent=5 // pred_check
        _
      $region30: #{model_forward.31} parent=5 // pred_check_branch
        %224 = sbr.rel (%p221) target = $region32
      $region31: #{model_forward.31} parent=5 // pred_region
        %s225 = ssub.s32 %s16, 1
        %s226 = sand.u32 %s50, 1
        %s227 = scalar_lea.sflag [#allocation4], %s226
        %s228 = sand.u32 %s50, 1
        %s229 = smul.addr %s228, 4
        %s230 = scalar_lea.vmem [#allocation3], %s229
        // Predicated region
        $region33: #{model_forward.31} parent=31 // pred_check
          %p231 = pneg %p63
        $region34: #{model_forward.31} parent=31 // pred_check_branch
          %233 = sbr.rel (%p231) target = $region36
        $region35: #{model_forward.31} parent=31 // pred_region
          %234 = dma.done %s227, 64
        $region36: #{model_forward.31} parent=31 // pred_fallthru
          _
        %s235 = sand.u32 %s21, 1
        %s236 = scalar_lea.sflag [#allocation7], %s235
        %s237 = sand.u32 %s78, 1
        %s238 = smul.addr %s237, 64
        %s239 = scalar_lea.vmem [#allocation6], %s238
        // Predicated region
        $region37: #{model_forward.31} parent=31 // pred_check
          %p240 = pneg %p91
        $region38: #{model_forward.31} parent=31 // pred_check_branch
          %242 = sbr.rel (%p240) target = $region40
        $region39: #{model_forward.31} parent=31 // pred_region
          %243 = dma.done %s236, 1024
        $region40: #{model_forward.31} parent=31 // pred_fallthru
          _
        // Predicated region
        $region41: #{model_forward.31} parent=31 // pred_check
          %p244 = pneg %p117
        $region42: #{model_forward.31} parent=31 // pred_check_branch
          %246 = sbr.rel (%p244) target = $region44
        $region43: #{model_forward.31} parent=31 // pred_region
          %247 = dma.done [#allocation7], 16
        $region44: #{model_forward.31} parent=31 // pred_fallthru
          _
        %s248 = sand.u32 %s50, 1
        %s249 = scalar_lea.sflag [#allocation4], %s248
        %s250 = sand.u32 %s50, 1
        %s251 = smul.addr %s250, 4
        %s252 = scalar_lea.vmem [#allocation3], %s251
        %p253 = pneg %p63
        %p254 = pneg %p60
        %s255 = sand.u32 %s21, 1
        %s256 = scalar_lea.sflag [#allocation7], %s255
        %s257 = sand.u32 %s78, 1
        %s258 = smul.addr %s257, 64
        %s259 = scalar_lea.vmem [#allocation6], %s258
        %p260 = pneg %p91
        %p261 = pneg %p88
        %p262 = pneg %p117
        %p263 = pneg %p114
        %p264 = pneg %p145
        %p265 = pneg %p142
        %s266 = smul.u32 16, %s28
        %p268 = scmp.eq.s32.totalorder %s28, 0
        // Predicated region
        $region45: #{model_forward.31} parent=31 // pred_check
          %p269 = pneg %p268
        $region46: #{model_forward.31} parent=31 // pred_check_branch
          %271 = sbr.rel (%p269) target = $region48
        $region47: #{model_forward.31} parent=31 // pred_region
          %272 = vst [vmem:[#allocation2] sm:$0xff] 0.0
        $region48: #{model_forward.31} parent=31 // pred_fallthru
          _
        %v273 = vld [vmem:[#allocation2] sm:$0xff]
        %v274 = vld [vmem:[%s230] sm:$0xf]
        %v275 = vld [vmem:[%s239] sm:$0xf]
        %v276 = vld [vmem:[%s239 + $0x4] sm:$0xf]
        %v277 = vld [vmem:[%s239 + $0x8] sm:$0xf]
        %v278 = vld [vmem:[%s239 + $0xc] sm:$0xf]
        %v279 = vld [vmem:[%s239 + $0x10] sm:$0xf]
        %v280 = vld [vmem:[%s239 + $0x14] sm:$0xf]
        %v281 = vld [vmem:[%s239 + $0x18] sm:$0xf]
        %v282 = vld [vmem:[%s239 + $0x1c] sm:$0xf]
        %v283 = vld [vmem:[%s239 + $0x20] sm:$0xf]
        %v284 = vld [vmem:[%s239 + $0x24] sm:$0xf]
        %v285 = vld [vmem:[%s239 + $0x28] sm:$0xf]
        %v286 = vld [vmem:[%s239 + $0x2c] sm:$0xf]
        %v287 = vld [vmem:[%s239 + $0x30] sm:$0xf]
        %v288 = vld [vmem:[%s239 + $0x34] sm:$0xf]
        %v289 = vld [vmem:[%s239 + $0x38] sm:$0xf]
        %v290 = vld [vmem:[%s239 + $0x3c] sm:$0xf]
        %v307 = vunpack.c.l.b16 %v275
        %v308 = vunpack.c.l.b16 %v276
        %v309 = vunpack.c.l.b16 %v277
        %v310 = vunpack.c.l.b16 %v278
        %v311 = vunpack.c.l.b16 %v279
        %v312 = vunpack.c.l.b16 %v280
        %v313 = vunpack.c.l.b16 %v281
        %v314 = vunpack.c.l.b16 %v282
        %v315 = vunpack.c.l.b16 %v283
        %v316 = vunpack.c.l.b16 %v284
        %v317 = vunpack.c.l.b16 %v285
        %v318 = vunpack.c.l.b16 %v286
        %v319 = vunpack.c.l.b16 %v287
        %v320 = vunpack.c.l.b16 %v288
        %v321 = vunpack.c.l.b16 %v289
        %v322 = vunpack.c.l.b16 %v290
        %v323 = vpack.c.b16 %v308, %v307
        %v324 = vpack.c.b16 %v310, %v309
        %v325 = vpack.c.b16 %v312, %v311
        %v326 = vpack.c.b16 %v314, %v313
        %v327 = vpack.c.b16 %v316, %v315
        %v328 = vpack.c.b16 %v318, %v317
        %v329 = vpack.c.b16 %v320, %v319
        %v330 = vpack.c.b16 %v322, %v321
        %339 = vmatprep.subr.bf16.mxu0 0
        %340 = vmatpush1.bf16.msra.mxu0 %v323
        %341 = vmatprep.subr.bf16.mxu0 0
        %342 = vmatpush1.bf16.msra.mxu0 %v324
        %343 = vmatprep.subr.bf16.mxu0 0
        %344 = vmatpush1.bf16.msra.mxu0 %v325
        %345 = vmatprep.subr.bf16.mxu0 0
        %346 = vmatpush1.bf16.msra.mxu0 %v326
        %347 = vmatprep.subr.bf16.mxu0 0
        %348 = vmatpush1.bf16.msra.mxu0 %v327
        %349 = vmatprep.subr.bf16.mxu0 0
        %350 = vmatpush1.bf16.msra.mxu0 %v328
        %351 = vmatprep.subr.bf16.mxu0 0
        %352 = vmatpush1.bf16.msra.mxu0 %v329
        %353 = vmatprep.subr.bf16.mxu0 0
        %354 = vmatpush1.bf16.msra.mxu0 %v330
        %355 = vmatprep.subr.bf16.mxu0 0
        %356 = vmatpush1.bf16.msra.mxu0 0
        %357 = vmatprep.subr.bf16.mxu0 0
        %358 = vmatpush1.bf16.msra.mxu0 0
        %359 = vmatprep.subr.bf16.mxu0 0
        %360 = vmatpush1.bf16.msra.mxu0 0
        %361 = vmatprep.subr.bf16.mxu0 0
        %362 = vmatpush1.bf16.msra.mxu0 0
        %363 = vmatprep.subr.bf16.mxu0 0
        %364 = vmatpush1.bf16.msra.mxu0 0
        %365 = vmatprep.subr.bf16.mxu0 0
        %366 = vmatpush1.bf16.msra.mxu0 0
        %367 = vmatprep.subr.bf16.mxu0 0
        %368 = vmatpush1.bf16.msra.mxu0 0
        %369 = vmatprep.subr.bf16.mxu0 0
        %370 = vmatpush1.bf16.msra.mxu0 0
        %371 = vmatprep.mubr.bf16.mxu0 0
        %372 = vmatmul.mubr.bf16.gmra.mrb[0].mxu0 %v274
        %v373 = vpop.f32.mrb[0].mxu0
        %v374 = vadd.f32 0.0, %v373
        %v375 = vpop.f32.mrb[0].mxu0
        %v376 = vpop.f32.mrb[0].mxu0
        %v377 = vpop.f32.mrb[0].mxu0
        %378 = vdwg.mxu0
        %v379 = vadd.f32 %v273, %v374
        %380 = vst [vmem:[#allocation2] sm:$0xff] %v379
        %p381 = scmp.eq.s32.totalorder %s28, 2
        // Predicated region
        $region49: #{model_forward.31} parent=31 // pred_check
          %p382 = pneg %p381
        $region50: #{model_forward.31} parent=31 // pred_check_branch
          %384 = sbr.rel (%p382) target = $region52
        $region51: #{model_forward.31} parent=31 // pred_region
          %v385 = vld [vmem:[#allocation2] sm:$0xff]
          %v386 = vld [vmem:[#allocation8] sm:$0x1]
          %v388 = vlaneseq
          %v389 = vshrl.u32 %v388, 7
          %v390 = vsub.s32 0, %v389
          %v391 = vrot.slane %v386, %v390
          %v393 = vadd.f32 %v385, %v391
          %v394 = vmax.f32 %v393, 0.0
          %395 = vst [vmem:[#allocation9] sm:$0xff] %v394
        $region52: #{model_forward.31} parent=31 // pred_fallthru
          _
        // Predicated region
        $region53: #{model_forward.31} parent=31 // pred_check
          %p396 = pneg %p142
        $region54: #{model_forward.31} parent=31 // pred_check_branch
          %398 = sbr.rel (%p396) target = $region56
        $region55: #{model_forward.31} parent=31 // pred_region
          %s400 = ssub.s32 128, 128
          %401 = vsyncadd [#allocation5], %s400
          %s402 = sadd.s32 %s27, %s26
          %s403 = smul.addr %s402, 128
          %s404 = scalar_lea.hbm %s3, %s403
          %s406 = sshll.u32 [#allocation9], 4
          %s407 = int_to_ptr.vmem [resolvable:$true] %s406
          %409 = dma.vmem_to_hbm [thread:$0]  %s407, 128, %s404, [#allocation5]
        $region56: #{model_forward.31} parent=31 // pred_fallthru
          _
        // Predicated region
        $region57: #{model_forward.31} parent=31 // pred_check
          %p410 = pneg %p142
        $region58: #{model_forward.31} parent=31 // pred_check_branch
          %412 = sbr.rel (%p410) target = $region60
        $region59: #{model_forward.31} parent=31 // pred_region
          %413 = dma.done [#allocation5], 128
        $region60: #{model_forward.31} parent=31 // pred_fallthru
          _
      $region32: #{model_forward.31} parent=5 // pred_fallthru
        _
      %p414 = scmp.le.s32.totalorder 2, %s16
      // Predicated region
      $region61: #{model_forward.31} parent=5 // pred_check
        %p415 = pneg %p414
      $region62: #{model_forward.31} parent=5 // pred_check_branch
        %417 = sbr.rel (%p415) target = $region64
      $region63: #{model_forward.31} parent=5 // pred_region
        %s418 = ssub.s32 %s16, 2
      $region64: #{model_forward.31} parent=5 // pred_fallthru
        _
    $region6: #{model_forward.31} parent=1 // loop_footer
      %s20 = sadd.s32 1, %s16
    $region7: #{model_forward.31} parent=1 // loop_footer_branch
      %15 = sbr.rel target = $region3
    $region8: #{model_forward.31} parent=1 // loop_exit
      _
    %419 = vsyncpa [#allocation4], 1
    %s420 = scalar_lea.sflag [#allocation4], 1
    %421 = vsyncpa %s420, 1
    %422 = vsyncpa [#allocation7], 1
    %s423 = scalar_lea.sflag [#allocation7], 1
    %424 = vsyncpa %s423, 1
    %425 = vsyncpa [#allocation5], 1
    %s426 = scalar_lea.sflag [#allocation5], 1
    %427 = vsyncpa %s426, 1

// kernel: model_forward.32
$region0: #{model_forward.32}
  #allocation0 [shape = 'u32[]', space=smem, size = 0x4, offset = 0x4, fixed_abs, tag = 'smem constant byte address 0x4 - core index']
  #allocation1 [shape = 'u32[144,128]{1,0:T(1,128)}', space=vmem, size = 0x12000, scoped, tag = 'internal scratch']
  %s0 = inlined_call_operand.vmem [shape: f32[8,64], index: 0, kind: input, shape index: {}]
  %s1 = inlined_call_operand.vmem [shape: f32[8,1], index: 1, kind: input, shape index: {}]
  %s2 = inlined_call_operand.vmem [shape: f32[8,64], index: 2, kind: output, shape index: {}]
  %s3 = sld [smem:[#allocation0]]
  $region18: #{model_forward.32} parent=0
    _
  %s5 = ssub.s32 1, %s3
  %s6 = scalar_select 0, %s5, %s3
  // Predicated region
  $region2: #{model_forward.32} parent=0 // pred_check
    _
  $region3: #{model_forward.32} parent=0 // pred_check_branch
    %8 = sbr.rel (0) target = $region5
  $region4: #{model_forward.32} parent=0 // pred_region
    _
  $region5: #{model_forward.32} parent=0 // pred_fallthru
    _
  // Predicated region
  $region6: #{model_forward.32} parent=0 // pred_check
    _
  $region7: #{model_forward.32} parent=0 // pred_check_branch
    %10 = sbr.rel (0) target = $region9
  $region8: #{model_forward.32} parent=0 // pred_region
    _
  $region9: #{model_forward.32} parent=0 // pred_fallthru
    _
  %v11 = vld [vmem:[%s0] sm:$0xff]
  %v12 = vld [vmem:[%s1] sm:$0xff]
  %14 = vset.pattern.permute.xlu0 0
  %15 = vperm.xlu0 %14, %v12
  %v16 = vpop.permute.xlu0 %15
  %v18 = vmul.f32 %v11, %v16
  %vm19 = vcmask 523264
  %20 = vst.msk [vmem:[%s2] sm:$0xff] %vm19, %v18
  // Predicated region
  $region10: #{model_forward.32} parent=0 // pred_check
    _
  $region11: #{model_forward.32} parent=0 // pred_check_branch
    %22 = sbr.rel (0) target = $region13
  $region12: #{model_forward.32} parent=0 // pred_region
    _
  $region13: #{model_forward.32} parent=0 // pred_fallthru
    _
  // Predicated region
  $region14: #{model_forward.32} parent=0 // pred_check
    _
  $region15: #{model_forward.32} parent=0 // pred_check_branch
    %24 = sbr.rel (0) target = $region17
  $region16: #{model_forward.32} parent=0 // pred_region
    _
  $region17: #{model_forward.32} parent=0 // pred_fallthru
    _

// kernel: model_forward.33
$region0: #{model_forward.33}
  #allocation0 [shape = 'u32[]', space=smem, size = 0x4, offset = 0x4, fixed_abs, tag = 'smem constant byte address 0x4 - core index']
  #allocation1 [shape = 'u32[144,128]{1,0:T(1,128)}', space=vmem, size = 0x12000, scoped, tag = 'internal scratch']
  #allocation2 [shape = 'f32[32,128]{1,0:T(8,128)}', space=vmem, size = 0x4000, scoped, tag = 'scratch operand']
  %s0 = inlined_call_operand.hbm [shape: bf16[32,128], index: 0, kind: input, shape index: {}]
  %s1 = inlined_call_operand.hbm [shape: bf16[128,128], index: 1, kind: input, shape index: {}]
  %s2 = inlined_call_operand.hbm [shape: f32[1,128], index: 2, kind: input, shape index: {}]
  %s3 = inlined_call_operand.hbm [shape: f32[32,128], index: 3, kind: output, shape index: {}]
  %s4 = sld [smem:[#allocation0]]
  $region42: #{model_forward.33} parent=0
    _
  %s6 = ssub.s32 1, %s4
  %s7 = scalar_select 0, %s6, %s4
  $region1: #{model_forward.33} parent=0
    #allocation3 [shape = 'u8[8192]{0}', space=vmem, size = 0x2000, scoped, tag = 'input window, operand 0, single buffered']
    #allocation4 [shape = 's32[1]{0}', space=sflag, size = 0x4, scoped, tag = 'scoped memory for model_forward.33']
    #allocation5 [shape = 's32[1]{0}', space=sflag, size = 0x4, scoped, tag = 'scoped memory for model_forward.33']
    #allocation6 [shape = 'u8[32768]{0}', space=vmem, size = 0x8000, scoped, tag = 'input window, operand 1, single buffered']
    #allocation7 [shape = 's32[1]{0}', space=sflag, size = 0x4, scoped, tag = 'scoped memory for model_forward.33']
    #allocation8 [shape = 'u8[512]{0}', space=vmem, size = 0x400, scoped, tag = 'input window, operand 2, single buffered']
    #allocation9 [shape = 'u8[16384]{0}', space=vmem, size = 0x4000, scoped, tag = 'output window, operand 0, single buffered']
    %8 = vsyncpa [#allocation4], 0
    %9 = vsyncpa [#allocation7], 0
    %10 = vsyncpa [#allocation5], 0
    // Predicated region
    $region2: #{model_forward.33} parent=1 // pred_check
      _
    $region3: #{model_forward.33} parent=1 // pred_check_branch
      %12 = sbr.rel (0) target = $region5
    $region4: #{model_forward.33} parent=1 // pred_region
      %s14 = ssub.s32 256, 256
      %15 = vsyncadd [#allocation4], %s14
      %s16 = sshll.u32 [#allocation3], 4
      %s17 = int_to_ptr.vmem [resolvable:$true] %s16
      %22 = dma.hbm_to_vmem [thread:$0]  %s0, 256, %s17, [#allocation4], 64, 64, 4
    $region5: #{model_forward.33} parent=1 // pred_fallthru
      _
    // Predicated region
    $region6: #{model_forward.33} parent=1 // pred_check
      _
    $region7: #{model_forward.33} parent=1 // pred_check_branch
      %24 = sbr.rel (0) target = $region9
    $region8: #{model_forward.33} parent=1 // pred_region
      %s26 = ssub.s32 1024, 1024
      %27 = vsyncadd [#allocation7], %s26
      %s28 = sshll.u32 [#allocation6], 4
      %s29 = int_to_ptr.vmem [resolvable:$true] %s28
      %34 = dma.hbm_to_vmem [thread:$0]  %s1, 1024, %s29, [#allocation7], 64, 64, 4
    $region9: #{model_forward.33} parent=1 // pred_fallthru
      _
    // Predicated region
    $region10: #{model_forward.33} parent=1 // pred_check
      _
    $region11: #{model_forward.33} parent=1 // pred_check_branch
      %36 = sbr.rel (0) target = $region13
    $region12: #{model_forward.33} parent=1 // pred_region
      %s38 = ssub.s32 16, 16
      %39 = vsyncadd [#allocation7], %s38
      %s41 = sshll.u32 [#allocation8], 4
      %s42 = int_to_ptr.vmem [resolvable:$true] %s41
      %44 = dma.hbm_to_vmem [thread:$0]  %s2, 16, %s42, [#allocation7]
    $region13: #{model_forward.33} parent=1 // pred_fallthru
      _
    // Predicated region
    $region14: #{model_forward.33} parent=1 // pred_check
      _
    $region15: #{model_forward.33} parent=1 // pred_check_branch
      %46 = sbr.rel (0) target = $region17
    $region16: #{model_forward.33} parent=1 // pred_region
      %47 = dma.done [#allocation4], 256
    $region17: #{model_forward.33} parent=1 // pred_fallthru
      _
    // Predicated region
    $region18: #{model_forward.33} parent=1 // pred_check
      _
    $region19: #{model_forward.33} parent=1 // pred_check_branch
      %49 = sbr.rel (0) target = $region21
    $region20: #{model_forward.33} parent=1 // pred_region
      %50 = dma.done [#allocation7], 1024
    $region21: #{model_forward.33} parent=1 // pred_fallthru
      _
    // Predicated region
    $region22: #{model_forward.33} parent=1 // pred_check
      _
    $region23: #{model_forward.33} parent=1 // pred_check_branch
      %52 = sbr.rel (0) target = $region25
    $region24: #{model_forward.33} parent=1 // pred_region
      %53 = dma.done [#allocation7], 16
    $region25: #{model_forward.33} parent=1 // pred_fallthru
      _
    %p55 = scmp.eq.s32.totalorder 0, 0
    // Predicated region
    $region26: #{model_forward.33} parent=1 // pred_check
      %p56 = pneg %p55
    $region27: #{model_forward.33} parent=1 // pred_check_branch
      %58 = sbr.rel (%p56) target = $region29
    $region28: #{model_forward.33} parent=1 // pred_region
      %59 = vst [vmem:[#allocation2] sm:$0xff] 0.0
      %60 = vst [vmem:[#allocation2 + $0x8] sm:$0xff] 0.0
      %61 = vst [vmem:[#allocation2 + $0x10] sm:$0xff] 0.0
      %62 = vst [vmem:[#allocation2 + $0x18] sm:$0xff] 0.0
    $region29: #{model_forward.33} parent=1 // pred_fallthru
      _
    %v63 = vld [vmem:[#allocation2] sm:$0xff]
    %v64 = vld [vmem:[#allocation2 + $0x8] sm:$0xff]
    %v65 = vld [vmem:[#allocation2 + $0x10] sm:$0xff]
    %v66 = vld [vmem:[#allocation2 + $0x18] sm:$0xff]
    %v67 = vld [vmem:[#allocation3] sm:$0xf]
    %v68 = vld [vmem:[#allocation3 + $0x4] sm:$0xf]
    %v69 = vld [vmem:[#allocation3 + $0x8] sm:$0xf]
    %v70 = vld [vmem:[#allocation3 + $0xc] sm:$0xf]
    %v71 = vld [vmem:[#allocation6] sm:$0xf]
    %v72 = vld [vmem:[#allocation6 + $0x4] sm:$0xf]
    %v73 = vld [vmem:[#allocation6 + $0x8] sm:$0xf]
    %v74 = vld [vmem:[#allocation6 + $0xc] sm:$0xf]
    %v75 = vld [vmem:[#allocation6 + $0x10] sm:$0xf]
    %v76 = vld [vmem:[#allocation6 + $0x14] sm:$0xf]
    %v77 = vld [vmem:[#allocation6 + $0x18] sm:$0xf]
    %v78 = vld [vmem:[#allocation6 + $0x1c] sm:$0xf]
    %v79 = vld [vmem:[#allocation6 + $0x20] sm:$0xf]
    %v80 = vld [vmem:[#allocation6 + $0x24] sm:$0xf]
    %v81 = vld [vmem:[#allocation6 + $0x28] sm:$0xf]
    %v82 = vld [vmem:[#allocation6 + $0x2c] sm:$0xf]
    %v83 = vld [vmem:[#allocation6 + $0x30] sm:$0xf]
    %v84 = vld [vmem:[#allocation6 + $0x34] sm:$0xf]
    %v85 = vld [vmem:[#allocation6 + $0x38] sm:$0xf]
    %v86 = vld [vmem:[#allocation6 + $0x3c] sm:$0xf]
    %v91 = vunpack.c.l.b16 %v67
    %v92 = vunpack.c.l.b16 %v68
    %v93 = vunpack.c.l.b16 %v69
    %v94 = vunpack.c.l.b16 %v70
    %v95 = vpack.c.b16 %v92, %v91
    %v96 = vpack.c.b16 %v94, %v93
    %v115 = vunpack.c.l.b16 %v71
    %v116 = vunpack.c.l.b16 %v72
    %v117 = vunpack.c.l.b16 %v73
    %v118 = vunpack.c.l.b16 %v74
    %v119 = vunpack.c.l.b16 %v75
    %v120 = vunpack.c.l.b16 %v76
    %v121 = vunpack.c.l.b16 %v77
    %v122 = vunpack.c.l.b16 %v78
    %v123 = vunpack.c.l.b16 %v79
    %v124 = vunpack.c.l.b16 %v80
    %v125 = vunpack.c.l.b16 %v81
    %v126 = vunpack.c.l.b16 %v82
    %v127 = vunpack.c.l.b16 %v83
    %v128 = vunpack.c.l.b16 %v84
    %v129 = vunpack.c.l.b16 %v85
    %v130 = vunpack.c.l.b16 %v86
    %v131 = vpack.c.b16 %v116, %v115
    %v132 = vpack.c.b16 %v118, %v117
    %v133 = vpack.c.b16 %v120, %v119
    %v134 = vpack.c.b16 %v122, %v121
    %v135 = vpack.c.b16 %v124, %v123
    %v136 = vpack.c.b16 %v126, %v125
    %v137 = vpack.c.b16 %v128, %v127
    %v138 = vpack.c.b16 %v130, %v129
    %147 = vmatprep.subr.bf16.mxu0 0
    %148 = vmatpush1.bf16.msra.mxu0 %v131
    %149 = vmatprep.subr.bf16.mxu0 0
    %150 = vmatpush1.bf16.msra.mxu0 %v132
    %151 = vmatprep.subr.bf16.mxu0 0
    %152 = vmatpush1.bf16.msra.mxu0 %v133
    %153 = vmatprep.subr.bf16.mxu0 0
    %154 = vmatpush1.bf16.msra.mxu0 %v134
    %155 = vmatprep.subr.bf16.mxu0 0
    %156 = vmatpush1.bf16.msra.mxu0 %v135
    %157 = vmatprep.subr.bf16.mxu0 0
    %158 = vmatpush1.bf16.msra.mxu0 %v136
    %159 = vmatprep.subr.bf16.mxu0 0
    %160 = vmatpush1.bf16.msra.mxu0 %v137
    %161 = vmatprep.subr.bf16.mxu0 0
    %162 = vmatpush1.bf16.msra.mxu0 %v138
    %163 = vmatprep.subr.bf16.mxu0 0
    %164 = vmatpush1.bf16.msra.mxu0 0
    %165 = vmatprep.subr.bf16.mxu0 0
    %166 = vmatpush1.bf16.msra.mxu0 0
    %167 = vmatprep.subr.bf16.mxu0 0
    %168 = vmatpush1.bf16.msra.mxu0 0
    %169 = vmatprep.subr.bf16.mxu0 0
    %170 = vmatpush1.bf16.msra.mxu0 0
    %171 = vmatprep.subr.bf16.mxu0 0
    %172 = vmatpush1.bf16.msra.mxu0 0
    %173 = vmatprep.subr.bf16.mxu0 0
    %174 = vmatpush1.bf16.msra.mxu0 0
    %175 = vmatprep.subr.bf16.mxu0 0
    %176 = vmatpush1.bf16.msra.mxu0 0
    %177 = vmatprep.subr.bf16.mxu0 0
    %178 = vmatpush1.bf16.msra.mxu0 0
    %179 = vmatprep.mubr.bf16.mxu0 0
    %180 = vmatmul.mubr.bf16.gmra.mrb[0].mxu0 %v95
    %v181 = vpop.f32.mrb[0].mxu0
    %v182 = vadd.f32 0.0, %v181
    %v183 = vpop.f32.mrb[0].mxu0
    %v184 = vpop.f32.mrb[0].mxu0
    %v185 = vadd.f32 0.0, %v184
    %v186 = vpop.f32.mrb[0].mxu0
    %187 = vmatprep.mubr.bf16.mxu0 0
    %188 = vmatmul.mubr.bf16.gmra.mrb[0].mxu0 %v96
    %v189 = vpop.f32.mrb[0].mxu0
    %v190 = vadd.f32 0.0, %v189
    %v191 = vpop.f32.mrb[0].mxu0
    %v192 = vpop.f32.mrb[0].mxu0
    %v193 = vadd.f32 0.0, %v192
    %v194 = vpop.f32.mrb[0].mxu0
    %195 = vdwg.mxu0
    %v196 = vadd.f32 %v63, %v182
    %v197 = vadd.f32 %v64, %v185
    %v198 = vadd.f32 %v65, %v190
    %v199 = vadd.f32 %v66, %v193
    %200 = vst [vmem:[#allocation2] sm:$0xff] %v196
    %201 = vst [vmem:[#allocation2 + $0x8] sm:$0xff] %v197
    %202 = vst [vmem:[#allocation2 + $0x10] sm:$0xff] %v198
    %203 = vst [vmem:[#allocation2 + $0x18] sm:$0xff] %v199
    // Predicated region
    $region30: #{model_forward.33} parent=1 // pred_check
      %p204 = pneg %p55
    $region31: #{model_forward.33} parent=1 // pred_check_branch
      %206 = sbr.rel (%p204) target = $region33
    $region32: #{model_forward.33} parent=1 // pred_region
      %v207 = vld [vmem:[#allocation2] sm:$0xff]
      %v208 = vld [vmem:[#allocation2 + $0x8] sm:$0xff]
      %v209 = vld [vmem:[#allocation2 + $0x10] sm:$0xff]
      %v210 = vld [vmem:[#allocation2 + $0x18] sm:$0xff]
      %v211 = vld [vmem:[#allocation8] sm:$0x1]
      %v213 = vlaneseq
      %v214 = vshrl.u32 %v213, 7
      %v215 = vsub.s32 0, %v214
      %v216 = vrot.slane %v211, %v215
      %v218 = vadd.f32 %v207, %v216
      %v219 = vadd.f32 %v208, %v216
      %v220 = vadd.f32 %v209, %v216
      %v221 = vadd.f32 %v210, %v216
      %222 = vst [vmem:[#allocation9] sm:$0xff] %v218
      %223 = vst [vmem:[#allocation9 + $0x8] sm:$0xff] %v219
      %224 = vst [vmem:[#allocation9 + $0x10] sm:$0xff] %v220
      %225 = vst [vmem:[#allocation9 + $0x18] sm:$0xff] %v221
    $region33: #{model_forward.33} parent=1 // pred_fallthru
      _
    // Predicated region
    $region34: #{model_forward.33} parent=1 // pred_check
      _
    $region35: #{model_forward.33} parent=1 // pred_check_branch
      %227 = sbr.rel (0) target = $region37
    $region36: #{model_forward.33} parent=1 // pred_region
      %s229 = ssub.s32 512, 512
      %230 = vsyncadd [#allocation5], %s229
      %s231 = sshll.u32 [#allocation9], 4
      %s232 = int_to_ptr.vmem [resolvable:$true] %s231
      %237 = dma.vmem_to_hbm [thread:$0]  %s232, 512, %s3, [#allocation5], 128, 128, 8
    $region37: #{model_forward.33} parent=1 // pred_fallthru
      _
    // Predicated region
    $region38: #{model_forward.33} parent=1 // pred_check
      _
    $region39: #{model_forward.33} parent=1 // pred_check_branch
      %239 = sbr.rel (0) target = $region41
    $region40: #{model_forward.33} parent=1 // pred_region
      %240 = dma.done [#allocation5], 512
    $region41: #{model_forward.33} parent=1 // pred_fallthru
      _
    %241 = vsyncpa [#allocation4], 1
    %242 = vsyncpa [#allocation7], 1
    %243 = vsyncpa [#allocation5], 1

// kernel: model_forward.34
$region0: #{model_forward.34}
  #allocation0 [shape = 'u32[]', space=smem, size = 0x4, offset = 0x4, fixed_abs, tag = 'smem constant byte address 0x4 - core index']
  #allocation1 [shape = 'u32[144,128]{1,0:T(1,128)}', space=vmem, size = 0x12000, scoped, tag = 'internal scratch']
  #allocation2 [shape = 'f32[32,256]{1,0:T(8,128)}', space=vmem, size = 0x8000, scoped, tag = 'scratch operand']
  %s0 = inlined_call_operand.hbm [shape: bf16[32,256], index: 0, kind: input, shape index: {}]
  %s1 = inlined_call_operand.hbm [shape: bf16[256,256], index: 1, kind: input, shape index: {}]
  %s2 = inlined_call_operand.hbm [shape: f32[1,256], index: 2, kind: input, shape index: {}]
  %s3 = inlined_call_operand.hbm [shape: f32[32,256], index: 3, kind: output, shape index: {}]
  %s4 = sld [smem:[#allocation0]]
  $region42: #{model_forward.34} parent=0
    _
  %s6 = ssub.s32 1, %s4
  %s7 = scalar_select 0, %s6, %s4
  $region1: #{model_forward.34} parent=0
    #allocation3 [shape = 'u8[16384]{0}', space=vmem, size = 0x4000, scoped, tag = 'input window, operand 0, single buffered']
    #allocation4 [shape = 's32[1]{0}', space=sflag, size = 0x4, scoped, tag = 'scoped memory for model_forward.34']
    #allocation5 [shape = 's32[1]{0}', space=sflag, size = 0x4, scoped, tag = 'scoped memory for model_forward.34']
    #allocation6 [shape = 'u8[131072]{0}', space=vmem, size = 0x20000, scoped, tag = 'input window, operand 1, single buffered']
    #allocation7 [shape = 's32[1]{0}', space=sflag, size = 0x4, scoped, tag = 'scoped memory for model_forward.34']
    #allocation8 [shape = 'u8[1024]{0}', space=vmem, size = 0x400, scoped, tag = 'input window, operand 2, single buffered']
    #allocation9 [shape = 'u8[32768]{0}', space=vmem, size = 0x8000, scoped, tag = 'output window, operand 0, single buffered']
    %8 = vsyncpa [#allocation4], 0
    %9 = vsyncpa [#allocation7], 0
    %10 = vsyncpa [#allocation5], 0
    // Predicated region
    $region2: #{model_forward.34} parent=1 // pred_check
      _
    $region3: #{model_forward.34} parent=1 // pred_check_branch
      %12 = sbr.rel (0) target = $region5
    $region4: #{model_forward.34} parent=1 // pred_region
      %s14 = ssub.s32 512, 512
      %15 = vsyncadd [#allocation4], %s14
      %s16 = sshll.u32 [#allocation3], 4
      %s17 = int_to_ptr.vmem [resolvable:$true] %s16
      %22 = dma.hbm_to_vmem [thread:$0]  %s0, 512, %s17, [#allocation4], 128, 128, 8
    $region5: #{model_forward.34} parent=1 // pred_fallthru
      _
    // Predicated region
    $region6: #{model_forward.34} parent=1 // pred_check
      _
    $region7: #{model_forward.34} parent=1 // pred_check_branch
      %24 = sbr.rel (0) target = $region9
    $region8: #{model_forward.34} parent=1 // pred_region
      %s26 = ssub.s32 4096, 4096
      %27 = vsyncadd [#allocation7], %s26
      %s28 = sshll.u32 [#allocation6], 4
      %s29 = int_to_ptr.vmem [resolvable:$true] %s28
      %34 = dma.hbm_to_vmem [thread:$0]  %s1, 4096, %s29, [#allocation7], 128, 128, 8
    $region9: #{model_forward.34} parent=1 // pred_fallthru
      _
    // Predicated region
    $region10: #{model_forward.34} parent=1 // pred_check
      _
    $region11: #{model_forward.34} parent=1 // pred_check_branch
      %36 = sbr.rel (0) target = $region13
    $region12: #{model_forward.34} parent=1 // pred_region
      %s38 = ssub.s32 32, 32
      %39 = vsyncadd [#allocation7], %s38
      %s41 = sshll.u32 [#allocation8], 4
      %s42 = int_to_ptr.vmem [resolvable:$true] %s41
      %44 = dma.hbm_to_vmem [thread:$0]  %s2, 32, %s42, [#allocation7]
    $region13: #{model_forward.34} parent=1 // pred_fallthru
      _
    // Predicated region
    $region14: #{model_forward.34} parent=1 // pred_check
      _
    $region15: #{model_forward.34} parent=1 // pred_check_branch
      %46 = sbr.rel (0) target = $region17
    $region16: #{model_forward.34} parent=1 // pred_region
      %47 = dma.done [#allocation4], 512
    $region17: #{model_forward.34} parent=1 // pred_fallthru
      _
    // Predicated region
    $region18: #{model_forward.34} parent=1 // pred_check
      _
    $region19: #{model_forward.34} parent=1 // pred_check_branch
      %49 = sbr.rel (0) target = $region21
    $region20: #{model_forward.34} parent=1 // pred_region
      %50 = dma.done [#allocation7], 4096
    $region21: #{model_forward.34} parent=1 // pred_fallthru
      _
    // Predicated region
    $region22: #{model_forward.34} parent=1 // pred_check
      _
    $region23: #{model_forward.34} parent=1 // pred_check_branch
      %52 = sbr.rel (0) target = $region25
    $region24: #{model_forward.34} parent=1 // pred_region
      %53 = dma.done [#allocation7], 32
    $region25: #{model_forward.34} parent=1 // pred_fallthru
      _
    %p54 = scmp.eq.s32.totalorder 0, 0
    // Predicated region
    $region26: #{model_forward.34} parent=1 // pred_check
      %p55 = pneg %p54
    $region27: #{model_forward.34} parent=1 // pred_check_branch
      %57 = sbr.rel (%p55) target = $region29
    $region28: #{model_forward.34} parent=1 // pred_region
      %58 = vst [vmem:[#allocation2] sm:$0xff] 0.0
      %59 = vst [vmem:[#allocation2 + $0x8] sm:$0xff] 0.0
      %60 = vst [vmem:[#allocation2 + $0x10] sm:$0xff] 0.0
      %61 = vst [vmem:[#allocation2 + $0x18] sm:$0xff] 0.0
      %62 = vst [vmem:[#allocation2 + $0x20] sm:$0xff] 0.0
      %63 = vst [vmem:[#allocation2 + $0x28] sm:$0xff] 0.0
      %64 = vst [vmem:[#allocation2 + $0x30] sm:$0xff] 0.0
      %65 = vst [vmem:[#allocation2 + $0x38] sm:$0xff] 0.0
    $region29: #{model_forward.34} parent=1 // pred_fallthru
      _
    %v66 = vld [vmem:[#allocation2] sm:$0xff]
    %v67 = vld [vmem:[#allocation2 + $0x8] sm:$0xff]
    %v68 = vld [vmem:[#allocation2 + $0x10] sm:$0xff]
    %v69 = vld [vmem:[#allocation2 + $0x18] sm:$0xff]
    %v70 = vld [vmem:[#allocation2 + $0x20] sm:$0xff]
    %v71 = vld [vmem:[#allocation2 + $0x28] sm:$0xff]
    %v72 = vld [vmem:[#allocation2 + $0x30] sm:$0xff]
    %v73 = vld [vmem:[#allocation2 + $0x38] sm:$0xff]
    %v74 = vld [vmem:[#allocation3] sm:$0xff]
    %v75 = vld [vmem:[#allocation3 + $0x8] sm:$0xff]
    %v76 = vld [vmem:[#allocation3 + $0x10] sm:$0xff]
    %v77 = vld [vmem:[#allocation3 + $0x18] sm:$0xff]
    %v78 = vld [vmem:[#allocation6] sm:$0xff]
    %v79 = vld [vmem:[#allocation6 + $0x8] sm:$0xff]
    %v80 = vld [vmem:[#allocation6 + $0x10] sm:$0xff]
    %v81 = vld [vmem:[#allocation6 + $0x18] sm:$0xff]
    %v82 = vld [vmem:[#allocation6 + $0x20] sm:$0xff]
    %v83 = vld [vmem:[#allocation6 + $0x28] sm:$0xff]
    %v84 = vld [vmem:[#allocation6 + $0x30] sm:$0xff]
    %v85 = vld [vmem:[#allocation6 + $0x38] sm:$0xff]
    %v86 = vld [vmem:[#allocation6 + $0x40] sm:$0xff]
    %v87 = vld [vmem:[#allocation6 + $0x48] sm:$0xff]
    %v88 = vld [vmem:[#allocation6 + $0x50] sm:$0xff]
    %v89 = vld [vmem:[#allocation6 + $0x58] sm:$0xff]
    %v90 = vld [vmem:[#allocation6 + $0x60] sm:$0xff]
    %v91 = vld [vmem:[#allocation6 + $0x68] sm:$0xff]
    %v92 = vld [vmem:[#allocation6 + $0x70] sm:$0xff]
    %v93 = vld [vmem:[#allocation6 + $0x78] sm:$0xff]
    %v94 = vld [vmem:[#allocation6 + $0x80] sm:$0xff]
    %v95 = vld [vmem:[#allocation6 + $0x88] sm:$0xff]
    %v96 = vld [vmem:[#allocation6 + $0x90] sm:$0xff]
    %v97 = vld [vmem:[#allocation6 + $0x98] sm:$0xff]
    %v98 = vld [vmem:[#allocation6 + $0xa0] sm:$0xff]
    %v99 = vld [vmem:[#allocation6 + $0xa8] sm:$0xff]
    %v100 = vld [vmem:[#allocation6 + $0xb0] sm:$0xff]
    %v101 = vld [vmem:[#allocation6 + $0xb8] sm:$0xff]
    %v102 = vld [vmem:[#allocation6 + $0xc0] sm:$0xff]
    %v103 = vld [vmem:[#allocation6 + $0xc8] sm:$0xff]
    %v104 = vld [vmem:[#allocation6 + $0xd0] sm:$0xff]
    %v105 = vld [vmem:[#allocation6 + $0xd8] sm:$0xff]
    %v106 = vld [vmem:[#allocation6 + $0xe0] sm:$0xff]
    %v107 = vld [vmem:[#allocation6 + $0xe8] sm:$0xff]
    %v108 = vld [vmem:[#allocation6 + $0xf0] sm:$0xff]
    %v109 = vld [vmem:[#allocation6 + $0xf8] sm:$0xff]
    %v114 = vunpack.c.l.b16 %v74
    %v115 = vunpack.c.h.b16 %v74
    %v116 = vunpack.c.l.b16 %v75
    %v117 = vunpack.c.h.b16 %v75
    %v118 = vunpack.c.l.b16 %v76
    %v119 = vunpack.c.h.b16 %v76
    %v120 = vunpack.c.l.b16 %v77
    %v121 = vunpack.c.h.b16 %v77
    %v122 = vpack.c.b16 %v116, %v114
    %v123 = vpack.c.b16 %v117, %v115
    %v124 = vpack.c.b16 %v120, %v118
    %v125 = vpack.c.b16 %v121, %v119
    %v162 = vunpack.c.l.b16 %v78
    %v163 = vunpack.c.h.b16 %v78
    %v164 = vunpack.c.l.b16 %v79
    %v165 = vunpack.c.h.b16 %v79
    %v166 = vunpack.c.l.b16 %v80
    %v167 = vunpack.c.h.b16 %v80
    %v168 = vunpack.c.l.b16 %v81
    %v169 = vunpack.c.h.b16 %v81
    %v170 = vunpack.c.l.b16 %v82
    %v171 = vunpack.c.h.b16 %v82
    %v172 = vunpack.c.l.b16 %v83
    %v173 = vunpack.c.h.b16 %v83
    %v174 = vunpack.c.l.b16 %v84
    %v175 = vunpack.c.h.b16 %v84
    %v176 = vunpack.c.l.b16 %v85
    %v177 = vunpack.c.h.b16 %v85
    %v178 = vunpack.c.l.b16 %v86
    %v179 = vunpack.c.h.b16 %v86
    %v180 = vunpack.c.l.b16 %v87
    %v181 = vunpack.c.h.b16 %v87
    %v182 = vunpack.c.l.b16 %v88
    %v183 = vunpack.c.h.b16 %v88
    %v184 = vunpack.c.l.b16 %v89
    %v185 = vunpack.c.h.b16 %v89
    %v186 = vunpack.c.l.b16 %v90
    %v187 = vunpack.c.h.b16 %v90
    %v188 = vunpack.c.l.b16 %v91
    %v189 = vunpack.c.h.b16 %v91
    %v190 = vunpack.c.l.b16 %v92
    %v191 = vunpack.c.h.b16 %v92
    %v192 = vunpack.c.l.b16 %v93
    %v193 = vunpack.c.h.b16 %v93
    %v194 = vunpack.c.l.b16 %v94
    %v195 = vunpack.c.h.b16 %v94
    %v196 = vunpack.c.l.b16 %v95
    %v197 = vunpack.c.h.b16 %v95
    %v198 = vunpack.c.l.b16 %v96
    %v199 = vunpack.c.h.b16 %v96
    %v200 = vunpack.c.l.b16 %v97
    %v201 = vunpack.c.h.b16 %v97
    %v202 = vunpack.c.l.b16 %v98
    %v203 = vunpack.c.h.b16 %v98
    %v204 = vunpack.c.l.b16 %v99
    %v205 = vunpack.c.h.b16 %v99
    %v206 = vunpack.c.l.b16 %v100
    %v207 = vunpack.c.h.b16 %v100
    %v208 = vunpack.c.l.b16 %v101
    %v209 = vunpack.c.h.b16 %v101
    %v210 = vunpack.c.l.b16 %v102
    %v211 = vunpack.c.h.b16 %v102
    %v212 = vunpack.c.l.b16 %v103
    %v213 = vunpack.c.h.b16 %v103
    %v214 = vunpack.c.l.b16 %v104
    %v215 = vunpack.c.h.b16 %v104
    %v216 = vunpack.c.l.b16 %v105
    %v217 = vunpack.c.h.b16 %v105
    %v218 = vunpack.c.l.b16 %v106
    %v219 = vunpack.c.h.b16 %v106
    %v220 = vunpack.c.l.b16 %v107
    %v221 = vunpack.c.h.b16 %v107
    %v222 = vunpack.c.l.b16 %v108
    %v223 = vunpack.c.h.b16 %v108
    %v224 = vunpack.c.l.b16 %v109
    %v225 = vunpack.c.h.b16 %v109
    %v226 = vpack.c.b16 %v164, %v162
    %v227 = vpack.c.b16 %v165, %v163
    %v228 = vpack.c.b16 %v168, %v166
    %v229 = vpack.c.b16 %v169, %v167
    %v230 = vpack.c.b16 %v172, %v170
    %v231 = vpack.c.b16 %v173, %v171
    %v232 = vpack.c.b16 %v176, %v174
    %v233 = vpack.c.b16 %v177, %v175
    %v234 = vpack.c.b16 %v180, %v178
    %v235 = vpack.c.b16 %v181, %v179
    %v236 = vpack.c.b16 %v184, %v182
    %v237 = vpack.c.b16 %v185, %v183
    %v238 = vpack.c.b16 %v188, %v186
    %v239 = vpack.c.b16 %v189, %v187
    %v240 = vpack.c.b16 %v192, %v190
    %v241 = vpack.c.b16 %v193, %v191
    %v242 = vpack.c.b16 %v196, %v194
    %v243 = vpack.c.b16 %v197, %v195
    %v244 = vpack.c.b16 %v200, %v198
    %v245 = vpack.c.b16 %v201, %v199
    %v246 = vpack.c.b16 %v204, %v202
    %v247 = vpack.c.b16 %v205, %v203
    %v248 = vpack.c.b16 %v208, %v206
    %v249 = vpack.c.b16 %v209, %v207
    %v250 = vpack.c.b16 %v212, %v210
    %v251 = vpack.c.b16 %v213, %v211
    %v252 = vpack.c.b16 %v216, %v214
    %v253 = vpack.c.b16 %v217, %v215
    %v254 = vpack.c.b16 %v220, %v218
    %v255 = vpack.c.b16 %v221, %v219
    %v256 = vpack.c.b16 %v224, %v222
    %v257 = vpack.c.b16 %v225, %v223
    %290 = vmatprep.subr.bf16.mxu0 %v227
    %291 = vmatpush1.bf16.msra.mxu0 %v226
    %292 = vmatprep.subr.bf16.mxu0 %v229
    %293 = vmatpush1.bf16.msra.mxu0 %v228
    %294 = vmatprep.subr.bf16.mxu0 %v231
    %295 = vmatpush1.bf16.msra.mxu0 %v230
    %296 = vmatprep.subr.bf16.mxu0 %v233
    %297 = vmatpush1.bf16.msra.mxu0 %v232
    %298 = vmatprep.subr.bf16.mxu0 %v235
    %299 = vmatpush1.bf16.msra.mxu0 %v234
    %300 = vmatprep.subr.bf16.mxu0 %v237
    %301 = vmatpush1.bf16.msra.mxu0 %v236
    %302 = vmatprep.subr.bf16.mxu0 %v239
    %303 = vmatpush1.bf16.msra.mxu0 %v238
    %304 = vmatprep.subr.bf16.mxu0 %v241
    %305 = vmatpush1.bf16.msra.mxu0 %v240
    %306 = vmatprep.subr.bf16.mxu0 %v243
    %307 = vmatpush1.bf16.msra.mxu0 %v242
    %308 = vmatprep.subr.bf16.mxu0 %v245
    %309 = vmatpush1.bf16.msra.mxu0 %v244
    %310 = vmatprep.subr.bf16.mxu0 %v247
    %311 = vmatpush1.bf16.msra.mxu0 %v246
    %312 = vmatprep.subr.bf16.mxu0 %v249
    %313 = vmatpush1.bf16.msra.mxu0 %v248
    %314 = vmatprep.subr.bf16.mxu0 %v251
    %315 = vmatpush1.bf16.msra.mxu0 %v250
    %316 = vmatprep.subr.bf16.mxu0 %v253
    %317 = vmatpush1.bf16.msra.mxu0 %v252
    %318 = vmatprep.subr.bf16.mxu0 %v255
    %319 = vmatpush1.bf16.msra.mxu0 %v254
    %320 = vmatprep.subr.bf16.mxu0 %v257
    %321 = vmatpush1.bf16.msra.mxu0 %v256
    %322 = vmatprep.mubr.bf16.mxu0 %v123
    %323 = vmatmul.mubr.bf16.gmra.mrb[0].mxu0 %v122
    %v324 = vpop.f32.mrb[0].mxu0
    %v325 = vadd.f32 0.0, %v324
    %v326 = vpop.f32.mrb[0].mxu0
    %v327 = vadd.f32 0.0, %v326
    %v328 = vpop.f32.mrb[0].mxu0
    %v329 = vadd.f32 0.0, %v328
    %v330 = vpop.f32.mrb[0].mxu0
    %v331 = vadd.f32 0.0, %v330
    %332 = vmatprep.mubr.bf16.mxu0 %v125
    %333 = vmatmul.mubr.bf16.gmra.mrb[0].mxu0 %v124
    %v334 = vpop.f32.mrb[0].mxu0
    %v335 = vadd.f32 0.0, %v334
    %v336 = vpop.f32.mrb[0].mxu0
    %v337 = vadd.f32 0.0, %v336
    %v338 = vpop.f32.mrb[0].mxu0
    %v339 = vadd.f32 0.0, %v338
    %v340 = vpop.f32.mrb[0].mxu0
    %v341 = vadd.f32 0.0, %v340
    %342 = vdwg.mxu0
    %v343 = vadd.f32 %v66, %v325
    %v344 = vadd.f32 %v67, %v327
    %v345 = vadd.f32 %v68, %v329
    %v346 = vadd.f32 %v69, %v331
    %v347 = vadd.f32 %v70, %v335
    %v348 = vadd.f32 %v71, %v337
    %v349 = vadd.f32 %v72, %v339
    %v350 = vadd.f32 %v73, %v341
    %351 = vst [vmem:[#allocation2] sm:$0xff] %v343
    %352 = vst [vmem:[#allocation2 + $0x8] sm:$0xff] %v344
    %353 = vst [vmem:[#allocation2 + $0x10] sm:$0xff] %v345
    %354 = vst [vmem:[#allocation2 + $0x18] sm:$0xff] %v346
    %355 = vst [vmem:[#allocation2 + $0x20] sm:$0xff] %v347
    %356 = vst [vmem:[#allocation2 + $0x28] sm:$0xff] %v348
    %357 = vst [vmem:[#allocation2 + $0x30] sm:$0xff] %v349
    %358 = vst [vmem:[#allocation2 + $0x38] sm:$0xff] %v350
    // Predicated region
    $region30: #{model_forward.34} parent=1 // pred_check
      %p359 = pneg %p54
    $region31: #{model_forward.34} parent=1 // pred_check_branch
      %361 = sbr.rel (%p359) target = $region33
    $region32: #{model_forward.34} parent=1 // pred_region
      %v362 = vld [vmem:[#allocation2] sm:$0xff]
      %v363 = vld [vmem:[#allocation2 + $0x8] sm:$0xff]
      %v364 = vld [vmem:[#allocation2 + $0x10] sm:$0xff]
      %v365 = vld [vmem:[#allocation2 + $0x18] sm:$0xff]
      %v366 = vld [vmem:[#allocation2 + $0x20] sm:$0xff]
      %v367 = vld [vmem:[#allocation2 + $0x28] sm:$0xff]
      %v368 = vld [vmem:[#allocation2 + $0x30] sm:$0xff]
      %v369 = vld [vmem:[#allocation2 + $0x38] sm:$0xff]
      %v370 = vld [vmem:[#allocation8] sm:$0x3]
      %v372 = vlaneseq
      %v373 = vshrl.u32 %v372, 7
      %v374 = vsub.s32 0, %v373
      %v375 = vrot.slane %v370, %v374
      %v376 = vlaneseq
      %v377 = vshrl.u32 %v376, 7
      %v378 = vsub.s32 1, %v377
      %v379 = vrot.slane %v370, %v378
      %v382 = vadd.f32 %v362, %v375
      %v383 = vadd.f32 %v363, %v379
      %v384 = vadd.f32 %v364, %v375
      %v385 = vadd.f32 %v365, %v379
      %v386 = vadd.f32 %v366, %v375
      %v387 = vadd.f32 %v367, %v379
      %v388 = vadd.f32 %v368, %v375
      %v389 = vadd.f32 %v369, %v379
      %390 = vst [vmem:[#allocation9] sm:$0xff] %v382
      %391 = vst [vmem:[#allocation9 + $0x8] sm:$0xff] %v383
      %392 = vst [vmem:[#allocation9 + $0x10] sm:$0xff] %v384
      %393 = vst [vmem:[#allocation9 + $0x18] sm:$0xff] %v385
      %394 = vst [vmem:[#allocation9 + $0x20] sm:$0xff] %v386
      %395 = vst [vmem:[#allocation9 + $0x28] sm:$0xff] %v387
      %396 = vst [vmem:[#allocation9 + $0x30] sm:$0xff] %v388
      %397 = vst [vmem:[#allocation9 + $0x38] sm:$0xff] %v389
    $region33: #{model_forward.34} parent=1 // pred_fallthru
      _
    // Predicated region
    $region34: #{model_forward.34} parent=1 // pred_check
      _
    $region35: #{model_forward.34} parent=1 // pred_check_branch
      %399 = sbr.rel (0) target = $region37
    $region36: #{model_forward.34} parent=1 // pred_region
      %s401 = ssub.s32 1024, 1024
      %402 = vsyncadd [#allocation5], %s401
      %s403 = sshll.u32 [#allocation9], 4
      %s404 = int_to_ptr.vmem [resolvable:$true] %s403
      %409 = dma.vmem_to_hbm [thread:$0]  %s404, 1024, %s3, [#allocation5], 256, 256, 16
    $region37: #{model_forward.34} parent=1 // pred_fallthru
      _
    // Predicated region
    $region38: #{model_forward.34} parent=1 // pred_check
      _
    $region39: #{model_forward.34} parent=1 // pred_check_branch
      %411 = sbr.rel (0) target = $region41
    $region40: #{model_forward.34} parent=1 // pred_region
      %412 = dma.done [#allocation5], 1024
    $region41: #{model_forward.34} parent=1 // pred_fallthru
      _
    %413 = vsyncpa [#allocation4], 1
    %414 = vsyncpa [#allocation7], 1
    %415 = vsyncpa [#allocation5], 1

// kernel: model_forward.35
$region0: #{model_forward.35}
  #allocation0 [shape = 'u32[]', space=smem, size = 0x4, offset = 0x4, fixed_abs, tag = 'smem constant byte address 0x4 - core index']
  #allocation1 [shape = 'u32[144,128]{1,0:T(1,128)}', space=vmem, size = 0x12000, scoped, tag = 'internal scratch']
  #allocation2 [shape = 'f32[32,128]{1,0:T(8,128)}', space=vmem, size = 0x4000, scoped, tag = 'scratch operand']
  %s0 = inlined_call_operand.hbm [shape: bf16[32,256], index: 0, kind: input, shape index: {}]
  %s1 = inlined_call_operand.hbm [shape: bf16[256,128], index: 1, kind: input, shape index: {}]
  %s2 = inlined_call_operand.hbm [shape: f32[1,128], index: 2, kind: input, shape index: {}]
  %s3 = inlined_call_operand.hbm [shape: f32[32,128], index: 3, kind: output, shape index: {}]
  %s4 = sld [smem:[#allocation0]]
  $region42: #{model_forward.35} parent=0
    _
  %s6 = ssub.s32 1, %s4
  %s7 = scalar_select 0, %s6, %s4
  $region1: #{model_forward.35} parent=0
    #allocation3 [shape = 'u8[16384]{0}', space=vmem, size = 0x4000, scoped, tag = 'input window, operand 0, single buffered']
    #allocation4 [shape = 's32[1]{0}', space=sflag, size = 0x4, scoped, tag = 'scoped memory for model_forward.35']
    #allocation5 [shape = 's32[1]{0}', space=sflag, size = 0x4, scoped, tag = 'scoped memory for model_forward.35']
    #allocation6 [shape = 'u8[65536]{0}', space=vmem, size = 0x10000, scoped, tag = 'input window, operand 1, single buffered']
    #allocation7 [shape = 's32[1]{0}', space=sflag, size = 0x4, scoped, tag = 'scoped memory for model_forward.35']
    #allocation8 [shape = 'u8[512]{0}', space=vmem, size = 0x400, scoped, tag = 'input window, operand 2, single buffered']
    #allocation9 [shape = 'u8[16384]{0}', space=vmem, size = 0x4000, scoped, tag = 'output window, operand 0, single buffered']
    %8 = vsyncpa [#allocation4], 0
    %9 = vsyncpa [#allocation7], 0
    %10 = vsyncpa [#allocation5], 0
    // Predicated region
    $region2: #{model_forward.35} parent=1 // pred_check
      _
    $region3: #{model_forward.35} parent=1 // pred_check_branch
      %12 = sbr.rel (0) target = $region5
    $region4: #{model_forward.35} parent=1 // pred_region
      %s14 = ssub.s32 512, 512
      %15 = vsyncadd [#allocation4], %s14
      %s16 = sshll.u32 [#allocation3], 4
      %s17 = int_to_ptr.vmem [resolvable:$true] %s16
      %22 = dma.hbm_to_vmem [thread:$0]  %s0, 512, %s17, [#allocation4], 128, 128, 8
    $region5: #{model_forward.35} parent=1 // pred_fallthru
      _
    // Predicated region
    $region6: #{model_forward.35} parent=1 // pred_check
      _
    $region7: #{model_forward.35} parent=1 // pred_check_branch
      %24 = sbr.rel (0) target = $region9
    $region8: #{model_forward.35} parent=1 // pred_region
      %s26 = ssub.s32 2048, 2048
      %27 = vsyncadd [#allocation7], %s26
      %s28 = sshll.u32 [#allocation6], 4
      %s29 = int_to_ptr.vmem [resolvable:$true] %s28
      %34 = dma.hbm_to_vmem [thread:$0]  %s1, 2048, %s29, [#allocation7], 64, 64, 4
    $region9: #{model_forward.35} parent=1 // pred_fallthru
      _
    // Predicated region
    $region10: #{model_forward.35} parent=1 // pred_check
      _
    $region11: #{model_forward.35} parent=1 // pred_check_branch
      %36 = sbr.rel (0) target = $region13
    $region12: #{model_forward.35} parent=1 // pred_region
      %s38 = ssub.s32 16, 16
      %39 = vsyncadd [#allocation7], %s38
      %s41 = sshll.u32 [#allocation8], 4
      %s42 = int_to_ptr.vmem [resolvable:$true] %s41
      %44 = dma.hbm_to_vmem [thread:$0]  %s2, 16, %s42, [#allocation7]
    $region13: #{model_forward.35} parent=1 // pred_fallthru
      _
    // Predicated region
    $region14: #{model_forward.35} parent=1 // pred_check
      _
    $region15: #{model_forward.35} parent=1 // pred_check_branch
      %46 = sbr.rel (0) target = $region17
    $region16: #{model_forward.35} parent=1 // pred_region
      %47 = dma.done [#allocation4], 512
    $region17: #{model_forward.35} parent=1 // pred_fallthru
      _
    // Predicated region
    $region18: #{model_forward.35} parent=1 // pred_check
      _
    $region19: #{model_forward.35} parent=1 // pred_check_branch
      %49 = sbr.rel (0) target = $region21
    $region20: #{model_forward.35} parent=1 // pred_region
      %50 = dma.done [#allocation7], 2048
    $region21: #{model_forward.35} parent=1 // pred_fallthru
      _
    // Predicated region
    $region22: #{model_forward.35} parent=1 // pred_check
      _
    $region23: #{model_forward.35} parent=1 // pred_check_branch
      %52 = sbr.rel (0) target = $region25
    $region24: #{model_forward.35} parent=1 // pred_region
      %53 = dma.done [#allocation7], 16
    $region25: #{model_forward.35} parent=1 // pred_fallthru
      _
    %p55 = scmp.eq.s32.totalorder 0, 0
    // Predicated region
    $region26: #{model_forward.35} parent=1 // pred_check
      %p56 = pneg %p55
    $region27: #{model_forward.35} parent=1 // pred_check_branch
      %58 = sbr.rel (%p56) target = $region29
    $region28: #{model_forward.35} parent=1 // pred_region
      %59 = vst [vmem:[#allocation2] sm:$0xff] 0.0
      %60 = vst [vmem:[#allocation2 + $0x8] sm:$0xff] 0.0
      %61 = vst [vmem:[#allocation2 + $0x10] sm:$0xff] 0.0
      %62 = vst [vmem:[#allocation2 + $0x18] sm:$0xff] 0.0
    $region29: #{model_forward.35} parent=1 // pred_fallthru
      _
    %v63 = vld [vmem:[#allocation2] sm:$0xff]
    %v64 = vld [vmem:[#allocation2 + $0x8] sm:$0xff]
    %v65 = vld [vmem:[#allocation2 + $0x10] sm:$0xff]
    %v66 = vld [vmem:[#allocation2 + $0x18] sm:$0xff]
    %v67 = vld [vmem:[#allocation3] sm:$0xff]
    %v68 = vld [vmem:[#allocation3 + $0x8] sm:$0xff]
    %v69 = vld [vmem:[#allocation3 + $0x10] sm:$0xff]
    %v70 = vld [vmem:[#allocation3 + $0x18] sm:$0xff]
    %v71 = vld [vmem:[#allocation6] sm:$0xf]
    %v72 = vld [vmem:[#allocation6 + $0x4] sm:$0xf]
    %v73 = vld [vmem:[#allocation6 + $0x8] sm:$0xf]
    %v74 = vld [vmem:[#allocation6 + $0xc] sm:$0xf]
    %v75 = vld [vmem:[#allocation6 + $0x10] sm:$0xf]
    %v76 = vld [vmem:[#allocation6 + $0x14] sm:$0xf]
    %v77 = vld [vmem:[#allocation6 + $0x18] sm:$0xf]
    %v78 = vld [vmem:[#allocation6 + $0x1c] sm:$0xf]
    %v79 = vld [vmem:[#allocation6 + $0x20] sm:$0xf]
    %v80 = vld [vmem:[#allocation6 + $0x24] sm:$0xf]
    %v81 = vld [vmem:[#allocation6 + $0x28] sm:$0xf]
    %v82 = vld [vmem:[#allocation6 + $0x2c] sm:$0xf]
    %v83 = vld [vmem:[#allocation6 + $0x30] sm:$0xf]
    %v84 = vld [vmem:[#allocation6 + $0x34] sm:$0xf]
    %v85 = vld [vmem:[#allocation6 + $0x38] sm:$0xf]
    %v86 = vld [vmem:[#allocation6 + $0x3c] sm:$0xf]
    %v87 = vld [vmem:[#allocation6 + $0x40] sm:$0xf]
    %v88 = vld [vmem:[#allocation6 + $0x44] sm:$0xf]
    %v89 = vld [vmem:[#allocation6 + $0x48] sm:$0xf]
    %v90 = vld [vmem:[#allocation6 + $0x4c] sm:$0xf]
    %v91 = vld [vmem:[#allocation6 + $0x50] sm:$0xf]
    %v92 = vld [vmem:[#allocation6 + $0x54] sm:$0xf]
    %v93 = vld [vmem:[#allocation6 + $0x58] sm:$0xf]
    %v94 = vld [vmem:[#allocation6 + $0x5c] sm:$0xf]
    %v95 = vld [vmem:[#allocation6 + $0x60] sm:$0xf]
    %v96 = vld [vmem:[#allocation6 + $0x64] sm:$0xf]
    %v97 = vld [vmem:[#allocation6 + $0x68] sm:$0xf]
    %v98 = vld [vmem:[#allocation6 + $0x6c] sm:$0xf]
    %v99 = vld [vmem:[#allocation6 + $0x70] sm:$0xf]
    %v100 = vld [vmem:[#allocation6 + $0x74] sm:$0xf]
    %v101 = vld [vmem:[#allocation6 + $0x78] sm:$0xf]
    %v102 = vld [vmem:[#allocation6 + $0x7c] sm:$0xf]
    %v107 = vunpack.c.l.b16 %v67
    %v108 = vunpack.c.h.b16 %v67
    %v109 = vunpack.c.l.b16 %v68
    %v110 = vunpack.c.h.b16 %v68
    %v111 = vunpack.c.l.b16 %v69
    %v112 = vunpack.c.h.b16 %v69
    %v113 = vunpack.c.l.b16 %v70
    %v114 = vunpack.c.h.b16 %v70
    %v115 = vpack.c.b16 %v109, %v107
    %v116 = vpack.c.b16 %v110, %v108
    %v117 = vpack.c.b16 %v113, %v111
    %v118 = vpack.c.b16 %v114, %v112
    %v155 = vunpack.c.l.b16 %v71
    %v156 = vunpack.c.l.b16 %v72
    %v157 = vunpack.c.l.b16 %v73
    %v158 = vunpack.c.l.b16 %v74
    %v159 = vunpack.c.l.b16 %v75
    %v160 = vunpack.c.l.b16 %v76
    %v161 = vunpack.c.l.b16 %v77
    %v162 = vunpack.c.l.b16 %v78
    %v163 = vunpack.c.l.b16 %v79
    %v164 = vunpack.c.l.b16 %v80
    %v165 = vunpack.c.l.b16 %v81
    %v166 = vunpack.c.l.b16 %v82
    %v167 = vunpack.c.l.b16 %v83
    %v168 = vunpack.c.l.b16 %v84
    %v169 = vunpack.c.l.b16 %v85
    %v170 = vunpack.c.l.b16 %v86
    %v171 = vunpack.c.l.b16 %v87
    %v172 = vunpack.c.l.b16 %v88
    %v173 = vunpack.c.l.b16 %v89
    %v174 = vunpack.c.l.b16 %v90
    %v175 = vunpack.c.l.b16 %v91
    %v176 = vunpack.c.l.b16 %v92
    %v177 = vunpack.c.l.b16 %v93
    %v178 = vunpack.c.l.b16 %v94
    %v179 = vunpack.c.l.b16 %v95
    %v180 = vunpack.c.l.b16 %v96
    %v181 = vunpack.c.l.b16 %v97
    %v182 = vunpack.c.l.b16 %v98
    %v183 = vunpack.c.l.b16 %v99
    %v184 = vunpack.c.l.b16 %v100
    %v185 = vunpack.c.l.b16 %v101
    %v186 = vunpack.c.l.b16 %v102
    %v187 = vpack.c.b16 %v156, %v155
    %v188 = vpack.c.b16 %v158, %v157
    %v189 = vpack.c.b16 %v160, %v159
    %v190 = vpack.c.b16 %v162, %v161
    %v191 = vpack.c.b16 %v164, %v163
    %v192 = vpack.c.b16 %v166, %v165
    %v193 = vpack.c.b16 %v168, %v167
    %v194 = vpack.c.b16 %v170, %v169
    %v195 = vpack.c.b16 %v172, %v171
    %v196 = vpack.c.b16 %v174, %v173
    %v197 = vpack.c.b16 %v176, %v175
    %v198 = vpack.c.b16 %v178, %v177
    %v199 = vpack.c.b16 %v180, %v179
    %v200 = vpack.c.b16 %v182, %v181
    %v201 = vpack.c.b16 %v184, %v183
    %v202 = vpack.c.b16 %v186, %v185
    %219 = vmatprep.subr.bf16.mxu0 0
    %220 = vmatpush1.bf16.msra.mxu0 %v187
    %221 = vmatprep.subr.bf16.mxu0 0
    %222 = vmatpush1.bf16.msra.mxu0 %v188
    %223 = vmatprep.subr.bf16.mxu0 0
    %224 = vmatpush1.bf16.msra.mxu0 %v189
    %225 = vmatprep.subr.bf16.mxu0 0
    %226 = vmatpush1.bf16.msra.mxu0 %v190
    %227 = vmatprep.subr.bf16.mxu0 0
    %228 = vmatpush1.bf16.msra.mxu0 %v191
    %229 = vmatprep.subr.bf16.mxu0 0
    %230 = vmatpush1.bf16.msra.mxu0 %v192
    %231 = vmatprep.subr.bf16.mxu0 0
    %232 = vmatpush1.bf16.msra.mxu0 %v193
    %233 = vmatprep.subr.bf16.mxu0 0
    %234 = vmatpush1.bf16.msra.mxu0 %v194
    %235 = vmatprep.subr.bf16.mxu0 0
    %236 = vmatpush1.bf16.msra.mxu0 %v195
    %237 = vmatprep.subr.bf16.mxu0 0
    %238 = vmatpush1.bf16.msra.mxu0 %v196
    %239 = vmatprep.subr.bf16.mxu0 0
    %240 = vmatpush1.bf16.msra.mxu0 %v197
    %241 = vmatprep.subr.bf16.mxu0 0
    %242 = vmatpush1.bf16.msra.mxu0 %v198
    %243 = vmatprep.subr.bf16.mxu0 0
    %244 = vmatpush1.bf16.msra.mxu0 %v199
    %245 = vmatprep.subr.bf16.mxu0 0
    %246 = vmatpush1.bf16.msra.mxu0 %v200
    %247 = vmatprep.subr.bf16.mxu0 0
    %248 = vmatpush1.bf16.msra.mxu0 %v201
    %249 = vmatprep.subr.bf16.mxu0 0
    %250 = vmatpush1.bf16.msra.mxu0 %v202
    %251 = vmatprep.mubr.bf16.mxu0 %v116
    %252 = vmatmul.mubr.bf16.gmra.mrb[0].mxu0 %v115
    %v253 = vpop.f32.mrb[0].mxu0
    %v254 = vadd.f32 0.0, %v253
    %v255 = vpop.f32.mrb[0].mxu0
    %v256 = vpop.f32.mrb[0].mxu0
    %v257 = vadd.f32 0.0, %v256
    %v258 = vpop.f32.mrb[0].mxu0
    %259 = vmatprep.mubr.bf16.mxu0 %v118
    %260 = vmatmul.mubr.bf16.gmra.mrb[0].mxu0 %v117
    %v261 = vpop.f32.mrb[0].mxu0
    %v262 = vadd.f32 0.0, %v261
    %v263 = vpop.f32.mrb[0].mxu0
    %v264 = vpop.f32.mrb[0].mxu0
    %v265 = vadd.f32 0.0, %v264
    %v266 = vpop.f32.mrb[0].mxu0
    %267 = vdwg.mxu0
    %v268 = vadd.f32 %v63, %v254
    %v269 = vadd.f32 %v64, %v257
    %v270 = vadd.f32 %v65, %v262
    %v271 = vadd.f32 %v66, %v265
    %272 = vst [vmem:[#allocation2] sm:$0xff] %v268
    %273 = vst [vmem:[#allocation2 + $0x8] sm:$0xff] %v269
    %274 = vst [vmem:[#allocation2 + $0x10] sm:$0xff] %v270
    %275 = vst [vmem:[#allocation2 + $0x18] sm:$0xff] %v271
    // Predicated region
    $region30: #{model_forward.35} parent=1 // pred_check
      %p276 = pneg %p55
    $region31: #{model_forward.35} parent=1 // pred_check_branch
      %278 = sbr.rel (%p276) target = $region33
    $region32: #{model_forward.35} parent=1 // pred_region
      %v279 = vld [vmem:[#allocation2] sm:$0xff]
      %v280 = vld [vmem:[#allocation2 + $0x8] sm:$0xff]
      %v281 = vld [vmem:[#allocation2 + $0x10] sm:$0xff]
      %v282 = vld [vmem:[#allocation2 + $0x18] sm:$0xff]
      %v283 = vld [vmem:[#allocation8] sm:$0x1]
      %v285 = vlaneseq
      %v286 = vshrl.u32 %v285, 7
      %v287 = vsub.s32 0, %v286
      %v288 = vrot.slane %v283, %v287
      %v290 = vadd.f32 %v279, %v288
      %v291 = vadd.f32 %v280, %v288
      %v292 = vadd.f32 %v281, %v288
      %v293 = vadd.f32 %v282, %v288
      %v294 = vmax.f32 %v290, 0.0
      %v295 = vmax.f32 %v291, 0.0
      %v296 = vmax.f32 %v292, 0.0
      %v297 = vmax.f32 %v293, 0.0
      %298 = vst [vmem:[#allocation9] sm:$0xff] %v294
      %299 = vst [vmem:[#allocation9 + $0x8] sm:$0xff] %v295
      %300 = vst [vmem:[#allocation9 + $0x10] sm:$0xff] %v296
      %301 = vst [vmem:[#allocation9 + $0x18] sm:$0xff] %v297
    $region33: #{model_forward.35} parent=1 // pred_fallthru
      _
    // Predicated region
    $region34: #{model_forward.35} parent=1 // pred_check
      _
    $region35: #{model_forward.35} parent=1 // pred_check_branch
      %303 = sbr.rel (0) target = $region37
    $region36: #{model_forward.35} parent=1 // pred_region
      %s305 = ssub.s32 512, 512
      %306 = vsyncadd [#allocation5], %s305
      %s307 = sshll.u32 [#allocation9], 4
      %s308 = int_to_ptr.vmem [resolvable:$true] %s307
      %313 = dma.vmem_to_hbm [thread:$0]  %s308, 512, %s3, [#allocation5], 128, 128, 8
    $region37: #{model_forward.35} parent=1 // pred_fallthru
      _
    // Predicated region
    $region38: #{model_forward.35} parent=1 // pred_check
      _
    $region39: #{model_forward.35} parent=1 // pred_check_branch
      %315 = sbr.rel (0) target = $region41
    $region40: #{model_forward.35} parent=1 // pred_region
      %316 = dma.done [#allocation5], 512
    $region41: #{model_forward.35} parent=1 // pred_fallthru
      _
    %317 = vsyncpa [#allocation4], 1
    %318 = vsyncpa [#allocation7], 1
    %319 = vsyncpa [#allocation5], 1

// kernel: model_forward.36
$region0: #{model_forward.36}
  #allocation0 [shape = 'u32[]', space=smem, size = 0x4, offset = 0x4, fixed_abs, tag = 'smem constant byte address 0x4 - core index']
  #allocation1 [shape = 'u32[144,128]{1,0:T(1,128)}', space=vmem, size = 0x12000, scoped, tag = 'internal scratch']
  %s0 = inlined_call_operand.vmem [shape: f32[32,32], index: 0, kind: input, shape index: {}]
  %s1 = inlined_call_operand.vmem [shape: f32[32,1], index: 1, kind: input, shape index: {}]
  %s2 = inlined_call_operand.vmem [shape: f32[32,32], index: 2, kind: output, shape index: {}]
  %s3 = sld [smem:[#allocation0]]
  $region18: #{model_forward.36} parent=0
    _
  %s5 = ssub.s32 1, %s3
  %s6 = scalar_select 0, %s5, %s3
  // Predicated region
  $region2: #{model_forward.36} parent=0 // pred_check
    _
  $region3: #{model_forward.36} parent=0 // pred_check_branch
    %8 = sbr.rel (0) target = $region5
  $region4: #{model_forward.36} parent=0 // pred_region
    _
  $region5: #{model_forward.36} parent=0 // pred_fallthru
    _
  // Predicated region
  $region6: #{model_forward.36} parent=0 // pred_check
    _
  $region7: #{model_forward.36} parent=0 // pred_check_branch
    %10 = sbr.rel (0) target = $region9
  $region8: #{model_forward.36} parent=0 // pred_region
    _
  $region9: #{model_forward.36} parent=0 // pred_fallthru
    _
  %v11 = vld [vmem:[%s0] sm:$0xff]
  %v12 = vld [vmem:[%s0 + $0x8] sm:$0xff]
  %v13 = vld [vmem:[%s0 + $0x10] sm:$0xff]
  %v14 = vld [vmem:[%s0 + $0x18] sm:$0xff]
  %v15 = vld [vmem:[%s1] sm:$0xff]
  %v16 = vld [vmem:[%s1 + $0x8] sm:$0xff]
  %v17 = vld [vmem:[%s1 + $0x10] sm:$0xff]
  %v18 = vld [vmem:[%s1 + $0x18] sm:$0xff]
  %20 = vset.pattern.permute.xlu0 0
  %21 = vperm.xlu0 %20, %v15
  %v22 = vpop.permute.xlu0 %21
  %25 = vset.pattern.permute.xlu0 0
  %26 = vperm.xlu0 %25, %v16
  %v27 = vpop.permute.xlu0 %26
  %30 = vset.pattern.permute.xlu0 0
  %31 = vperm.xlu0 %30, %v17
  %v32 = vpop.permute.xlu0 %31
  %35 = vset.pattern.permute.xlu0 0
  %36 = vperm.xlu0 %35, %v18
  %v37 = vpop.permute.xlu0 %36
  %v39 = vmul.f32 %v11, %v22
  %v40 = vmul.f32 %v12, %v27
  %v41 = vmul.f32 %v13, %v32
  %v42 = vmul.f32 %v14, %v37
  %vm43 = vcmask 261120
  %44 = vst.msk [vmem:[%s2] sm:$0xff] %vm43, %v39
  %45 = vst.msk [vmem:[%s2 + $0x8] sm:$0xff] %vm43, %v40
  %46 = vst.msk [vmem:[%s2 + $0x10] sm:$0xff] %vm43, %v41
  %47 = vst.msk [vmem:[%s2 + $0x18] sm:$0xff] %vm43, %v42
  // Predicated region
  $region10: #{model_forward.36} parent=0 // pred_check
    _
  $region11: #{model_forward.36} parent=0 // pred_check_branch
    %49 = sbr.rel (0) target = $region13
  $region12: #{model_forward.36} parent=0 // pred_region
    _
  $region13: #{model_forward.36} parent=0 // pred_fallthru
    _
  // Predicated region
  $region14: #{model_forward.36} parent=0 // pred_check
    _
  $region15: #{model_forward.36} parent=0 // pred_check_branch
    %51 = sbr.rel (0) target = $region17
  $region16: #{model_forward.36} parent=0 // pred_region
    _
  $region17: #{model_forward.36} parent=0 // pred_fallthru
    _

// kernel: model_forward.37
$region0: #{model_forward.37}
  #allocation0 [shape = 'u32[]', space=smem, size = 0x4, offset = 0x4, fixed_abs, tag = 'smem constant byte address 0x4 - core index']
  #allocation1 [shape = 'u32[144,128]{1,0:T(1,128)}', space=vmem, size = 0x12000, scoped, tag = 'internal scratch']
  #allocation2 [shape = 'f32[128,128]{1,0:T(8,128)}', space=vmem, size = 0x10000, scoped, tag = 'scratch operand']
  %s0 = inlined_call_operand.hbm [shape: bf16[128,128], index: 0, kind: input, shape index: {}]
  %s1 = inlined_call_operand.hbm [shape: bf16[128,128], index: 1, kind: input, shape index: {}]
  %s2 = inlined_call_operand.hbm [shape: f32[1,128], index: 2, kind: input, shape index: {}]
  %s3 = inlined_call_operand.hbm [shape: f32[128,128], index: 3, kind: output, shape index: {}]
  %s4 = sld [smem:[#allocation0]]
  $region42: #{model_forward.37} parent=0
    _
  %s6 = ssub.s32 1, %s4
  %s7 = scalar_select 0, %s6, %s4
  $region1: #{model_forward.37} parent=0
    #allocation3 [shape = 'u8[32768]{0}', space=vmem, size = 0x8000, scoped, tag = 'input window, operand 0, single buffered']
    #allocation4 [shape = 's32[1]{0}', space=sflag, size = 0x4, scoped, tag = 'scoped memory for model_forward.37']
    #allocation5 [shape = 's32[1]{0}', space=sflag, size = 0x4, scoped, tag = 'scoped memory for model_forward.37']
    #allocation6 [shape = 'u8[32768]{0}', space=vmem, size = 0x8000, scoped, tag = 'input window, operand 1, single buffered']
    #allocation7 [shape = 's32[1]{0}', space=sflag, size = 0x4, scoped, tag = 'scoped memory for model_forward.37']
    #allocation8 [shape = 'u8[512]{0}', space=vmem, size = 0x400, scoped, tag = 'input window, operand 2, single buffered']
    #allocation9 [shape = 'u8[65536]{0}', space=vmem, size = 0x10000, scoped, tag = 'output window, operand 0, single buffered']
    %8 = vsyncpa [#allocation4], 0
    %9 = vsyncpa [#allocation7], 0
    %10 = vsyncpa [#allocation5], 0
    // Predicated region
    $region2: #{model_forward.37} parent=1 // pred_check
      _
    $region3: #{model_forward.37} parent=1 // pred_check_branch
      %12 = sbr.rel (0) target = $region5
    $region4: #{model_forward.37} parent=1 // pred_region
      %s14 = ssub.s32 1024, 1024
      %15 = vsyncadd [#allocation4], %s14
      %s16 = sshll.u32 [#allocation3], 4
      %s17 = int_to_ptr.vmem [resolvable:$true] %s16
      %22 = dma.hbm_to_vmem [thread:$0]  %s0, 1024, %s17, [#allocation4], 64, 64, 4
    $region5: #{model_forward.37} parent=1 // pred_fallthru
      _
    // Predicated region
    $region6: #{model_forward.37} parent=1 // pred_check
      _
    $region7: #{model_forward.37} parent=1 // pred_check_branch
      %24 = sbr.rel (0) target = $region9
    $region8: #{model_forward.37} parent=1 // pred_region
      %s26 = ssub.s32 1024, 1024
      %27 = vsyncadd [#allocation7], %s26
      %s28 = sshll.u32 [#allocation6], 4
      %s29 = int_to_ptr.vmem [resolvable:$true] %s28
      %34 = dma.hbm_to_vmem [thread:$0]  %s1, 1024, %s29, [#allocation7], 64, 64, 4
    $region9: #{model_forward.37} parent=1 // pred_fallthru
      _
    // Predicated region
    $region10: #{model_forward.37} parent=1 // pred_check
      _
    $region11: #{model_forward.37} parent=1 // pred_check_branch
      %36 = sbr.rel (0) target = $region13
    $region12: #{model_forward.37} parent=1 // pred_region
      %s38 = ssub.s32 16, 16
      %39 = vsyncadd [#allocation7], %s38
      %s41 = sshll.u32 [#allocation8], 4
      %s42 = int_to_ptr.vmem [resolvable:$true] %s41
      %44 = dma.hbm_to_vmem [thread:$0]  %s2, 16, %s42, [#allocation7]
    $region13: #{model_forward.37} parent=1 // pred_fallthru
      _
    // Predicated region
    $region14: #{model_forward.37} parent=1 // pred_check
      _
    $region15: #{model_forward.37} parent=1 // pred_check_branch
      %46 = sbr.rel (0) target = $region17
    $region16: #{model_forward.37} parent=1 // pred_region
      %47 = dma.done [#allocation4], 1024
    $region17: #{model_forward.37} parent=1 // pred_fallthru
      _
    // Predicated region
    $region18: #{model_forward.37} parent=1 // pred_check
      _
    $region19: #{model_forward.37} parent=1 // pred_check_branch
      %49 = sbr.rel (0) target = $region21
    $region20: #{model_forward.37} parent=1 // pred_region
      %50 = dma.done [#allocation7], 1024
    $region21: #{model_forward.37} parent=1 // pred_fallthru
      _
    // Predicated region
    $region22: #{model_forward.37} parent=1 // pred_check
      _
    $region23: #{model_forward.37} parent=1 // pred_check_branch
      %52 = sbr.rel (0) target = $region25
    $region24: #{model_forward.37} parent=1 // pred_region
      %53 = dma.done [#allocation7], 16
    $region25: #{model_forward.37} parent=1 // pred_fallthru
      _
    %p55 = scmp.eq.s32.totalorder 0, 0
    // Predicated region
    $region26: #{model_forward.37} parent=1 // pred_check
      %p56 = pneg %p55
    $region27: #{model_forward.37} parent=1 // pred_check_branch
      %58 = sbr.rel (%p56) target = $region29
    $region28: #{model_forward.37} parent=1 // pred_region
      %59 = vst [vmem:[#allocation2] sm:$0xff] 0.0
      %60 = vst [vmem:[#allocation2 + $0x8] sm:$0xff] 0.0
      %61 = vst [vmem:[#allocation2 + $0x10] sm:$0xff] 0.0
      %62 = vst [vmem:[#allocation2 + $0x18] sm:$0xff] 0.0
      %63 = vst [vmem:[#allocation2 + $0x20] sm:$0xff] 0.0
      %64 = vst [vmem:[#allocation2 + $0x28] sm:$0xff] 0.0
      %65 = vst [vmem:[#allocation2 + $0x30] sm:$0xff] 0.0
      %66 = vst [vmem:[#allocation2 + $0x38] sm:$0xff] 0.0
      %67 = vst [vmem:[#allocation2 + $0x40] sm:$0xff] 0.0
      %68 = vst [vmem:[#allocation2 + $0x48] sm:$0xff] 0.0
      %69 = vst [vmem:[#allocation2 + $0x50] sm:$0xff] 0.0
      %70 = vst [vmem:[#allocation2 + $0x58] sm:$0xff] 0.0
      %71 = vst [vmem:[#allocation2 + $0x60] sm:$0xff] 0.0
      %72 = vst [vmem:[#allocation2 + $0x68] sm:$0xff] 0.0
      %73 = vst [vmem:[#allocation2 + $0x70] sm:$0xff] 0.0
      %74 = vst [vmem:[#allocation2 + $0x78] sm:$0xff] 0.0
    $region29: #{model_forward.37} parent=1 // pred_fallthru
      _
    %v75 = vld [vmem:[#allocation2] sm:$0xff]
    %v76 = vld [vmem:[#allocation2 + $0x8] sm:$0xff]
    %v77 = vld [vmem:[#allocation2 + $0x10] sm:$0xff]
    %v78 = vld [vmem:[#allocation2 + $0x18] sm:$0xff]
    %v79 = vld [vmem:[#allocation2 + $0x20] sm:$0xff]
    %v80 = vld [vmem:[#allocation2 + $0x28] sm:$0xff]
    %v81 = vld [vmem:[#allocation2 + $0x30] sm:$0xff]
    %v82 = vld [vmem:[#allocation2 + $0x38] sm:$0xff]
    %v83 = vld [vmem:[#allocation2 + $0x40] sm:$0xff]
    %v84 = vld [vmem:[#allocation2 + $0x48] sm:$0xff]
    %v85 = vld [vmem:[#allocation2 + $0x50] sm:$0xff]
    %v86 = vld [vmem:[#allocation2 + $0x58] sm:$0xff]
    %v87 = vld [vmem:[#allocation2 + $0x60] sm:$0xff]
    %v88 = vld [vmem:[#allocation2 + $0x68] sm:$0xff]
    %v89 = vld [vmem:[#allocation2 + $0x70] sm:$0xff]
    %v90 = vld [vmem:[#allocation2 + $0x78] sm:$0xff]
    %v91 = vld [vmem:[#allocation3] sm:$0xf]
    %v92 = vld [vmem:[#allocation3 + $0x4] sm:$0xf]
    %v93 = vld [vmem:[#allocation3 + $0x8] sm:$0xf]
    %v94 = vld [vmem:[#allocation3 + $0xc] sm:$0xf]
    %v95 = vld [vmem:[#allocation3 + $0x10] sm:$0xf]
    %v96 = vld [vmem:[#allocation3 + $0x14] sm:$0xf]
    %v97 = vld [vmem:[#allocation3 + $0x18] sm:$0xf]
    %v98 = vld [vmem:[#allocation3 + $0x1c] sm:$0xf]
    %v99 = vld [vmem:[#allocation3 + $0x20] sm:$0xf]
    %v100 = vld [vmem:[#allocation3 + $0x24] sm:$0xf]
    %v101 = vld [vmem:[#allocation3 + $0x28] sm:$0xf]
    %v102 = vld [vmem:[#allocation3 + $0x2c] sm:$0xf]
    %v103 = vld [vmem:[#allocation3 + $0x30] sm:$0xf]
    %v104 = vld [vmem:[#allocation3 + $0x34] sm:$0xf]
    %v105 = vld [vmem:[#allocation3 + $0x38] sm:$0xf]
    %v106 = vld [vmem:[#allocation3 + $0x3c] sm:$0xf]
    %v107 = vld [vmem:[#allocation6] sm:$0xf]
    %v108 = vld [vmem:[#allocation6 + $0x4] sm:$0xf]
    %v109 = vld [vmem:[#allocation6 + $0x8] sm:$0xf]
    %v110 = vld [vmem:[#allocation6 + $0xc] sm:$0xf]
    %v111 = vld [vmem:[#allocation6 + $0x10] sm:$0xf]
    %v112 = vld [vmem:[#allocation6 + $0x14] sm:$0xf]
    %v113 = vld [vmem:[#allocation6 + $0x18] sm:$0xf]
    %v114 = vld [vmem:[#allocation6 + $0x1c] sm:$0xf]
    %v115 = vld [vmem:[#allocation6 + $0x20] sm:$0xf]
    %v116 = vld [vmem:[#allocation6 + $0x24] sm:$0xf]
    %v117 = vld [vmem:[#allocation6 + $0x28] sm:$0xf]
    %v118 = vld [vmem:[#allocation6 + $0x2c] sm:$0xf]
    %v119 = vld [vmem:[#allocation6 + $0x30] sm:$0xf]
    %v120 = vld [vmem:[#allocation6 + $0x34] sm:$0xf]
    %v121 = vld [vmem:[#allocation6 + $0x38] sm:$0xf]
    %v122 = vld [vmem:[#allocation6 + $0x3c] sm:$0xf]
    %v139 = vunpack.c.l.b16 %v91
    %v140 = vunpack.c.l.b16 %v92
    %v141 = vunpack.c.l.b16 %v93
    %v142 = vunpack.c.l.b16 %v94
    %v143 = vunpack.c.l.b16 %v95
    %v144 = vunpack.c.l.b16 %v96
    %v145 = vunpack.c.l.b16 %v97
    %v146 = vunpack.c.l.b16 %v98
    %v147 = vunpack.c.l.b16 %v99
    %v148 = vunpack.c.l.b16 %v100
    %v149 = vunpack.c.l.b16 %v101
    %v150 = vunpack.c.l.b16 %v102
    %v151 = vunpack.c.l.b16 %v103
    %v152 = vunpack.c.l.b16 %v104
    %v153 = vunpack.c.l.b16 %v105
    %v154 = vunpack.c.l.b16 %v106
    %v155 = vpack.c.b16 %v140, %v139
    %v156 = vpack.c.b16 %v142, %v141
    %v157 = vpack.c.b16 %v144, %v143
    %v158 = vpack.c.b16 %v146, %v145
    %v159 = vpack.c.b16 %v148, %v147
    %v160 = vpack.c.b16 %v150, %v149
    %v161 = vpack.c.b16 %v152, %v151
    %v162 = vpack.c.b16 %v154, %v153
    %v187 = vunpack.c.l.b16 %v107
    %v188 = vunpack.c.l.b16 %v108
    %v189 = vunpack.c.l.b16 %v109
    %v190 = vunpack.c.l.b16 %v110
    %v191 = vunpack.c.l.b16 %v111
    %v192 = vunpack.c.l.b16 %v112
    %v193 = vunpack.c.l.b16 %v113
    %v194 = vunpack.c.l.b16 %v114
    %v195 = vunpack.c.l.b16 %v115
    %v196 = vunpack.c.l.b16 %v116
    %v197 = vunpack.c.l.b16 %v117
    %v198 = vunpack.c.l.b16 %v118
    %v199 = vunpack.c.l.b16 %v119
    %v200 = vunpack.c.l.b16 %v120
    %v201 = vunpack.c.l.b16 %v121
    %v202 = vunpack.c.l.b16 %v122
    %v203 = vpack.c.b16 %v188, %v187
    %v204 = vpack.c.b16 %v190, %v189
    %v205 = vpack.c.b16 %v192, %v191
    %v206 = vpack.c.b16 %v194, %v193
    %v207 = vpack.c.b16 %v196, %v195
    %v208 = vpack.c.b16 %v198, %v197
    %v209 = vpack.c.b16 %v200, %v199
    %v210 = vpack.c.b16 %v202, %v201
    %219 = vmatprep.subr.bf16.mxu0 0
    %220 = vmatpush1.bf16.msra.mxu0 %v203
    %221 = vmatprep.subr.bf16.mxu0 0
    %222 = vmatpush1.bf16.msra.mxu0 %v204
    %223 = vmatprep.subr.bf16.mxu0 0
    %224 = vmatpush1.bf16.msra.mxu0 %v205
    %225 = vmatprep.subr.bf16.mxu0 0
    %226 = vmatpush1.bf16.msra.mxu0 %v206
    %227 = vmatprep.subr.bf16.mxu0 0
    %228 = vmatpush1.bf16.msra.mxu0 %v207
    %229 = vmatprep.subr.bf16.mxu0 0
    %230 = vmatpush1.bf16.msra.mxu0 %v208
    %231 = vmatprep.subr.bf16.mxu0 0
    %232 = vmatpush1.bf16.msra.mxu0 %v209
    %233 = vmatprep.subr.bf16.mxu0 0
    %234 = vmatpush1.bf16.msra.mxu0 %v210
    %235 = vmatprep.subr.bf16.mxu0 0
    %236 = vmatpush1.bf16.msra.mxu0 0
    %237 = vmatprep.subr.bf16.mxu0 0
    %238 = vmatpush1.bf16.msra.mxu0 0
    %239 = vmatprep.subr.bf16.mxu0 0
    %240 = vmatpush1.bf16.msra.mxu0 0
    %241 = vmatprep.subr.bf16.mxu0 0
    %242 = vmatpush1.bf16.msra.mxu0 0
    %243 = vmatprep.subr.bf16.mxu0 0
    %244 = vmatpush1.bf16.msra.mxu0 0
    %245 = vmatprep.subr.bf16.mxu0 0
    %246 = vmatpush1.bf16.msra.mxu0 0
    %247 = vmatprep.subr.bf16.mxu0 0
    %248 = vmatpush1.bf16.msra.mxu0 0
    %249 = vmatprep.subr.bf16.mxu0 0
    %250 = vmatpush1.bf16.msra.mxu0 0
    %251 = vmatprep.mubr.bf16.mxu0 0
    %252 = vmatmul.mubr.bf16.gmra.mrb[0].mxu0 %v155
    %v253 = vpop.f32.mrb[0].mxu0
    %v254 = vadd.f32 0.0, %v253
    %v255 = vpop.f32.mrb[0].mxu0
    %v256 = vpop.f32.mrb[0].mxu0
    %v257 = vadd.f32 0.0, %v256
    %v258 = vpop.f32.mrb[0].mxu0
    %259 = vmatprep.mubr.bf16.mxu0 0
    %260 = vmatmul.mubr.bf16.gmra.mrb[0].mxu0 %v156
    %v261 = vpop.f32.mrb[0].mxu0
    %v262 = vadd.f32 0.0, %v261
    %v263 = vpop.f32.mrb[0].mxu0
    %v264 = vpop.f32.mrb[0].mxu0
    %v265 = vadd.f32 0.0, %v264
    %v266 = vpop.f32.mrb[0].mxu0
    %267 = vmatprep.mubr.bf16.mxu0 0
    %268 = vmatmul.mubr.bf16.gmra.mrb[0].mxu0 %v157
    %v269 = vpop.f32.mrb[0].mxu0
    %v270 = vadd.f32 0.0, %v269
    %v271 = vpop.f32.mrb[0].mxu0
    %v272 = vpop.f32.mrb[0].mxu0
    %v273 = vadd.f32 0.0, %v272
    %v274 = vpop.f32.mrb[0].mxu0
    %275 = vmatprep.mubr.bf16.mxu0 0
    %276 = vmatmul.mubr.bf16.gmra.mrb[0].mxu0 %v158
    %v277 = vpop.f32.mrb[0].mxu0
    %v278 = vadd.f32 0.0, %v277
    %v279 = vpop.f32.mrb[0].mxu0
    %v280 = vpop.f32.mrb[0].mxu0
    %v281 = vadd.f32 0.0, %v280
    %v282 = vpop.f32.mrb[0].mxu0
    %283 = vmatprep.mubr.bf16.mxu0 0
    %284 = vmatmul.mubr.bf16.gmra.mrb[0].mxu0 %v159
    %v285 = vpop.f32.mrb[0].mxu0
    %v286 = vadd.f32 0.0, %v285
    %v287 = vpop.f32.mrb[0].mxu0
    %v288 = vpop.f32.mrb[0].mxu0
    %v289 = vadd.f32 0.0, %v288
    %v290 = vpop.f32.mrb[0].mxu0
    %291 = vmatprep.mubr.bf16.mxu0 0
    %292 = vmatmul.mubr.bf16.gmra.mrb[0].mxu0 %v160
    %v293 = vpop.f32.mrb[0].mxu0
    %v294 = vadd.f32 0.0, %v293
    %v295 = vpop.f32.mrb[0].mxu0
    %v296 = vpop.f32.mrb[0].mxu0
    %v297 = vadd.f32 0.0, %v296
    %v298 = vpop.f32.mrb[0].mxu0
    %299 = vmatprep.mubr.bf16.mxu0 0
    %300 = vmatmul.mubr.bf16.gmra.mrb[0].mxu0 %v161
    %v301 = vpop.f32.mrb[0].mxu0
    %v302 = vadd.f32 0.0, %v301
    %v303 = vpop.f32.mrb[0].mxu0
    %v304 = vpop.f32.mrb[0].mxu0
    %v305 = vadd.f32 0.0, %v304
    %v306 = vpop.f32.mrb[0].mxu0
    %307 = vmatprep.mubr.bf16.mxu0 0
    %308 = vmatmul.mubr.bf16.gmra.mrb[0].mxu0 %v162
    %v309 = vpop.f32.mrb[0].mxu0
    %v310 = vadd.f32 0.0, %v309
    %v311 = vpop.f32.mrb[0].mxu0
    %v312 = vpop.f32.mrb[0].mxu0
    %v313 = vadd.f32 0.0, %v312
    %v314 = vpop.f32.mrb[0].mxu0
    %315 = vdwg.mxu0
    %v316 = vadd.f32 %v75, %v254
    %v317 = vadd.f32 %v76, %v257
    %v318 = vadd.f32 %v77, %v262
    %v319 = vadd.f32 %v78, %v265
    %v320 = vadd.f32 %v79, %v270
    %v321 = vadd.f32 %v80, %v273
    %v322 = vadd.f32 %v81, %v278
    %v323 = vadd.f32 %v82, %v281
    %v324 = vadd.f32 %v83, %v286
    %v325 = vadd.f32 %v84, %v289
    %v326 = vadd.f32 %v85, %v294
    %v327 = vadd.f32 %v86, %v297
    %v328 = vadd.f32 %v87, %v302
    %v329 = vadd.f32 %v88, %v305
    %v330 = vadd.f32 %v89, %v310
    %v331 = vadd.f32 %v90, %v313
    %332 = vst [vmem:[#allocation2] sm:$0xff] %v316
    %333 = vst [vmem:[#allocation2 + $0x8] sm:$0xff] %v317
    %334 = vst [vmem:[#allocation2 + $0x10] sm:$0xff] %v318
    %335 = vst [vmem:[#allocation2 + $0x18] sm:$0xff] %v319
    %336 = vst [vmem:[#allocation2 + $0x20] sm:$0xff] %v320
    %337 = vst [vmem:[#allocation2 + $0x28] sm:$0xff] %v321
    %338 = vst [vmem:[#allocation2 + $0x30] sm:$0xff] %v322
    %339 = vst [vmem:[#allocation2 + $0x38] sm:$0xff] %v323
    %340 = vst [vmem:[#allocation2 + $0x40] sm:$0xff] %v324
    %341 = vst [vmem:[#allocation2 + $0x48] sm:$0xff] %v325
    %342 = vst [vmem:[#allocation2 + $0x50] sm:$0xff] %v326
    %343 = vst [vmem:[#allocation2 + $0x58] sm:$0xff] %v327
    %344 = vst [vmem:[#allocation2 + $0x60] sm:$0xff] %v328
    %345 = vst [vmem:[#allocation2 + $0x68] sm:$0xff] %v329
    %346 = vst [vmem:[#allocation2 + $0x70] sm:$0xff] %v330
    %347 = vst [vmem:[#allocation2 + $0x78] sm:$0xff] %v331
    // Predicated region
    $region30: #{model_forward.37} parent=1 // pred_check
      %p348 = pneg %p55
    $region31: #{model_forward.37} parent=1 // pred_check_branch
      %350 = sbr.rel (%p348) target = $region33
    $region32: #{model_forward.37} parent=1 // pred_region
      %v351 = vld [vmem:[#allocation2] sm:$0xff]
      %v352 = vld [vmem:[#allocation2 + $0x8] sm:$0xff]
      %v353 = vld [vmem:[#allocation2 + $0x10] sm:$0xff]
      %v354 = vld [vmem:[#allocation2 + $0x18] sm:$0xff]
      %v355 = vld [vmem:[#allocation2 + $0x20] sm:$0xff]
      %v356 = vld [vmem:[#allocation2 + $0x28] sm:$0xff]
      %v357 = vld [vmem:[#allocation2 + $0x30] sm:$0xff]
      %v358 = vld [vmem:[#allocation2 + $0x38] sm:$0xff]
      %v359 = vld [vmem:[#allocation2 + $0x40] sm:$0xff]
      %v360 = vld [vmem:[#allocation2 + $0x48] sm:$0xff]
      %v361 = vld [vmem:[#allocation2 + $0x50] sm:$0xff]
      %v362 = vld [vmem:[#allocation2 + $0x58] sm:$0xff]
      %v363 = vld [vmem:[#allocation2 + $0x60] sm:$0xff]
      %v364 = vld [vmem:[#allocation2 + $0x68] sm:$0xff]
      %v365 = vld [vmem:[#allocation2 + $0x70] sm:$0xff]
      %v366 = vld [vmem:[#allocation2 + $0x78] sm:$0xff]
      %v367 = vld [vmem:[#allocation8] sm:$0x1]
      %v369 = vlaneseq
      %v370 = vshrl.u32 %v369, 7
      %v371 = vsub.s32 0, %v370
      %v372 = vrot.slane %v367, %v371
      %v374 = vadd.f32 %v351, %v372
      %v375 = vadd.f32 %v352, %v372
      %v376 = vadd.f32 %v353, %v372
      %v377 = vadd.f32 %v354, %v372
      %v378 = vadd.f32 %v355, %v372
      %v379 = vadd.f32 %v356, %v372
      %v380 = vadd.f32 %v357, %v372
      %v381 = vadd.f32 %v358, %v372
      %v382 = vadd.f32 %v359, %v372
      %v383 = vadd.f32 %v360, %v372
      %v384 = vadd.f32 %v361, %v372
      %v385 = vadd.f32 %v362, %v372
      %v386 = vadd.f32 %v363, %v372
      %v387 = vadd.f32 %v364, %v372
      %v388 = vadd.f32 %v365, %v372
      %v389 = vadd.f32 %v366, %v372
      %390 = vst [vmem:[#allocation9] sm:$0xff] %v374
      %391 = vst [vmem:[#allocation9 + $0x8] sm:$0xff] %v375
      %392 = vst [vmem:[#allocation9 + $0x10] sm:$0xff] %v376
      %393 = vst [vmem:[#allocation9 + $0x18] sm:$0xff] %v377
      %394 = vst [vmem:[#allocation9 + $0x20] sm:$0xff] %v378
      %395 = vst [vmem:[#allocation9 + $0x28] sm:$0xff] %v379
      %396 = vst [vmem:[#allocation9 + $0x30] sm:$0xff] %v380
      %397 = vst [vmem:[#allocation9 + $0x38] sm:$0xff] %v381
      %398 = vst [vmem:[#allocation9 + $0x40] sm:$0xff] %v382
      %399 = vst [vmem:[#allocation9 + $0x48] sm:$0xff] %v383
      %400 = vst [vmem:[#allocation9 + $0x50] sm:$0xff] %v384
      %401 = vst [vmem:[#allocation9 + $0x58] sm:$0xff] %v385
      %402 = vst [vmem:[#allocation9 + $0x60] sm:$0xff] %v386
      %403 = vst [vmem:[#allocation9 + $0x68] sm:$0xff] %v387
      %404 = vst [vmem:[#allocation9 + $0x70] sm:$0xff] %v388
      %405 = vst [vmem:[#allocation9 + $0x78] sm:$0xff] %v389
    $region33: #{model_forward.37} parent=1 // pred_fallthru
      _
    // Predicated region
    $region34: #{model_forward.37} parent=1 // pred_check
      _
    $region35: #{model_forward.37} parent=1 // pred_check_branch
      %407 = sbr.rel (0) target = $region37
    $region36: #{model_forward.37} parent=1 // pred_region
      %s409 = ssub.s32 2048, 2048
      %410 = vsyncadd [#allocation5], %s409
      %s411 = sshll.u32 [#allocation9], 4
      %s412 = int_to_ptr.vmem [resolvable:$true] %s411
      %417 = dma.vmem_to_hbm [thread:$0]  %s412, 2048, %s3, [#allocation5], 128, 128, 8
    $region37: #{model_forward.37} parent=1 // pred_fallthru
      _
    // Predicated region
    $region38: #{model_forward.37} parent=1 // pred_check
      _
    $region39: #{model_forward.37} parent=1 // pred_check_branch
      %419 = sbr.rel (0) target = $region41
    $region40: #{model_forward.37} parent=1 // pred_region
      %420 = dma.done [#allocation5], 2048
    $region41: #{model_forward.37} parent=1 // pred_fallthru
      _
    %421 = vsyncpa [#allocation4], 1
    %422 = vsyncpa [#allocation7], 1
    %423 = vsyncpa [#allocation5], 1

// kernel: model_forward.38
$region0: #{model_forward.38}
  #allocation0 [shape = 'u32[]', space=smem, size = 0x4, offset = 0x4, fixed_abs, tag = 'smem constant byte address 0x4 - core index']
  #allocation1 [shape = 'u32[144,128]{1,0:T(1,128)}', space=vmem, size = 0x12000, scoped, tag = 'internal scratch']
  #allocation2 [shape = 'f32[128,256]{1,0:T(8,128)}', space=vmem, size = 0x20000, scoped, tag = 'scratch operand']
  %s0 = inlined_call_operand.hbm [shape: bf16[128,128], index: 0, kind: input, shape index: {}]
  %s1 = inlined_call_operand.hbm [shape: bf16[128,256], index: 1, kind: input, shape index: {}]
  %s2 = inlined_call_operand.hbm [shape: f32[1,256], index: 2, kind: input, shape index: {}]
  %s3 = inlined_call_operand.hbm [shape: f32[128,256], index: 3, kind: output, shape index: {}]
  %s4 = sld [smem:[#allocation0]]
  $region42: #{model_forward.38} parent=0
    _
  %s6 = ssub.s32 1, %s4
  %s7 = scalar_select 0, %s6, %s4
  $region1: #{model_forward.38} parent=0
    #allocation3 [shape = 'u8[32768]{0}', space=vmem, size = 0x8000, scoped, tag = 'input window, operand 0, single buffered']
    #allocation4 [shape = 's32[1]{0}', space=sflag, size = 0x4, scoped, tag = 'scoped memory for model_forward.38']
    #allocation5 [shape = 's32[1]{0}', space=sflag, size = 0x4, scoped, tag = 'scoped memory for model_forward.38']
    #allocation6 [shape = 'u8[65536]{0}', space=vmem, size = 0x10000, scoped, tag = 'input window, operand 1, single buffered']
    #allocation7 [shape = 's32[1]{0}', space=sflag, size = 0x4, scoped, tag = 'scoped memory for model_forward.38']
    #allocation8 [shape = 'u8[1024]{0}', space=vmem, size = 0x400, scoped, tag = 'input window, operand 2, single buffered']
    #allocation9 [shape = 'u8[131072]{0}', space=vmem, size = 0x20000, scoped, tag = 'output window, operand 0, single buffered']
    %8 = vsyncpa [#allocation4], 0
    %9 = vsyncpa [#allocation7], 0
    %10 = vsyncpa [#allocation5], 0
    // Predicated region
    $region2: #{model_forward.38} parent=1 // pred_check
      _
    $region3: #{model_forward.38} parent=1 // pred_check_branch
      %12 = sbr.rel (0) target = $region5
    $region4: #{model_forward.38} parent=1 // pred_region
      %s14 = ssub.s32 1024, 1024
      %15 = vsyncadd [#allocation4], %s14
      %s16 = sshll.u32 [#allocation3], 4
      %s17 = int_to_ptr.vmem [resolvable:$true] %s16
      %22 = dma.hbm_to_vmem [thread:$0]  %s0, 1024, %s17, [#allocation4], 64, 64, 4
    $region5: #{model_forward.38} parent=1 // pred_fallthru
      _
    // Predicated region
    $region6: #{model_forward.38} parent=1 // pred_check
      _
    $region7: #{model_forward.38} parent=1 // pred_check_branch
      %24 = sbr.rel (0) target = $region9
    $region8: #{model_forward.38} parent=1 // pred_region
      %s26 = ssub.s32 2048, 2048
      %27 = vsyncadd [#allocation7], %s26
      %s28 = sshll.u32 [#allocation6], 4
      %s29 = int_to_ptr.vmem [resolvable:$true] %s28
      %34 = dma.hbm_to_vmem [thread:$0]  %s1, 2048, %s29, [#allocation7], 128, 128, 8
    $region9: #{model_forward.38} parent=1 // pred_fallthru
      _
    // Predicated region
    $region10: #{model_forward.38} parent=1 // pred_check
      _
    $region11: #{model_forward.38} parent=1 // pred_check_branch
      %36 = sbr.rel (0) target = $region13
    $region12: #{model_forward.38} parent=1 // pred_region
      %s38 = ssub.s32 32, 32
      %39 = vsyncadd [#allocation7], %s38
      %s41 = sshll.u32 [#allocation8], 4
      %s42 = int_to_ptr.vmem [resolvable:$true] %s41
      %44 = dma.hbm_to_vmem [thread:$0]  %s2, 32, %s42, [#allocation7]
    $region13: #{model_forward.38} parent=1 // pred_fallthru
      _
    // Predicated region
    $region14: #{model_forward.38} parent=1 // pred_check
      _
    $region15: #{model_forward.38} parent=1 // pred_check_branch
      %46 = sbr.rel (0) target = $region17
    $region16: #{model_forward.38} parent=1 // pred_region
      %47 = dma.done [#allocation4], 1024
    $region17: #{model_forward.38} parent=1 // pred_fallthru
      _
    // Predicated region
    $region18: #{model_forward.38} parent=1 // pred_check
      _
    $region19: #{model_forward.38} parent=1 // pred_check_branch
      %49 = sbr.rel (0) target = $region21
    $region20: #{model_forward.38} parent=1 // pred_region
      %50 = dma.done [#allocation7], 2048
    $region21: #{model_forward.38} parent=1 // pred_fallthru
      _
    // Predicated region
    $region22: #{model_forward.38} parent=1 // pred_check
      _
    $region23: #{model_forward.38} parent=1 // pred_check_branch
      %52 = sbr.rel (0) target = $region25
    $region24: #{model_forward.38} parent=1 // pred_region
      %53 = dma.done [#allocation7], 32
    $region25: #{model_forward.38} parent=1 // pred_fallthru
      _
    %p55 = scmp.eq.s32.totalorder 0, 0
    // Predicated region
    $region26: #{model_forward.38} parent=1 // pred_check
      %p56 = pneg %p55
    $region27: #{model_forward.38} parent=1 // pred_check_branch
      %58 = sbr.rel (%p56) target = $region29
    $region28: #{model_forward.38} parent=1 // pred_region
      %59 = vst [vmem:[#allocation2] sm:$0xff] 0.0
      %60 = vst [vmem:[#allocation2 + $0x8] sm:$0xff] 0.0
      %61 = vst [vmem:[#allocation2 + $0x10] sm:$0xff] 0.0
      %62 = vst [vmem:[#allocation2 + $0x18] sm:$0xff] 0.0
      %63 = vst [vmem:[#allocation2 + $0x20] sm:$0xff] 0.0
      %64 = vst [vmem:[#allocation2 + $0x28] sm:$0xff] 0.0
      %65 = vst [vmem:[#allocation2 + $0x30] sm:$0xff] 0.0
      %66 = vst [vmem:[#allocation2 + $0x38] sm:$0xff] 0.0
      %67 = vst [vmem:[#allocation2 + $0x40] sm:$0xff] 0.0
      %68 = vst [vmem:[#allocation2 + $0x48] sm:$0xff] 0.0
      %69 = vst [vmem:[#allocation2 + $0x50] sm:$0xff] 0.0
      %70 = vst [vmem:[#allocation2 + $0x58] sm:$0xff] 0.0
      %71 = vst [vmem:[#allocation2 + $0x60] sm:$0xff] 0.0
      %72 = vst [vmem:[#allocation2 + $0x68] sm:$0xff] 0.0
      %73 = vst [vmem:[#allocation2 + $0x70] sm:$0xff] 0.0
      %74 = vst [vmem:[#allocation2 + $0x78] sm:$0xff] 0.0
      %75 = vst [vmem:[#allocation2 + $0x80] sm:$0xff] 0.0
      %76 = vst [vmem:[#allocation2 + $0x88] sm:$0xff] 0.0
      %77 = vst [vmem:[#allocation2 + $0x90] sm:$0xff] 0.0
      %78 = vst [vmem:[#allocation2 + $0x98] sm:$0xff] 0.0
      %79 = vst [vmem:[#allocation2 + $0xa0] sm:$0xff] 0.0
      %80 = vst [vmem:[#allocation2 + $0xa8] sm:$0xff] 0.0
      %81 = vst [vmem:[#allocation2 + $0xb0] sm:$0xff] 0.0
      %82 = vst [vmem:[#allocation2 + $0xb8] sm:$0xff] 0.0
      %83 = vst [vmem:[#allocation2 + $0xc0] sm:$0xff] 0.0
      %84 = vst [vmem:[#allocation2 + $0xc8] sm:$0xff] 0.0
      %85 = vst [vmem:[#allocation2 + $0xd0] sm:$0xff] 0.0
      %86 = vst [vmem:[#allocation2 + $0xd8] sm:$0xff] 0.0
      %87 = vst [vmem:[#allocation2 + $0xe0] sm:$0xff] 0.0
      %88 = vst [vmem:[#allocation2 + $0xe8] sm:$0xff] 0.0
      %89 = vst [vmem:[#allocation2 + $0xf0] sm:$0xff] 0.0
      %90 = vst [vmem:[#allocation2 + $0xf8] sm:$0xff] 0.0
    $region29: #{model_forward.38} parent=1 // pred_fallthru
      _
    %v91 = vld [vmem:[#allocation2] sm:$0xff]
    %v92 = vld [vmem:[#allocation2 + $0x8] sm:$0xff]
    %v93 = vld [vmem:[#allocation2 + $0x10] sm:$0xff]
    %v94 = vld [vmem:[#allocation2 + $0x18] sm:$0xff]
    %v95 = vld [vmem:[#allocation2 + $0x20] sm:$0xff]
    %v96 = vld [vmem:[#allocation2 + $0x28] sm:$0xff]
    %v97 = vld [vmem:[#allocation2 + $0x30] sm:$0xff]
    %v98 = vld [vmem:[#allocation2 + $0x38] sm:$0xff]
    %v99 = vld [vmem:[#allocation2 + $0x40] sm:$0xff]
    %v100 = vld [vmem:[#allocation2 + $0x48] sm:$0xff]
    %v101 = vld [vmem:[#allocation2 + $0x50] sm:$0xff]
    %v102 = vld [vmem:[#allocation2 + $0x58] sm:$0xff]
    %v103 = vld [vmem:[#allocation2 + $0x60] sm:$0xff]
    %v104 = vld [vmem:[#allocation2 + $0x68] sm:$0xff]
    %v105 = vld [vmem:[#allocation2 + $0x70] sm:$0xff]
    %v106 = vld [vmem:[#allocation2 + $0x78] sm:$0xff]
    %v107 = vld [vmem:[#allocation2 + $0x80] sm:$0xff]
    %v108 = vld [vmem:[#allocation2 + $0x88] sm:$0xff]
    %v109 = vld [vmem:[#allocation2 + $0x90] sm:$0xff]
    %v110 = vld [vmem:[#allocation2 + $0x98] sm:$0xff]
    %v111 = vld [vmem:[#allocation2 + $0xa0] sm:$0xff]
    %v112 = vld [vmem:[#allocation2 + $0xa8] sm:$0xff]
    %v113 = vld [vmem:[#allocation2 + $0xb0] sm:$0xff]
    %v114 = vld [vmem:[#allocation2 + $0xb8] sm:$0xff]
    %v115 = vld [vmem:[#allocation2 + $0xc0] sm:$0xff]
    %v116 = vld [vmem:[#allocation2 + $0xc8] sm:$0xff]
    %v117 = vld [vmem:[#allocation2 + $0xd0] sm:$0xff]
    %v118 = vld [vmem:[#allocation2 + $0xd8] sm:$0xff]
    %v119 = vld [vmem:[#allocation2 + $0xe0] sm:$0xff]
    %v120 = vld [vmem:[#allocation2 + $0xe8] sm:$0xff]
    %v121 = vld [vmem:[#allocation2 + $0xf0] sm:$0xff]
    %v122 = vld [vmem:[#allocation2 + $0xf8] sm:$0xff]
    %v123 = vld [vmem:[#allocation3] sm:$0xf]
    %v124 = vld [vmem:[#allocation3 + $0x4] sm:$0xf]
    %v125 = vld [vmem:[#allocation3 + $0x8] sm:$0xf]
    %v126 = vld [vmem:[#allocation3 + $0xc] sm:$0xf]
    %v127 = vld [vmem:[#allocation3 + $0x10] sm:$0xf]
    %v128 = vld [vmem:[#allocation3 + $0x14] sm:$0xf]
    %v129 = vld [vmem:[#allocation3 + $0x18] sm:$0xf]
    %v130 = vld [vmem:[#allocation3 + $0x1c] sm:$0xf]
    %v131 = vld [vmem:[#allocation3 + $0x20] sm:$0xf]
    %v132 = vld [vmem:[#allocation3 + $0x24] sm:$0xf]
    %v133 = vld [vmem:[#allocation3 + $0x28] sm:$0xf]
    %v134 = vld [vmem:[#allocation3 + $0x2c] sm:$0xf]
    %v135 = vld [vmem:[#allocation3 + $0x30] sm:$0xf]
    %v136 = vld [vmem:[#allocation3 + $0x34] sm:$0xf]
    %v137 = vld [vmem:[#allocation3 + $0x38] sm:$0xf]
    %v138 = vld [vmem:[#allocation3 + $0x3c] sm:$0xf]
    %v139 = vld [vmem:[#allocation6] sm:$0xff]
    %v140 = vld [vmem:[#allocation6 + $0x8] sm:$0xff]
    %v141 = vld [vmem:[#allocation6 + $0x10] sm:$0xff]
    %v142 = vld [vmem:[#allocation6 + $0x18] sm:$0xff]
    %v143 = vld [vmem:[#allocation6 + $0x20] sm:$0xff]
    %v144 = vld [vmem:[#allocation6 + $0x28] sm:$0xff]
    %v145 = vld [vmem:[#allocation6 + $0x30] sm:$0xff]
    %v146 = vld [vmem:[#allocation6 + $0x38] sm:$0xff]
    %v147 = vld [vmem:[#allocation6 + $0x40] sm:$0xff]
    %v148 = vld [vmem:[#allocation6 + $0x48] sm:$0xff]
    %v149 = vld [vmem:[#allocation6 + $0x50] sm:$0xff]
    %v150 = vld [vmem:[#allocation6 + $0x58] sm:$0xff]
    %v151 = vld [vmem:[#allocation6 + $0x60] sm:$0xff]
    %v152 = vld [vmem:[#allocation6 + $0x68] sm:$0xff]
    %v153 = vld [vmem:[#allocation6 + $0x70] sm:$0xff]
    %v154 = vld [vmem:[#allocation6 + $0x78] sm:$0xff]
    %v171 = vunpack.c.l.b16 %v123
    %v172 = vunpack.c.l.b16 %v124
    %v173 = vunpack.c.l.b16 %v125
    %v174 = vunpack.c.l.b16 %v126
    %v175 = vunpack.c.l.b16 %v127
    %v176 = vunpack.c.l.b16 %v128
    %v177 = vunpack.c.l.b16 %v129
    %v178 = vunpack.c.l.b16 %v130
    %v179 = vunpack.c.l.b16 %v131
    %v180 = vunpack.c.l.b16 %v132
    %v181 = vunpack.c.l.b16 %v133
    %v182 = vunpack.c.l.b16 %v134
    %v183 = vunpack.c.l.b16 %v135
    %v184 = vunpack.c.l.b16 %v136
    %v185 = vunpack.c.l.b16 %v137
    %v186 = vunpack.c.l.b16 %v138
    %v187 = vpack.c.b16 %v172, %v171
    %v188 = vpack.c.b16 %v174, %v173
    %v189 = vpack.c.b16 %v176, %v175
    %v190 = vpack.c.b16 %v178, %v177
    %v191 = vpack.c.b16 %v180, %v179
    %v192 = vpack.c.b16 %v182, %v181
    %v193 = vpack.c.b16 %v184, %v183
    %v194 = vpack.c.b16 %v186, %v185
    %v219 = vunpack.c.l.b16 %v139
    %v220 = vunpack.c.h.b16 %v139
    %v221 = vunpack.c.l.b16 %v140
    %v222 = vunpack.c.h.b16 %v140
    %v223 = vunpack.c.l.b16 %v141
    %v224 = vunpack.c.h.b16 %v141
    %v225 = vunpack.c.l.b16 %v142
    %v226 = vunpack.c.h.b16 %v142
    %v227 = vunpack.c.l.b16 %v143
    %v228 = vunpack.c.h.b16 %v143
    %v229 = vunpack.c.l.b16 %v144
    %v230 = vunpack.c.h.b16 %v144
    %v231 = vunpack.c.l.b16 %v145
    %v232 = vunpack.c.h.b16 %v145
    %v233 = vunpack.c.l.b16 %v146
    %v234 = vunpack.c.h.b16 %v146
    %v235 = vunpack.c.l.b16 %v147
    %v236 = vunpack.c.h.b16 %v147
    %v237 = vunpack.c.l.b16 %v148
    %v238 = vunpack.c.h.b16 %v148
    %v239 = vunpack.c.l.b16 %v149
    %v240 = vunpack.c.h.b16 %v149
    %v241 = vunpack.c.l.b16 %v150
    %v242 = vunpack.c.h.b16 %v150
    %v243 = vunpack.c.l.b16 %v151
    %v244 = vunpack.c.h.b16 %v151
    %v245 = vunpack.c.l.b16 %v152
    %v246 = vunpack.c.h.b16 %v152
    %v247 = vunpack.c.l.b16 %v153
    %v248 = vunpack.c.h.b16 %v153
    %v249 = vunpack.c.l.b16 %v154
    %v250 = vunpack.c.h.b16 %v154
    %v251 = vpack.c.b16 %v221, %v219
    %v252 = vpack.c.b16 %v222, %v220
    %v253 = vpack.c.b16 %v225, %v223
    %v254 = vpack.c.b16 %v226, %v224
    %v255 = vpack.c.b16 %v229, %v227
    %v256 = vpack.c.b16 %v230, %v228
    %v257 = vpack.c.b16 %v233, %v231
    %v258 = vpack.c.b16 %v234, %v232
    %v259 = vpack.c.b16 %v237, %v235
    %v260 = vpack.c.b16 %v238, %v236
    %v261 = vpack.c.b16 %v241, %v239
    %v262 = vpack.c.b16 %v242, %v240
    %v263 = vpack.c.b16 %v245, %v243
    %v264 = vpack.c.b16 %v246, %v244
    %v265 = vpack.c.b16 %v249, %v247
    %v266 = vpack.c.b16 %v250, %v248
    %283 = vmatprep.subr.bf16.mxu0 %v252
    %284 = vmatpush1.bf16.msra.mxu0 %v251
    %285 = vmatprep.subr.bf16.mxu0 %v254
    %286 = vmatpush1.bf16.msra.mxu0 %v253
    %287 = vmatprep.subr.bf16.mxu0 %v256
    %288 = vmatpush1.bf16.msra.mxu0 %v255
    %289 = vmatprep.subr.bf16.mxu0 %v258
    %290 = vmatpush1.bf16.msra.mxu0 %v257
    %291 = vmatprep.subr.bf16.mxu0 %v260
    %292 = vmatpush1.bf16.msra.mxu0 %v259
    %293 = vmatprep.subr.bf16.mxu0 %v262
    %294 = vmatpush1.bf16.msra.mxu0 %v261
    %295 = vmatprep.subr.bf16.mxu0 %v264
    %296 = vmatpush1.bf16.msra.mxu0 %v263
    %297 = vmatprep.subr.bf16.mxu0 %v266
    %298 = vmatpush1.bf16.msra.mxu0 %v265
    %299 = vmatprep.subr.bf16.mxu0 0
    %300 = vmatpush1.bf16.msra.mxu0 0
    %301 = vmatprep.subr.bf16.mxu0 0
    %302 = vmatpush1.bf16.msra.mxu0 0
    %303 = vmatprep.subr.bf16.mxu0 0
    %304 = vmatpush1.bf16.msra.mxu0 0
    %305 = vmatprep.subr.bf16.mxu0 0
    %306 = vmatpush1.bf16.msra.mxu0 0
    %307 = vmatprep.subr.bf16.mxu0 0
    %308 = vmatpush1.bf16.msra.mxu0 0
    %309 = vmatprep.subr.bf16.mxu0 0
    %310 = vmatpush1.bf16.msra.mxu0 0
    %311 = vmatprep.subr.bf16.mxu0 0
    %312 = vmatpush1.bf16.msra.mxu0 0
    %313 = vmatprep.subr.bf16.mxu0 0
    %314 = vmatpush1.bf16.msra.mxu0 0
    %315 = vmatprep.mubr.bf16.mxu0 0
    %316 = vmatmul.mubr.bf16.gmra.mrb[0].mxu0 %v187
    %v317 = vpop.f32.mrb[0].mxu0
    %v318 = vadd.f32 0.0, %v317
    %v319 = vpop.f32.mrb[0].mxu0
    %v320 = vadd.f32 0.0, %v319
    %v321 = vpop.f32.mrb[0].mxu0
    %v322 = vadd.f32 0.0, %v321
    %v323 = vpop.f32.mrb[0].mxu0
    %v324 = vadd.f32 0.0, %v323
    %325 = vmatprep.mubr.bf16.mxu0 0
    %326 = vmatmul.mubr.bf16.gmra.mrb[0].mxu0 %v188
    %v327 = vpop.f32.mrb[0].mxu0
    %v328 = vadd.f32 0.0, %v327
    %v329 = vpop.f32.mrb[0].mxu0
    %v330 = vadd.f32 0.0, %v329
    %v331 = vpop.f32.mrb[0].mxu0
    %v332 = vadd.f32 0.0, %v331
    %v333 = vpop.f32.mrb[0].mxu0
    %v334 = vadd.f32 0.0, %v333
    %335 = vmatprep.mubr.bf16.mxu0 0
    %336 = vmatmul.mubr.bf16.gmra.mrb[0].mxu0 %v189
    %v337 = vpop.f32.mrb[0].mxu0
    %v338 = vadd.f32 0.0, %v337
    %v339 = vpop.f32.mrb[0].mxu0
    %v340 = vadd.f32 0.0, %v339
    %v341 = vpop.f32.mrb[0].mxu0
    %v342 = vadd.f32 0.0, %v341
    %v343 = vpop.f32.mrb[0].mxu0
    %v344 = vadd.f32 0.0, %v343
    %345 = vmatprep.mubr.bf16.mxu0 0
    %346 = vmatmul.mubr.bf16.gmra.mrb[0].mxu0 %v190
    %v347 = vpop.f32.mrb[0].mxu0
    %v348 = vadd.f32 0.0, %v347
    %v349 = vpop.f32.mrb[0].mxu0
    %v350 = vadd.f32 0.0, %v349
    %v351 = vpop.f32.mrb[0].mxu0
    %v352 = vadd.f32 0.0, %v351
    %v353 = vpop.f32.mrb[0].mxu0
    %v354 = vadd.f32 0.0, %v353
    %355 = vmatprep.mubr.bf16.mxu0 0
    %356 = vmatmul.mubr.bf16.gmra.mrb[0].mxu0 %v191
    %v357 = vpop.f32.mrb[0].mxu0
    %v358 = vadd.f32 0.0, %v357
    %v359 = vpop.f32.mrb[0].mxu0
    %v360 = vadd.f32 0.0, %v359
    %v361 = vpop.f32.mrb[0].mxu0
    %v362 = vadd.f32 0.0, %v361
    %v363 = vpop.f32.mrb[0].mxu0
    %v364 = vadd.f32 0.0, %v363
    %365 = vmatprep.mubr.bf16.mxu0 0
    %366 = vmatmul.mubr.bf16.gmra.mrb[0].mxu0 %v192
    %v367 = vpop.f32.mrb[0].mxu0
    %v368 = vadd.f32 0.0, %v367
    %v369 = vpop.f32.mrb[0].mxu0
    %v370 = vadd.f32 0.0, %v369
    %v371 = vpop.f32.mrb[0].mxu0
    %v372 = vadd.f32 0.0, %v371
    %v373 = vpop.f32.mrb[0].mxu0
    %v374 = vadd.f32 0.0, %v373
    %375 = vmatprep.mubr.bf16.mxu0 0
    %376 = vmatmul.mubr.bf16.gmra.mrb[0].mxu0 %v193
    %v377 = vpop.f32.mrb[0].mxu0
    %v378 = vadd.f32 0.0, %v377
    %v379 = vpop.f32.mrb[0].mxu0
    %v380 = vadd.f32 0.0, %v379
    %v381 = vpop.f32.mrb[0].mxu0
    %v382 = vadd.f32 0.0, %v381
    %v383 = vpop.f32.mrb[0].mxu0
    %v384 = vadd.f32 0.0, %v383
    %385 = vmatprep.mubr.bf16.mxu0 0
    %386 = vmatmul.mubr.bf16.gmra.mrb[0].mxu0 %v194
    %v387 = vpop.f32.mrb[0].mxu0
    %v388 = vadd.f32 0.0, %v387
    %v389 = vpop.f32.mrb[0].mxu0
    %v390 = vadd.f32 0.0, %v389
    %v391 = vpop.f32.mrb[0].mxu0
    %v392 = vadd.f32 0.0, %v391
    %v393 = vpop.f32.mrb[0].mxu0
    %v394 = vadd.f32 0.0, %v393
    %395 = vdwg.mxu0
    %v396 = vadd.f32 %v91, %v318
    %v397 = vadd.f32 %v92, %v320
    %v398 = vadd.f32 %v93, %v322
    %v399 = vadd.f32 %v94, %v324
    %v400 = vadd.f32 %v95, %v328
    %v401 = vadd.f32 %v96, %v330
    %v402 = vadd.f32 %v97, %v332
    %v403 = vadd.f32 %v98, %v334
    %v404 = vadd.f32 %v99, %v338
    %v405 = vadd.f32 %v100, %v340
    %v406 = vadd.f32 %v101, %v342
    %v407 = vadd.f32 %v102, %v344
    %v408 = vadd.f32 %v103, %v348
    %v409 = vadd.f32 %v104, %v350
    %v410 = vadd.f32 %v105, %v352
    %v411 = vadd.f32 %v106, %v354
    %v412 = vadd.f32 %v107, %v358
    %v413 = vadd.f32 %v108, %v360
    %v414 = vadd.f32 %v109, %v362
    %v415 = vadd.f32 %v110, %v364
    %v416 = vadd.f32 %v111, %v368
    %v417 = vadd.f32 %v112, %v370
    %v418 = vadd.f32 %v113, %v372
    %v419 = vadd.f32 %v114, %v374
    %v420 = vadd.f32 %v115, %v378
    %v421 = vadd.f32 %v116, %v380
    %v422 = vadd.f32 %v117, %v382
    %v423 = vadd.f32 %v118, %v384
    %v424 = vadd.f32 %v119, %v388
    %v425 = vadd.f32 %v120, %v390
    %v426 = vadd.f32 %v121, %v392
    %v427 = vadd.f32 %v122, %v394
    %428 = vst [vmem:[#allocation2] sm:$0xff] %v396
    %429 = vst [vmem:[#allocation2 + $0x8] sm:$0xff] %v397
    %430 = vst [vmem:[#allocation2 + $0x10] sm:$0xff] %v398
    %431 = vst [vmem:[#allocation2 + $0x18] sm:$0xff] %v399
    %432 = vst [vmem:[#allocation2 + $0x20] sm:$0xff] %v400
    %433 = vst [vmem:[#allocation2 + $0x28] sm:$0xff] %v401
    %434 = vst [vmem:[#allocation2 + $0x30] sm:$0xff] %v402
    %435 = vst [vmem:[#allocation2 + $0x38] sm:$0xff] %v403
    %436 = vst [vmem:[#allocation2 + $0x40] sm:$0xff] %v404
    %437 = vst [vmem:[#allocation2 + $0x48] sm:$0xff] %v405
    %438 = vst [vmem:[#allocation2 + $0x50] sm:$0xff] %v406
    %439 = vst [vmem:[#allocation2 + $0x58] sm:$0xff] %v407
    %440 = vst [vmem:[#allocation2 + $0x60] sm:$0xff] %v408
    %441 = vst [vmem:[#allocation2 + $0x68] sm:$0xff] %v409
    %442 = vst [vmem:[#allocation2 + $0x70] sm:$0xff] %v410
    %443 = vst [vmem:[#allocation2 + $0x78] sm:$0xff] %v411
    %444 = vst [vmem:[#allocation2 + $0x80] sm:$0xff] %v412
    %445 = vst [vmem:[#allocation2 + $0x88] sm:$0xff] %v413
    %446 = vst [vmem:[#allocation2 + $0x90] sm:$0xff] %v414
    %447 = vst [vmem:[#allocation2 + $0x98] sm:$0xff] %v415
    %448 = vst [vmem:[#allocation2 + $0xa0] sm:$0xff] %v416
    %449 = vst [vmem:[#allocation2 + $0xa8] sm:$0xff] %v417
    %450 = vst [vmem:[#allocation2 + $0xb0] sm:$0xff] %v418
    %451 = vst [vmem:[#allocation2 + $0xb8] sm:$0xff] %v419
    %452 = vst [vmem:[#allocation2 + $0xc0] sm:$0xff] %v420
    %453 = vst [vmem:[#allocation2 + $0xc8] sm:$0xff] %v421
    %454 = vst [vmem:[#allocation2 + $0xd0] sm:$0xff] %v422
    %455 = vst [vmem:[#allocation2 + $0xd8] sm:$0xff] %v423
    %456 = vst [vmem:[#allocation2 + $0xe0] sm:$0xff] %v424
    %457 = vst [vmem:[#allocation2 + $0xe8] sm:$0xff] %v425
    %458 = vst [vmem:[#allocation2 + $0xf0] sm:$0xff] %v426
    %459 = vst [vmem:[#allocation2 + $0xf8] sm:$0xff] %v427
    // Predicated region
    $region30: #{model_forward.38} parent=1 // pred_check
      %p460 = pneg %p55
    $region31: #{model_forward.38} parent=1 // pred_check_branch
      %462 = sbr.rel (%p460) target = $region33
    $region32: #{model_forward.38} parent=1 // pred_region
      %v463 = vld [vmem:[#allocation2] sm:$0xff]
      %v464 = vld [vmem:[#allocation2 + $0x8] sm:$0xff]
      %v465 = vld [vmem:[#allocation2 + $0x10] sm:$0xff]
      %v466 = vld [vmem:[#allocation2 + $0x18] sm:$0xff]
      %v467 = vld [vmem:[#allocation2 + $0x20] sm:$0xff]
      %v468 = vld [vmem:[#allocation2 + $0x28] sm:$0xff]
      %v469 = vld [vmem:[#allocation2 + $0x30] sm:$0xff]
      %v470 = vld [vmem:[#allocation2 + $0x38] sm:$0xff]
      %v471 = vld [vmem:[#allocation2 + $0x40] sm:$0xff]
      %v472 = vld [vmem:[#allocation2 + $0x48] sm:$0xff]
      %v473 = vld [vmem:[#allocation2 + $0x50] sm:$0xff]
      %v474 = vld [vmem:[#allocation2 + $0x58] sm:$0xff]
      %v475 = vld [vmem:[#allocation2 + $0x60] sm:$0xff]
      %v476 = vld [vmem:[#allocation2 + $0x68] sm:$0xff]
      %v477 = vld [vmem:[#allocation2 + $0x70] sm:$0xff]
      %v478 = vld [vmem:[#allocation2 + $0x78] sm:$0xff]
      %v479 = vld [vmem:[#allocation2 + $0x80] sm:$0xff]
      %v480 = vld [vmem:[#allocation2 + $0x88] sm:$0xff]
      %v481 = vld [vmem:[#allocation2 + $0x90] sm:$0xff]
      %v482 = vld [vmem:[#allocation2 + $0x98] sm:$0xff]
      %v483 = vld [vmem:[#allocation2 + $0xa0] sm:$0xff]
      %v484 = vld [vmem:[#allocation2 + $0xa8] sm:$0xff]
      %v485 = vld [vmem:[#allocation2 + $0xb0] sm:$0xff]
      %v486 = vld [vmem:[#allocation2 + $0xb8] sm:$0xff]
      %v487 = vld [vmem:[#allocation2 + $0xc0] sm:$0xff]
      %v488 = vld [vmem:[#allocation2 + $0xc8] sm:$0xff]
      %v489 = vld [vmem:[#allocation2 + $0xd0] sm:$0xff]
      %v490 = vld [vmem:[#allocation2 + $0xd8] sm:$0xff]
      %v491 = vld [vmem:[#allocation2 + $0xe0] sm:$0xff]
      %v492 = vld [vmem:[#allocation2 + $0xe8] sm:$0xff]
      %v493 = vld [vmem:[#allocation2 + $0xf0] sm:$0xff]
      %v494 = vld [vmem:[#allocation2 + $0xf8] sm:$0xff]
      %v495 = vld [vmem:[#allocation8] sm:$0x3]
      %v497 = vlaneseq
      %v498 = vshrl.u32 %v497, 7
      %v499 = vsub.s32 0, %v498
      %v500 = vrot.slane %v495, %v499
      %v501 = vlaneseq
      %v502 = vshrl.u32 %v501, 7
      %v503 = vsub.s32 1, %v502
      %v504 = vrot.slane %v495, %v503
      %v507 = vadd.f32 %v463, %v500
      %v508 = vadd.f32 %v464, %v504
      %v509 = vadd.f32 %v465, %v500
      %v510 = vadd.f32 %v466, %v504
      %v511 = vadd.f32 %v467, %v500
      %v512 = vadd.f32 %v468, %v504
      %v513 = vadd.f32 %v469, %v500
      %v514 = vadd.f32 %v470, %v504
      %v515 = vadd.f32 %v471, %v500
      %v516 = vadd.f32 %v472, %v504
      %v517 = vadd.f32 %v473, %v500
      %v518 = vadd.f32 %v474, %v504
      %v519 = vadd.f32 %v475, %v500
      %v520 = vadd.f32 %v476, %v504
      %v521 = vadd.f32 %v477, %v500
      %v522 = vadd.f32 %v478, %v504
      %v523 = vadd.f32 %v479, %v500
      %v524 = vadd.f32 %v480, %v504
      %v525 = vadd.f32 %v481, %v500
      %v526 = vadd.f32 %v482, %v504
      %v527 = vadd.f32 %v483, %v500
      %v528 = vadd.f32 %v484, %v504
      %v529 = vadd.f32 %v485, %v500
      %v530 = vadd.f32 %v486, %v504
      %v531 = vadd.f32 %v487, %v500
      %v532 = vadd.f32 %v488, %v504
      %v533 = vadd.f32 %v489, %v500
      %v534 = vadd.f32 %v490, %v504
      %v535 = vadd.f32 %v491, %v500
      %v536 = vadd.f32 %v492, %v504
      %v537 = vadd.f32 %v493, %v500
      %v538 = vadd.f32 %v494, %v504
      %539 = vst [vmem:[#allocation9] sm:$0xff] %v507
      %540 = vst [vmem:[#allocation9 + $0x8] sm:$0xff] %v508
      %541 = vst [vmem:[#allocation9 + $0x10] sm:$0xff] %v509
      %542 = vst [vmem:[#allocation9 + $0x18] sm:$0xff] %v510
      %543 = vst [vmem:[#allocation9 + $0x20] sm:$0xff] %v511
      %544 = vst [vmem:[#allocation9 + $0x28] sm:$0xff] %v512
      %545 = vst [vmem:[#allocation9 + $0x30] sm:$0xff] %v513
      %546 = vst [vmem:[#allocation9 + $0x38] sm:$0xff] %v514
      %547 = vst [vmem:[#allocation9 + $0x40] sm:$0xff] %v515
      %548 = vst [vmem:[#allocation9 + $0x48] sm:$0xff] %v516
      %549 = vst [vmem:[#allocation9 + $0x50] sm:$0xff] %v517
      %550 = vst [vmem:[#allocation9 + $0x58] sm:$0xff] %v518
      %551 = vst [vmem:[#allocation9 + $0x60] sm:$0xff] %v519
      %552 = vst [vmem:[#allocation9 + $0x68] sm:$0xff] %v520
      %553 = vst [vmem:[#allocation9 + $0x70] sm:$0xff] %v521
      %554 = vst [vmem:[#allocation9 + $0x78] sm:$0xff] %v522
      %555 = vst [vmem:[#allocation9 + $0x80] sm:$0xff] %v523
      %556 = vst [vmem:[#allocation9 + $0x88] sm:$0xff] %v524
      %557 = vst [vmem:[#allocation9 + $0x90] sm:$0xff] %v525
      %558 = vst [vmem:[#allocation9 + $0x98] sm:$0xff] %v526
      %559 = vst [vmem:[#allocation9 + $0xa0] sm:$0xff] %v527
      %560 = vst [vmem:[#allocation9 + $0xa8] sm:$0xff] %v528
      %561 = vst [vmem:[#allocation9 + $0xb0] sm:$0xff] %v529
      %562 = vst [vmem:[#allocation9 + $0xb8] sm:$0xff] %v530
      %563 = vst [vmem:[#allocation9 + $0xc0] sm:$0xff] %v531
      %564 = vst [vmem:[#allocation9 + $0xc8] sm:$0xff] %v532
      %565 = vst [vmem:[#allocation9 + $0xd0] sm:$0xff] %v533
      %566 = vst [vmem:[#allocation9 + $0xd8] sm:$0xff] %v534
      %567 = vst [vmem:[#allocation9 + $0xe0] sm:$0xff] %v535
      %568 = vst [vmem:[#allocation9 + $0xe8] sm:$0xff] %v536
      %569 = vst [vmem:[#allocation9 + $0xf0] sm:$0xff] %v537
      %570 = vst [vmem:[#allocation9 + $0xf8] sm:$0xff] %v538
    $region33: #{model_forward.38} parent=1 // pred_fallthru
      _
    // Predicated region
    $region34: #{model_forward.38} parent=1 // pred_check
      _
    $region35: #{model_forward.38} parent=1 // pred_check_branch
      %572 = sbr.rel (0) target = $region37
    $region36: #{model_forward.38} parent=1 // pred_region
      %s574 = ssub.s32 4096, 4096
      %575 = vsyncadd [#allocation5], %s574
      %s576 = sshll.u32 [#allocation9], 4
      %s577 = int_to_ptr.vmem [resolvable:$true] %s576
      %582 = dma.vmem_to_hbm [thread:$0]  %s577, 4096, %s3, [#allocation5], 256, 256, 16
    $region37: #{model_forward.38} parent=1 // pred_fallthru
      _
    // Predicated region
    $region38: #{model_forward.38} parent=1 // pred_check
      _
    $region39: #{model_forward.38} parent=1 // pred_check_branch
      %584 = sbr.rel (0) target = $region41
    $region40: #{model_forward.38} parent=1 // pred_region
      %585 = dma.done [#allocation5], 4096
    $region41: #{model_forward.38} parent=1 // pred_fallthru
      _
    %586 = vsyncpa [#allocation4], 1
    %587 = vsyncpa [#allocation7], 1
    %588 = vsyncpa [#allocation5], 1

// kernel: model_forward.39
$region0: #{model_forward.39}
  #allocation0 [shape = 'u32[]', space=smem, size = 0x4, offset = 0x4, fixed_abs, tag = 'smem constant byte address 0x4 - core index']
  #allocation1 [shape = 'u32[144,128]{1,0:T(1,128)}', space=vmem, size = 0x12000, scoped, tag = 'internal scratch']
  #allocation2 [shape = 'f32[128,128]{1,0:T(8,128)}', space=vmem, size = 0x10000, scoped, tag = 'scratch operand']
  %s0 = inlined_call_operand.hbm [shape: bf16[128,128], index: 0, kind: input, shape index: {}]
  %s1 = inlined_call_operand.hbm [shape: bf16[128,128], index: 1, kind: input, shape index: {}]
  %s2 = inlined_call_operand.hbm [shape: f32[1,128], index: 2, kind: input, shape index: {}]
  %s3 = inlined_call_operand.hbm [shape: f32[128,128], index: 3, kind: output, shape index: {}]
  %s4 = sld [smem:[#allocation0]]
  $region42: #{model_forward.39} parent=0
    _
  %s6 = ssub.s32 1, %s4
  %s7 = scalar_select 0, %s6, %s4
  $region1: #{model_forward.39} parent=0
    #allocation3 [shape = 'u8[32768]{0}', space=vmem, size = 0x8000, scoped, tag = 'input window, operand 0, single buffered']
    #allocation4 [shape = 's32[1]{0}', space=sflag, size = 0x4, scoped, tag = 'scoped memory for model_forward.39']
    #allocation5 [shape = 's32[1]{0}', space=sflag, size = 0x4, scoped, tag = 'scoped memory for model_forward.39']
    #allocation6 [shape = 'u8[32768]{0}', space=vmem, size = 0x8000, scoped, tag = 'input window, operand 1, single buffered']
    #allocation7 [shape = 's32[1]{0}', space=sflag, size = 0x4, scoped, tag = 'scoped memory for model_forward.39']
    #allocation8 [shape = 'u8[512]{0}', space=vmem, size = 0x400, scoped, tag = 'input window, operand 2, single buffered']
    #allocation9 [shape = 'u8[65536]{0}', space=vmem, size = 0x10000, scoped, tag = 'output window, operand 0, single buffered']
    %8 = vsyncpa [#allocation4], 0
    %9 = vsyncpa [#allocation7], 0
    %10 = vsyncpa [#allocation5], 0
    // Predicated region
    $region2: #{model_forward.39} parent=1 // pred_check
      _
    $region3: #{model_forward.39} parent=1 // pred_check_branch
      %12 = sbr.rel (0) target = $region5
    $region4: #{model_forward.39} parent=1 // pred_region
      %s14 = ssub.s32 1024, 1024
      %15 = vsyncadd [#allocation4], %s14
      %s16 = sshll.u32 [#allocation3], 4
      %s17 = int_to_ptr.vmem [resolvable:$true] %s16
      %22 = dma.hbm_to_vmem [thread:$0]  %s0, 1024, %s17, [#allocation4], 64, 64, 4
    $region5: #{model_forward.39} parent=1 // pred_fallthru
      _
    // Predicated region
    $region6: #{model_forward.39} parent=1 // pred_check
      _
    $region7: #{model_forward.39} parent=1 // pred_check_branch
      %24 = sbr.rel (0) target = $region9
    $region8: #{model_forward.39} parent=1 // pred_region
      %s26 = ssub.s32 1024, 1024
      %27 = vsyncadd [#allocation7], %s26
      %s28 = sshll.u32 [#allocation6], 4
      %s29 = int_to_ptr.vmem [resolvable:$true] %s28
      %34 = dma.hbm_to_vmem [thread:$0]  %s1, 1024, %s29, [#allocation7], 64, 64, 4
    $region9: #{model_forward.39} parent=1 // pred_fallthru
      _
    // Predicated region
    $region10: #{model_forward.39} parent=1 // pred_check
      _
    $region11: #{model_forward.39} parent=1 // pred_check_branch
      %36 = sbr.rel (0) target = $region13
    $region12: #{model_forward.39} parent=1 // pred_region
      %s38 = ssub.s32 16, 16
      %39 = vsyncadd [#allocation7], %s38
      %s41 = sshll.u32 [#allocation8], 4
      %s42 = int_to_ptr.vmem [resolvable:$true] %s41
      %44 = dma.hbm_to_vmem [thread:$0]  %s2, 16, %s42, [#allocation7]
    $region13: #{model_forward.39} parent=1 // pred_fallthru
      _
    // Predicated region
    $region14: #{model_forward.39} parent=1 // pred_check
      _
    $region15: #{model_forward.39} parent=1 // pred_check_branch
      %46 = sbr.rel (0) target = $region17
    $region16: #{model_forward.39} parent=1 // pred_region
      %47 = dma.done [#allocation4], 1024
    $region17: #{model_forward.39} parent=1 // pred_fallthru
      _
    // Predicated region
    $region18: #{model_forward.39} parent=1 // pred_check
      _
    $region19: #{model_forward.39} parent=1 // pred_check_branch
      %49 = sbr.rel (0) target = $region21
    $region20: #{model_forward.39} parent=1 // pred_region
      %50 = dma.done [#allocation7], 1024
    $region21: #{model_forward.39} parent=1 // pred_fallthru
      _
    // Predicated region
    $region22: #{model_forward.39} parent=1 // pred_check
      _
    $region23: #{model_forward.39} parent=1 // pred_check_branch
      %52 = sbr.rel (0) target = $region25
    $region24: #{model_forward.39} parent=1 // pred_region
      %53 = dma.done [#allocation7], 16
    $region25: #{model_forward.39} parent=1 // pred_fallthru
      _
    %p55 = scmp.eq.s32.totalorder 0, 0
    // Predicated region
    $region26: #{model_forward.39} parent=1 // pred_check
      %p56 = pneg %p55
    $region27: #{model_forward.39} parent=1 // pred_check_branch
      %58 = sbr.rel (%p56) target = $region29
    $region28: #{model_forward.39} parent=1 // pred_region
      %59 = vst [vmem:[#allocation2] sm:$0xff] 0.0
      %60 = vst [vmem:[#allocation2 + $0x8] sm:$0xff] 0.0
      %61 = vst [vmem:[#allocation2 + $0x10] sm:$0xff] 0.0
      %62 = vst [vmem:[#allocation2 + $0x18] sm:$0xff] 0.0
      %63 = vst [vmem:[#allocation2 + $0x20] sm:$0xff] 0.0
      %64 = vst [vmem:[#allocation2 + $0x28] sm:$0xff] 0.0
      %65 = vst [vmem:[#allocation2 + $0x30] sm:$0xff] 0.0
      %66 = vst [vmem:[#allocation2 + $0x38] sm:$0xff] 0.0
      %67 = vst [vmem:[#allocation2 + $0x40] sm:$0xff] 0.0
      %68 = vst [vmem:[#allocation2 + $0x48] sm:$0xff] 0.0
      %69 = vst [vmem:[#allocation2 + $0x50] sm:$0xff] 0.0
      %70 = vst [vmem:[#allocation2 + $0x58] sm:$0xff] 0.0
      %71 = vst [vmem:[#allocation2 + $0x60] sm:$0xff] 0.0
      %72 = vst [vmem:[#allocation2 + $0x68] sm:$0xff] 0.0
      %73 = vst [vmem:[#allocation2 + $0x70] sm:$0xff] 0.0
      %74 = vst [vmem:[#allocation2 + $0x78] sm:$0xff] 0.0
    $region29: #{model_forward.39} parent=1 // pred_fallthru
      _
    %v75 = vld [vmem:[#allocation2] sm:$0xff]
    %v76 = vld [vmem:[#allocation2 + $0x8] sm:$0xff]
    %v77 = vld [vmem:[#allocation2 + $0x10] sm:$0xff]
    %v78 = vld [vmem:[#allocation2 + $0x18] sm:$0xff]
    %v79 = vld [vmem:[#allocation2 + $0x20] sm:$0xff]
    %v80 = vld [vmem:[#allocation2 + $0x28] sm:$0xff]
    %v81 = vld [vmem:[#allocation2 + $0x30] sm:$0xff]
    %v82 = vld [vmem:[#allocation2 + $0x38] sm:$0xff]
    %v83 = vld [vmem:[#allocation2 + $0x40] sm:$0xff]
    %v84 = vld [vmem:[#allocation2 + $0x48] sm:$0xff]
    %v85 = vld [vmem:[#allocation2 + $0x50] sm:$0xff]
    %v86 = vld [vmem:[#allocation2 + $0x58] sm:$0xff]
    %v87 = vld [vmem:[#allocation2 + $0x60] sm:$0xff]
    %v88 = vld [vmem:[#allocation2 + $0x68] sm:$0xff]
    %v89 = vld [vmem:[#allocation2 + $0x70] sm:$0xff]
    %v90 = vld [vmem:[#allocation2 + $0x78] sm:$0xff]
    %v91 = vld [vmem:[#allocation3] sm:$0xf]
    %v92 = vld [vmem:[#allocation3 + $0x4] sm:$0xf]
    %v93 = vld [vmem:[#allocation3 + $0x8] sm:$0xf]
    %v94 = vld [vmem:[#allocation3 + $0xc] sm:$0xf]
    %v95 = vld [vmem:[#allocation3 + $0x10] sm:$0xf]
    %v96 = vld [vmem:[#allocation3 + $0x14] sm:$0xf]
    %v97 = vld [vmem:[#allocation3 + $0x18] sm:$0xf]
    %v98 = vld [vmem:[#allocation3 + $0x1c] sm:$0xf]
    %v99 = vld [vmem:[#allocation3 + $0x20] sm:$0xf]
    %v100 = vld [vmem:[#allocation3 + $0x24] sm:$0xf]
    %v101 = vld [vmem:[#allocation3 + $0x28] sm:$0xf]
    %v102 = vld [vmem:[#allocation3 + $0x2c] sm:$0xf]
    %v103 = vld [vmem:[#allocation3 + $0x30] sm:$0xf]
    %v104 = vld [vmem:[#allocation3 + $0x34] sm:$0xf]
    %v105 = vld [vmem:[#allocation3 + $0x38] sm:$0xf]
    %v106 = vld [vmem:[#allocation3 + $0x3c] sm:$0xf]
    %v107 = vld [vmem:[#allocation6] sm:$0xf]
    %v108 = vld [vmem:[#allocation6 + $0x4] sm:$0xf]
    %v109 = vld [vmem:[#allocation6 + $0x8] sm:$0xf]
    %v110 = vld [vmem:[#allocation6 + $0xc] sm:$0xf]
    %v111 = vld [vmem:[#allocation6 + $0x10] sm:$0xf]
    %v112 = vld [vmem:[#allocation6 + $0x14] sm:$0xf]
    %v113 = vld [vmem:[#allocation6 + $0x18] sm:$0xf]
    %v114 = vld [vmem:[#allocation6 + $0x1c] sm:$0xf]
    %v115 = vld [vmem:[#allocation6 + $0x20] sm:$0xf]
    %v116 = vld [vmem:[#allocation6 + $0x24] sm:$0xf]
    %v117 = vld [vmem:[#allocation6 + $0x28] sm:$0xf]
    %v118 = vld [vmem:[#allocation6 + $0x2c] sm:$0xf]
    %v119 = vld [vmem:[#allocation6 + $0x30] sm:$0xf]
    %v120 = vld [vmem:[#allocation6 + $0x34] sm:$0xf]
    %v121 = vld [vmem:[#allocation6 + $0x38] sm:$0xf]
    %v122 = vld [vmem:[#allocation6 + $0x3c] sm:$0xf]
    %v139 = vunpack.c.l.b16 %v91
    %v140 = vunpack.c.l.b16 %v92
    %v141 = vunpack.c.l.b16 %v93
    %v142 = vunpack.c.l.b16 %v94
    %v143 = vunpack.c.l.b16 %v95
    %v144 = vunpack.c.l.b16 %v96
    %v145 = vunpack.c.l.b16 %v97
    %v146 = vunpack.c.l.b16 %v98
    %v147 = vunpack.c.l.b16 %v99
    %v148 = vunpack.c.l.b16 %v100
    %v149 = vunpack.c.l.b16 %v101
    %v150 = vunpack.c.l.b16 %v102
    %v151 = vunpack.c.l.b16 %v103
    %v152 = vunpack.c.l.b16 %v104
    %v153 = vunpack.c.l.b16 %v105
    %v154 = vunpack.c.l.b16 %v106
    %v155 = vpack.c.b16 %v140, %v139
    %v156 = vpack.c.b16 %v142, %v141
    %v157 = vpack.c.b16 %v144, %v143
    %v158 = vpack.c.b16 %v146, %v145
    %v159 = vpack.c.b16 %v148, %v147
    %v160 = vpack.c.b16 %v150, %v149
    %v161 = vpack.c.b16 %v152, %v151
    %v162 = vpack.c.b16 %v154, %v153
    %v187 = vunpack.c.l.b16 %v107
    %v188 = vunpack.c.l.b16 %v108
    %v189 = vunpack.c.l.b16 %v109
    %v190 = vunpack.c.l.b16 %v110
    %v191 = vunpack.c.l.b16 %v111
    %v192 = vunpack.c.l.b16 %v112
    %v193 = vunpack.c.l.b16 %v113
    %v194 = vunpack.c.l.b16 %v114
    %v195 = vunpack.c.l.b16 %v115
    %v196 = vunpack.c.l.b16 %v116
    %v197 = vunpack.c.l.b16 %v117
    %v198 = vunpack.c.l.b16 %v118
    %v199 = vunpack.c.l.b16 %v119
    %v200 = vunpack.c.l.b16 %v120
    %v201 = vunpack.c.l.b16 %v121
    %v202 = vunpack.c.l.b16 %v122
    %v203 = vpack.c.b16 %v188, %v187
    %v204 = vpack.c.b16 %v190, %v189
    %v205 = vpack.c.b16 %v192, %v191
    %v206 = vpack.c.b16 %v194, %v193
    %v207 = vpack.c.b16 %v196, %v195
    %v208 = vpack.c.b16 %v198, %v197
    %v209 = vpack.c.b16 %v200, %v199
    %v210 = vpack.c.b16 %v202, %v201
    %219 = vmatprep.subr.bf16.mxu0 0
    %220 = vmatpush1.bf16.msra.mxu0 %v203
    %221 = vmatprep.subr.bf16.mxu0 0
    %222 = vmatpush1.bf16.msra.mxu0 %v204
    %223 = vmatprep.subr.bf16.mxu0 0
    %224 = vmatpush1.bf16.msra.mxu0 %v205
    %225 = vmatprep.subr.bf16.mxu0 0
    %226 = vmatpush1.bf16.msra.mxu0 %v206
    %227 = vmatprep.subr.bf16.mxu0 0
    %228 = vmatpush1.bf16.msra.mxu0 %v207
    %229 = vmatprep.subr.bf16.mxu0 0
    %230 = vmatpush1.bf16.msra.mxu0 %v208
    %231 = vmatprep.subr.bf16.mxu0 0
    %232 = vmatpush1.bf16.msra.mxu0 %v209
    %233 = vmatprep.subr.bf16.mxu0 0
    %234 = vmatpush1.bf16.msra.mxu0 %v210
    %235 = vmatprep.subr.bf16.mxu0 0
    %236 = vmatpush1.bf16.msra.mxu0 0
    %237 = vmatprep.subr.bf16.mxu0 0
    %238 = vmatpush1.bf16.msra.mxu0 0
    %239 = vmatprep.subr.bf16.mxu0 0
    %240 = vmatpush1.bf16.msra.mxu0 0
    %241 = vmatprep.subr.bf16.mxu0 0
    %242 = vmatpush1.bf16.msra.mxu0 0
    %243 = vmatprep.subr.bf16.mxu0 0
    %244 = vmatpush1.bf16.msra.mxu0 0
    %245 = vmatprep.subr.bf16.mxu0 0
    %246 = vmatpush1.bf16.msra.mxu0 0
    %247 = vmatprep.subr.bf16.mxu0 0
    %248 = vmatpush1.bf16.msra.mxu0 0
    %249 = vmatprep.subr.bf16.mxu0 0
    %250 = vmatpush1.bf16.msra.mxu0 0
    %251 = vmatprep.mubr.bf16.mxu0 0
    %252 = vmatmul.mubr.bf16.gmra.mrb[0].mxu0 %v155
    %v253 = vpop.f32.mrb[0].mxu0
    %v254 = vadd.f32 0.0, %v253
    %v255 = vpop.f32.mrb[0].mxu0
    %v256 = vpop.f32.mrb[0].mxu0
    %v257 = vadd.f32 0.0, %v256
    %v258 = vpop.f32.mrb[0].mxu0
    %259 = vmatprep.mubr.bf16.mxu0 0
    %260 = vmatmul.mubr.bf16.gmra.mrb[0].mxu0 %v156
    %v261 = vpop.f32.mrb[0].mxu0
    %v262 = vadd.f32 0.0, %v261
    %v263 = vpop.f32.mrb[0].mxu0
    %v264 = vpop.f32.mrb[0].mxu0
    %v265 = vadd.f32 0.0, %v264
    %v266 = vpop.f32.mrb[0].mxu0
    %267 = vmatprep.mubr.bf16.mxu0 0
    %268 = vmatmul.mubr.bf16.gmra.mrb[0].mxu0 %v157
    %v269 = vpop.f32.mrb[0].mxu0
    %v270 = vadd.f32 0.0, %v269
    %v271 = vpop.f32.mrb[0].mxu0
    %v272 = vpop.f32.mrb[0].mxu0
    %v273 = vadd.f32 0.0, %v272
    %v274 = vpop.f32.mrb[0].mxu0
    %275 = vmatprep.mubr.bf16.mxu0 0
    %276 = vmatmul.mubr.bf16.gmra.mrb[0].mxu0 %v158
    %v277 = vpop.f32.mrb[0].mxu0
    %v278 = vadd.f32 0.0, %v277
    %v279 = vpop.f32.mrb[0].mxu0
    %v280 = vpop.f32.mrb[0].mxu0
    %v281 = vadd.f32 0.0, %v280
    %v282 = vpop.f32.mrb[0].mxu0
    %283 = vmatprep.mubr.bf16.mxu0 0
    %284 = vmatmul.mubr.bf16.gmra.mrb[0].mxu0 %v159
    %v285 = vpop.f32.mrb[0].mxu0
    %v286 = vadd.f32 0.0, %v285
    %v287 = vpop.f32.mrb[0].mxu0
    %v288 = vpop.f32.mrb[0].mxu0
    %v289 = vadd.f32 0.0, %v288
    %v290 = vpop.f32.mrb[0].mxu0
    %291 = vmatprep.mubr.bf16.mxu0 0
    %292 = vmatmul.mubr.bf16.gmra.mrb[0].mxu0 %v160
    %v293 = vpop.f32.mrb[0].mxu0
    %v294 = vadd.f32 0.0, %v293
    %v295 = vpop.f32.mrb[0].mxu0
    %v296 = vpop.f32.mrb[0].mxu0
    %v297 = vadd.f32 0.0, %v296
    %v298 = vpop.f32.mrb[0].mxu0
    %299 = vmatprep.mubr.bf16.mxu0 0
    %300 = vmatmul.mubr.bf16.gmra.mrb[0].mxu0 %v161
    %v301 = vpop.f32.mrb[0].mxu0
    %v302 = vadd.f32 0.0, %v301
    %v303 = vpop.f32.mrb[0].mxu0
    %v304 = vpop.f32.mrb[0].mxu0
    %v305 = vadd.f32 0.0, %v304
    %v306 = vpop.f32.mrb[0].mxu0
    %307 = vmatprep.mubr.bf16.mxu0 0
    %308 = vmatmul.mubr.bf16.gmra.mrb[0].mxu0 %v162
    %v309 = vpop.f32.mrb[0].mxu0
    %v310 = vadd.f32 0.0, %v309
    %v311 = vpop.f32.mrb[0].mxu0
    %v312 = vpop.f32.mrb[0].mxu0
    %v313 = vadd.f32 0.0, %v312
    %v314 = vpop.f32.mrb[0].mxu0
    %315 = vdwg.mxu0
    %v316 = vadd.f32 %v75, %v254
    %v317 = vadd.f32 %v76, %v257
    %v318 = vadd.f32 %v77, %v262
    %v319 = vadd.f32 %v78, %v265
    %v320 = vadd.f32 %v79, %v270
    %v321 = vadd.f32 %v80, %v273
    %v322 = vadd.f32 %v81, %v278
    %v323 = vadd.f32 %v82, %v281
    %v324 = vadd.f32 %v83, %v286
    %v325 = vadd.f32 %v84, %v289
    %v326 = vadd.f32 %v85, %v294
    %v327 = vadd.f32 %v86, %v297
    %v328 = vadd.f32 %v87, %v302
    %v329 = vadd.f32 %v88, %v305
    %v330 = vadd.f32 %v89, %v310
    %v331 = vadd.f32 %v90, %v313
    %332 = vst [vmem:[#allocation2] sm:$0xff] %v316
    %333 = vst [vmem:[#allocation2 + $0x8] sm:$0xff] %v317
    %334 = vst [vmem:[#allocation2 + $0x10] sm:$0xff] %v318
    %335 = vst [vmem:[#allocation2 + $0x18] sm:$0xff] %v319
    %336 = vst [vmem:[#allocation2 + $0x20] sm:$0xff] %v320
    %337 = vst [vmem:[#allocation2 + $0x28] sm:$0xff] %v321
    %338 = vst [vmem:[#allocation2 + $0x30] sm:$0xff] %v322
    %339 = vst [vmem:[#allocation2 + $0x38] sm:$0xff] %v323
    %340 = vst [vmem:[#allocation2 + $0x40] sm:$0xff] %v324
    %341 = vst [vmem:[#allocation2 + $0x48] sm:$0xff] %v325
    %342 = vst [vmem:[#allocation2 + $0x50] sm:$0xff] %v326
    %343 = vst [vmem:[#allocation2 + $0x58] sm:$0xff] %v327
    %344 = vst [vmem:[#allocation2 + $0x60] sm:$0xff] %v328
    %345 = vst [vmem:[#allocation2 + $0x68] sm:$0xff] %v329
    %346 = vst [vmem:[#allocation2 + $0x70] sm:$0xff] %v330
    %347 = vst [vmem:[#allocation2 + $0x78] sm:$0xff] %v331
    // Predicated region
    $region30: #{model_forward.39} parent=1 // pred_check
      %p348 = pneg %p55
    $region31: #{model_forward.39} parent=1 // pred_check_branch
      %350 = sbr.rel (%p348) target = $region33
    $region32: #{model_forward.39} parent=1 // pred_region
      %v351 = vld [vmem:[#allocation2] sm:$0xff]
      %v352 = vld [vmem:[#allocation2 + $0x8] sm:$0xff]
      %v353 = vld [vmem:[#allocation2 + $0x10] sm:$0xff]
      %v354 = vld [vmem:[#allocation2 + $0x18] sm:$0xff]
      %v355 = vld [vmem:[#allocation2 + $0x20] sm:$0xff]
      %v356 = vld [vmem:[#allocation2 + $0x28] sm:$0xff]
      %v357 = vld [vmem:[#allocation2 + $0x30] sm:$0xff]
      %v358 = vld [vmem:[#allocation2 + $0x38] sm:$0xff]
      %v359 = vld [vmem:[#allocation2 + $0x40] sm:$0xff]
      %v360 = vld [vmem:[#allocation2 + $0x48] sm:$0xff]
      %v361 = vld [vmem:[#allocation2 + $0x50] sm:$0xff]
      %v362 = vld [vmem:[#allocation2 + $0x58] sm:$0xff]
      %v363 = vld [vmem:[#allocation2 + $0x60] sm:$0xff]
      %v364 = vld [vmem:[#allocation2 + $0x68] sm:$0xff]
      %v365 = vld [vmem:[#allocation2 + $0x70] sm:$0xff]
      %v366 = vld [vmem:[#allocation2 + $0x78] sm:$0xff]
      %v367 = vld [vmem:[#allocation8] sm:$0x1]
      %v369 = vlaneseq
      %v370 = vshrl.u32 %v369, 7
      %v371 = vsub.s32 0, %v370
      %v372 = vrot.slane %v367, %v371
      %v374 = vadd.f32 %v351, %v372
      %v375 = vadd.f32 %v352, %v372
      %v376 = vadd.f32 %v353, %v372
      %v377 = vadd.f32 %v354, %v372
      %v378 = vadd.f32 %v355, %v372
      %v379 = vadd.f32 %v356, %v372
      %v380 = vadd.f32 %v357, %v372
      %v381 = vadd.f32 %v358, %v372
      %v382 = vadd.f32 %v359, %v372
      %v383 = vadd.f32 %v360, %v372
      %v384 = vadd.f32 %v361, %v372
      %v385 = vadd.f32 %v362, %v372
      %v386 = vadd.f32 %v363, %v372
      %v387 = vadd.f32 %v364, %v372
      %v388 = vadd.f32 %v365, %v372
      %v389 = vadd.f32 %v366, %v372
      %v390 = vmax.f32 %v374, 0.0
      %v391 = vmax.f32 %v375, 0.0
      %v392 = vmax.f32 %v376, 0.0
      %v393 = vmax.f32 %v377, 0.0
      %v394 = vmax.f32 %v378, 0.0
      %v395 = vmax.f32 %v379, 0.0
      %v396 = vmax.f32 %v380, 0.0
      %v397 = vmax.f32 %v381, 0.0
      %v398 = vmax.f32 %v382, 0.0
      %v399 = vmax.f32 %v383, 0.0
      %v400 = vmax.f32 %v384, 0.0
      %v401 = vmax.f32 %v385, 0.0
      %v402 = vmax.f32 %v386, 0.0
      %v403 = vmax.f32 %v387, 0.0
      %v404 = vmax.f32 %v388, 0.0
      %v405 = vmax.f32 %v389, 0.0
      %406 = vst [vmem:[#allocation9] sm:$0xff] %v390
      %407 = vst [vmem:[#allocation9 + $0x8] sm:$0xff] %v391
      %408 = vst [vmem:[#allocation9 + $0x10] sm:$0xff] %v392
      %409 = vst [vmem:[#allocation9 + $0x18] sm:$0xff] %v393
      %410 = vst [vmem:[#allocation9 + $0x20] sm:$0xff] %v394
      %411 = vst [vmem:[#allocation9 + $0x28] sm:$0xff] %v395
      %412 = vst [vmem:[#allocation9 + $0x30] sm:$0xff] %v396
      %413 = vst [vmem:[#allocation9 + $0x38] sm:$0xff] %v397
      %414 = vst [vmem:[#allocation9 + $0x40] sm:$0xff] %v398
      %415 = vst [vmem:[#allocation9 + $0x48] sm:$0xff] %v399
      %416 = vst [vmem:[#allocation9 + $0x50] sm:$0xff] %v400
      %417 = vst [vmem:[#allocation9 + $0x58] sm:$0xff] %v401
      %418 = vst [vmem:[#allocation9 + $0x60] sm:$0xff] %v402
      %419 = vst [vmem:[#allocation9 + $0x68] sm:$0xff] %v403
      %420 = vst [vmem:[#allocation9 + $0x70] sm:$0xff] %v404
      %421 = vst [vmem:[#allocation9 + $0x78] sm:$0xff] %v405
    $region33: #{model_forward.39} parent=1 // pred_fallthru
      _
    // Predicated region
    $region34: #{model_forward.39} parent=1 // pred_check
      _
    $region35: #{model_forward.39} parent=1 // pred_check_branch
      %423 = sbr.rel (0) target = $region37
    $region36: #{model_forward.39} parent=1 // pred_region
      %s425 = ssub.s32 2048, 2048
      %426 = vsyncadd [#allocation5], %s425
      %s427 = sshll.u32 [#allocation9], 4
      %s428 = int_to_ptr.vmem [resolvable:$true] %s427
      %433 = dma.vmem_to_hbm [thread:$0]  %s428, 2048, %s3, [#allocation5], 128, 128, 8
    $region37: #{model_forward.39} parent=1 // pred_fallthru
      _
    // Predicated region
    $region38: #{model_forward.39} parent=1 // pred_check
      _
    $region39: #{model_forward.39} parent=1 // pred_check_branch
      %435 = sbr.rel (0) target = $region41
    $region40: #{model_forward.39} parent=1 // pred_region
      %436 = dma.done [#allocation5], 2048
    $region41: #{model_forward.39} parent=1 // pred_fallthru
      _
    %437 = vsyncpa [#allocation4], 1
    %438 = vsyncpa [#allocation7], 1
    %439 = vsyncpa [#allocation5], 1

// kernel: model_forward.40
$region0: #{model_forward.40}
  #allocation0 [shape = 'u32[]', space=smem, size = 0x4, offset = 0x4, fixed_abs, tag = 'smem constant byte address 0x4 - core index']
  #allocation1 [shape = 'u32[144,128]{1,0:T(1,128)}', space=vmem, size = 0x12000, scoped, tag = 'internal scratch']
  %s0 = inlined_call_operand.vmem [shape: f32[128,16], index: 0, kind: input, shape index: {}]
  %s1 = inlined_call_operand.vmem [shape: f32[128,1], index: 1, kind: input, shape index: {}]
  %s2 = inlined_call_operand.vmem [shape: f32[128,16], index: 2, kind: output, shape index: {}]
  %s3 = sld [smem:[#allocation0]]
  $region18: #{model_forward.40} parent=0
    _
  %s5 = ssub.s32 1, %s3
  %s6 = scalar_select 0, %s5, %s3
  // Predicated region
  $region2: #{model_forward.40} parent=0 // pred_check
    _
  $region3: #{model_forward.40} parent=0 // pred_check_branch
    %8 = sbr.rel (0) target = $region5
  $region4: #{model_forward.40} parent=0 // pred_region
    _
  $region5: #{model_forward.40} parent=0 // pred_fallthru
    _
  // Predicated region
  $region6: #{model_forward.40} parent=0 // pred_check
    _
  $region7: #{model_forward.40} parent=0 // pred_check_branch
    %10 = sbr.rel (0) target = $region9
  $region8: #{model_forward.40} parent=0 // pred_region
    _
  $region9: #{model_forward.40} parent=0 // pred_fallthru
    _
  %v11 = vld [vmem:[%s0] sm:$0xff]
  %v12 = vld [vmem:[%s0 + $0x8] sm:$0xff]
  %v13 = vld [vmem:[%s0 + $0x10] sm:$0xff]
  %v14 = vld [vmem:[%s0 + $0x18] sm:$0xff]
  %v15 = vld [vmem:[%s0 + $0x20] sm:$0xff]
  %v16 = vld [vmem:[%s0 + $0x28] sm:$0xff]
  %v17 = vld [vmem:[%s0 + $0x30] sm:$0xff]
  %v18 = vld [vmem:[%s0 + $0x38] sm:$0xff]
  %v19 = vld [vmem:[%s0 + $0x40] sm:$0xff]
  %v20 = vld [vmem:[%s0 + $0x48] sm:$0xff]
  %v21 = vld [vmem:[%s0 + $0x50] sm:$0xff]
  %v22 = vld [vmem:[%s0 + $0x58] sm:$0xff]
  %v23 = vld [vmem:[%s0 + $0x60] sm:$0xff]
  %v24 = vld [vmem:[%s0 + $0x68] sm:$0xff]
  %v25 = vld [vmem:[%s0 + $0x70] sm:$0xff]
  %v26 = vld [vmem:[%s0 + $0x78] sm:$0xff]
  %v27 = vld [vmem:[%s1] sm:$0xff]
  %v28 = vld [vmem:[%s1 + $0x8] sm:$0xff]
  %v29 = vld [vmem:[%s1 + $0x10] sm:$0xff]
  %v30 = vld [vmem:[%s1 + $0x18] sm:$0xff]
  %v31 = vld [vmem:[%s1 + $0x20] sm:$0xff]
  %v32 = vld [vmem:[%s1 + $0x28] sm:$0xff]
  %v33 = vld [vmem:[%s1 + $0x30] sm:$0xff]
  %v34 = vld [vmem:[%s1 + $0x38] sm:$0xff]
  %v35 = vld [vmem:[%s1 + $0x40] sm:$0xff]
  %v36 = vld [vmem:[%s1 + $0x48] sm:$0xff]
  %v37 = vld [vmem:[%s1 + $0x50] sm:$0xff]
  %v38 = vld [vmem:[%s1 + $0x58] sm:$0xff]
  %v39 = vld [vmem:[%s1 + $0x60] sm:$0xff]
  %v40 = vld [vmem:[%s1 + $0x68] sm:$0xff]
  %v41 = vld [vmem:[%s1 + $0x70] sm:$0xff]
  %v42 = vld [vmem:[%s1 + $0x78] sm:$0xff]
  %44 = vset.pattern.permute.xlu0 0
  %45 = vperm.xlu0 %44, %v27
  %v46 = vpop.permute.xlu0 %45
  %49 = vset.pattern.permute.xlu0 0
  %50 = vperm.xlu0 %49, %v28
  %v51 = vpop.permute.xlu0 %50
  %54 = vset.pattern.permute.xlu0 0
  %55 = vperm.xlu0 %54, %v29
  %v56 = vpop.permute.xlu0 %55
  %59 = vset.pattern.permute.xlu0 0
  %60 = vperm.xlu0 %59, %v30
  %v61 = vpop.permute.xlu0 %60
  %64 = vset.pattern.permute.xlu0 0
  %65 = vperm.xlu0 %64, %v31
  %v66 = vpop.permute.xlu0 %65
  %69 = vset.pattern.permute.xlu0 0
  %70 = vperm.xlu0 %69, %v32
  %v71 = vpop.permute.xlu0 %70
  %74 = vset.pattern.permute.xlu0 0
  %75 = vperm.xlu0 %74, %v33
  %v76 = vpop.permute.xlu0 %75
  %79 = vset.pattern.permute.xlu0 0
  %80 = vperm.xlu0 %79, %v34
  %v81 = vpop.permute.xlu0 %80
  %84 = vset.pattern.permute.xlu0 0
  %85 = vperm.xlu0 %84, %v35
  %v86 = vpop.permute.xlu0 %85
  %89 = vset.pattern.permute.xlu0 0
  %90 = vperm.xlu0 %89, %v36
  %v91 = vpop.permute.xlu0 %90
  %94 = vset.pattern.permute.xlu0 0
  %95 = vperm.xlu0 %94, %v37
  %v96 = vpop.permute.xlu0 %95
  %99 = vset.pattern.permute.xlu0 0
  %100 = vperm.xlu0 %99, %v38
  %v101 = vpop.permute.xlu0 %100
  %104 = vset.pattern.permute.xlu0 0
  %105 = vperm.xlu0 %104, %v39
  %v106 = vpop.permute.xlu0 %105
  %109 = vset.pattern.permute.xlu0 0
  %110 = vperm.xlu0 %109, %v40
  %v111 = vpop.permute.xlu0 %110
  %114 = vset.pattern.permute.xlu0 0
  %115 = vperm.xlu0 %114, %v41
  %v116 = vpop.permute.xlu0 %115
  %119 = vset.pattern.permute.xlu0 0
  %120 = vperm.xlu0 %119, %v42
  %v121 = vpop.permute.xlu0 %120
  %v123 = vmul.f32 %v11, %v46
  %v124 = vmul.f32 %v12, %v51
  %v125 = vmul.f32 %v13, %v56
  %v126 = vmul.f32 %v14, %v61
  %v127 = vmul.f32 %v15, %v66
  %v128 = vmul.f32 %v16, %v71
  %v129 = vmul.f32 %v17, %v76
  %v130 = vmul.f32 %v18, %v81
  %v131 = vmul.f32 %v19, %v86
  %v132 = vmul.f32 %v20, %v91
  %v133 = vmul.f32 %v21, %v96
  %v134 = vmul.f32 %v22, %v101
  %v135 = vmul.f32 %v23, %v106
  %v136 = vmul.f32 %v24, %v111
  %v137 = vmul.f32 %v25, %v116
  %v138 = vmul.f32 %v26, %v121
  %vm139 = vcmask 130048
  %140 = vst.msk [vmem:[%s2] sm:$0xff] %vm139, %v123
  %141 = vst.msk [vmem:[%s2 + $0x8] sm:$0xff] %vm139, %v124
  %142 = vst.msk [vmem:[%s2 + $0x10] sm:$0xff] %vm139, %v125
  %143 = vst.msk [vmem:[%s2 + $0x18] sm:$0xff] %vm139, %v126
  %144 = vst.msk [vmem:[%s2 + $0x20] sm:$0xff] %vm139, %v127
  %145 = vst.msk [vmem:[%s2 + $0x28] sm:$0xff] %vm139, %v128
  %146 = vst.msk [vmem:[%s2 + $0x30] sm:$0xff] %vm139, %v129
  %147 = vst.msk [vmem:[%s2 + $0x38] sm:$0xff] %vm139, %v130
  %148 = vst.msk [vmem:[%s2 + $0x40] sm:$0xff] %vm139, %v131
  %149 = vst.msk [vmem:[%s2 + $0x48] sm:$0xff] %vm139, %v132
  %150 = vst.msk [vmem:[%s2 + $0x50] sm:$0xff] %vm139, %v133
  %151 = vst.msk [vmem:[%s2 + $0x58] sm:$0xff] %vm139, %v134
  %152 = vst.msk [vmem:[%s2 + $0x60] sm:$0xff] %vm139, %v135
  %153 = vst.msk [vmem:[%s2 + $0x68] sm:$0xff] %vm139, %v136
  %154 = vst.msk [vmem:[%s2 + $0x70] sm:$0xff] %vm139, %v137
  %155 = vst.msk [vmem:[%s2 + $0x78] sm:$0xff] %vm139, %v138
  // Predicated region
  $region10: #{model_forward.40} parent=0 // pred_check
    _
  $region11: #{model_forward.40} parent=0 // pred_check_branch
    %157 = sbr.rel (0) target = $region13
  $region12: #{model_forward.40} parent=0 // pred_region
    _
  $region13: #{model_forward.40} parent=0 // pred_fallthru
    _
  // Predicated region
  $region14: #{model_forward.40} parent=0 // pred_check
    _
  $region15: #{model_forward.40} parent=0 // pred_check_branch
    %159 = sbr.rel (0) target = $region17
  $region16: #{model_forward.40} parent=0 // pred_region
    _
  $region17: #{model_forward.40} parent=0 // pred_fallthru
    _

// kernel: model_forward.41
$region0: #{model_forward.41}
  #allocation0 [shape = 'u32[]', space=smem, size = 0x4, offset = 0x4, fixed_abs, tag = 'smem constant byte address 0x4 - core index']
  #allocation1 [shape = 'u32[144,128]{1,0:T(1,128)}', space=vmem, size = 0x12000, scoped, tag = 'internal scratch']
  #allocation2 [shape = 'f32[256,128]{1,0:T(8,128)}', space=vmem, size = 0x20000, scoped, tag = 'scratch operand']
  %s0 = inlined_call_operand.hbm [shape: bf16[512,128], index: 0, kind: input, shape index: {}]
  %s1 = inlined_call_operand.hbm [shape: bf16[128,128], index: 1, kind: input, shape index: {}]
  %s2 = inlined_call_operand.hbm [shape: f32[1,128], index: 2, kind: input, shape index: {}]
  %s3 = inlined_call_operand.hbm [shape: f32[512,128], index: 3, kind: output, shape index: {}]
  %s4 = sld [smem:[#allocation0]]
  $region65: #{model_forward.41} parent=0
    _
  %s6 = ssub.s32 1, %s4
  %s7 = scalar_select 0, %s6, %s4
  $region1: #{model_forward.41} parent=0
    #allocation3 [shape = 'u8[131072]{0}', space=vmem, size = 0x20000, scoped, tag = 'input window, operand 0']
    #allocation4 [shape = 's32[2]{0}', space=sflag, size = 0x8, scoped, tag = 'scoped memory for model_forward.41']
    #allocation5 [shape = 's32[2]{0}', space=sflag, size = 0x8, scoped, tag = 'scoped memory for model_forward.41']
    #allocation6 [shape = 'u8[32768]{0}', space=vmem, size = 0x8000, scoped, tag = 'input window, operand 1, single buffered']
    #allocation7 [shape = 's32[1]{0}', space=sflag, size = 0x4, scoped, tag = 'scoped memory for model_forward.41']
    #allocation8 [shape = 'u8[512]{0}', space=vmem, size = 0x400, scoped, tag = 'input window, operand 2, single buffered']
    #allocation9 [shape = 'u8[262144]{0}', space=vmem, size = 0x40000, scoped, tag = 'output window, operand 0']
    %8 = vsyncpa [#allocation4], 0
    %s9 = scalar_lea.sflag [#allocation4], 1
    %10 = vsyncpa %s9, 0
    %11 = vsyncpa [#allocation7], 0
    %12 = vsyncpa [#allocation5], 0
    %s13 = scalar_lea.sflag [#allocation5], 1
    %14 = vsyncpa %s13, 0
    loop: start=0, step=1, limit=4
    $region2: #{model_forward.41} parent=1 // loop_pre_header
      _
    $region3: #{model_forward.41} parent=1 // loop_header
      %s16 = sphi 0, %s20
      %p17 = scmp.ge.s32.totalorder %s16, 4
      %s23 = sphi 0, %s42
      %s24 = sphi 0, %s38
      %s25 = sphi 0, %s34
      %s26 = sphi 0, %s23
      %s27 = sphi 0, %s24
      %s28 = sphi 0, %s25
      %s29 = sphi 0, %s26
      %s30 = sphi 0, %s27
      %s31 = sphi 0, %s28
      %s47 = sphi 0, %s49
      %s50 = sphi 0, %s47
      %s51 = sphi 0, %s50
      %s67 = sphi 0, %s51
      %s75 = sphi 0, %s77
      %s78 = sphi 0, %s75
      %s79 = sphi 0, %s78
      %s95 = sphi 0, %s79
      %s101 = sphi 0, %s103
      %s104 = sphi 0, %s101
      %s105 = sphi 0, %s104
      %s121 = sphi 0, %s105
      %s129 = sphi 0, %s131
      %s132 = sphi 0, %s129
      %s133 = sphi 0, %s132
      %s149 = sphi 0, %s133
    $region4: #{model_forward.41} parent=1 // loop_header_branch
      %19 = sbr.rel (%p17) target = $region8
    $region5: #{model_forward.41} parent=1 // loop_body
      %s21 = ssub.s32 %s16, 1
      %s22 = ssub.s32 %s16, 2
      %s32 = sadd.s32 1, %s25
      %p33 = scmp.ge.s32.totalorder %s32, 1
      %s34 = scalar_select %p33, 0, %s32
      %s35 = sadd.s32 1, %s24
      %s36 = scalar_select %p33, %s35, %s24
      %p37 = scmp.ge.s32.totalorder %s36, 1
      %s38 = scalar_select %p37, 0, %s36
      %s39 = sadd.s32 1, %s23
      %s40 = scalar_select %p37, %s39, %s23
      %p41 = scmp.ge.s32.totalorder %s40, 2
      %s42 = scalar_select %p41, 0, %s40
      %s43 = ssub.s32 %s23, %s42
      %s44 = ssub.s32 %s25, %s34
      %s45 = sor.u32 %s43, %s44
      %p46 = scmp.eq.s32.totalorder %s45, 0
      %s48 = sadd.s32 %s47, 1
      %s49 = scalar_select %p46, %s47, %s48
      %p52 = pneg %p46
      %p53 = scmp.eq.s32.totalorder %s16, 1
      %p54 = por %p52, %p53
      %p55 = scmp.ne.s32.totalorder %s47, %s50
      %p56 = scmp.eq.s32.totalorder %s16, 0
      %p57 = por %p55, %p56
      %p58 = scmp.ne.s32.totalorder %s47, %s50
      %p59 = scmp.eq.s32.totalorder %s21, 1
      %p60 = por %p58, %p59
      %p61 = scmp.ne.s32.totalorder %s50, %s51
      %p62 = scmp.eq.s32.totalorder %s21, 0
      %p63 = por %p61, %p62
      %p64 = scmp.ne.s32.totalorder %s50, %s51
      %p65 = scmp.eq.s32.totalorder %s22, 1
      %p66 = por %p64, %p65
      %p68 = scmp.ne.s32.totalorder %s51, %s67
      %p69 = scmp.eq.s32.totalorder %s22, 0
      %p70 = por %p68, %p69
      %s71 = ssub.s32 %s25, %s34
      %s72 = ssub.s32 %s24, %s38
      %s73 = sor.u32 %s71, %s72
      %p74 = scmp.eq.s32.totalorder %s73, 0
      %s76 = sadd.s32 %s75, 1
      %s77 = scalar_select %p74, %s75, %s76
      %p80 = pneg %p74
      %p81 = scmp.eq.s32.totalorder %s16, 1
      %p82 = por %p80, %p81
      %p83 = scmp.ne.s32.totalorder %s75, %s78
      %p84 = scmp.eq.s32.totalorder %s16, 0
      %p85 = por %p83, %p84
      %p86 = scmp.ne.s32.totalorder %s75, %s78
      %p87 = scmp.eq.s32.totalorder %s21, 1
      %p88 = por %p86, %p87
      %p89 = scmp.ne.s32.totalorder %s78, %s79
      %p90 = scmp.eq.s32.totalorder %s21, 0
      %p91 = por %p89, %p90
      %p92 = scmp.ne.s32.totalorder %s78, %s79
      %p93 = scmp.eq.s32.totalorder %s22, 1
      %p94 = por %p92, %p93
      %p96 = scmp.ne.s32.totalorder %s79, %s95
      %p97 = scmp.eq.s32.totalorder %s22, 0
      %p98 = por %p96, %p97
      %s99 = ssub.s32 %s24, %s38
      %p100 = scmp.eq.s32.totalorder %s99, 0
      %s102 = sadd.s32 %s101, 1
      %s103 = scalar_select %p100, %s101, %s102
      %p106 = pneg %p100
      %p107 = scmp.eq.s32.totalorder %s16, 1
      %p108 = por %p106, %p107
      %p109 = scmp.ne.s32.totalorder %s101, %s104
      %p110 = scmp.eq.s32.totalorder %s16, 0
      %p111 = por %p109, %p110
      %p112 = scmp.ne.s32.totalorder %s101, %s104
      %p113 = scmp.eq.s32.totalorder %s21, 1
      %p114 = por %p112, %p113
      %p115 = scmp.ne.s32.totalorder %s104, %s105
      %p116 = scmp.eq.s32.totalorder %s21, 0
      %p117 = por %p115, %p116
      %p118 = scmp.ne.s32.totalorder %s104, %s105
      %p119 = scmp.eq.s32.totalorder %s22, 1
      %p120 = por %p118, %p119
      %p122 = scmp.ne.s32.totalorder %s105, %s121
      %p123 = scmp.eq.s32.totalorder %s22, 0
      %p124 = por %p122, %p123
      %s125 = ssub.s32 %s23, %s42
      %s126 = ssub.s32 %s24, %s38
      %s127 = sor.u32 %s125, %s126
      %p128 = scmp.eq.s32.totalorder %s127, 0
      %s130 = sadd.s32 %s129, 1
      %s131 = scalar_select %p128, %s129, %s130
      %p134 = pneg %p128
      %p135 = scmp.eq.s32.totalorder %s16, 1
      %p136 = por %p134, %p135
      %p137 = scmp.ne.s32.totalorder %s129, %s132
      %p138 = scmp.eq.s32.totalorder %s16, 0
      %p139 = por %p137, %p138
      %p140 = scmp.ne.s32.totalorder %s129, %s132
      %p141 = scmp.eq.s32.totalorder %s21, 1
      %p142 = por %p140, %p141
      %p143 = scmp.ne.s32.totalorder %s132, %s133
      %p144 = scmp.eq.s32.totalorder %s21, 0
      %p145 = por %p143, %p144
      %p146 = scmp.ne.s32.totalorder %s132, %s133
      %p147 = scmp.eq.s32.totalorder %s22, 1
      %p148 = por %p146, %p147
      %p150 = scmp.ne.s32.totalorder %s133, %s149
      %p151 = scmp.eq.s32.totalorder %s22, 0
      %p152 = por %p150, %p151
      %p153 = scmp.le.s32.totalorder 1, %s16
      %p154 = scmp.lt.s32.totalorder %s16, 3
      %p155 = pnand %p153, %p154
      %p156 = pneg %p155
      // Predicated region
      $region9: #{model_forward.41} parent=5 // pred_check
        _
      $region10: #{model_forward.41} parent=5 // pred_check_branch
        %158 = sbr.rel (%p155) target = $region12
      $region11: #{model_forward.41} parent=5 // pred_region
        %s159 = ssub.s32 %s16, 1
        // Predicated region
        $region13: #{model_forward.41} parent=11 // pred_check
          %p160 = pneg %p91
        $region14: #{model_forward.41} parent=11 // pred_check_branch
          %162 = sbr.rel (%p160) target = $region16
        $region15: #{model_forward.41} parent=11 // pred_region
          %s163 = smul.u32 16, %s28
          %s165 = ssub.s32 1024, 1024
          %166 = vsyncadd [#allocation7], %s165
          %s167 = sadd.s32 %s27, %s163
          %s168 = smul.addr %s167, 64
          %s169 = scalar_lea.hbm %s1, %s168
          %s170 = sshll.u32 [#allocation6], 4
          %s171 = int_to_ptr.vmem [resolvable:$true] %s170
          %176 = dma.hbm_to_vmem [thread:$0]  %s169, 1024, %s171, [#allocation7], 64, 64, 4
        $region16: #{model_forward.41} parent=11 // pred_fallthru
          _
        // Predicated region
        $region17: #{model_forward.41} parent=11 // pred_check
          %p177 = pneg %p117
        $region18: #{model_forward.41} parent=11 // pred_check_branch
          %179 = sbr.rel (%p177) target = $region20
        $region19: #{model_forward.41} parent=11 // pred_region
          %s181 = ssub.s32 16, 16
          %182 = vsyncadd [#allocation7], %s181
          %s183 = smul.addr %s27, 16
          %s184 = scalar_lea.hbm %s2, %s183
          %s186 = sshll.u32 [#allocation8], 4
          %s187 = int_to_ptr.vmem [resolvable:$true] %s186
          %189 = dma.hbm_to_vmem [thread:$0]  %s184, 16, %s187, [#allocation7]
        $region20: #{model_forward.41} parent=11 // pred_fallthru
          _
      $region12: #{model_forward.41} parent=5 // pred_fallthru
        _
      %p190 = scmp.lt.s32.totalorder %s16, 2
      // Predicated region
      $region21: #{model_forward.41} parent=5 // pred_check
        %p191 = pneg %p190
      $region22: #{model_forward.41} parent=5 // pred_check_branch
        %193 = sbr.rel (%p191) target = $region24
      $region23: #{model_forward.41} parent=5 // pred_region
        // Predicated region
        $region25: #{model_forward.41} parent=23 // pred_check
          %p194 = pneg %p57
        $region26: #{model_forward.41} parent=23 // pred_check_branch
          %196 = sbr.rel (%p194) target = $region28
        $region27: #{model_forward.41} parent=23 // pred_region
          %s197 = sand.u32 %s47, 1
          %s198 = scalar_lea.sflag [#allocation4], %s197
          %s199 = sand.u32 %s47, 1
          %s200 = smul.addr %s199, 128
          %s201 = scalar_lea.vmem [#allocation3], %s200
          %s202 = smul.u32 32, %s23
          %s204 = ssub.s32 2048, 2048
          %205 = vsyncadd %s198, %s204
          %s206 = sadd.s32 %s25, %s202
          %s207 = smul.addr %s206, 64
          %s208 = scalar_lea.hbm %s0, %s207
          %s209 = sshll.u32 %s201, 4
          %s210 = int_to_ptr.vmem [resolvable:$true] %s209
          %215 = dma.hbm_to_vmem [thread:$0]  %s208, 2048, %s210, %s198, 64, 64, 4
        $region28: #{model_forward.41} parent=23 // pred_fallthru
          _
      $region24: #{model_forward.41} parent=5 // pred_fallthru
        _
      %p216 = scmp.le.s32.totalorder 1, %s16
      %p217 = scmp.lt.s32.totalorder %s16, 3
      %p218 = pnand %p216, %p217
      %p219 = pneg %p218
      // Predicated region
      $region29: #{model_forward.41} parent=5 // pred_check
        _
      $region30: #{model_forward.41} parent=5 // pred_check_branch
        %221 = sbr.rel (%p218) target = $region32
      $region31: #{model_forward.41} parent=5 // pred_region
        %s222 = ssub.s32 %s16, 1
        %s223 = sand.u32 %s50, 1
        %s224 = scalar_lea.sflag [#allocation4], %s223
        %s225 = sand.u32 %s50, 1
        %s226 = smul.addr %s225, 128
        %s227 = scalar_lea.vmem [#allocation3], %s226
        // Predicated region
        $region33: #{model_forward.41} parent=31 // pred_check
          %p228 = pneg %p63
        $region34: #{model_forward.41} parent=31 // pred_check_branch
          %230 = sbr.rel (%p228) target = $region36
        $region35: #{model_forward.41} parent=31 // pred_region
          %231 = dma.done %s224, 2048
        $region36: #{model_forward.41} parent=31 // pred_fallthru
          _
        // Predicated region
        $region37: #{model_forward.41} parent=31 // pred_check
          %p232 = pneg %p91
        $region38: #{model_forward.41} parent=31 // pred_check_branch
          %234 = sbr.rel (%p232) target = $region40
        $region39: #{model_forward.41} parent=31 // pred_region
          %235 = dma.done [#allocation7], 1024
        $region40: #{model_forward.41} parent=31 // pred_fallthru
          _
        // Predicated region
        $region41: #{model_forward.41} parent=31 // pred_check
          %p236 = pneg %p117
        $region42: #{model_forward.41} parent=31 // pred_check_branch
          %238 = sbr.rel (%p236) target = $region44
        $region43: #{model_forward.41} parent=31 // pred_region
          %239 = dma.done [#allocation7], 16
        $region44: #{model_forward.41} parent=31 // pred_fallthru
          _
        %s240 = sand.u32 %s50, 1
        %s241 = scalar_lea.sflag [#allocation4], %s240
        %s242 = sand.u32 %s50, 1
        %s243 = smul.addr %s242, 128
        %s244 = scalar_lea.vmem [#allocation3], %s243
        %p245 = pneg %p63
        %p246 = pneg %p60
        %p247 = pneg %p91
        %p248 = pneg %p88
        %p249 = pneg %p117
        %p250 = pneg %p114
        %p251 = pneg %p145
        %p252 = pneg %p142
        %s253 = sand.u32 %s132, 1
        %s254 = scalar_lea.sflag [#allocation5], %s253
        %s255 = sand.u32 %s132, 1
        %s256 = smul.addr %s255, 256
        %s257 = scalar_lea.vmem [#allocation9], %s256
        %s258 = smul.u32 32, %s26
        %s259 = smul.u32 16, %s28
        %s260 = smul.u32 32, %s26
        %p262 = scmp.eq.s32.totalorder %s28, 0
        // Predicated region
        $region45: #{model_forward.41} parent=31 // pred_check
          %p263 = pneg %p262
        $region46: #{model_forward.41} parent=31 // pred_check_branch
          %265 = sbr.rel (%p263) target = $region48
        $region47: #{model_forward.41} parent=31 // pred_region
          %266 = vst [vmem:[#allocation2] sm:$0xff] 0.0
          %267 = vst [vmem:[#allocation2 + $0x8] sm:$0xff] 0.0
          %268 = vst [vmem:[#allocation2 + $0x10] sm:$0xff] 0.0
          %269 = vst [vmem:[#allocation2 + $0x18] sm:$0xff] 0.0
          %270 = vst [vmem:[#allocation2 + $0x20] sm:$0xff] 0.0
          %271 = vst [vmem:[#allocation2 + $0x28] sm:$0xff] 0.0
          %272 = vst [vmem:[#allocation2 + $0x30] sm:$0xff] 0.0
          %273 = vst [vmem:[#allocation2 + $0x38] sm:$0xff] 0.0
          %274 = vst [vmem:[#allocation2 + $0x40] sm:$0xff] 0.0
          %275 = vst [vmem:[#allocation2 + $0x48] sm:$0xff] 0.0
          %276 = vst [vmem:[#allocation2 + $0x50] sm:$0xff] 0.0
          %277 = vst [vmem:[#allocation2 + $0x58] sm:$0xff] 0.0
          %278 = vst [vmem:[#allocation2 + $0x60] sm:$0xff] 0.0
          %279 = vst [vmem:[#allocation2 + $0x68] sm:$0xff] 0.0
          %280 = vst [vmem:[#allocation2 + $0x70] sm:$0xff] 0.0
          %281 = vst [vmem:[#allocation2 + $0x78] sm:$0xff] 0.0
          %282 = vst [vmem:[#allocation2 + $0x80] sm:$0xff] 0.0
          %283 = vst [vmem:[#allocation2 + $0x88] sm:$0xff] 0.0
          %284 = vst [vmem:[#allocation2 + $0x90] sm:$0xff] 0.0
          %285 = vst [vmem:[#allocation2 + $0x98] sm:$0xff] 0.0
          %286 = vst [vmem:[#allocation2 + $0xa0] sm:$0xff] 0.0
          %287 = vst [vmem:[#allocation2 + $0xa8] sm:$0xff] 0.0
          %288 = vst [vmem:[#allocation2 + $0xb0] sm:$0xff] 0.0
          %289 = vst [vmem:[#allocation2 + $0xb8] sm:$0xff] 0.0
          %290 = vst [vmem:[#allocation2 + $0xc0] sm:$0xff] 0.0
          %291 = vst [vmem:[#allocation2 + $0xc8] sm:$0xff] 0.0
          %292 = vst [vmem:[#allocation2 + $0xd0] sm:$0xff] 0.0
          %293 = vst [vmem:[#allocation2 + $0xd8] sm:$0xff] 0.0
          %294 = vst [vmem:[#allocation2 + $0xe0] sm:$0xff] 0.0
          %295 = vst [vmem:[#allocation2 + $0xe8] sm:$0xff] 0.0
          %296 = vst [vmem:[#allocation2 + $0xf0] sm:$0xff] 0.0
          %297 = vst [vmem:[#allocation2 + $0xf8] sm:$0xff] 0.0
        $region48: #{model_forward.41} parent=31 // pred_fallthru
          _
        %v298 = vld [vmem:[#allocation2] sm:$0xff]
        %v299 = vld [vmem:[#allocation2 + $0x8] sm:$0xff]
        %v300 = vld [vmem:[#allocation2 + $0x10] sm:$0xff]
        %v301 = vld [vmem:[#allocation2 + $0x18] sm:$0xff]
        %v302 = vld [vmem:[#allocation2 + $0x20] sm:$0xff]
        %v303 = vld [vmem:[#allocation2 + $0x28] sm:$0xff]
        %v304 = vld [vmem:[#allocation2 + $0x30] sm:$0xff]
        %v305 = vld [vmem:[#allocation2 + $0x38] sm:$0xff]
        %v306 = vld [vmem:[#allocation2 + $0x40] sm:$0xff]
        %v307 = vld [vmem:[#allocation2 + $0x48] sm:$0xff]
        %v308 = vld [vmem:[#allocation2 + $0x50] sm:$0xff]
        %v309 = vld [vmem:[#allocation2 + $0x58] sm:$0xff]
        %v310 = vld [vmem:[#allocation2 + $0x60] sm:$0xff]
        %v311 = vld [vmem:[#allocation2 + $0x68] sm:$0xff]
        %v312 = vld [vmem:[#allocation2 + $0x70] sm:$0xff]
        %v313 = vld [vmem:[#allocation2 + $0x78] sm:$0xff]
        %v314 = vld [vmem:[#allocation2 + $0x80] sm:$0xff]
        %v315 = vld [vmem:[#allocation2 + $0x88] sm:$0xff]
        %v316 = vld [vmem:[#allocation2 + $0x90] sm:$0xff]
        %v317 = vld [vmem:[#allocation2 + $0x98] sm:$0xff]
        %v318 = vld [vmem:[#allocation2 + $0xa0] sm:$0xff]
        %v319 = vld [vmem:[#allocation2 + $0xa8] sm:$0xff]
        %v320 = vld [vmem:[#allocation2 + $0xb0] sm:$0xff]
        %v321 = vld [vmem:[#allocation2 + $0xb8] sm:$0xff]
        %v322 = vld [vmem:[#allocation2 + $0xc0] sm:$0xff]
        %v323 = vld [vmem:[#allocation2 + $0xc8] sm:$0xff]
        %v324 = vld [vmem:[#allocation2 + $0xd0] sm:$0xff]
        %v325 = vld [vmem:[#allocation2 + $0xd8] sm:$0xff]
        %v326 = vld [vmem:[#allocation2 + $0xe0] sm:$0xff]
        %v327 = vld [vmem:[#allocation2 + $0xe8] sm:$0xff]
        %v328 = vld [vmem:[#allocation2 + $0xf0] sm:$0xff]
        %v329 = vld [vmem:[#allocation2 + $0xf8] sm:$0xff]
        %v330 = vld [vmem:[%s227] sm:$0xf]
        %v331 = vld [vmem:[%s227 + $0x4] sm:$0xf]
        %v332 = vld [vmem:[%s227 + $0x8] sm:$0xf]
        %v333 = vld [vmem:[%s227 + $0xc] sm:$0xf]
        %v334 = vld [vmem:[%s227 + $0x10] sm:$0xf]
        %v335 = vld [vmem:[%s227 + $0x14] sm:$0xf]
        %v336 = vld [vmem:[%s227 + $0x18] sm:$0xf]
        %v337 = vld [vmem:[%s227 + $0x1c] sm:$0xf]
        %v338 = vld [vmem:[%s227 + $0x20] sm:$0xf]
        %v339 = vld [vmem:[%s227 + $0x24] sm:$0xf]
        %v340 = vld [vmem:[%s227 + $0x28] sm:$0xf]
        %v341 = vld [vmem:[%s227 + $0x2c] sm:$0xf]
        %v342 = vld [vmem:[%s227 + $0x30] sm:$0xf]
        %v343 = vld [vmem:[%s227 + $0x34] sm:$0xf]
        %v344 = vld [vmem:[%s227 + $0x38] sm:$0xf]
        %v345 = vld [vmem:[%s227 + $0x3c] sm:$0xf]
        %v346 = vld [vmem:[%s227 + $0x40] sm:$0xf]
        %v347 = vld [vmem:[%s227 + $0x44] sm:$0xf]
        %v348 = vld [vmem:[%s227 + $0x48] sm:$0xf]
        %v349 = vld [vmem:[%s227 + $0x4c] sm:$0xf]
        %v350 = vld [vmem:[%s227 + $0x50] sm:$0xf]
        %v351 = vld [vmem:[%s227 + $0x54] sm:$0xf]
        %v352 = vld [vmem:[%s227 + $0x58] sm:$0xf]
        %v353 = vld [vmem:[%s227 + $0x5c] sm:$0xf]
        %v354 = vld [vmem:[%s227 + $0x60] sm:$0xf]
        %v355 = vld [vmem:[%s227 + $0x64] sm:$0xf]
        %v356 = vld [vmem:[%s227 + $0x68] sm:$0xf]
        %v357 = vld [vmem:[%s227 + $0x6c] sm:$0xf]
        %v358 = vld [vmem:[%s227 + $0x70] sm:$0xf]
        %v359 = vld [vmem:[%s227 + $0x74] sm:$0xf]
        %v360 = vld [vmem:[%s227 + $0x78] sm:$0xf]
        %v361 = vld [vmem:[%s227 + $0x7c] sm:$0xf]
        %v362 = vld [vmem:[#allocation6] sm:$0xf]
        %v363 = vld [vmem:[#allocation6 + $0x4] sm:$0xf]
        %v364 = vld [vmem:[#allocation6 + $0x8] sm:$0xf]
        %v365 = vld [vmem:[#allocation6 + $0xc] sm:$0xf]
        %v366 = vld [vmem:[#allocation6 + $0x10] sm:$0xf]
        %v367 = vld [vmem:[#allocation6 + $0x14] sm:$0xf]
        %v368 = vld [vmem:[#allocation6 + $0x18] sm:$0xf]
        %v369 = vld [vmem:[#allocation6 + $0x1c] sm:$0xf]
        %v370 = vld [vmem:[#allocation6 + $0x20] sm:$0xf]
        %v371 = vld [vmem:[#allocation6 + $0x24] sm:$0xf]
        %v372 = vld [vmem:[#allocation6 + $0x28] sm:$0xf]
        %v373 = vld [vmem:[#allocation6 + $0x2c] sm:$0xf]
        %v374 = vld [vmem:[#allocation6 + $0x30] sm:$0xf]
        %v375 = vld [vmem:[#allocation6 + $0x34] sm:$0xf]
        %v376 = vld [vmem:[#allocation6 + $0x38] sm:$0xf]
        %v377 = vld [vmem:[#allocation6 + $0x3c] sm:$0xf]
        %v410 = vunpack.c.l.b16 %v330
        %v411 = vunpack.c.l.b16 %v331
        %v412 = vunpack.c.l.b16 %v332
        %v413 = vunpack.c.l.b16 %v333
        %v414 = vunpack.c.l.b16 %v334
        %v415 = vunpack.c.l.b16 %v335
        %v416 = vunpack.c.l.b16 %v336
        %v417 = vunpack.c.l.b16 %v337
        %v418 = vunpack.c.l.b16 %v338
        %v419 = vunpack.c.l.b16 %v339
        %v420 = vunpack.c.l.b16 %v340
        %v421 = vunpack.c.l.b16 %v341
        %v422 = vunpack.c.l.b16 %v342
        %v423 = vunpack.c.l.b16 %v343
        %v424 = vunpack.c.l.b16 %v344
        %v425 = vunpack.c.l.b16 %v345
        %v426 = vunpack.c.l.b16 %v346
        %v427 = vunpack.c.l.b16 %v347
        %v428 = vunpack.c.l.b16 %v348
        %v429 = vunpack.c.l.b16 %v349
        %v430 = vunpack.c.l.b16 %v350
        %v431 = vunpack.c.l.b16 %v351
        %v432 = vunpack.c.l.b16 %v352
        %v433 = vunpack.c.l.b16 %v353
        %v434 = vunpack.c.l.b16 %v354
        %v435 = vunpack.c.l.b16 %v355
        %v436 = vunpack.c.l.b16 %v356
        %v437 = vunpack.c.l.b16 %v357
        %v438 = vunpack.c.l.b16 %v358
        %v439 = vunpack.c.l.b16 %v359
        %v440 = vunpack.c.l.b16 %v360
        %v441 = vunpack.c.l.b16 %v361
        %v442 = vpack.c.b16 %v411, %v410
        %v443 = vpack.c.b16 %v413, %v412
        %v444 = vpack.c.b16 %v415, %v414
        %v445 = vpack.c.b16 %v417, %v416
        %v446 = vpack.c.b16 %v419, %v418
        %v447 = vpack.c.b16 %v421, %v420
        %v448 = vpack.c.b16 %v423, %v422
        %v449 = vpack.c.b16 %v425, %v424
        %v450 = vpack.c.b16 %v427, %v426
        %v451 = vpack.c.b16 %v429, %v428
        %v452 = vpack.c.b16 %v431, %v430
        %v453 = vpack.c.b16 %v433, %v432
        %v454 = vpack.c.b16 %v435, %v434
        %v455 = vpack.c.b16 %v437, %v436
        %v456 = vpack.c.b16 %v439, %v438
        %v457 = vpack.c.b16 %v441, %v440
        %v490 = vunpack.c.l.b16 %v362
        %v491 = vunpack.c.l.b16 %v363
        %v492 = vunpack.c.l.b16 %v364
        %v493 = vunpack.c.l.b16 %v365
        %v494 = vunpack.c.l.b16 %v366
        %v495 = vunpack.c.l.b16 %v367
        %v496 = vunpack.c.l.b16 %v368
        %v497 = vunpack.c.l.b16 %v369
        %v498 = vunpack.c.l.b16 %v370
        %v499 = vunpack.c.l.b16 %v371
        %v500 = vunpack.c.l.b16 %v372
        %v501 = vunpack.c.l.b16 %v373
        %v502 = vunpack.c.l.b16 %v374
        %v503 = vunpack.c.l.b16 %v375
        %v504 = vunpack.c.l.b16 %v376
        %v505 = vunpack.c.l.b16 %v377
        %v506 = vpack.c.b16 %v491, %v490
        %v507 = vpack.c.b16 %v493, %v492
        %v508 = vpack.c.b16 %v495, %v494
        %v509 = vpack.c.b16 %v497, %v496
        %v510 = vpack.c.b16 %v499, %v498
        %v511 = vpack.c.b16 %v501, %v500
        %v512 = vpack.c.b16 %v503, %v502
        %v513 = vpack.c.b16 %v505, %v504
        %522 = vmatprep.subr.bf16.mxu0 0
        %523 = vmatpush1.bf16.msra.mxu0 %v506
        %524 = vmatprep.subr.bf16.mxu0 0
        %525 = vmatpush1.bf16.msra.mxu0 %v507
        %526 = vmatprep.subr.bf16.mxu0 0
        %527 = vmatpush1.bf16.msra.mxu0 %v508
        %528 = vmatprep.subr.bf16.mxu0 0
        %529 = vmatpush1.bf16.msra.mxu0 %v509
        %530 = vmatprep.subr.bf16.mxu0 0
        %531 = vmatpush1.bf16.msra.mxu0 %v510
        %532 = vmatprep.subr.bf16.mxu0 0
        %533 = vmatpush1.bf16.msra.mxu0 %v511
        %534 = vmatprep.subr.bf16.mxu0 0
        %535 = vmatpush1.bf16.msra.mxu0 %v512
        %536 = vmatprep.subr.bf16.mxu0 0
        %537 = vmatpush1.bf16.msra.mxu0 %v513
        %538 = vmatprep.subr.bf16.mxu0 0
        %539 = vmatpush1.bf16.msra.mxu0 0
        %540 = vmatprep.subr.bf16.mxu0 0
        %541 = vmatpush1.bf16.msra.mxu0 0
        %542 = vmatprep.subr.bf16.mxu0 0
        %543 = vmatpush1.bf16.msra.mxu0 0
        %544 = vmatprep.subr.bf16.mxu0 0
        %545 = vmatpush1.bf16.msra.mxu0 0
        %546 = vmatprep.subr.bf16.mxu0 0
        %547 = vmatpush1.bf16.msra.mxu0 0
        %548 = vmatprep.subr.bf16.mxu0 0
        %549 = vmatpush1.bf16.msra.mxu0 0
        %550 = vmatprep.subr.bf16.mxu0 0
        %551 = vmatpush1.bf16.msra.mxu0 0
        %552 = vmatprep.subr.bf16.mxu0 0
        %553 = vmatpush1.bf16.msra.mxu0 0
        %554 = vmatprep.mubr.bf16.mxu0 0
        %555 = vmatmul.mubr.bf16.gmra.mrb[0].mxu0 %v442
        %v556 = vpop.f32.mrb[0].mxu0
        %v557 = vadd.f32 0.0, %v556
        %v558 = vpop.f32.mrb[0].mxu0
        %v559 = vpop.f32.mrb[0].mxu0
        %v560 = vadd.f32 0.0, %v559
        %v561 = vpop.f32.mrb[0].mxu0
        %562 = vmatprep.mubr.bf16.mxu0 0
        %563 = vmatmul.mubr.bf16.gmra.mrb[0].mxu0 %v443
        %v564 = vpop.f32.mrb[0].mxu0
        %v565 = vadd.f32 0.0, %v564
        %v566 = vpop.f32.mrb[0].mxu0
        %v567 = vpop.f32.mrb[0].mxu0
        %v568 = vadd.f32 0.0, %v567
        %v569 = vpop.f32.mrb[0].mxu0
        %570 = vmatprep.mubr.bf16.mxu0 0
        %571 = vmatmul.mubr.bf16.gmra.mrb[0].mxu0 %v444
        %v572 = vpop.f32.mrb[0].mxu0
        %v573 = vadd.f32 0.0, %v572
        %v574 = vpop.f32.mrb[0].mxu0
        %v575 = vpop.f32.mrb[0].mxu0
        %v576 = vadd.f32 0.0, %v575
        %v577 = vpop.f32.mrb[0].mxu0
        %578 = vmatprep.mubr.bf16.mxu0 0
        %579 = vmatmul.mubr.bf16.gmra.mrb[0].mxu0 %v445
        %v580 = vpop.f32.mrb[0].mxu0
        %v581 = vadd.f32 0.0, %v580
        %v582 = vpop.f32.mrb[0].mxu0
        %v583 = vpop.f32.mrb[0].mxu0
        %v584 = vadd.f32 0.0, %v583
        %v585 = vpop.f32.mrb[0].mxu0
        %586 = vmatprep.mubr.bf16.mxu0 0
        %587 = vmatmul.mubr.bf16.gmra.mrb[0].mxu0 %v446
        %v588 = vpop.f32.mrb[0].mxu0
        %v589 = vadd.f32 0.0, %v588
        %v590 = vpop.f32.mrb[0].mxu0
        %v591 = vpop.f32.mrb[0].mxu0
        %v592 = vadd.f32 0.0, %v591
        %v593 = vpop.f32.mrb[0].mxu0
        %594 = vmatprep.mubr.bf16.mxu0 0
        %595 = vmatmul.mubr.bf16.gmra.mrb[0].mxu0 %v447
        %v596 = vpop.f32.mrb[0].mxu0
        %v597 = vadd.f32 0.0, %v596
        %v598 = vpop.f32.mrb[0].mxu0
        %v599 = vpop.f32.mrb[0].mxu0
        %v600 = vadd.f32 0.0, %v599
        %v601 = vpop.f32.mrb[0].mxu0
        %602 = vmatprep.mubr.bf16.mxu0 0
        %603 = vmatmul.mubr.bf16.gmra.mrb[0].mxu0 %v448
        %v604 = vpop.f32.mrb[0].mxu0
        %v605 = vadd.f32 0.0, %v604
        %v606 = vpop.f32.mrb[0].mxu0
        %v607 = vpop.f32.mrb[0].mxu0
        %v608 = vadd.f32 0.0, %v607
        %v609 = vpop.f32.mrb[0].mxu0
        %610 = vmatprep.mubr.bf16.mxu0 0
        %611 = vmatmul.mubr.bf16.gmra.mrb[0].mxu0 %v449
        %v612 = vpop.f32.mrb[0].mxu0
        %v613 = vadd.f32 0.0, %v612
        %v614 = vpop.f32.mrb[0].mxu0
        %v615 = vpop.f32.mrb[0].mxu0
        %v616 = vadd.f32 0.0, %v615
        %v617 = vpop.f32.mrb[0].mxu0
        %618 = vmatprep.mubr.bf16.mxu0 0
        %619 = vmatmul.mubr.bf16.gmra.mrb[0].mxu0 %v450
        %v620 = vpop.f32.mrb[0].mxu0
        %v621 = vadd.f32 0.0, %v620
        %v622 = vpop.f32.mrb[0].mxu0
        %v623 = vpop.f32.mrb[0].mxu0
        %v624 = vadd.f32 0.0, %v623
        %v625 = vpop.f32.mrb[0].mxu0
        %626 = vmatprep.mubr.bf16.mxu0 0
        %627 = vmatmul.mubr.bf16.gmra.mrb[0].mxu0 %v451
        %v628 = vpop.f32.mrb[0].mxu0
        %v629 = vadd.f32 0.0, %v628
        %v630 = vpop.f32.mrb[0].mxu0
        %v631 = vpop.f32.mrb[0].mxu0
        %v632 = vadd.f32 0.0, %v631
        %v633 = vpop.f32.mrb[0].mxu0
        %634 = vmatprep.mubr.bf16.mxu0 0
        %635 = vmatmul.mubr.bf16.gmra.mrb[0].mxu0 %v452
        %v636 = vpop.f32.mrb[0].mxu0
        %v637 = vadd.f32 0.0, %v636
        %v638 = vpop.f32.mrb[0].mxu0
        %v639 = vpop.f32.mrb[0].mxu0
        %v640 = vadd.f32 0.0, %v639
        %v641 = vpop.f32.mrb[0].mxu0
        %642 = vmatprep.mubr.bf16.mxu0 0
        %643 = vmatmul.mubr.bf16.gmra.mrb[0].mxu0 %v453
        %v644 = vpop.f32.mrb[0].mxu0
        %v645 = vadd.f32 0.0, %v644
        %v646 = vpop.f32.mrb[0].mxu0
        %v647 = vpop.f32.mrb[0].mxu0
        %v648 = vadd.f32 0.0, %v647
        %v649 = vpop.f32.mrb[0].mxu0
        %650 = vmatprep.mubr.bf16.mxu0 0
        %651 = vmatmul.mubr.bf16.gmra.mrb[0].mxu0 %v454
        %v652 = vpop.f32.mrb[0].mxu0
        %v653 = vadd.f32 0.0, %v652
        %v654 = vpop.f32.mrb[0].mxu0
        %v655 = vpop.f32.mrb[0].mxu0
        %v656 = vadd.f32 0.0, %v655
        %v657 = vpop.f32.mrb[0].mxu0
        %658 = vmatprep.mubr.bf16.mxu0 0
        %659 = vmatmul.mubr.bf16.gmra.mrb[0].mxu0 %v455
        %v660 = vpop.f32.mrb[0].mxu0
        %v661 = vadd.f32 0.0, %v660
        %v662 = vpop.f32.mrb[0].mxu0
        %v663 = vpop.f32.mrb[0].mxu0
        %v664 = vadd.f32 0.0, %v663
        %v665 = vpop.f32.mrb[0].mxu0
        %666 = vmatprep.mubr.bf16.mxu0 0
        %667 = vmatmul.mubr.bf16.gmra.mrb[0].mxu0 %v456
        %v668 = vpop.f32.mrb[0].mxu0
        %v669 = vadd.f32 0.0, %v668
        %v670 = vpop.f32.mrb[0].mxu0
        %v671 = vpop.f32.mrb[0].mxu0
        %v672 = vadd.f32 0.0, %v671
        %v673 = vpop.f32.mrb[0].mxu0
        %674 = vmatprep.mubr.bf16.mxu0 0
        %675 = vmatmul.mubr.bf16.gmra.mrb[0].mxu0 %v457
        %v676 = vpop.f32.mrb[0].mxu0
        %v677 = vadd.f32 0.0, %v676
        %v678 = vpop.f32.mrb[0].mxu0
        %v679 = vpop.f32.mrb[0].mxu0
        %v680 = vadd.f32 0.0, %v679
        %v681 = vpop.f32.mrb[0].mxu0
        %682 = vdwg.mxu0
        %v683 = vadd.f32 %v298, %v557
        %v684 = vadd.f32 %v299, %v560
        %v685 = vadd.f32 %v300, %v565
        %v686 = vadd.f32 %v301, %v568
        %v687 = vadd.f32 %v302, %v573
        %v688 = vadd.f32 %v303, %v576
        %v689 = vadd.f32 %v304, %v581
        %v690 = vadd.f32 %v305, %v584
        %v691 = vadd.f32 %v306, %v589
        %v692 = vadd.f32 %v307, %v592
        %v693 = vadd.f32 %v308, %v597
        %v694 = vadd.f32 %v309, %v600
        %v695 = vadd.f32 %v310, %v605
        %v696 = vadd.f32 %v311, %v608
        %v697 = vadd.f32 %v312, %v613
        %v698 = vadd.f32 %v313, %v616
        %v699 = vadd.f32 %v314, %v621
        %v700 = vadd.f32 %v315, %v624
        %v701 = vadd.f32 %v316, %v629
        %v702 = vadd.f32 %v317, %v632
        %v703 = vadd.f32 %v318, %v637
        %v704 = vadd.f32 %v319, %v640
        %v705 = vadd.f32 %v320, %v645
        %v706 = vadd.f32 %v321, %v648
        %v707 = vadd.f32 %v322, %v653
        %v708 = vadd.f32 %v323, %v656
        %v709 = vadd.f32 %v324, %v661
        %v710 = vadd.f32 %v325, %v664
        %v711 = vadd.f32 %v326, %v669
        %v712 = vadd.f32 %v327, %v672
        %v713 = vadd.f32 %v328, %v677
        %v714 = vadd.f32 %v329, %v680
        %715 = vst [vmem:[#allocation2] sm:$0xff] %v683
        %716 = vst [vmem:[#allocation2 + $0x8] sm:$0xff] %v684
        %717 = vst [vmem:[#allocation2 + $0x10] sm:$0xff] %v685
        %718 = vst [vmem:[#allocation2 + $0x18] sm:$0xff] %v686
        %719 = vst [vmem:[#allocation2 + $0x20] sm:$0xff] %v687
        %720 = vst [vmem:[#allocation2 + $0x28] sm:$0xff] %v688
        %721 = vst [vmem:[#allocation2 + $0x30] sm:$0xff] %v689
        %722 = vst [vmem:[#allocation2 + $0x38] sm:$0xff] %v690
        %723 = vst [vmem:[#allocation2 + $0x40] sm:$0xff] %v691
        %724 = vst [vmem:[#allocation2 + $0x48] sm:$0xff] %v692
        %725 = vst [vmem:[#allocation2 + $0x50] sm:$0xff] %v693
        %726 = vst [vmem:[#allocation2 + $0x58] sm:$0xff] %v694
        %727 = vst [vmem:[#allocation2 + $0x60] sm:$0xff] %v695
        %728 = vst [vmem:[#allocation2 + $0x68] sm:$0xff] %v696
        %729 = vst [vmem:[#allocation2 + $0x70] sm:$0xff] %v697
        %730 = vst [vmem:[#allocation2 + $0x78] sm:$0xff] %v698
        %731 = vst [vmem:[#allocation2 + $0x80] sm:$0xff] %v699
        %732 = vst [vmem:[#allocation2 + $0x88] sm:$0xff] %v700
        %733 = vst [vmem:[#allocation2 + $0x90] sm:$0xff] %v701
        %734 = vst [vmem:[#allocation2 + $0x98] sm:$0xff] %v702
        %735 = vst [vmem:[#allocation2 + $0xa0] sm:$0xff] %v703
        %736 = vst [vmem:[#allocation2 + $0xa8] sm:$0xff] %v704
        %737 = vst [vmem:[#allocation2 + $0xb0] sm:$0xff] %v705
        %738 = vst [vmem:[#allocation2 + $0xb8] sm:$0xff] %v706
        %739 = vst [vmem:[#allocation2 + $0xc0] sm:$0xff] %v707
        %740 = vst [vmem:[#allocation2 + $0xc8] sm:$0xff] %v708
        %741 = vst [vmem:[#allocation2 + $0xd0] sm:$0xff] %v709
        %742 = vst [vmem:[#allocation2 + $0xd8] sm:$0xff] %v710
        %743 = vst [vmem:[#allocation2 + $0xe0] sm:$0xff] %v711
        %744 = vst [vmem:[#allocation2 + $0xe8] sm:$0xff] %v712
        %745 = vst [vmem:[#allocation2 + $0xf0] sm:$0xff] %v713
        %746 = vst [vmem:[#allocation2 + $0xf8] sm:$0xff] %v714
        // Predicated region
        $region49: #{model_forward.41} parent=31 // pred_check
          %p747 = pneg %p262
        $region50: #{model_forward.41} parent=31 // pred_check_branch
          %749 = sbr.rel (%p747) target = $region52
        $region51: #{model_forward.41} parent=31 // pred_region
          %v750 = vld [vmem:[#allocation2] sm:$0xff]
          %v751 = vld [vmem:[#allocation2 + $0x8] sm:$0xff]
          %v752 = vld [vmem:[#allocation2 + $0x10] sm:$0xff]
          %v753 = vld [vmem:[#allocation2 + $0x18] sm:$0xff]
          %v754 = vld [vmem:[#allocation2 + $0x20] sm:$0xff]
          %v755 = vld [vmem:[#allocation2 + $0x28] sm:$0xff]
          %v756 = vld [vmem:[#allocation2 + $0x30] sm:$0xff]
          %v757 = vld [vmem:[#allocation2 + $0x38] sm:$0xff]
          %v758 = vld [vmem:[#allocation2 + $0x40] sm:$0xff]
          %v759 = vld [vmem:[#allocation2 + $0x48] sm:$0xff]
          %v760 = vld [vmem:[#allocation2 + $0x50] sm:$0xff]
          %v761 = vld [vmem:[#allocation2 + $0x58] sm:$0xff]
          %v762 = vld [vmem:[#allocation2 + $0x60] sm:$0xff]
          %v763 = vld [vmem:[#allocation2 + $0x68] sm:$0xff]
          %v764 = vld [vmem:[#allocation2 + $0x70] sm:$0xff]
          %v765 = vld [vmem:[#allocation2 + $0x78] sm:$0xff]
          %v766 = vld [vmem:[#allocation2 + $0x80] sm:$0xff]
          %v767 = vld [vmem:[#allocation2 + $0x88] sm:$0xff]
          %v768 = vld [vmem:[#allocation2 + $0x90] sm:$0xff]
          %v769 = vld [vmem:[#allocation2 + $0x98] sm:$0xff]
          %v770 = vld [vmem:[#allocation2 + $0xa0] sm:$0xff]
          %v771 = vld [vmem:[#allocation2 + $0xa8] sm:$0xff]
          %v772 = vld [vmem:[#allocation2 + $0xb0] sm:$0xff]
          %v773 = vld [vmem:[#allocation2 + $0xb8] sm:$0xff]
          %v774 = vld [vmem:[#allocation2 + $0xc0] sm:$0xff]
          %v775 = vld [vmem:[#allocation2 + $0xc8] sm:$0xff]
          %v776 = vld [vmem:[#allocation2 + $0xd0] sm:$0xff]
          %v777 = vld [vmem:[#allocation2 + $0xd8] sm:$0xff]
          %v778 = vld [vmem:[#allocation2 + $0xe0] sm:$0xff]
          %v779 = vld [vmem:[#allocation2 + $0xe8] sm:$0xff]
          %v780 = vld [vmem:[#allocation2 + $0xf0] sm:$0xff]
          %v781 = vld [vmem:[#allocation2 + $0xf8] sm:$0xff]
          %v782 = vld [vmem:[#allocation8] sm:$0x1]
          %v784 = vlaneseq
          %v785 = vshrl.u32 %v784, 7
          %v786 = vsub.s32 0, %v785
          %v787 = vrot.slane %v782, %v786
          %v789 = vadd.f32 %v750, %v787
          %v790 = vadd.f32 %v751, %v787
          %v791 = vadd.f32 %v752, %v787
          %v792 = vadd.f32 %v753, %v787
          %v793 = vadd.f32 %v754, %v787
          %v794 = vadd.f32 %v755, %v787
          %v795 = vadd.f32 %v756, %v787
          %v796 = vadd.f32 %v757, %v787
          %v797 = vadd.f32 %v758, %v787
          %v798 = vadd.f32 %v759, %v787
          %v799 = vadd.f32 %v760, %v787
          %v800 = vadd.f32 %v761, %v787
          %v801 = vadd.f32 %v762, %v787
          %v802 = vadd.f32 %v763, %v787
          %v803 = vadd.f32 %v764, %v787
          %v804 = vadd.f32 %v765, %v787
          %v805 = vadd.f32 %v766, %v787
          %v806 = vadd.f32 %v767, %v787
          %v807 = vadd.f32 %v768, %v787
          %v808 = vadd.f32 %v769, %v787
          %v809 = vadd.f32 %v770, %v787
          %v810 = vadd.f32 %v771, %v787
          %v811 = vadd.f32 %v772, %v787
          %v812 = vadd.f32 %v773, %v787
          %v813 = vadd.f32 %v774, %v787
          %v814 = vadd.f32 %v775, %v787
          %v815 = vadd.f32 %v776, %v787
          %v816 = vadd.f32 %v777, %v787
          %v817 = vadd.f32 %v778, %v787
          %v818 = vadd.f32 %v779, %v787
          %v819 = vadd.f32 %v780, %v787
          %v820 = vadd.f32 %v781, %v787
          %v821 = vmax.f32 %v789, 0.0
          %v822 = vmax.f32 %v790, 0.0
          %v823 = vmax.f32 %v791, 0.0
          %v824 = vmax.f32 %v792, 0.0
          %v825 = vmax.f32 %v793, 0.0
          %v826 = vmax.f32 %v794, 0.0
          %v827 = vmax.f32 %v795, 0.0
          %v828 = vmax.f32 %v796, 0.0
          %v829 = vmax.f32 %v797, 0.0
          %v830 = vmax.f32 %v798, 0.0
          %v831 = vmax.f32 %v799, 0.0
          %v832 = vmax.f32 %v800, 0.0
          %v833 = vmax.f32 %v801, 0.0
          %v834 = vmax.f32 %v802, 0.0
          %v835 = vmax.f32 %v803, 0.0
          %v836 = vmax.f32 %v804, 0.0
          %v837 = vmax.f32 %v805, 0.0
          %v838 = vmax.f32 %v806, 0.0
          %v839 = vmax.f32 %v807, 0.0
          %v840 = vmax.f32 %v808, 0.0
          %v841 = vmax.f32 %v809, 0.0
          %v842 = vmax.f32 %v810, 0.0
          %v843 = vmax.f32 %v811, 0.0
          %v844 = vmax.f32 %v812, 0.0
          %v845 = vmax.f32 %v813, 0.0
          %v846 = vmax.f32 %v814, 0.0
          %v847 = vmax.f32 %v815, 0.0
          %v848 = vmax.f32 %v816, 0.0
          %v849 = vmax.f32 %v817, 0.0
          %v850 = vmax.f32 %v818, 0.0
          %v851 = vmax.f32 %v819, 0.0
          %v852 = vmax.f32 %v820, 0.0
          %853 = vst [vmem:[%s257] sm:$0xff] %v821
          %854 = vst [vmem:[%s257 + $0x8] sm:$0xff] %v822
          %855 = vst [vmem:[%s257 + $0x10] sm:$0xff] %v823
          %856 = vst [vmem:[%s257 + $0x18] sm:$0xff] %v824
          %857 = vst [vmem:[%s257 + $0x20] sm:$0xff] %v825
          %858 = vst [vmem:[%s257 + $0x28] sm:$0xff] %v826
          %859 = vst [vmem:[%s257 + $0x30] sm:$0xff] %v827
          %860 = vst [vmem:[%s257 + $0x38] sm:$0xff] %v828
          %861 = vst [vmem:[%s257 + $0x40] sm:$0xff] %v829
          %862 = vst [vmem:[%s257 + $0x48] sm:$0xff] %v830
          %863 = vst [vmem:[%s257 + $0x50] sm:$0xff] %v831
          %864 = vst [vmem:[%s257 + $0x58] sm:$0xff] %v832
          %865 = vst [vmem:[%s257 + $0x60] sm:$0xff] %v833
          %866 = vst [vmem:[%s257 + $0x68] sm:$0xff] %v834
          %867 = vst [vmem:[%s257 + $0x70] sm:$0xff] %v835
          %868 = vst [vmem:[%s257 + $0x78] sm:$0xff] %v836
          %869 = vst [vmem:[%s257 + $0x80] sm:$0xff] %v837
          %870 = vst [vmem:[%s257 + $0x88] sm:$0xff] %v838
          %871 = vst [vmem:[%s257 + $0x90] sm:$0xff] %v839
          %872 = vst [vmem:[%s257 + $0x98] sm:$0xff] %v840
          %873 = vst [vmem:[%s257 + $0xa0] sm:$0xff] %v841
          %874 = vst [vmem:[%s257 + $0xa8] sm:$0xff] %v842
          %875 = vst [vmem:[%s257 + $0xb0] sm:$0xff] %v843
          %876 = vst [vmem:[%s257 + $0xb8] sm:$0xff] %v844
          %877 = vst [vmem:[%s257 + $0xc0] sm:$0xff] %v845
          %878 = vst [vmem:[%s257 + $0xc8] sm:$0xff] %v846
          %879 = vst [vmem:[%s257 + $0xd0] sm:$0xff] %v847
          %880 = vst [vmem:[%s257 + $0xd8] sm:$0xff] %v848
          %881 = vst [vmem:[%s257 + $0xe0] sm:$0xff] %v849
          %882 = vst [vmem:[%s257 + $0xe8] sm:$0xff] %v850
          %883 = vst [vmem:[%s257 + $0xf0] sm:$0xff] %v851
          %884 = vst [vmem:[%s257 + $0xf8] sm:$0xff] %v852
        $region52: #{model_forward.41} parent=31 // pred_fallthru
          _
        %s885 = sand.u32 %s132, 1
        %s886 = scalar_lea.sflag [#allocation5], %s885
        %s887 = sand.u32 %s132, 1
        %s888 = smul.addr %s887, 256
        %s889 = scalar_lea.vmem [#allocation9], %s888
        // Predicated region
        $region53: #{model_forward.41} parent=31 // pred_check
          %p890 = pneg %p142
        $region54: #{model_forward.41} parent=31 // pred_check_branch
          %892 = sbr.rel (%p890) target = $region56
        $region55: #{model_forward.41} parent=31 // pred_region
          %s893 = smul.u32 32, %s26
          %s895 = ssub.s32 4096, 4096
          %896 = vsyncadd %s886, %s895
          %s897 = sadd.s32 %s27, %s893
          %s898 = smul.addr %s897, 128
          %s899 = scalar_lea.hbm %s3, %s898
          %s900 = sshll.u32 %s889, 4
          %s901 = int_to_ptr.vmem [resolvable:$true] %s900
          %906 = dma.vmem_to_hbm [thread:$0]  %s901, 4096, %s899, %s886, 128, 128, 8
        $region56: #{model_forward.41} parent=31 // pred_fallthru
          _
      $region32: #{model_forward.41} parent=5 // pred_fallthru
        _
      %p907 = scmp.le.s32.totalorder 2, %s16
      // Predicated region
      $region57: #{model_forward.41} parent=5 // pred_check
        %p908 = pneg %p907
      $region58: #{model_forward.41} parent=5 // pred_check_branch
        %910 = sbr.rel (%p908) target = $region60
      $region59: #{model_forward.41} parent=5 // pred_region
        %s911 = ssub.s32 %s16, 2
        // Predicated region
        $region61: #{model_forward.41} parent=59 // pred_check
          %p912 = pneg %p148
        $region62: #{model_forward.41} parent=59 // pred_check_branch
          %914 = sbr.rel (%p912) target = $region64
        $region63: #{model_forward.41} parent=59 // pred_region
          %s915 = sand.u32 %s133, 1
          %s916 = scalar_lea.sflag [#allocation5], %s915
          %s917 = sand.u32 %s133, 1
          %s918 = smul.addr %s917, 256
          %s919 = scalar_lea.vmem [#allocation9], %s918
          %920 = dma.done %s916, 4096
        $region64: #{model_forward.41} parent=59 // pred_fallthru
          _
      $region60: #{model_forward.41} parent=5 // pred_fallthru
        _
    $region6: #{model_forward.41} parent=1 // loop_footer
      %s20 = sadd.s32 1, %s16
    $region7: #{model_forward.41} parent=1 // loop_footer_branch
      %15 = sbr.rel target = $region3
    $region8: #{model_forward.41} parent=1 // loop_exit
      _
    %921 = vsyncpa [#allocation4], 1
    %s922 = scalar_lea.sflag [#allocation4], 1
    %923 = vsyncpa %s922, 1
    %924 = vsyncpa [#allocation7], 1
    %925 = vsyncpa [#allocation5], 1
    %s926 = scalar_lea.sflag [#allocation5], 1
    %927 = vsyncpa %s926, 1

</llo_original>
